<compile_context>
chip_gen: v5e
topology: v5e:2x2
jax: 0.10.0
libtpu: 0.0.40
codegen_flags: <defaults>
</compile_context>

<pallas_src>
import functools
import math

import jax
import jax.numpy as jnp
from jax.experimental import pallas as pl
from jax.experimental.pallas import tpu as pltpu

HIDDEN = 32          # args.hidden_size
NUM_HEADS = 4        # args.multi_head
FF_SIZE = 128        # args.ff_size
LANG_SEQ = 8         # args.lang_seq_len
AUDIO_SEQ = 12       # args.audio_seq_len
EPS = 1e-6
NEG_INF = -1e9


# ----------------------------- weight slab layout ----------------------------

def _pad128(n):
    return ((n + 127) // 128) * 128


def _col_layout(order):
    lay, off = {}, 0
    for name, w in order:
        lay[name] = (off, w)
        off += _pad128(w)            # every block starts on a 128-lane boundary
    return lay, off


# slab A: every weight whose input dim is HIDDEN (32 rows), packed along lanes.
_A_ORDER = (("sa_wqkv", 3 * HIDDEN), ("sa_wm", HIDDEN), ("saf_w1", FF_SIZE),
            ("g1_wqkv", 3 * HIDDEN), ("g1_wm", HIDDEN),
            ("g2_wqkv", 3 * HIDDEN), ("g2_wm", HIDDEN), ("gf_w1", FF_SIZE),
            ("afl_w1", FF_SIZE), ("afa_w1", FF_SIZE))
LAY_A, A_COLS = _col_layout(_A_ORDER)

# slab F: every weight whose input dim is FF_SIZE (128 rows).
_F_ORDER = (("saf_w2", HIDDEN), ("gf_w2", HIDDEN),
            ("afl_w2", LANG_SEQ), ("afa_w2", AUDIO_SEQ))
LAY_F, F_COLS = _col_layout(_F_ORDER)

# slab V: one 128-lane row per small vector (biases, LayerNorm gamma/beta).
_V_ORDER = (("sa_bqkv", 3 * HIDDEN), ("sa_bm", HIDDEN), ("sa_g", HIDDEN), ("sa_b", HIDDEN),
            ("saf_b1", FF_SIZE), ("saf_b2", HIDDEN), ("saf_g", HIDDEN), ("saf_b", HIDDEN),
            ("g1_bqkv", 3 * HIDDEN), ("g1_bm", HIDDEN), ("g1_g", HIDDEN), ("g1_b", HIDDEN),
            ("g2_bqkv", 3 * HIDDEN), ("g2_bm", HIDDEN), ("g2_g", HIDDEN), ("g2_b", HIDDEN),
            ("gf_b1", FF_SIZE), ("gf_b2", HIDDEN), ("gf_g", HIDDEN), ("gf_b", HIDDEN),
            ("afl_b1", FF_SIZE), ("afl_b2", LANG_SEQ), ("afl_g", HIDDEN), ("afl_b", HIDDEN),
            ("afa_b1", FF_SIZE), ("afa_b2", AUDIO_SEQ), ("afa_g", HIDDEN), ("afa_b", HIDDEN))
LAY_V = {name: (i, w) for i, (name, w) in enumerate(_V_ORDER)}
V_ROWS = len(_V_ORDER)
V_COLS = 128


# ----------------------------- in-kernel helpers -----------------------------

def _softmax(x, axis):
    m = jnp.max(x, axis=axis, keepdims=True)
    e = jnp.exp(x - m)
    return e / jnp.sum(e, axis=axis, keepdims=True)


def _layernorm(z, gamma, beta):
    # Matches the reference LayerNorm: Bessel-corrected std (N-1), eps on std.
    h = z.shape[-1]
    mean = jnp.mean(z, axis=-1, keepdims=True)
    var = jnp.sum((z - mean) ** 2, axis=-1, keepdims=True) * (1.0 / (h - 1))
    inv = 1.0 / (jnp.sqrt(var) + EPS)
    return gamma * (z - mean) * inv + beta


# --------------------------------- fused kernel -------------------------------

def la_block_kernel(*refs, nh, last, bblk, sx, sy):
    if last:
        (x_ref, y_ref, xm_ref, ym_ref,
         wA_ref, wF_ref, vec_ref, ox_ref, oy_ref) = refs
        xmc_ref = ymc_ref = None
    else:
        (x_ref, y_ref, xm_ref, ym_ref, xmc_ref, ymc_ref,
         wA_ref, wF_ref, vec_ref, ox_ref, oy_ref) = refs

    H = HIDDEN
    x2 = x_ref[...]                       # (bblk*sx, H)  language, flattened
    y2 = y_ref[...]                       # (bblk*sy, H)  audio, flattened
    xpad = xm_ref[...] > 0.5              # (bblk, 1, sx)  True == pad
    ypad = ym_ref[...] > 0.5              # (bblk, 1, sy)

    # ---- zero-cost static ref-slices into the packed weight slabs ----
    def wa(name):
        o, w = LAY_A[name]
        return wA_ref[:, o:o + w]

    def wf(name):
        o, w = LAY_F[name]
        return wF_ref[:, o:o + w]

    def vrow(name):
        r, w = LAY_V[name]
        return vec_ref[r:r + 1, :w]       # (1, w)

    # ---- LayerNorm(x_q + MHAtt(v=x_kv, k=x_kv, q=x_q, mask)) ----
    def mhatt_ln(q_in, kv_in, sq_, sk_, pad, pre, self_attn):
        w_qkv = wa(pre + "_wqkv")         # (H, 3H) = [Wq | Wk | Wv]
        b_qkv = vrow(pre + "_bqkv")       # (1, 3H)
        w_m = wa(pre + "_wm")             # (H, H)
        b_m = vrow(pre + "_bm")
        gamma, beta = vrow(pre + "_g"), vrow(pre + "_b")

        if self_attn:
            # single fused QKV matmul, M = bblk*seq rows into the MXU
            qkv = jnp.dot(q_in, w_qkv, preferred_element_type=jnp.float32) + b_qkv
            q2, k2, v2 = qkv[:, :H], qkv[:, H:2 * H], qkv[:, 2 * H:]
        else:
            q2 = jnp.dot(q_in, w_qkv[:, :H],
                         preferred_element_type=jnp.float32) + b_qkv[:, :H]
            kv = jnp.dot(kv_in, w_qkv[:, H:],
                         preferred_element_type=jnp.float32) + b_qkv[:, H:]
            k2, v2 = kv[:, :H], kv[:, H:]

        q3 = q2.reshape(bblk, sq_, H)
        k3 = k2.reshape(bblk, sk_, H)
        v3 = v2.reshape(bblk, sk_, H)

        dh = H // nh
        scale = 1.0 / math.sqrt(dh)
        ctx_heads = []
        for h_i in range(nh):             # static unroll, nh == 4
            sl = slice(h_i * dh, (h_i + 1) * dh)
            sc = jnp.einsum('bqd,bkd->bqk', q3[:, :, sl], k3[:, :, sl],
                            preferred_element_type=jnp.float32) * scale
            sc = jnp.where(pad, NEG_INF, sc)
            att = _softmax(sc, axis=-1)   # dropout(att) == identity (eval)
            ctx_heads.append(jnp.einsum('bqk,bkd->bqd', att, v3[:, :, sl],
                                        preferred_element_type=jnp.float32))
        # lane-slice assembly of the 4 heads, then ONE merge matmul
        ctx = jnp.concatenate(ctx_heads, axis=-1).reshape(bblk * sq_, H)
        atted = jnp.dot(ctx, w_m, preferred_element_type=jnp.float32) + b_m
        return _layernorm(q_in + atted, gamma, beta)

    # ---- LayerNorm(z + Linear(ReLU(Linear(z)))) ----
    def ffn_ln(z2, pre):
        w1, b1 = wa(pre + "_w1"), vrow(pre + "_b1")
        w2, b2 = wf(pre + "_w2"), vrow(pre + "_b2")
        gamma, beta = vrow(pre + "_g"), vrow(pre + "_b")
        h = jnp.maximum(
            jnp.dot(z2, w1, preferred_element_type=jnp.float32) + b1, 0.0)
        out = jnp.dot(h, w2, preferred_element_type=jnp.float32) + b2
        return _layernorm(z2 + out, gamma, beta)

    # ---- AttFlat(merge=False, glimpse == seq) + residual + LayerNorm ----
    def attflat_ln(z2, s_, pad_col, pre):
        w1, b1 = wa(pre + "_w1"), vrow(pre + "_b1")
        w2, b2 = wf(pre + "_w2"), vrow(pre + "_b2")     # (FF, s_), (1, s_)
        gamma, beta = vrow(pre + "_g"), vrow(pre + "_b")
        h = jnp.maximum(
            jnp.dot(z2, w1, preferred_element_type=jnp.float32) + b1, 0.0)
        att2 = jnp.dot(h, w2, preferred_element_type=jnp.float32) + b2   # (b*s, s)
        att = att2.reshape(bblk, s_, s_)
        att = jnp.where(pad_col, NEG_INF, att)          # pad_col: (bblk, s, 1)
        att = _softmax(att, axis=1)                     # softmax over seq dim
        z3 = z2.reshape(bblk, s_, H)
        # flat[b, g, :] = sum_s att[b, s, g] * z[b, s, :]
        att_t = jnp.swapaxes(att, 1, 2)                 # (bblk, g, s)
        flat = jnp.einsum('bgs,bsh->bgh', att_t, z3,
                          preferred_element_type=jnp.float32)
        out = z3 + flat                                 # glimpse == seq
        return _layernorm(out.reshape(bblk * s_, H), gamma, beta)

    # ---------------- LA_Block forward ----------------
    # ax = SA(x, x_mask): self-attention + FFN (post-LN, residual inside)
    h = mhatt_ln(x2, x2, sx, sx, xpad, "sa", self_attn=True)
    ax = ffn_ln(h, "saf")

    # ay = SGA(y, x, y_mask, x_mask): self-attn(y) -> cross(q=y, kv=x) -> FFN
    g1 = mhatt_ln(y2, y2, sy, sy, ypad, "g1", self_attn=True)
    g2 = mhatt_ln(g1, x2, sy, sx, xpad, "g2", self_attn=False)
    ay = ffn_ln(g2, "gf")

    xo = ax + x2                          # outer residuals of LA_Block.forward
    yo = ay + y2

    if last:
        ox_ref[...] = xo
        oy_ref[...] = yo
    else:
        xpc = xmc_ref[...] > 0.5          # (bblk, sx, 1)
        ypc = ymc_ref[...] > 0.5
        ox_ref[...] = attflat_ln(xo, sx, xpc, "afl")
        oy_ref[...] = attflat_ln(yo, sy, ypc, "afa")


# ------------------------------ pallas wrapper ---------------------------------

@functools.partial(jax.jit, static_argnames=("last", "block_b"))
def la_block_forward(x, x_mask, y, y_mask, params, last=False, block_b=None):
    """x: (B, LANG_SEQ, H) language; y: (B, AUDIO_SEQ, H) audio.
    x_mask / y_mask: (B, S) bool, True == padded."""
    B, Sx, H = x.shape
    Sy = y.shape[1]
    if block_b is None:
        block_b = B                       # toy case: whole batch in one step
    assert B % block_b == 0
    grid = (B // block_b,)

    # flatten batch*seq into the matmul M dimension (free reshape in XLA)
    x2 = x.reshape(B * Sx, H)
    y2 = y.reshape(B * Sy, H)
    xm_row = x_mask.astype(jnp.float32)[:, None, :]   # (B, 1, Sx)
    ym_row = y_mask.astype(jnp.float32)[:, None, :]   # (B, 1, Sy)

    data = [x2, y2, xm_row, ym_row]
    in_specs = [
        pl.BlockSpec((block_b * Sx, H), lambda b: (b, 0)),
        pl.BlockSpec((block_b * Sy, H), lambda b: (b, 0)),
        pl.BlockSpec((block_b, 1, Sx), lambda b: (b, 0, 0)),
        pl.BlockSpec((block_b, 1, Sy), lambda b: (b, 0, 0)),
    ]
    if not last:
        xm_col = x_mask.astype(jnp.float32)[:, :, None]   # (B, Sx, 1)
        ym_col = y_mask.astype(jnp.float32)[:, :, None]   # (B, Sy, 1)
        data += [xm_col, ym_col]
        in_specs += [pl.BlockSpec((block_b, Sx, 1), lambda b: (b, 0, 0)),
                     pl.BlockSpec((block_b, Sy, 1), lambda b: (b, 0, 0))]

    slabs = [params["wA"], params["wF"], params["vec"]]
    data += slabs
    in_specs += [pl.BlockSpec(s.shape, lambda b, nd=s.ndim: (0,) * nd)
                 for s in slabs]          # replicated: fetched once

    kernel = functools.partial(la_block_kernel, nh=NUM_HEADS, last=last,
                               bblk=block_b, sx=Sx, sy=Sy)

    out_x2, out_y2 = pl.pallas_call(
        kernel,
        out_shape=(jax.ShapeDtypeStruct((B * Sx, H), jnp.float32),
                   jax.ShapeDtypeStruct((B * Sy, H), jnp.float32)),
        grid=grid,
        in_specs=in_specs,
        out_specs=(pl.BlockSpec((block_b * Sx, H), lambda b: (b, 0)),
                   pl.BlockSpec((block_b * Sy, H), lambda b: (b, 0))),
        compiler_params=pltpu.CompilerParams(
            dimension_semantics=("parallel",)),
    )(*data)
    return out_x2.reshape(B, Sx, H), out_y2.reshape(B, Sy, H)


# ------------------------------- parameters ------------------------------------

def _linear(key, in_dim, out_dim, scale=0.02):
    kw, kb = jax.random.split(key)
    w = scale * jax.random.normal(kw, (in_dim, out_dim), jnp.float32)
    b = scale * jax.random.normal(kb, (1, out_dim), jnp.float32)
    return w, b


def make_params(key):
    ks = jax.random.split(key, 7)
    raw = {}

    def ln(pre):
        raw[pre + "_g"] = jnp.ones((1, HIDDEN), jnp.float32)
        raw[pre + "_b"] = jnp.zeros((1, HIDDEN), jnp.float32)

    def mh(k, pre):
        kk = jax.random.split(k, 4)
        wq, bq = _linear(kk[0], HIDDEN, HIDDEN)
        wk, bk = _linear(kk[1], HIDDEN, HIDDEN)
        wv, bv = _linear(kk[2], HIDDEN, HIDDEN)
        wm, bm = _linear(kk[3], HIDDEN, HIDDEN)
        raw[pre + "_wqkv"] = jnp.concatenate([wq, wk, wv], axis=1)
        raw[pre + "_bqkv"] = jnp.concatenate([bq, bk, bv], axis=1)
        raw[pre + "_wm"], raw[pre + "_bm"] = wm, bm
        ln(pre)

    def ffn(k, pre):
        k1, k2 = jax.random.split(k)
        raw[pre + "_w1"], raw[pre + "_b1"] = _linear(k1, HIDDEN, FF_SIZE)
        raw[pre + "_w2"], raw[pre + "_b2"] = _linear(k2, FF_SIZE, HIDDEN)
        ln(pre)

    def attflat(k, pre, seq):
        k1, k2 = jax.random.split(k)
        raw[pre + "_w1"], raw[pre + "_b1"] = _linear(k1, HIDDEN, FF_SIZE)
        raw[pre + "_w2"], raw[pre + "_b2"] = _linear(k2, FF_SIZE, seq)
        ln(pre)

    mh(ks[0], "sa");  ffn(ks[1], "saf")
    mh(ks[2], "g1");  mh(ks[3], "g2");  ffn(ks[4], "gf")
    attflat(ks[5], "afl", LANG_SEQ)
    attflat(ks[6], "afa", AUDIO_SEQ)

    # pack into the three slabs the kernel expects
    wA = jnp.zeros((HIDDEN, A_COLS), jnp.float32)
    for name, w in _A_ORDER:
        off, _ = LAY_A[name]
        wA = wA.at[:, off:off + w].set(raw[name])
    wF = jnp.zeros((FF_SIZE, F_COLS), jnp.float32)
    for name, w in _F_ORDER:
        off, _ = LAY_F[name]
        wF = wF.at[:, off:off + w].set(raw[name])
    vec = jnp.zeros((V_ROWS, V_COLS), jnp.float32)
    for name, w in _V_ORDER:
        r, _ = LAY_V[name]
        vec = vec.at[r, :w].set(raw[name].reshape(-1))
    return {"wA": wA, "wF": wF, "vec": vec}


# ----------------------------------- main ---------------------------------------

if __name__ == "__main__":
    key = jax.random.PRNGKey(0)
    kp, kx, ky = jax.random.split(key, 3)

    B = 2
    params = make_params(kp)
    x = jax.random.normal(kx, (B, LANG_SEQ, HIDDEN), jnp.float32)
    y = jax.random.normal(ky, (B, AUDIO_SEQ, HIDDEN), jnp.float32)

    # valid lengths per batch element; True == padded position
    lang_lens = jnp.array([LANG_SEQ, 5], jnp.int32)
    audio_lens = jnp.array([AUDIO_SEQ, 9], jnp.int32)
    x_mask = jnp.arange(LANG_SEQ)[None, :] >= lang_lens[:, None]     # (B, Sx)
    y_mask = jnp.arange(AUDIO_SEQ)[None, :] >= audio_lens[:, None]   # (B, Sy)

    out_x, out_y = la_block_forward(x, x_mask, y, y_mask, params, last=False)
    last_x, last_y = la_block_forward(x, x_mask, y, y_mask, params, last=True)
    jax.block_until_ready((out_x, out_y, last_x, last_y))

    assert out_x.shape == (B, LANG_SEQ, HIDDEN)
    assert out_y.shape == (B, AUDIO_SEQ, HIDDEN)
    assert last_x.shape == (B, LANG_SEQ, HIDDEN)
    assert last_y.shape == (B, AUDIO_SEQ, HIDDEN)
    assert bool(jnp.all(jnp.isfinite(out_x))) and bool(jnp.all(jnp.isfinite(out_y)))
    assert bool(jnp.all(jnp.isfinite(last_x))) and bool(jnp.all(jnp.isfinite(last_y)))
    print("KERNEL_OK")
</pallas_src>

<mosaic_0001>
module attributes {stable_mosaic.version = 11 : i64} {
  func.func @la_block_kernel(%arg0: i32, %arg1: memref<16x32xf32, #tpu.memory_space<vmem>>, %arg2: memref<24x32xf32, #tpu.memory_space<vmem>>, %arg3: memref<2x1x8xf32, #tpu.memory_space<vmem>>, %arg4: memref<2x1x12xf32, #tpu.memory_space<vmem>>, %arg5: memref<2x8x1xf32, #tpu.memory_space<vmem>>, %arg6: memref<2x12x1xf32, #tpu.memory_space<vmem>>, %arg7: memref<32x1280xf32, #tpu.memory_space<vmem>>, %arg8: memref<128x512xf32, #tpu.memory_space<vmem>>, %arg9: memref<28x128xf32, #tpu.memory_space<vmem>>, %arg10: memref<16x32xf32, #tpu.memory_space<vmem>>, %arg11: memref<24x32xf32, #tpu.memory_space<vmem>>) attributes {dimension_semantics = [#tpu.dimension_semantics<parallel>], iteration_bounds = array<i64: 1>, scalar_prefetch = 0 : i64, scratch_operands = 0 : i64, tpu.core_type = #tpu.core_type<tc>, window_params = [{transform_indices = @transform_0, window_bounds = array<i64: 16, 32>}, {transform_indices = @transform_1, window_bounds = array<i64: 24, 32>}, {transform_indices = @transform_2, window_bounds = array<i64: 2, 1, 8>}, {transform_indices = @transform_3, window_bounds = array<i64: 2, 1, 12>}, {transform_indices = @transform_4, window_bounds = array<i64: 2, 8, 1>}, {transform_indices = @transform_5, window_bounds = array<i64: 2, 12, 1>}, {pipeline_mode = #tpu.pipeline_mode<synchronous>, transform_indices = @transform_6, window_bounds = array<i64: 32, 1280>}, {pipeline_mode = #tpu.pipeline_mode<synchronous>, transform_indices = @transform_7, window_bounds = array<i64: 128, 512>}, {pipeline_mode = #tpu.pipeline_mode<synchronous>, transform_indices = @transform_8, window_bounds = array<i64: 28, 128>}, {transform_indices = @transform_9, window_bounds = array<i64: 16, 32>}, {transform_indices = @transform_10, window_bounds = array<i64: 24, 32>}]} {
    %c0 = arith.constant 0 : index
    %c0_0 = arith.constant 0 : index
    %0 = vector.load %arg1[%c0, %c0_0] : memref<16x32xf32, #tpu.memory_space<vmem>>, vector<16x32xf32>
    %c0_1 = arith.constant 0 : index
    %c0_2 = arith.constant 0 : index
    %1 = vector.load %arg2[%c0_1, %c0_2] : memref<24x32xf32, #tpu.memory_space<vmem>>, vector<24x32xf32>
    %c0_3 = arith.constant 0 : index
    %c0_4 = arith.constant 0 : index
    %c0_5 = arith.constant 0 : index
    %2 = vector.load %arg3[%c0_3, %c0_4, %c0_5] : memref<2x1x8xf32, #tpu.memory_space<vmem>>, vector<2x1x8xf32>
    %cst = arith.constant 5.000000e-01 : f32
    %3 = vector.broadcast %cst : f32 to vector<2x1x8xf32>
    %4 = arith.cmpf ogt, %2, %3 : vector<2x1x8xf32>
    %c0_6 = arith.constant 0 : index
    %c0_7 = arith.constant 0 : index
    %c0_8 = arith.constant 0 : index
    %5 = vector.load %arg4[%c0_6, %c0_7, %c0_8] : memref<2x1x12xf32, #tpu.memory_space<vmem>>, vector<2x1x12xf32>
    %cst_9 = arith.constant 5.000000e-01 : f32
    %6 = vector.broadcast %cst_9 : f32 to vector<2x1x12xf32>
    %7 = arith.cmpf ogt, %5, %6 : vector<2x1x12xf32>
    %c0_10 = arith.constant 0 : index
    %c0_11 = arith.constant 0 : index
    %8 = vector.load %arg7[%c0_10, %c0_11] : memref<32x1280xf32, #tpu.memory_space<vmem>>, vector<32x96xf32>
    %c0_12 = arith.constant 0 : index
    %c0_13 = arith.constant 0 : index
    %9 = vector.load %arg9[%c0_12, %c0_13] : memref<28x128xf32, #tpu.memory_space<vmem>>, vector<1x96xf32>
    %c0_14 = arith.constant 0 : index
    %c128 = arith.constant 128 : index
    %10 = vector.load %arg7[%c0_14, %c128] : memref<32x1280xf32, #tpu.memory_space<vmem>>, vector<32x32xf32>
    %c1 = arith.constant 1 : index
    %c0_15 = arith.constant 0 : index
    %11 = vector.load %arg9[%c1, %c0_15] : memref<28x128xf32, #tpu.memory_space<vmem>>, vector<1x32xf32>
    %c2 = arith.constant 2 : index
    %c0_16 = arith.constant 0 : index
    %12 = vector.load %arg9[%c2, %c0_16] : memref<28x128xf32, #tpu.memory_space<vmem>>, vector<1x32xf32>
    %c3 = arith.constant 3 : index
    %c0_17 = arith.constant 0 : index
    %13 = vector.load %arg9[%c3, %c0_17] : memref<28x128xf32, #tpu.memory_space<vmem>>, vector<1x32xf32>
    %cst_18 = arith.constant dense<0.000000e+00> : vector<16x96xf32>
    %14 = tpu.matmul %0, %8, %cst_18 {dimension_numbers = #tpu.dot_dimension_numbers<[1], [0], [0], [1], [0, 0, 1, 1], [], []>} : vector<16x32xf32>, vector<32x96xf32>, vector<16x96xf32> -> vector<16x96xf32>
    %15 = vector.broadcast %9 : vector<1x96xf32> to vector<16x96xf32>
    %16 = arith.addf %14, %15 : vector<16x96xf32>
    %17 = vector.extract_strided_slice %16 {offsets = [0, 0], sizes = [16, 32], strides = [1, 1]} : vector<16x96xf32> to vector<16x32xf32>
    %18 = vector.extract_strided_slice %16 {offsets = [0, 32], sizes = [16, 32], strides = [1, 1]} : vector<16x96xf32> to vector<16x32xf32>
    %19 = vector.extract_strided_slice %16 {offsets = [0, 64], sizes = [16, 32], strides = [1, 1]} : vector<16x96xf32> to vector<16x32xf32>
    %20 = vector.shape_cast %17 : vector<16x32xf32> to vector<2x8x32xf32>
    %21 = vector.shape_cast %18 : vector<16x32xf32> to vector<2x8x32xf32>
    %22 = vector.shape_cast %19 : vector<16x32xf32> to vector<2x8x32xf32>
    %23 = vector.extract_strided_slice %20 {offsets = [0, 0, 0], sizes = [2, 8, 8], strides = [1, 1, 1]} : vector<2x8x32xf32> to vector<2x8x8xf32>
    %24 = vector.extract_strided_slice %21 {offsets = [0, 0, 0], sizes = [2, 8, 8], strides = [1, 1, 1]} : vector<2x8x32xf32> to vector<2x8x8xf32>
    "tpu.trace_start"() <{level = 10 : i32, message = "bqd,bkd->bqk"}> : () -> ()
    %cst_19 = arith.constant dense<0.000000e+00> : vector<2x8x8xf32>
    %25 = tpu.matmul %23, %24, %cst_19 {dimension_numbers = #tpu.dot_dimension_numbers<[2], [2], [1], [1], [0, 0, 0, 1, 1, 1], [0], [0]>} : vector<2x8x8xf32>, vector<2x8x8xf32>, vector<2x8x8xf32> -> vector<2x8x8xf32>
    "tpu.trace_stop"() : () -> ()
    %cst_20 = arith.constant 0.353553385 : f32
    %26 = vector.broadcast %cst_20 : f32 to vector<2x8x8xf32>
    %27 = arith.mulf %25, %26 : vector<2x8x8xf32>
    %cst_21 = arith.constant -1.000000e+09 : f32
    %28 = vector.shape_cast %4 : vector<2x1x8xi1> to vector<2x1x8xi1>
    %29 = vector.broadcast %28 : vector<2x1x8xi1> to vector<2x8x8xi1>
    %30 = vector.broadcast %cst_21 : f32 to vector<2x8x8xf32>
    %31 = arith.select %29, %30, %27 : vector<2x8x8xi1>, vector<2x8x8xf32>
    %cst_22 = arith.constant dense<0xFF800000> : vector<2x8xf32>
    %32 = vector.multi_reduction <maximumf>, %31, %cst_22 [2] : vector<2x8x8xf32> to vector<2x8xf32>
    %33 = vector.shape_cast %32 : vector<2x8xf32> to vector<2x8x1xf32>
    %34 = vector.broadcast %33 : vector<2x8x1xf32> to vector<2x8x8xf32>
    %35 = arith.subf %31, %34 : vector<2x8x8xf32>
    %36 = math.exp %35 : vector<2x8x8xf32>
    %cst_23 = arith.constant dense<0.000000e+00> : vector<2x8xf32>
    %37 = vector.multi_reduction <add>, %36, %cst_23 [2] : vector<2x8x8xf32> to vector<2x8xf32>
    %38 = vector.shape_cast %37 : vector<2x8xf32> to vector<2x8x1xf32>
    %39 = vector.broadcast %38 : vector<2x8x1xf32> to vector<2x8x8xf32>
    %40 = arith.divf %36, %39 : vector<2x8x8xf32>
    %41 = vector.extract_strided_slice %22 {offsets = [0, 0, 0], sizes = [2, 8, 8], strides = [1, 1, 1]} : vector<2x8x32xf32> to vector<2x8x8xf32>
    "tpu.trace_start"() <{level = 10 : i32, message = "bqk,bkd->bqd"}> : () -> ()
    %cst_24 = arith.constant dense<0.000000e+00> : vector<2x8x8xf32>
    %42 = tpu.matmul %40, %41, %cst_24 {dimension_numbers = #tpu.dot_dimension_numbers<[2], [1], [1], [2], [0, 0, 0, 1, 1, 2], [0], [0]>} : vector<2x8x8xf32>, vector<2x8x8xf32>, vector<2x8x8xf32> -> vector<2x8x8xf32>
    "tpu.trace_stop"() : () -> ()
    %43 = vector.extract_strided_slice %20 {offsets = [0, 0, 8], sizes = [2, 8, 8], strides = [1, 1, 1]} : vector<2x8x32xf32> to vector<2x8x8xf32>
    %44 = vector.extract_strided_slice %21 {offsets = [0, 0, 8], sizes = [2, 8, 8], strides = [1, 1, 1]} : vector<2x8x32xf32> to vector<2x8x8xf32>
    "tpu.trace_start"() <{level = 10 : i32, message = "bqd,bkd->bqk"}> : () -> ()
    %cst_25 = arith.constant dense<0.000000e+00> : vector<2x8x8xf32>
    %45 = tpu.matmul %43, %44, %cst_25 {dimension_numbers = #tpu.dot_dimension_numbers<[2], [2], [1], [1], [0, 0, 0, 1, 1, 1], [0], [0]>} : vector<2x8x8xf32>, vector<2x8x8xf32>, vector<2x8x8xf32> -> vector<2x8x8xf32>
    "tpu.trace_stop"() : () -> ()
    %cst_26 = arith.constant 0.353553385 : f32
    %46 = vector.broadcast %cst_26 : f32 to vector<2x8x8xf32>
    %47 = arith.mulf %45, %46 : vector<2x8x8xf32>
    %cst_27 = arith.constant -1.000000e+09 : f32
    %48 = vector.shape_cast %4 : vector<2x1x8xi1> to vector<2x1x8xi1>
    %49 = vector.broadcast %48 : vector<2x1x8xi1> to vector<2x8x8xi1>
    %50 = vector.broadcast %cst_27 : f32 to vector<2x8x8xf32>
    %51 = arith.select %49, %50, %47 : vector<2x8x8xi1>, vector<2x8x8xf32>
    %cst_28 = arith.constant dense<0xFF800000> : vector<2x8xf32>
    %52 = vector.multi_reduction <maximumf>, %51, %cst_28 [2] : vector<2x8x8xf32> to vector<2x8xf32>
    %53 = vector.shape_cast %52 : vector<2x8xf32> to vector<2x8x1xf32>
    %54 = vector.broadcast %53 : vector<2x8x1xf32> to vector<2x8x8xf32>
    %55 = arith.subf %51, %54 : vector<2x8x8xf32>
    %56 = math.exp %55 : vector<2x8x8xf32>
    %cst_29 = arith.constant dense<0.000000e+00> : vector<2x8xf32>
    %57 = vector.multi_reduction <add>, %56, %cst_29 [2] : vector<2x8x8xf32> to vector<2x8xf32>
    %58 = vector.shape_cast %57 : vector<2x8xf32> to vector<2x8x1xf32>
    %59 = vector.broadcast %58 : vector<2x8x1xf32> to vector<2x8x8xf32>
    %60 = arith.divf %56, %59 : vector<2x8x8xf32>
    %61 = vector.extract_strided_slice %22 {offsets = [0, 0, 8], sizes = [2, 8, 8], strides = [1, 1, 1]} : vector<2x8x32xf32> to vector<2x8x8xf32>
    "tpu.trace_start"() <{level = 10 : i32, message = "bqk,bkd->bqd"}> : () -> ()
    %cst_30 = arith.constant dense<0.000000e+00> : vector<2x8x8xf32>
    %62 = tpu.matmul %60, %61, %cst_30 {dimension_numbers = #tpu.dot_dimension_numbers<[2], [1], [1], [2], [0, 0, 0, 1, 1, 2], [0], [0]>} : vector<2x8x8xf32>, vector<2x8x8xf32>, vector<2x8x8xf32> -> vector<2x8x8xf32>
    "tpu.trace_stop"() : () -> ()
    %63 = vector.extract_strided_slice %20 {offsets = [0, 0, 16], sizes = [2, 8, 8], strides = [1, 1, 1]} : vector<2x8x32xf32> to vector<2x8x8xf32>
    %64 = vector.extract_strided_slice %21 {offsets = [0, 0, 16], sizes = [2, 8, 8], strides = [1, 1, 1]} : vector<2x8x32xf32> to vector<2x8x8xf32>
    "tpu.trace_start"() <{level = 10 : i32, message = "bqd,bkd->bqk"}> : () -> ()
    %cst_31 = arith.constant dense<0.000000e+00> : vector<2x8x8xf32>
    %65 = tpu.matmul %63, %64, %cst_31 {dimension_numbers = #tpu.dot_dimension_numbers<[2], [2], [1], [1], [0, 0, 0, 1, 1, 1], [0], [0]>} : vector<2x8x8xf32>, vector<2x8x8xf32>, vector<2x8x8xf32> -> vector<2x8x8xf32>
    "tpu.trace_stop"() : () -> ()
    %cst_32 = arith.constant 0.353553385 : f32
    %66 = vector.broadcast %cst_32 : f32 to vector<2x8x8xf32>
    %67 = arith.mulf %65, %66 : vector<2x8x8xf32>
    %cst_33 = arith.constant -1.000000e+09 : f32
    %68 = vector.shape_cast %4 : vector<2x1x8xi1> to vector<2x1x8xi1>
    %69 = vector.broadcast %68 : vector<2x1x8xi1> to vector<2x8x8xi1>
    %70 = vector.broadcast %cst_33 : f32 to vector<2x8x8xf32>
    %71 = arith.select %69, %70, %67 : vector<2x8x8xi1>, vector<2x8x8xf32>
    %cst_34 = arith.constant dense<0xFF800000> : vector<2x8xf32>
    %72 = vector.multi_reduction <maximumf>, %71, %cst_34 [2] : vector<2x8x8xf32> to vector<2x8xf32>
    %73 = vector.shape_cast %72 : vector<2x8xf32> to vector<2x8x1xf32>
    %74 = vector.broadcast %73 : vector<2x8x1xf32> to vector<2x8x8xf32>
    %75 = arith.subf %71, %74 : vector<2x8x8xf32>
    %76 = math.exp %75 : vector<2x8x8xf32>
    %cst_35 = arith.constant dense<0.000000e+00> : vector<2x8xf32>
    %77 = vector.multi_reduction <add>, %76, %cst_35 [2] : vector<2x8x8xf32> to vector<2x8xf32>
    %78 = vector.shape_cast %77 : vector<2x8xf32> to vector<2x8x1xf32>
    %79 = vector.broadcast %78 : vector<2x8x1xf32> to vector<2x8x8xf32>
    %80 = arith.divf %76, %79 : vector<2x8x8xf32>
    %81 = vector.extract_strided_slice %22 {offsets = [0, 0, 16], sizes = [2, 8, 8], strides = [1, 1, 1]} : vector<2x8x32xf32> to vector<2x8x8xf32>
    "tpu.trace_start"() <{level = 10 : i32, message = "bqk,bkd->bqd"}> : () -> ()
    %cst_36 = arith.constant dense<0.000000e+00> : vector<2x8x8xf32>
    %82 = tpu.matmul %80, %81, %cst_36 {dimension_numbers = #tpu.dot_dimension_numbers<[2], [1], [1], [2], [0, 0, 0, 1, 1, 2], [0], [0]>} : vector<2x8x8xf32>, vector<2x8x8xf32>, vector<2x8x8xf32> -> vector<2x8x8xf32>
    "tpu.trace_stop"() : () -> ()
    %83 = vector.extract_strided_slice %20 {offsets = [0, 0, 24], sizes = [2, 8, 8], strides = [1, 1, 1]} : vector<2x8x32xf32> to vector<2x8x8xf32>
    %84 = vector.extract_strided_slice %21 {offsets = [0, 0, 24], sizes = [2, 8, 8], strides = [1, 1, 1]} : vector<2x8x32xf32> to vector<2x8x8xf32>
    "tpu.trace_start"() <{level = 10 : i32, message = "bqd,bkd->bqk"}> : () -> ()
    %cst_37 = arith.constant dense<0.000000e+00> : vector<2x8x8xf32>
    %85 = tpu.matmul %83, %84, %cst_37 {dimension_numbers = #tpu.dot_dimension_numbers<[2], [2], [1], [1], [0, 0, 0, 1, 1, 1], [0], [0]>} : vector<2x8x8xf32>, vector<2x8x8xf32>, vector<2x8x8xf32> -> vector<2x8x8xf32>
    "tpu.trace_stop"() : () -> ()
    %cst_38 = arith.constant 0.353553385 : f32
    %86 = vector.broadcast %cst_38 : f32 to vector<2x8x8xf32>
    %87 = arith.mulf %85, %86 : vector<2x8x8xf32>
    %cst_39 = arith.constant -1.000000e+09 : f32
    %88 = vector.shape_cast %4 : vector<2x1x8xi1> to vector<2x1x8xi1>
    %89 = vector.broadcast %88 : vector<2x1x8xi1> to vector<2x8x8xi1>
    %90 = vector.broadcast %cst_39 : f32 to vector<2x8x8xf32>
    %91 = arith.select %89, %90, %87 : vector<2x8x8xi1>, vector<2x8x8xf32>
    %cst_40 = arith.constant dense<0xFF800000> : vector<2x8xf32>
    %92 = vector.multi_reduction <maximumf>, %91, %cst_40 [2] : vector<2x8x8xf32> to vector<2x8xf32>
    %93 = vector.shape_cast %92 : vector<2x8xf32> to vector<2x8x1xf32>
    %94 = vector.broadcast %93 : vector<2x8x1xf32> to vector<2x8x8xf32>
    %95 = arith.subf %91, %94 : vector<2x8x8xf32>
    %96 = math.exp %95 : vector<2x8x8xf32>
    %cst_41 = arith.constant dense<0.000000e+00> : vector<2x8xf32>
    %97 = vector.multi_reduction <add>, %96, %cst_41 [2] : vector<2x8x8xf32> to vector<2x8xf32>
    %98 = vector.shape_cast %97 : vector<2x8xf32> to vector<2x8x1xf32>
    %99 = vector.broadcast %98 : vector<2x8x1xf32> to vector<2x8x8xf32>
    %100 = arith.divf %96, %99 : vector<2x8x8xf32>
    %101 = vector.extract_strided_slice %22 {offsets = [0, 0, 24], sizes = [2, 8, 8], strides = [1, 1, 1]} : vector<2x8x32xf32> to vector<2x8x8xf32>
    "tpu.trace_start"() <{level = 10 : i32, message = "bqk,bkd->bqd"}> : () -> ()
    %cst_42 = arith.constant dense<0.000000e+00> : vector<2x8x8xf32>
    %102 = tpu.matmul %100, %101, %cst_42 {dimension_numbers = #tpu.dot_dimension_numbers<[2], [1], [1], [2], [0, 0, 0, 1, 1, 2], [0], [0]>} : vector<2x8x8xf32>, vector<2x8x8xf32>, vector<2x8x8xf32> -> vector<2x8x8xf32>
    "tpu.trace_stop"() : () -> ()
    %103 = tpu.concatenate %42, %62, %82, %102 in 2 : vector<2x8x8xf32>, vector<2x8x8xf32>, vector<2x8x8xf32>, vector<2x8x8xf32> -> vector<2x8x32xf32>
    %104 = vector.shape_cast %103 : vector<2x8x32xf32> to vector<16x32xf32>
    %cst_43 = arith.constant dense<0.000000e+00> : vector<16x32xf32>
    %105 = tpu.matmul %104, %10, %cst_43 {dimension_numbers = #tpu.dot_dimension_numbers<[1], [0], [0], [1], [0, 0, 1, 1], [], []>} : vector<16x32xf32>, vector<32x32xf32>, vector<16x32xf32> -> vector<16x32xf32>
    %106 = vector.broadcast %11 : vector<1x32xf32> to vector<16x32xf32>
    %107 = arith.addf %105, %106 : vector<16x32xf32>
    %108 = arith.addf %0, %107 : vector<16x32xf32>
    %cst_44 = arith.constant dense<0.000000e+00> : vector<16xf32>
    %109 = vector.multi_reduction <add>, %108, %cst_44 [1] : vector<16x32xf32> to vector<16xf32>
    %110 = vector.shape_cast %109 : vector<16xf32> to vector<16x1xf32>
    %cst_45 = arith.constant 3.200000e+01 : f32
    %111 = vector.broadcast %cst_45 : f32 to vector<16x1xf32>
    %112 = arith.divf %110, %111 : vector<16x1xf32>
    %113 = vector.broadcast %112 : vector<16x1xf32> to vector<16x32xf32>
    %114 = arith.subf %108, %113 : vector<16x32xf32>
    %115 = arith.mulf %114, %114 : vector<16x32xf32>
    %cst_46 = arith.constant dense<0.000000e+00> : vector<16xf32>
    %116 = vector.multi_reduction <add>, %115, %cst_46 [1] : vector<16x32xf32> to vector<16xf32>
    %117 = vector.shape_cast %116 : vector<16xf32> to vector<16x1xf32>
    %cst_47 = arith.constant 0.0322580636 : f32
    %118 = vector.broadcast %cst_47 : f32 to vector<16x1xf32>
    %119 = arith.mulf %117, %118 : vector<16x1xf32>
    %120 = math.sqrt %119 : vector<16x1xf32>
    %cst_48 = arith.constant 9.99999997E-7 : f32
    %121 = vector.broadcast %cst_48 : f32 to vector<16x1xf32>
    %122 = arith.addf %120, %121 : vector<16x1xf32>
    %cst_49 = arith.constant 1.000000e+00 : f32
    %123 = vector.broadcast %cst_49 : f32 to vector<16x1xf32>
    %124 = arith.divf %123, %122 : vector<16x1xf32>
    %125 = vector.broadcast %112 : vector<16x1xf32> to vector<16x32xf32>
    %126 = arith.subf %108, %125 : vector<16x32xf32>
    %127 = vector.broadcast %12 : vector<1x32xf32> to vector<16x32xf32>
    %128 = arith.mulf %127, %126 : vector<16x32xf32>
    %129 = vector.broadcast %124 : vector<16x1xf32> to vector<16x32xf32>
    %130 = arith.mulf %128, %129 : vector<16x32xf32>
    %131 = vector.broadcast %13 : vector<1x32xf32> to vector<16x32xf32>
    %132 = arith.addf %130, %131 : vector<16x32xf32>
    %c0_50 = arith.constant 0 : index
    %c256 = arith.constant 256 : index
    %133 = vector.load %arg7[%c0_50, %c256] : memref<32x1280xf32, #tpu.memory_space<vmem>>, vector<32x128xf32>
    %c4 = arith.constant 4 : index
    %c0_51 = arith.constant 0 : index
    %134 = vector.load %arg9[%c4, %c0_51] : memref<28x128xf32, #tpu.memory_space<vmem>>, vector<1x128xf32>
    %c0_52 = arith.constant 0 : index
    %c0_53 = arith.constant 0 : index
    %135 = vector.load %arg8[%c0_52, %c0_53] : memref<128x512xf32, #tpu.memory_space<vmem>>, vector<128x32xf32>
    %c5 = arith.constant 5 : index
    %c0_54 = arith.constant 0 : index
    %136 = vector.load %arg9[%c5, %c0_54] : memref<28x128xf32, #tpu.memory_space<vmem>>, vector<1x32xf32>
    %c6 = arith.constant 6 : index
    %c0_55 = arith.constant 0 : index
    %137 = vector.load %arg9[%c6, %c0_55] : memref<28x128xf32, #tpu.memory_space<vmem>>, vector<1x32xf32>
    %c7 = arith.constant 7 : index
    %c0_56 = arith.constant 0 : index
    %138 = vector.load %arg9[%c7, %c0_56] : memref<28x128xf32, #tpu.memory_space<vmem>>, vector<1x32xf32>
    %cst_57 = arith.constant dense<0.000000e+00> : vector<16x128xf32>
    %139 = tpu.matmul %132, %133, %cst_57 {dimension_numbers = #tpu.dot_dimension_numbers<[1], [0], [0], [1], [0, 0, 1, 1], [], []>} : vector<16x32xf32>, vector<32x128xf32>, vector<16x128xf32> -> vector<16x128xf32>
    %140 = vector.broadcast %134 : vector<1x128xf32> to vector<16x128xf32>
    %141 = arith.addf %139, %140 : vector<16x128xf32>
    %cst_58 = arith.constant 0.000000e+00 : f32
    %142 = vector.broadcast %cst_58 : f32 to vector<16x128xf32>
    %143 = arith.maximumf %141, %142 : vector<16x128xf32>
    %cst_59 = arith.constant dense<0.000000e+00> : vector<16x32xf32>
    %144 = tpu.matmul %143, %135, %cst_59 {dimension_numbers = #tpu.dot_dimension_numbers<[1], [0], [0], [1], [0, 0, 1, 1], [], []>} : vector<16x128xf32>, vector<128x32xf32>, vector<16x32xf32> -> vector<16x32xf32>
    %145 = vector.broadcast %136 : vector<1x32xf32> to vector<16x32xf32>
    %146 = arith.addf %144, %145 : vector<16x32xf32>
    %147 = arith.addf %132, %146 : vector<16x32xf32>
    %cst_60 = arith.constant dense<0.000000e+00> : vector<16xf32>
    %148 = vector.multi_reduction <add>, %147, %cst_60 [1] : vector<16x32xf32> to vector<16xf32>
    %149 = vector.shape_cast %148 : vector<16xf32> to vector<16x1xf32>
    %cst_61 = arith.constant 3.200000e+01 : f32
    %150 = vector.broadcast %cst_61 : f32 to vector<16x1xf32>
    %151 = arith.divf %149, %150 : vector<16x1xf32>
    %152 = vector.broadcast %151 : vector<16x1xf32> to vector<16x32xf32>
    %153 = arith.subf %147, %152 : vector<16x32xf32>
    %154 = arith.mulf %153, %153 : vector<16x32xf32>
    %cst_62 = arith.constant dense<0.000000e+00> : vector<16xf32>
    %155 = vector.multi_reduction <add>, %154, %cst_62 [1] : vector<16x32xf32> to vector<16xf32>
    %156 = vector.shape_cast %155 : vector<16xf32> to vector<16x1xf32>
    %cst_63 = arith.constant 0.0322580636 : f32
    %157 = vector.broadcast %cst_63 : f32 to vector<16x1xf32>
    %158 = arith.mulf %156, %157 : vector<16x1xf32>
    %159 = math.sqrt %158 : vector<16x1xf32>
    %cst_64 = arith.constant 9.99999997E-7 : f32
    %160 = vector.broadcast %cst_64 : f32 to vector<16x1xf32>
    %161 = arith.addf %159, %160 : vector<16x1xf32>
    %cst_65 = arith.constant 1.000000e+00 : f32
    %162 = vector.broadcast %cst_65 : f32 to vector<16x1xf32>
    %163 = arith.divf %162, %161 : vector<16x1xf32>
    %164 = vector.broadcast %151 : vector<16x1xf32> to vector<16x32xf32>
    %165 = arith.subf %147, %164 : vector<16x32xf32>
    %166 = vector.broadcast %137 : vector<1x32xf32> to vector<16x32xf32>
    %167 = arith.mulf %166, %165 : vector<16x32xf32>
    %168 = vector.broadcast %163 : vector<16x1xf32> to vector<16x32xf32>
    %169 = arith.mulf %167, %168 : vector<16x32xf32>
    %170 = vector.broadcast %138 : vector<1x32xf32> to vector<16x32xf32>
    %171 = arith.addf %169, %170 : vector<16x32xf32>
    %c0_66 = arith.constant 0 : index
    %c384 = arith.constant 384 : index
    %172 = vector.load %arg7[%c0_66, %c384] : memref<32x1280xf32, #tpu.memory_space<vmem>>, vector<32x96xf32>
    %c8 = arith.constant 8 : index
    %c0_67 = arith.constant 0 : index
    %173 = vector.load %arg9[%c8, %c0_67] : memref<28x128xf32, #tpu.memory_space<vmem>>, vector<1x96xf32>
    %c0_68 = arith.constant 0 : index
    %c512 = arith.constant 512 : index
    %174 = vector.load %arg7[%c0_68, %c512] : memref<32x1280xf32, #tpu.memory_space<vmem>>, vector<32x32xf32>
    %c9 = arith.constant 9 : index
    %c0_69 = arith.constant 0 : index
    %175 = vector.load %arg9[%c9, %c0_69] : memref<28x128xf32, #tpu.memory_space<vmem>>, vector<1x32xf32>
    %c10 = arith.constant 10 : index
    %c0_70 = arith.constant 0 : index
    %176 = vector.load %arg9[%c10, %c0_70] : memref<28x128xf32, #tpu.memory_space<vmem>>, vector<1x32xf32>
    %c11 = arith.constant 11 : index
    %c0_71 = arith.constant 0 : index
    %177 = vector.load %arg9[%c11, %c0_71] : memref<28x128xf32, #tpu.memory_space<vmem>>, vector<1x32xf32>
    %cst_72 = arith.constant dense<0.000000e+00> : vector<24x96xf32>
    %178 = tpu.matmul %1, %172, %cst_72 {dimension_numbers = #tpu.dot_dimension_numbers<[1], [0], [0], [1], [0, 0, 1, 1], [], []>} : vector<24x32xf32>, vector<32x96xf32>, vector<24x96xf32> -> vector<24x96xf32>
    %179 = vector.broadcast %173 : vector<1x96xf32> to vector<24x96xf32>
    %180 = arith.addf %178, %179 : vector<24x96xf32>
    %181 = vector.extract_strided_slice %180 {offsets = [0, 0], sizes = [24, 32], strides = [1, 1]} : vector<24x96xf32> to vector<24x32xf32>
    %182 = vector.extract_strided_slice %180 {offsets = [0, 32], sizes = [24, 32], strides = [1, 1]} : vector<24x96xf32> to vector<24x32xf32>
    %183 = vector.extract_strided_slice %180 {offsets = [0, 64], sizes = [24, 32], strides = [1, 1]} : vector<24x96xf32> to vector<24x32xf32>
    %184 = vector.shape_cast %181 : vector<24x32xf32> to vector<2x12x32xf32>
    %185 = vector.shape_cast %182 : vector<24x32xf32> to vector<2x12x32xf32>
    %186 = vector.shape_cast %183 : vector<24x32xf32> to vector<2x12x32xf32>
    %187 = vector.extract_strided_slice %184 {offsets = [0, 0, 0], sizes = [2, 12, 8], strides = [1, 1, 1]} : vector<2x12x32xf32> to vector<2x12x8xf32>
    %188 = vector.extract_strided_slice %185 {offsets = [0, 0, 0], sizes = [2, 12, 8], strides = [1, 1, 1]} : vector<2x12x32xf32> to vector<2x12x8xf32>
    "tpu.trace_start"() <{level = 10 : i32, message = "bqd,bkd->bqk"}> : () -> ()
    %cst_73 = arith.constant dense<0.000000e+00> : vector<2x12x12xf32>
    %189 = tpu.matmul %187, %188, %cst_73 {dimension_numbers = #tpu.dot_dimension_numbers<[2], [2], [1], [1], [0, 0, 0, 1, 1, 1], [0], [0]>} : vector<2x12x8xf32>, vector<2x12x8xf32>, vector<2x12x12xf32> -> vector<2x12x12xf32>
    "tpu.trace_stop"() : () -> ()
    %cst_74 = arith.constant 0.353553385 : f32
    %190 = vector.broadcast %cst_74 : f32 to vector<2x12x12xf32>
    %191 = arith.mulf %189, %190 : vector<2x12x12xf32>
    %cst_75 = arith.constant -1.000000e+09 : f32
    %192 = vector.shape_cast %7 : vector<2x1x12xi1> to vector<2x1x12xi1>
    %193 = vector.broadcast %192 : vector<2x1x12xi1> to vector<2x12x12xi1>
    %194 = vector.broadcast %cst_75 : f32 to vector<2x12x12xf32>
    %195 = arith.select %193, %194, %191 : vector<2x12x12xi1>, vector<2x12x12xf32>
    %cst_76 = arith.constant dense<0xFF800000> : vector<2x12xf32>
    %196 = vector.multi_reduction <maximumf>, %195, %cst_76 [2] : vector<2x12x12xf32> to vector<2x12xf32>
    %197 = vector.shape_cast %196 : vector<2x12xf32> to vector<2x12x1xf32>
    %198 = vector.broadcast %197 : vector<2x12x1xf32> to vector<2x12x12xf32>
    %199 = arith.subf %195, %198 : vector<2x12x12xf32>
    %200 = math.exp %199 : vector<2x12x12xf32>
    %cst_77 = arith.constant dense<0.000000e+00> : vector<2x12xf32>
    %201 = vector.multi_reduction <add>, %200, %cst_77 [2] : vector<2x12x12xf32> to vector<2x12xf32>
    %202 = vector.shape_cast %201 : vector<2x12xf32> to vector<2x12x1xf32>
    %203 = vector.broadcast %202 : vector<2x12x1xf32> to vector<2x12x12xf32>
    %204 = arith.divf %200, %203 : vector<2x12x12xf32>
    %205 = vector.extract_strided_slice %186 {offsets = [0, 0, 0], sizes = [2, 12, 8], strides = [1, 1, 1]} : vector<2x12x32xf32> to vector<2x12x8xf32>
    "tpu.trace_start"() <{level = 10 : i32, message = "bqk,bkd->bqd"}> : () -> ()
    %cst_78 = arith.constant dense<0.000000e+00> : vector<2x12x8xf32>
    %206 = tpu.matmul %204, %205, %cst_78 {dimension_numbers = #tpu.dot_dimension_numbers<[2], [1], [1], [2], [0, 0, 0, 1, 1, 2], [0], [0]>} : vector<2x12x12xf32>, vector<2x12x8xf32>, vector<2x12x8xf32> -> vector<2x12x8xf32>
    "tpu.trace_stop"() : () -> ()
    %207 = vector.extract_strided_slice %184 {offsets = [0, 0, 8], sizes = [2, 12, 8], strides = [1, 1, 1]} : vector<2x12x32xf32> to vector<2x12x8xf32>
    %208 = vector.extract_strided_slice %185 {offsets = [0, 0, 8], sizes = [2, 12, 8], strides = [1, 1, 1]} : vector<2x12x32xf32> to vector<2x12x8xf32>
    "tpu.trace_start"() <{level = 10 : i32, message = "bqd,bkd->bqk"}> : () -> ()
    %cst_79 = arith.constant dense<0.000000e+00> : vector<2x12x12xf32>
    %209 = tpu.matmul %207, %208, %cst_79 {dimension_numbers = #tpu.dot_dimension_numbers<[2], [2], [1], [1], [0, 0, 0, 1, 1, 1], [0], [0]>} : vector<2x12x8xf32>, vector<2x12x8xf32>, vector<2x12x12xf32> -> vector<2x12x12xf32>
    "tpu.trace_stop"() : () -> ()
    %cst_80 = arith.constant 0.353553385 : f32
    %210 = vector.broadcast %cst_80 : f32 to vector<2x12x12xf32>
    %211 = arith.mulf %209, %210 : vector<2x12x12xf32>
    %cst_81 = arith.constant -1.000000e+09 : f32
    %212 = vector.shape_cast %7 : vector<2x1x12xi1> to vector<2x1x12xi1>
    %213 = vector.broadcast %212 : vector<2x1x12xi1> to vector<2x12x12xi1>
    %214 = vector.broadcast %cst_81 : f32 to vector<2x12x12xf32>
    %215 = arith.select %213, %214, %211 : vector<2x12x12xi1>, vector<2x12x12xf32>
    %cst_82 = arith.constant dense<0xFF800000> : vector<2x12xf32>
    %216 = vector.multi_reduction <maximumf>, %215, %cst_82 [2] : vector<2x12x12xf32> to vector<2x12xf32>
    %217 = vector.shape_cast %216 : vector<2x12xf32> to vector<2x12x1xf32>
    %218 = vector.broadcast %217 : vector<2x12x1xf32> to vector<2x12x12xf32>
    %219 = arith.subf %215, %218 : vector<2x12x12xf32>
    %220 = math.exp %219 : vector<2x12x12xf32>
    %cst_83 = arith.constant dense<0.000000e+00> : vector<2x12xf32>
    %221 = vector.multi_reduction <add>, %220, %cst_83 [2] : vector<2x12x12xf32> to vector<2x12xf32>
    %222 = vector.shape_cast %221 : vector<2x12xf32> to vector<2x12x1xf32>
    %223 = vector.broadcast %222 : vector<2x12x1xf32> to vector<2x12x12xf32>
    %224 = arith.divf %220, %223 : vector<2x12x12xf32>
    %225 = vector.extract_strided_slice %186 {offsets = [0, 0, 8], sizes = [2, 12, 8], strides = [1, 1, 1]} : vector<2x12x32xf32> to vector<2x12x8xf32>
    "tpu.trace_start"() <{level = 10 : i32, message = "bqk,bkd->bqd"}> : () -> ()
    %cst_84 = arith.constant dense<0.000000e+00> : vector<2x12x8xf32>
    %226 = tpu.matmul %224, %225, %cst_84 {dimension_numbers = #tpu.dot_dimension_numbers<[2], [1], [1], [2], [0, 0, 0, 1, 1, 2], [0], [0]>} : vector<2x12x12xf32>, vector<2x12x8xf32>, vector<2x12x8xf32> -> vector<2x12x8xf32>
    "tpu.trace_stop"() : () -> ()
    %227 = vector.extract_strided_slice %184 {offsets = [0, 0, 16], sizes = [2, 12, 8], strides = [1, 1, 1]} : vector<2x12x32xf32> to vector<2x12x8xf32>
    %228 = vector.extract_strided_slice %185 {offsets = [0, 0, 16], sizes = [2, 12, 8], strides = [1, 1, 1]} : vector<2x12x32xf32> to vector<2x12x8xf32>
    "tpu.trace_start"() <{level = 10 : i32, message = "bqd,bkd->bqk"}> : () -> ()
    %cst_85 = arith.constant dense<0.000000e+00> : vector<2x12x12xf32>
    %229 = tpu.matmul %227, %228, %cst_85 {dimension_numbers = #tpu.dot_dimension_numbers<[2], [2], [1], [1], [0, 0, 0, 1, 1, 1], [0], [0]>} : vector<2x12x8xf32>, vector<2x12x8xf32>, vector<2x12x12xf32> -> vector<2x12x12xf32>
    "tpu.trace_stop"() : () -> ()
    %cst_86 = arith.constant 0.353553385 : f32
    %230 = vector.broadcast %cst_86 : f32 to vector<2x12x12xf32>
    %231 = arith.mulf %229, %230 : vector<2x12x12xf32>
    %cst_87 = arith.constant -1.000000e+09 : f32
    %232 = vector.shape_cast %7 : vector<2x1x12xi1> to vector<2x1x12xi1>
    %233 = vector.broadcast %232 : vector<2x1x12xi1> to vector<2x12x12xi1>
    %234 = vector.broadcast %cst_87 : f32 to vector<2x12x12xf32>
    %235 = arith.select %233, %234, %231 : vector<2x12x12xi1>, vector<2x12x12xf32>
    %cst_88 = arith.constant dense<0xFF800000> : vector<2x12xf32>
    %236 = vector.multi_reduction <maximumf>, %235, %cst_88 [2] : vector<2x12x12xf32> to vector<2x12xf32>
    %237 = vector.shape_cast %236 : vector<2x12xf32> to vector<2x12x1xf32>
    %238 = vector.broadcast %237 : vector<2x12x1xf32> to vector<2x12x12xf32>
    %239 = arith.subf %235, %238 : vector<2x12x12xf32>
    %240 = math.exp %239 : vector<2x12x12xf32>
    %cst_89 = arith.constant dense<0.000000e+00> : vector<2x12xf32>
    %241 = vector.multi_reduction <add>, %240, %cst_89 [2] : vector<2x12x12xf32> to vector<2x12xf32>
    %242 = vector.shape_cast %241 : vector<2x12xf32> to vector<2x12x1xf32>
    %243 = vector.broadcast %242 : vector<2x12x1xf32> to vector<2x12x12xf32>
    %244 = arith.divf %240, %243 : vector<2x12x12xf32>
    %245 = vector.extract_strided_slice %186 {offsets = [0, 0, 16], sizes = [2, 12, 8], strides = [1, 1, 1]} : vector<2x12x32xf32> to vector<2x12x8xf32>
    "tpu.trace_start"() <{level = 10 : i32, message = "bqk,bkd->bqd"}> : () -> ()
    %cst_90 = arith.constant dense<0.000000e+00> : vector<2x12x8xf32>
    %246 = tpu.matmul %244, %245, %cst_90 {dimension_numbers = #tpu.dot_dimension_numbers<[2], [1], [1], [2], [0, 0, 0, 1, 1, 2], [0], [0]>} : vector<2x12x12xf32>, vector<2x12x8xf32>, vector<2x12x8xf32> -> vector<2x12x8xf32>
    "tpu.trace_stop"() : () -> ()
    %247 = vector.extract_strided_slice %184 {offsets = [0, 0, 24], sizes = [2, 12, 8], strides = [1, 1, 1]} : vector<2x12x32xf32> to vector<2x12x8xf32>
    %248 = vector.extract_strided_slice %185 {offsets = [0, 0, 24], sizes = [2, 12, 8], strides = [1, 1, 1]} : vector<2x12x32xf32> to vector<2x12x8xf32>
    "tpu.trace_start"() <{level = 10 : i32, message = "bqd,bkd->bqk"}> : () -> ()
    %cst_91 = arith.constant dense<0.000000e+00> : vector<2x12x12xf32>
    %249 = tpu.matmul %247, %248, %cst_91 {dimension_numbers = #tpu.dot_dimension_numbers<[2], [2], [1], [1], [0, 0, 0, 1, 1, 1], [0], [0]>} : vector<2x12x8xf32>, vector<2x12x8xf32>, vector<2x12x12xf32> -> vector<2x12x12xf32>
    "tpu.trace_stop"() : () -> ()
    %cst_92 = arith.constant 0.353553385 : f32
    %250 = vector.broadcast %cst_92 : f32 to vector<2x12x12xf32>
    %251 = arith.mulf %249, %250 : vector<2x12x12xf32>
    %cst_93 = arith.constant -1.000000e+09 : f32
    %252 = vector.shape_cast %7 : vector<2x1x12xi1> to vector<2x1x12xi1>
    %253 = vector.broadcast %252 : vector<2x1x12xi1> to vector<2x12x12xi1>
    %254 = vector.broadcast %cst_93 : f32 to vector<2x12x12xf32>
    %255 = arith.select %253, %254, %251 : vector<2x12x12xi1>, vector<2x12x12xf32>
    %cst_94 = arith.constant dense<0xFF800000> : vector<2x12xf32>
    %256 = vector.multi_reduction <maximumf>, %255, %cst_94 [2] : vector<2x12x12xf32> to vector<2x12xf32>
    %257 = vector.shape_cast %256 : vector<2x12xf32> to vector<2x12x1xf32>
    %258 = vector.broadcast %257 : vector<2x12x1xf32> to vector<2x12x12xf32>
    %259 = arith.subf %255, %258 : vector<2x12x12xf32>
    %260 = math.exp %259 : vector<2x12x12xf32>
    %cst_95 = arith.constant dense<0.000000e+00> : vector<2x12xf32>
    %261 = vector.multi_reduction <add>, %260, %cst_95 [2] : vector<2x12x12xf32> to vector<2x12xf32>
    %262 = vector.shape_cast %261 : vector<2x12xf32> to vector<2x12x1xf32>
    %263 = vector.broadcast %262 : vector<2x12x1xf32> to vector<2x12x12xf32>
    %264 = arith.divf %260, %263 : vector<2x12x12xf32>
    %265 = vector.extract_strided_slice %186 {offsets = [0, 0, 24], sizes = [2, 12, 8], strides = [1, 1, 1]} : vector<2x12x32xf32> to vector<2x12x8xf32>
    "tpu.trace_start"() <{level = 10 : i32, message = "bqk,bkd->bqd"}> : () -> ()
    %cst_96 = arith.constant dense<0.000000e+00> : vector<2x12x8xf32>
    %266 = tpu.matmul %264, %265, %cst_96 {dimension_numbers = #tpu.dot_dimension_numbers<[2], [1], [1], [2], [0, 0, 0, 1, 1, 2], [0], [0]>} : vector<2x12x12xf32>, vector<2x12x8xf32>, vector<2x12x8xf32> -> vector<2x12x8xf32>
    "tpu.trace_stop"() : () -> ()
    %267 = tpu.concatenate %206, %226, %246, %266 in 2 : vector<2x12x8xf32>, vector<2x12x8xf32>, vector<2x12x8xf32>, vector<2x12x8xf32> -> vector<2x12x32xf32>
    %268 = vector.shape_cast %267 : vector<2x12x32xf32> to vector<24x32xf32>
    %cst_97 = arith.constant dense<0.000000e+00> : vector<24x32xf32>
    %269 = tpu.matmul %268, %174, %cst_97 {dimension_numbers = #tpu.dot_dimension_numbers<[1], [0], [0], [1], [0, 0, 1, 1], [], []>} : vector<24x32xf32>, vector<32x32xf32>, vector<24x32xf32> -> vector<24x32xf32>
    %270 = vector.broadcast %175 : vector<1x32xf32> to vector<24x32xf32>
    %271 = arith.addf %269, %270 : vector<24x32xf32>
    %272 = arith.addf %1, %271 : vector<24x32xf32>
    %cst_98 = arith.constant dense<0.000000e+00> : vector<24xf32>
    %273 = vector.multi_reduction <add>, %272, %cst_98 [1] : vector<24x32xf32> to vector<24xf32>
    %274 = vector.shape_cast %273 : vector<24xf32> to vector<24x1xf32>
    %cst_99 = arith.constant 3.200000e+01 : f32
    %275 = vector.broadcast %cst_99 : f32 to vector<24x1xf32>
    %276 = arith.divf %274, %275 : vector<24x1xf32>
    %277 = vector.broadcast %276 : vector<24x1xf32> to vector<24x32xf32>
    %278 = arith.subf %272, %277 : vector<24x32xf32>
    %279 = arith.mulf %278, %278 : vector<24x32xf32>
    %cst_100 = arith.constant dense<0.000000e+00> : vector<24xf32>
    %280 = vector.multi_reduction <add>, %279, %cst_100 [1] : vector<24x32xf32> to vector<24xf32>
    %281 = vector.shape_cast %280 : vector<24xf32> to vector<24x1xf32>
    %cst_101 = arith.constant 0.0322580636 : f32
    %282 = vector.broadcast %cst_101 : f32 to vector<24x1xf32>
    %283 = arith.mulf %281, %282 : vector<24x1xf32>
    %284 = math.sqrt %283 : vector<24x1xf32>
    %cst_102 = arith.constant 9.99999997E-7 : f32
    %285 = vector.broadcast %cst_102 : f32 to vector<24x1xf32>
    %286 = arith.addf %284, %285 : vector<24x1xf32>
    %cst_103 = arith.constant 1.000000e+00 : f32
    %287 = vector.broadcast %cst_103 : f32 to vector<24x1xf32>
    %288 = arith.divf %287, %286 : vector<24x1xf32>
    %289 = vector.broadcast %276 : vector<24x1xf32> to vector<24x32xf32>
    %290 = arith.subf %272, %289 : vector<24x32xf32>
    %291 = vector.broadcast %176 : vector<1x32xf32> to vector<24x32xf32>
    %292 = arith.mulf %291, %290 : vector<24x32xf32>
    %293 = vector.broadcast %288 : vector<24x1xf32> to vector<24x32xf32>
    %294 = arith.mulf %292, %293 : vector<24x32xf32>
    %295 = vector.broadcast %177 : vector<1x32xf32> to vector<24x32xf32>
    %296 = arith.addf %294, %295 : vector<24x32xf32>
    %c0_104 = arith.constant 0 : index
    %c640 = arith.constant 640 : index
    %297 = vector.load %arg7[%c0_104, %c640] : memref<32x1280xf32, #tpu.memory_space<vmem>>, vector<32x96xf32>
    %c12 = arith.constant 12 : index
    %c0_105 = arith.constant 0 : index
    %298 = vector.load %arg9[%c12, %c0_105] : memref<28x128xf32, #tpu.memory_space<vmem>>, vector<1x96xf32>
    %c0_106 = arith.constant 0 : index
    %c768 = arith.constant 768 : index
    %299 = vector.load %arg7[%c0_106, %c768] : memref<32x1280xf32, #tpu.memory_space<vmem>>, vector<32x32xf32>
    %c13 = arith.constant 13 : index
    %c0_107 = arith.constant 0 : index
    %300 = vector.load %arg9[%c13, %c0_107] : memref<28x128xf32, #tpu.memory_space<vmem>>, vector<1x32xf32>
    %c14 = arith.constant 14 : index
    %c0_108 = arith.constant 0 : index
    %301 = vector.load %arg9[%c14, %c0_108] : memref<28x128xf32, #tpu.memory_space<vmem>>, vector<1x32xf32>
    %c15 = arith.constant 15 : index
    %c0_109 = arith.constant 0 : index
    %302 = vector.load %arg9[%c15, %c0_109] : memref<28x128xf32, #tpu.memory_space<vmem>>, vector<1x32xf32>
    %303 = vector.extract_strided_slice %297 {offsets = [0, 0], sizes = [32, 32], strides = [1, 1]} : vector<32x96xf32> to vector<32x32xf32>
    %cst_110 = arith.constant dense<0.000000e+00> : vector<24x32xf32>
    %304 = tpu.matmul %296, %303, %cst_110 {dimension_numbers = #tpu.dot_dimension_numbers<[1], [0], [0], [1], [0, 0, 1, 1], [], []>} : vector<24x32xf32>, vector<32x32xf32>, vector<24x32xf32> -> vector<24x32xf32>
    %305 = vector.extract_strided_slice %298 {offsets = [0, 0], sizes = [1, 32], strides = [1, 1]} : vector<1x96xf32> to vector<1x32xf32>
    %306 = vector.broadcast %305 : vector<1x32xf32> to vector<24x32xf32>
    %307 = arith.addf %304, %306 : vector<24x32xf32>
    %308 = vector.extract_strided_slice %297 {offsets = [0, 32], sizes = [32, 64], strides = [1, 1]} : vector<32x96xf32> to vector<32x64xf32>
    %cst_111 = arith.constant dense<0.000000e+00> : vector<16x64xf32>
    %309 = tpu.matmul %0, %308, %cst_111 {dimension_numbers = #tpu.dot_dimension_numbers<[1], [0], [0], [1], [0, 0, 1, 1], [], []>} : vector<16x32xf32>, vector<32x64xf32>, vector<16x64xf32> -> vector<16x64xf32>
    %310 = vector.extract_strided_slice %298 {offsets = [0, 32], sizes = [1, 64], strides = [1, 1]} : vector<1x96xf32> to vector<1x64xf32>
    %311 = vector.broadcast %310 : vector<1x64xf32> to vector<16x64xf32>
    %312 = arith.addf %309, %311 : vector<16x64xf32>
    %313 = vector.extract_strided_slice %312 {offsets = [0, 0], sizes = [16, 32], strides = [1, 1]} : vector<16x64xf32> to vector<16x32xf32>
    %314 = vector.extract_strided_slice %312 {offsets = [0, 32], sizes = [16, 32], strides = [1, 1]} : vector<16x64xf32> to vector<16x32xf32>
    %315 = vector.shape_cast %307 : vector<24x32xf32> to vector<2x12x32xf32>
    %316 = vector.shape_cast %313 : vector<16x32xf32> to vector<2x8x32xf32>
    %317 = vector.shape_cast %314 : vector<16x32xf32> to vector<2x8x32xf32>
    %318 = vector.extract_strided_slice %315 {offsets = [0, 0, 0], sizes = [2, 12, 8], strides = [1, 1, 1]} : vector<2x12x32xf32> to vector<2x12x8xf32>
    %319 = vector.extract_strided_slice %316 {offsets = [0, 0, 0], sizes = [2, 8, 8], strides = [1, 1, 1]} : vector<2x8x32xf32> to vector<2x8x8xf32>
    "tpu.trace_start"() <{level = 10 : i32, message = "bqd,bkd->bqk"}> : () -> ()
    %cst_112 = arith.constant dense<0.000000e+00> : vector<2x12x8xf32>
    %320 = tpu.matmul %318, %319, %cst_112 {dimension_numbers = #tpu.dot_dimension_numbers<[2], [2], [1], [1], [0, 0, 0, 1, 1, 1], [0], [0]>} : vector<2x12x8xf32>, vector<2x8x8xf32>, vector<2x12x8xf32> -> vector<2x12x8xf32>
    "tpu.trace_stop"() : () -> ()
    %cst_113 = arith.constant 0.353553385 : f32
    %321 = vector.broadcast %cst_113 : f32 to vector<2x12x8xf32>
    %322 = arith.mulf %320, %321 : vector<2x12x8xf32>
    %cst_114 = arith.constant -1.000000e+09 : f32
    %323 = vector.shape_cast %4 : vector<2x1x8xi1> to vector<2x1x8xi1>
    %324 = vector.broadcast %323 : vector<2x1x8xi1> to vector<2x12x8xi1>
    %325 = vector.broadcast %cst_114 : f32 to vector<2x12x8xf32>
    %326 = arith.select %324, %325, %322 : vector<2x12x8xi1>, vector<2x12x8xf32>
    %cst_115 = arith.constant dense<0xFF800000> : vector<2x12xf32>
    %327 = vector.multi_reduction <maximumf>, %326, %cst_115 [2] : vector<2x12x8xf32> to vector<2x12xf32>
    %328 = vector.shape_cast %327 : vector<2x12xf32> to vector<2x12x1xf32>
    %329 = vector.broadcast %328 : vector<2x12x1xf32> to vector<2x12x8xf32>
    %330 = arith.subf %326, %329 : vector<2x12x8xf32>
    %331 = math.exp %330 : vector<2x12x8xf32>
    %cst_116 = arith.constant dense<0.000000e+00> : vector<2x12xf32>
    %332 = vector.multi_reduction <add>, %331, %cst_116 [2] : vector<2x12x8xf32> to vector<2x12xf32>
    %333 = vector.shape_cast %332 : vector<2x12xf32> to vector<2x12x1xf32>
    %334 = vector.broadcast %333 : vector<2x12x1xf32> to vector<2x12x8xf32>
    %335 = arith.divf %331, %334 : vector<2x12x8xf32>
    %336 = vector.extract_strided_slice %317 {offsets = [0, 0, 0], sizes = [2, 8, 8], strides = [1, 1, 1]} : vector<2x8x32xf32> to vector<2x8x8xf32>
    "tpu.trace_start"() <{level = 10 : i32, message = "bqk,bkd->bqd"}> : () -> ()
    %cst_117 = arith.constant dense<0.000000e+00> : vector<2x12x8xf32>
    %337 = tpu.matmul %335, %336, %cst_117 {dimension_numbers = #tpu.dot_dimension_numbers<[2], [1], [1], [2], [0, 0, 0, 1, 1, 2], [0], [0]>} : vector<2x12x8xf32>, vector<2x8x8xf32>, vector<2x12x8xf32> -> vector<2x12x8xf32>
    "tpu.trace_stop"() : () -> ()
    %338 = vector.extract_strided_slice %315 {offsets = [0, 0, 8], sizes = [2, 12, 8], strides = [1, 1, 1]} : vector<2x12x32xf32> to vector<2x12x8xf32>
    %339 = vector.extract_strided_slice %316 {offsets = [0, 0, 8], sizes = [2, 8, 8], strides = [1, 1, 1]} : vector<2x8x32xf32> to vector<2x8x8xf32>
    "tpu.trace_start"() <{level = 10 : i32, message = "bqd,bkd->bqk"}> : () -> ()
    %cst_118 = arith.constant dense<0.000000e+00> : vector<2x12x8xf32>
    %340 = tpu.matmul %338, %339, %cst_118 {dimension_numbers = #tpu.dot_dimension_numbers<[2], [2], [1], [1], [0, 0, 0, 1, 1, 1], [0], [0]>} : vector<2x12x8xf32>, vector<2x8x8xf32>, vector<2x12x8xf32> -> vector<2x12x8xf32>
    "tpu.trace_stop"() : () -> ()
    %cst_119 = arith.constant 0.353553385 : f32
    %341 = vector.broadcast %cst_119 : f32 to vector<2x12x8xf32>
    %342 = arith.mulf %340, %341 : vector<2x12x8xf32>
    %cst_120 = arith.constant -1.000000e+09 : f32
    %343 = vector.shape_cast %4 : vector<2x1x8xi1> to vector<2x1x8xi1>
    %344 = vector.broadcast %343 : vector<2x1x8xi1> to vector<2x12x8xi1>
    %345 = vector.broadcast %cst_120 : f32 to vector<2x12x8xf32>
    %346 = arith.select %344, %345, %342 : vector<2x12x8xi1>, vector<2x12x8xf32>
    %cst_121 = arith.constant dense<0xFF800000> : vector<2x12xf32>
    %347 = vector.multi_reduction <maximumf>, %346, %cst_121 [2] : vector<2x12x8xf32> to vector<2x12xf32>
    %348 = vector.shape_cast %347 : vector<2x12xf32> to vector<2x12x1xf32>
    %349 = vector.broadcast %348 : vector<2x12x1xf32> to vector<2x12x8xf32>
    %350 = arith.subf %346, %349 : vector<2x12x8xf32>
    %351 = math.exp %350 : vector<2x12x8xf32>
    %cst_122 = arith.constant dense<0.000000e+00> : vector<2x12xf32>
    %352 = vector.multi_reduction <add>, %351, %cst_122 [2] : vector<2x12x8xf32> to vector<2x12xf32>
    %353 = vector.shape_cast %352 : vector<2x12xf32> to vector<2x12x1xf32>
    %354 = vector.broadcast %353 : vector<2x12x1xf32> to vector<2x12x8xf32>
    %355 = arith.divf %351, %354 : vector<2x12x8xf32>
    %356 = vector.extract_strided_slice %317 {offsets = [0, 0, 8], sizes = [2, 8, 8], strides = [1, 1, 1]} : vector<2x8x32xf32> to vector<2x8x8xf32>
    "tpu.trace_start"() <{level = 10 : i32, message = "bqk,bkd->bqd"}> : () -> ()
    %cst_123 = arith.constant dense<0.000000e+00> : vector<2x12x8xf32>
    %357 = tpu.matmul %355, %356, %cst_123 {dimension_numbers = #tpu.dot_dimension_numbers<[2], [1], [1], [2], [0, 0, 0, 1, 1, 2], [0], [0]>} : vector<2x12x8xf32>, vector<2x8x8xf32>, vector<2x12x8xf32> -> vector<2x12x8xf32>
    "tpu.trace_stop"() : () -> ()
    %358 = vector.extract_strided_slice %315 {offsets = [0, 0, 16], sizes = [2, 12, 8], strides = [1, 1, 1]} : vector<2x12x32xf32> to vector<2x12x8xf32>
    %359 = vector.extract_strided_slice %316 {offsets = [0, 0, 16], sizes = [2, 8, 8], strides = [1, 1, 1]} : vector<2x8x32xf32> to vector<2x8x8xf32>
    "tpu.trace_start"() <{level = 10 : i32, message = "bqd,bkd->bqk"}> : () -> ()
    %cst_124 = arith.constant dense<0.000000e+00> : vector<2x12x8xf32>
    %360 = tpu.matmul %358, %359, %cst_124 {dimension_numbers = #tpu.dot_dimension_numbers<[2], [2], [1], [1], [0, 0, 0, 1, 1, 1], [0], [0]>} : vector<2x12x8xf32>, vector<2x8x8xf32>, vector<2x12x8xf32> -> vector<2x12x8xf32>
    "tpu.trace_stop"() : () -> ()
    %cst_125 = arith.constant 0.353553385 : f32
    %361 = vector.broadcast %cst_125 : f32 to vector<2x12x8xf32>
    %362 = arith.mulf %360, %361 : vector<2x12x8xf32>
    %cst_126 = arith.constant -1.000000e+09 : f32
    %363 = vector.shape_cast %4 : vector<2x1x8xi1> to vector<2x1x8xi1>
    %364 = vector.broadcast %363 : vector<2x1x8xi1> to vector<2x12x8xi1>
    %365 = vector.broadcast %cst_126 : f32 to vector<2x12x8xf32>
    %366 = arith.select %364, %365, %362 : vector<2x12x8xi1>, vector<2x12x8xf32>
    %cst_127 = arith.constant dense<0xFF800000> : vector<2x12xf32>
    %367 = vector.multi_reduction <maximumf>, %366, %cst_127 [2] : vector<2x12x8xf32> to vector<2x12xf32>
    %368 = vector.shape_cast %367 : vector<2x12xf32> to vector<2x12x1xf32>
    %369 = vector.broadcast %368 : vector<2x12x1xf32> to vector<2x12x8xf32>
    %370 = arith.subf %366, %369 : vector<2x12x8xf32>
    %371 = math.exp %370 : vector<2x12x8xf32>
    %cst_128 = arith.constant dense<0.000000e+00> : vector<2x12xf32>
    %372 = vector.multi_reduction <add>, %371, %cst_128 [2] : vector<2x12x8xf32> to vector<2x12xf32>
    %373 = vector.shape_cast %372 : vector<2x12xf32> to vector<2x12x1xf32>
    %374 = vector.broadcast %373 : vector<2x12x1xf32> to vector<2x12x8xf32>
    %375 = arith.divf %371, %374 : vector<2x12x8xf32>
    %376 = vector.extract_strided_slice %317 {offsets = [0, 0, 16], sizes = [2, 8, 8], strides = [1, 1, 1]} : vector<2x8x32xf32> to vector<2x8x8xf32>
    "tpu.trace_start"() <{level = 10 : i32, message = "bqk,bkd->bqd"}> : () -> ()
    %cst_129 = arith.constant dense<0.000000e+00> : vector<2x12x8xf32>
    %377 = tpu.matmul %375, %376, %cst_129 {dimension_numbers = #tpu.dot_dimension_numbers<[2], [1], [1], [2], [0, 0, 0, 1, 1, 2], [0], [0]>} : vector<2x12x8xf32>, vector<2x8x8xf32>, vector<2x12x8xf32> -> vector<2x12x8xf32>
    "tpu.trace_stop"() : () -> ()
    %378 = vector.extract_strided_slice %315 {offsets = [0, 0, 24], sizes = [2, 12, 8], strides = [1, 1, 1]} : vector<2x12x32xf32> to vector<2x12x8xf32>
    %379 = vector.extract_strided_slice %316 {offsets = [0, 0, 24], sizes = [2, 8, 8], strides = [1, 1, 1]} : vector<2x8x32xf32> to vector<2x8x8xf32>
    "tpu.trace_start"() <{level = 10 : i32, message = "bqd,bkd->bqk"}> : () -> ()
    %cst_130 = arith.constant dense<0.000000e+00> : vector<2x12x8xf32>
    %380 = tpu.matmul %378, %379, %cst_130 {dimension_numbers = #tpu.dot_dimension_numbers<[2], [2], [1], [1], [0, 0, 0, 1, 1, 1], [0], [0]>} : vector<2x12x8xf32>, vector<2x8x8xf32>, vector<2x12x8xf32> -> vector<2x12x8xf32>
    "tpu.trace_stop"() : () -> ()
    %cst_131 = arith.constant 0.353553385 : f32
    %381 = vector.broadcast %cst_131 : f32 to vector<2x12x8xf32>
    %382 = arith.mulf %380, %381 : vector<2x12x8xf32>
    %cst_132 = arith.constant -1.000000e+09 : f32
    %383 = vector.shape_cast %4 : vector<2x1x8xi1> to vector<2x1x8xi1>
    %384 = vector.broadcast %383 : vector<2x1x8xi1> to vector<2x12x8xi1>
    %385 = vector.broadcast %cst_132 : f32 to vector<2x12x8xf32>
    %386 = arith.select %384, %385, %382 : vector<2x12x8xi1>, vector<2x12x8xf32>
    %cst_133 = arith.constant dense<0xFF800000> : vector<2x12xf32>
    %387 = vector.multi_reduction <maximumf>, %386, %cst_133 [2] : vector<2x12x8xf32> to vector<2x12xf32>
    %388 = vector.shape_cast %387 : vector<2x12xf32> to vector<2x12x1xf32>
    %389 = vector.broadcast %388 : vector<2x12x1xf32> to vector<2x12x8xf32>
    %390 = arith.subf %386, %389 : vector<2x12x8xf32>
    %391 = math.exp %390 : vector<2x12x8xf32>
    %cst_134 = arith.constant dense<0.000000e+00> : vector<2x12xf32>
    %392 = vector.multi_reduction <add>, %391, %cst_134 [2] : vector<2x12x8xf32> to vector<2x12xf32>
    %393 = vector.shape_cast %392 : vector<2x12xf32> to vector<2x12x1xf32>
    %394 = vector.broadcast %393 : vector<2x12x1xf32> to vector<2x12x8xf32>
    %395 = arith.divf %391, %394 : vector<2x12x8xf32>
    %396 = vector.extract_strided_slice %317 {offsets = [0, 0, 24], sizes = [2, 8, 8], strides = [1, 1, 1]} : vector<2x8x32xf32> to vector<2x8x8xf32>
    "tpu.trace_start"() <{level = 10 : i32, message = "bqk,bkd->bqd"}> : () -> ()
    %cst_135 = arith.constant dense<0.000000e+00> : vector<2x12x8xf32>
    %397 = tpu.matmul %395, %396, %cst_135 {dimension_numbers = #tpu.dot_dimension_numbers<[2], [1], [1], [2], [0, 0, 0, 1, 1, 2], [0], [0]>} : vector<2x12x8xf32>, vector<2x8x8xf32>, vector<2x12x8xf32> -> vector<2x12x8xf32>
    "tpu.trace_stop"() : () -> ()
    %398 = tpu.concatenate %337, %357, %377, %397 in 2 : vector<2x12x8xf32>, vector<2x12x8xf32>, vector<2x12x8xf32>, vector<2x12x8xf32> -> vector<2x12x32xf32>
    %399 = vector.shape_cast %398 : vector<2x12x32xf32> to vector<24x32xf32>
    %cst_136 = arith.constant dense<0.000000e+00> : vector<24x32xf32>
    %400 = tpu.matmul %399, %299, %cst_136 {dimension_numbers = #tpu.dot_dimension_numbers<[1], [0], [0], [1], [0, 0, 1, 1], [], []>} : vector<24x32xf32>, vector<32x32xf32>, vector<24x32xf32> -> vector<24x32xf32>
    %401 = vector.broadcast %300 : vector<1x32xf32> to vector<24x32xf32>
    %402 = arith.addf %400, %401 : vector<24x32xf32>
    %403 = arith.addf %296, %402 : vector<24x32xf32>
    %cst_137 = arith.constant dense<0.000000e+00> : vector<24xf32>
    %404 = vector.multi_reduction <add>, %403, %cst_137 [1] : vector<24x32xf32> to vector<24xf32>
    %405 = vector.shape_cast %404 : vector<24xf32> to vector<24x1xf32>
    %cst_138 = arith.constant 3.200000e+01 : f32
    %406 = vector.broadcast %cst_138 : f32 to vector<24x1xf32>
    %407 = arith.divf %405, %406 : vector<24x1xf32>
    %408 = vector.broadcast %407 : vector<24x1xf32> to vector<24x32xf32>
    %409 = arith.subf %403, %408 : vector<24x32xf32>
    %410 = arith.mulf %409, %409 : vector<24x32xf32>
    %cst_139 = arith.constant dense<0.000000e+00> : vector<24xf32>
    %411 = vector.multi_reduction <add>, %410, %cst_139 [1] : vector<24x32xf32> to vector<24xf32>
    %412 = vector.shape_cast %411 : vector<24xf32> to vector<24x1xf32>
    %cst_140 = arith.constant 0.0322580636 : f32
    %413 = vector.broadcast %cst_140 : f32 to vector<24x1xf32>
    %414 = arith.mulf %412, %413 : vector<24x1xf32>
    %415 = math.sqrt %414 : vector<24x1xf32>
    %cst_141 = arith.constant 9.99999997E-7 : f32
    %416 = vector.broadcast %cst_141 : f32 to vector<24x1xf32>
    %417 = arith.addf %415, %416 : vector<24x1xf32>
    %cst_142 = arith.constant 1.000000e+00 : f32
    %418 = vector.broadcast %cst_142 : f32 to vector<24x1xf32>
    %419 = arith.divf %418, %417 : vector<24x1xf32>
    %420 = vector.broadcast %407 : vector<24x1xf32> to vector<24x32xf32>
    %421 = arith.subf %403, %420 : vector<24x32xf32>
    %422 = vector.broadcast %301 : vector<1x32xf32> to vector<24x32xf32>
    %423 = arith.mulf %422, %421 : vector<24x32xf32>
    %424 = vector.broadcast %419 : vector<24x1xf32> to vector<24x32xf32>
    %425 = arith.mulf %423, %424 : vector<24x32xf32>
    %426 = vector.broadcast %302 : vector<1x32xf32> to vector<24x32xf32>
    %427 = arith.addf %425, %426 : vector<24x32xf32>
    %c0_143 = arith.constant 0 : index
    %c896 = arith.constant 896 : index
    %428 = vector.load %arg7[%c0_143, %c896] : memref<32x1280xf32, #tpu.memory_space<vmem>>, vector<32x128xf32>
    %c16 = arith.constant 16 : index
    %c0_144 = arith.constant 0 : index
    %429 = vector.load %arg9[%c16, %c0_144] : memref<28x128xf32, #tpu.memory_space<vmem>>, vector<1x128xf32>
    %c0_145 = arith.constant 0 : index
    %c128_146 = arith.constant 128 : index
    %430 = vector.load %arg8[%c0_145, %c128_146] : memref<128x512xf32, #tpu.memory_space<vmem>>, vector<128x32xf32>
    %c17 = arith.constant 17 : index
    %c0_147 = arith.constant 0 : index
    %431 = vector.load %arg9[%c17, %c0_147] : memref<28x128xf32, #tpu.memory_space<vmem>>, vector<1x32xf32>
    %c18 = arith.constant 18 : index
    %c0_148 = arith.constant 0 : index
    %432 = vector.load %arg9[%c18, %c0_148] : memref<28x128xf32, #tpu.memory_space<vmem>>, vector<1x32xf32>
    %c19 = arith.constant 19 : index
    %c0_149 = arith.constant 0 : index
    %433 = vector.load %arg9[%c19, %c0_149] : memref<28x128xf32, #tpu.memory_space<vmem>>, vector<1x32xf32>
    %cst_150 = arith.constant dense<0.000000e+00> : vector<24x128xf32>
    %434 = tpu.matmul %427, %428, %cst_150 {dimension_numbers = #tpu.dot_dimension_numbers<[1], [0], [0], [1], [0, 0, 1, 1], [], []>} : vector<24x32xf32>, vector<32x128xf32>, vector<24x128xf32> -> vector<24x128xf32>
    %435 = vector.broadcast %429 : vector<1x128xf32> to vector<24x128xf32>
    %436 = arith.addf %434, %435 : vector<24x128xf32>
    %cst_151 = arith.constant 0.000000e+00 : f32
    %437 = vector.broadcast %cst_151 : f32 to vector<24x128xf32>
    %438 = arith.maximumf %436, %437 : vector<24x128xf32>
    %cst_152 = arith.constant dense<0.000000e+00> : vector<24x32xf32>
    %439 = tpu.matmul %438, %430, %cst_152 {dimension_numbers = #tpu.dot_dimension_numbers<[1], [0], [0], [1], [0, 0, 1, 1], [], []>} : vector<24x128xf32>, vector<128x32xf32>, vector<24x32xf32> -> vector<24x32xf32>
    %440 = vector.broadcast %431 : vector<1x32xf32> to vector<24x32xf32>
    %441 = arith.addf %439, %440 : vector<24x32xf32>
    %442 = arith.addf %427, %441 : vector<24x32xf32>
    %cst_153 = arith.constant dense<0.000000e+00> : vector<24xf32>
    %443 = vector.multi_reduction <add>, %442, %cst_153 [1] : vector<24x32xf32> to vector<24xf32>
    %444 = vector.shape_cast %443 : vector<24xf32> to vector<24x1xf32>
    %cst_154 = arith.constant 3.200000e+01 : f32
    %445 = vector.broadcast %cst_154 : f32 to vector<24x1xf32>
    %446 = arith.divf %444, %445 : vector<24x1xf32>
    %447 = vector.broadcast %446 : vector<24x1xf32> to vector<24x32xf32>
    %448 = arith.subf %442, %447 : vector<24x32xf32>
    %449 = arith.mulf %448, %448 : vector<24x32xf32>
    %cst_155 = arith.constant dense<0.000000e+00> : vector<24xf32>
    %450 = vector.multi_reduction <add>, %449, %cst_155 [1] : vector<24x32xf32> to vector<24xf32>
    %451 = vector.shape_cast %450 : vector<24xf32> to vector<24x1xf32>
    %cst_156 = arith.constant 0.0322580636 : f32
    %452 = vector.broadcast %cst_156 : f32 to vector<24x1xf32>
    %453 = arith.mulf %451, %452 : vector<24x1xf32>
    %454 = math.sqrt %453 : vector<24x1xf32>
    %cst_157 = arith.constant 9.99999997E-7 : f32
    %455 = vector.broadcast %cst_157 : f32 to vector<24x1xf32>
    %456 = arith.addf %454, %455 : vector<24x1xf32>
    %cst_158 = arith.constant 1.000000e+00 : f32
    %457 = vector.broadcast %cst_158 : f32 to vector<24x1xf32>
    %458 = arith.divf %457, %456 : vector<24x1xf32>
    %459 = vector.broadcast %446 : vector<24x1xf32> to vector<24x32xf32>
    %460 = arith.subf %442, %459 : vector<24x32xf32>
    %461 = vector.broadcast %432 : vector<1x32xf32> to vector<24x32xf32>
    %462 = arith.mulf %461, %460 : vector<24x32xf32>
    %463 = vector.broadcast %458 : vector<24x1xf32> to vector<24x32xf32>
    %464 = arith.mulf %462, %463 : vector<24x32xf32>
    %465 = vector.broadcast %433 : vector<1x32xf32> to vector<24x32xf32>
    %466 = arith.addf %464, %465 : vector<24x32xf32>
    %467 = arith.addf %171, %0 : vector<16x32xf32>
    %468 = arith.addf %466, %1 : vector<24x32xf32>
    %c0_159 = arith.constant 0 : index
    %c0_160 = arith.constant 0 : index
    %c0_161 = arith.constant 0 : index
    %469 = vector.load %arg5[%c0_159, %c0_160, %c0_161] : memref<2x8x1xf32, #tpu.memory_space<vmem>>, vector<2x8x1xf32>
    %cst_162 = arith.constant 5.000000e-01 : f32
    %470 = vector.broadcast %cst_162 : f32 to vector<2x8x1xf32>
    %471 = arith.cmpf ogt, %469, %470 : vector<2x8x1xf32>
    %c0_163 = arith.constant 0 : index
    %c0_164 = arith.constant 0 : index
    %c0_165 = arith.constant 0 : index
    %472 = vector.load %arg6[%c0_163, %c0_164, %c0_165] : memref<2x12x1xf32, #tpu.memory_space<vmem>>, vector<2x12x1xf32>
    %cst_166 = arith.constant 5.000000e-01 : f32
    %473 = vector.broadcast %cst_166 : f32 to vector<2x12x1xf32>
    %474 = arith.cmpf ogt, %472, %473 : vector<2x12x1xf32>
    %c0_167 = arith.constant 0 : index
    %c1024 = arith.constant 1024 : index
    %475 = vector.load %arg7[%c0_167, %c1024] : memref<32x1280xf32, #tpu.memory_space<vmem>>, vector<32x128xf32>
    %c20 = arith.constant 20 : index
    %c0_168 = arith.constant 0 : index
    %476 = vector.load %arg9[%c20, %c0_168] : memref<28x128xf32, #tpu.memory_space<vmem>>, vector<1x128xf32>
    %c0_169 = arith.constant 0 : index
    %c256_170 = arith.constant 256 : index
    %477 = vector.load %arg8[%c0_169, %c256_170] : memref<128x512xf32, #tpu.memory_space<vmem>>, vector<128x8xf32>
    %c21 = arith.constant 21 : index
    %c0_171 = arith.constant 0 : index
    %478 = vector.load %arg9[%c21, %c0_171] : memref<28x128xf32, #tpu.memory_space<vmem>>, vector<1x8xf32>
    %c22 = arith.constant 22 : index
    %c0_172 = arith.constant 0 : index
    %479 = vector.load %arg9[%c22, %c0_172] : memref<28x128xf32, #tpu.memory_space<vmem>>, vector<1x32xf32>
    %c23 = arith.constant 23 : index
    %c0_173 = arith.constant 0 : index
    %480 = vector.load %arg9[%c23, %c0_173] : memref<28x128xf32, #tpu.memory_space<vmem>>, vector<1x32xf32>
    %cst_174 = arith.constant dense<0.000000e+00> : vector<16x128xf32>
    %481 = tpu.matmul %467, %475, %cst_174 {dimension_numbers = #tpu.dot_dimension_numbers<[1], [0], [0], [1], [0, 0, 1, 1], [], []>} : vector<16x32xf32>, vector<32x128xf32>, vector<16x128xf32> -> vector<16x128xf32>
    %482 = vector.broadcast %476 : vector<1x128xf32> to vector<16x128xf32>
    %483 = arith.addf %481, %482 : vector<16x128xf32>
    %cst_175 = arith.constant 0.000000e+00 : f32
    %484 = vector.broadcast %cst_175 : f32 to vector<16x128xf32>
    %485 = arith.maximumf %483, %484 : vector<16x128xf32>
    %cst_176 = arith.constant dense<0.000000e+00> : vector<16x8xf32>
    %486 = tpu.matmul %485, %477, %cst_176 {dimension_numbers = #tpu.dot_dimension_numbers<[1], [0], [0], [1], [0, 0, 1, 1], [], []>} : vector<16x128xf32>, vector<128x8xf32>, vector<16x8xf32> -> vector<16x8xf32>
    %487 = vector.broadcast %478 : vector<1x8xf32> to vector<16x8xf32>
    %488 = arith.addf %486, %487 : vector<16x8xf32>
    %489 = vector.shape_cast %488 : vector<16x8xf32> to vector<2x8x8xf32>
    %cst_177 = arith.constant -1.000000e+09 : f32
    %490 = vector.shape_cast %471 : vector<2x8x1xi1> to vector<2x8x1xi1>
    %491 = vector.broadcast %490 : vector<2x8x1xi1> to vector<2x8x8xi1>
    %492 = vector.broadcast %cst_177 : f32 to vector<2x8x8xf32>
    %493 = arith.select %491, %492, %489 : vector<2x8x8xi1>, vector<2x8x8xf32>
    %cst_178 = arith.constant dense<0xFF800000> : vector<2x8xf32>
    %494 = vector.multi_reduction <maximumf>, %493, %cst_178 [1] : vector<2x8x8xf32> to vector<2x8xf32>
    %495 = vector.shape_cast %494 : vector<2x8xf32> to vector<2x1x8xf32>
    %496 = vector.broadcast %495 : vector<2x1x8xf32> to vector<2x8x8xf32>
    %497 = arith.subf %493, %496 : vector<2x8x8xf32>
    %498 = math.exp %497 : vector<2x8x8xf32>
    %cst_179 = arith.constant dense<0.000000e+00> : vector<2x8xf32>
    %499 = vector.multi_reduction <add>, %498, %cst_179 [1] : vector<2x8x8xf32> to vector<2x8xf32>
    %500 = vector.shape_cast %499 : vector<2x8xf32> to vector<2x1x8xf32>
    %501 = vector.broadcast %500 : vector<2x1x8xf32> to vector<2x8x8xf32>
    %502 = arith.divf %498, %501 : vector<2x8x8xf32>
    %503 = vector.shape_cast %467 : vector<16x32xf32> to vector<2x8x32xf32>
    %504 = tpu.transpose %502, [0, 2, 1] : vector<2x8x8xf32> -> vector<2x8x8xf32>
    "tpu.trace_start"() <{level = 10 : i32, message = "bgs,bsh->bgh"}> : () -> ()
    %cst_180 = arith.constant dense<0.000000e+00> : vector<2x8x32xf32>
    %505 = tpu.matmul %504, %503, %cst_180 {dimension_numbers = #tpu.dot_dimension_numbers<[2], [1], [1], [2], [0, 0, 0, 1, 1, 2], [0], [0]>} : vector<2x8x8xf32>, vector<2x8x32xf32>, vector<2x8x32xf32> -> vector<2x8x32xf32>
    "tpu.trace_stop"() : () -> ()
    %506 = arith.addf %503, %505 : vector<2x8x32xf32>
    %507 = vector.shape_cast %506 : vector<2x8x32xf32> to vector<16x32xf32>
    %cst_181 = arith.constant dense<0.000000e+00> : vector<16xf32>
    %508 = vector.multi_reduction <add>, %507, %cst_181 [1] : vector<16x32xf32> to vector<16xf32>
    %509 = vector.shape_cast %508 : vector<16xf32> to vector<16x1xf32>
    %cst_182 = arith.constant 3.200000e+01 : f32
    %510 = vector.broadcast %cst_182 : f32 to vector<16x1xf32>
    %511 = arith.divf %509, %510 : vector<16x1xf32>
    %512 = vector.broadcast %511 : vector<16x1xf32> to vector<16x32xf32>
    %513 = arith.subf %507, %512 : vector<16x32xf32>
    %514 = arith.mulf %513, %513 : vector<16x32xf32>
    %cst_183 = arith.constant dense<0.000000e+00> : vector<16xf32>
    %515 = vector.multi_reduction <add>, %514, %cst_183 [1] : vector<16x32xf32> to vector<16xf32>
    %516 = vector.shape_cast %515 : vector<16xf32> to vector<16x1xf32>
    %cst_184 = arith.constant 0.0322580636 : f32
    %517 = vector.broadcast %cst_184 : f32 to vector<16x1xf32>
    %518 = arith.mulf %516, %517 : vector<16x1xf32>
    %519 = math.sqrt %518 : vector<16x1xf32>
    %cst_185 = arith.constant 9.99999997E-7 : f32
    %520 = vector.broadcast %cst_185 : f32 to vector<16x1xf32>
    %521 = arith.addf %519, %520 : vector<16x1xf32>
    %cst_186 = arith.constant 1.000000e+00 : f32
    %522 = vector.broadcast %cst_186 : f32 to vector<16x1xf32>
    %523 = arith.divf %522, %521 : vector<16x1xf32>
    %524 = vector.broadcast %511 : vector<16x1xf32> to vector<16x32xf32>
    %525 = arith.subf %507, %524 : vector<16x32xf32>
    %526 = vector.broadcast %479 : vector<1x32xf32> to vector<16x32xf32>
    %527 = arith.mulf %526, %525 : vector<16x32xf32>
    %528 = vector.broadcast %523 : vector<16x1xf32> to vector<16x32xf32>
    %529 = arith.mulf %527, %528 : vector<16x32xf32>
    %530 = vector.broadcast %480 : vector<1x32xf32> to vector<16x32xf32>
    %531 = arith.addf %529, %530 : vector<16x32xf32>
    %c0_187 = arith.constant 0 : index
    %c0_188 = arith.constant 0 : index
    %532 = vector.load %arg10[%c0_187, %c0_188] : memref<16x32xf32, #tpu.memory_space<vmem>>, vector<16x32xf32>
    tpu.vector_store %arg10[%c0_187, %c0_188], %531 {strides = array<i32>} : memref<16x32xf32, #tpu.memory_space<vmem>>, vector<16x32xf32>,
    %c0_189 = arith.constant 0 : index
    %c1152 = arith.constant 1152 : index
    %533 = vector.load %arg7[%c0_189, %c1152] : memref<32x1280xf32, #tpu.memory_space<vmem>>, vector<32x128xf32>
    %c24 = arith.constant 24 : index
    %c0_190 = arith.constant 0 : index
    %534 = vector.load %arg9[%c24, %c0_190] : memref<28x128xf32, #tpu.memory_space<vmem>>, vector<1x128xf32>
    %c0_191 = arith.constant 0 : index
    %c384_192 = arith.constant 384 : index
    %535 = vector.load %arg8[%c0_191, %c384_192] : memref<128x512xf32, #tpu.memory_space<vmem>>, vector<128x12xf32>
    %c25 = arith.constant 25 : index
    %c0_193 = arith.constant 0 : index
    %536 = vector.load %arg9[%c25, %c0_193] : memref<28x128xf32, #tpu.memory_space<vmem>>, vector<1x12xf32>
    %c26 = arith.constant 26 : index
    %c0_194 = arith.constant 0 : index
    %537 = vector.load %arg9[%c26, %c0_194] : memref<28x128xf32, #tpu.memory_space<vmem>>, vector<1x32xf32>
    %c27 = arith.constant 27 : index
    %c0_195 = arith.constant 0 : index
    %538 = vector.load %arg9[%c27, %c0_195] : memref<28x128xf32, #tpu.memory_space<vmem>>, vector<1x32xf32>
    %cst_196 = arith.constant dense<0.000000e+00> : vector<24x128xf32>
    %539 = tpu.matmul %468, %533, %cst_196 {dimension_numbers = #tpu.dot_dimension_numbers<[1], [0], [0], [1], [0, 0, 1, 1], [], []>} : vector<24x32xf32>, vector<32x128xf32>, vector<24x128xf32> -> vector<24x128xf32>
    %540 = vector.broadcast %534 : vector<1x128xf32> to vector<24x128xf32>
    %541 = arith.addf %539, %540 : vector<24x128xf32>
    %cst_197 = arith.constant 0.000000e+00 : f32
    %542 = vector.broadcast %cst_197 : f32 to vector<24x128xf32>
    %543 = arith.maximumf %541, %542 : vector<24x128xf32>
    %cst_198 = arith.constant dense<0.000000e+00> : vector<24x12xf32>
    %544 = tpu.matmul %543, %535, %cst_198 {dimension_numbers = #tpu.dot_dimension_numbers<[1], [0], [0], [1], [0, 0, 1, 1], [], []>} : vector<24x128xf32>, vector<128x12xf32>, vector<24x12xf32> -> vector<24x12xf32>
    %545 = vector.broadcast %536 : vector<1x12xf32> to vector<24x12xf32>
    %546 = arith.addf %544, %545 : vector<24x12xf32>
    %547 = vector.shape_cast %546 : vector<24x12xf32> to vector<2x12x12xf32>
    %cst_199 = arith.constant -1.000000e+09 : f32
    %548 = vector.shape_cast %474 : vector<2x12x1xi1> to vector<2x12x1xi1>
    %549 = vector.broadcast %548 : vector<2x12x1xi1> to vector<2x12x12xi1>
    %550 = vector.broadcast %cst_199 : f32 to vector<2x12x12xf32>
    %551 = arith.select %549, %550, %547 : vector<2x12x12xi1>, vector<2x12x12xf32>
    %cst_200 = arith.constant dense<0xFF800000> : vector<2x12xf32>
    %552 = vector.multi_reduction <maximumf>, %551, %cst_200 [1] : vector<2x12x12xf32> to vector<2x12xf32>
    %553 = vector.shape_cast %552 : vector<2x12xf32> to vector<2x1x12xf32>
    %554 = vector.broadcast %553 : vector<2x1x12xf32> to vector<2x12x12xf32>
    %555 = arith.subf %551, %554 : vector<2x12x12xf32>
    %556 = math.exp %555 : vector<2x12x12xf32>
    %cst_201 = arith.constant dense<0.000000e+00> : vector<2x12xf32>
    %557 = vector.multi_reduction <add>, %556, %cst_201 [1] : vector<2x12x12xf32> to vector<2x12xf32>
    %558 = vector.shape_cast %557 : vector<2x12xf32> to vector<2x1x12xf32>
    %559 = vector.broadcast %558 : vector<2x1x12xf32> to vector<2x12x12xf32>
    %560 = arith.divf %556, %559 : vector<2x12x12xf32>
    %561 = vector.shape_cast %468 : vector<24x32xf32> to vector<2x12x32xf32>
    %562 = tpu.transpose %560, [0, 2, 1] : vector<2x12x12xf32> -> vector<2x12x12xf32>
    "tpu.trace_start"() <{level = 10 : i32, message = "bgs,bsh->bgh"}> : () -> ()
    %cst_202 = arith.constant dense<0.000000e+00> : vector<2x12x32xf32>
    %563 = tpu.matmul %562, %561, %cst_202 {dimension_numbers = #tpu.dot_dimension_numbers<[2], [1], [1], [2], [0, 0, 0, 1, 1, 2], [0], [0]>} : vector<2x12x12xf32>, vector<2x12x32xf32>, vector<2x12x32xf32> -> vector<2x12x32xf32>
    "tpu.trace_stop"() : () -> ()
    %564 = arith.addf %561, %563 : vector<2x12x32xf32>
    %565 = vector.shape_cast %564 : vector<2x12x32xf32> to vector<24x32xf32>
    %cst_203 = arith.constant dense<0.000000e+00> : vector<24xf32>
    %566 = vector.multi_reduction <add>, %565, %cst_203 [1] : vector<24x32xf32> to vector<24xf32>
    %567 = vector.shape_cast %566 : vector<24xf32> to vector<24x1xf32>
    %cst_204 = arith.constant 3.200000e+01 : f32
    %568 = vector.broadcast %cst_204 : f32 to vector<24x1xf32>
    %569 = arith.divf %567, %568 : vector<24x1xf32>
    %570 = vector.broadcast %569 : vector<24x1xf32> to vector<24x32xf32>
    %571 = arith.subf %565, %570 : vector<24x32xf32>
    %572 = arith.mulf %571, %571 : vector<24x32xf32>
    %cst_205 = arith.constant dense<0.000000e+00> : vector<24xf32>
    %573 = vector.multi_reduction <add>, %572, %cst_205 [1] : vector<24x32xf32> to vector<24xf32>
    %574 = vector.shape_cast %573 : vector<24xf32> to vector<24x1xf32>
    %cst_206 = arith.constant 0.0322580636 : f32
    %575 = vector.broadcast %cst_206 : f32 to vector<24x1xf32>
    %576 = arith.mulf %574, %575 : vector<24x1xf32>
    %577 = math.sqrt %576 : vector<24x1xf32>
    %cst_207 = arith.constant 9.99999997E-7 : f32
    %578 = vector.broadcast %cst_207 : f32 to vector<24x1xf32>
    %579 = arith.addf %577, %578 : vector<24x1xf32>
    %cst_208 = arith.constant 1.000000e+00 : f32
    %580 = vector.broadcast %cst_208 : f32 to vector<24x1xf32>
    %581 = arith.divf %580, %579 : vector<24x1xf32>
    %582 = vector.broadcast %569 : vector<24x1xf32> to vector<24x32xf32>
    %583 = arith.subf %565, %582 : vector<24x32xf32>
    %584 = vector.broadcast %537 : vector<1x32xf32> to vector<24x32xf32>
    %585 = arith.mulf %584, %583 : vector<24x32xf32>
    %586 = vector.broadcast %581 : vector<24x1xf32> to vector<24x32xf32>
    %587 = arith.mulf %585, %586 : vector<24x32xf32>
    %588 = vector.broadcast %538 : vector<1x32xf32> to vector<24x32xf32>
    %589 = arith.addf %587, %588 : vector<24x32xf32>
    %c0_209 = arith.constant 0 : index
    %c0_210 = arith.constant 0 : index
    %590 = vector.load %arg11[%c0_209, %c0_210] : memref<24x32xf32, #tpu.memory_space<vmem>>, vector<24x32xf32>
    tpu.vector_store %arg11[%c0_209, %c0_210], %589 {strides = array<i32>} : memref<24x32xf32, #tpu.memory_space<vmem>>, vector<24x32xf32>,
    return
  }
  func.func @transform_0(%arg0: i32) -> (i32, i32) {
    %c0_i32 = arith.constant 0 : i32
    %c0_i32_0 = arith.constant 0 : i32
    return %arg0, %c0_i32 : i32, i32
  }
  func.func @transform_1(%arg0: i32) -> (i32, i32) {
    %c0_i32 = arith.constant 0 : i32
    %c0_i32_0 = arith.constant 0 : i32
    return %arg0, %c0_i32 : i32, i32
  }
  func.func @transform_2(%arg0: i32) -> (i32, i32, i32) {
    %c0_i32 = arith.constant 0 : i32
    %c0_i32_0 = arith.constant 0 : i32
    %c0_i32_1 = arith.constant 0 : i32
    return %arg0, %c0_i32, %c0_i32_0 : i32, i32, i32
  }
  func.func @transform_3(%arg0: i32) -> (i32, i32, i32) {
    %c0_i32 = arith.constant 0 : i32
    %c0_i32_0 = arith.constant 0 : i32
    %c0_i32_1 = arith.constant 0 : i32
    return %arg0, %c0_i32, %c0_i32_0 : i32, i32, i32
  }
  func.func @transform_4(%arg0: i32) -> (i32, i32, i32) {
    %c0_i32 = arith.constant 0 : i32
    %c0_i32_0 = arith.constant 0 : i32
    %c0_i32_1 = arith.constant 0 : i32
    return %arg0, %c0_i32, %c0_i32_0 : i32, i32, i32
  }
  func.func @transform_5(%arg0: i32) -> (i32, i32, i32) {
    %c0_i32 = arith.constant 0 : i32
    %c0_i32_0 = arith.constant 0 : i32
    %c0_i32_1 = arith.constant 0 : i32
    return %arg0, %c0_i32, %c0_i32_0 : i32, i32, i32
  }
  func.func @transform_6(%arg0: i32) -> (i32, i32) {
    %c0_i32 = arith.constant 0 : i32
    %c0_i32_0 = arith.constant 0 : i32
    %c0_i32_1 = arith.constant 0 : i32
    return %c0_i32, %c0_i32_0 : i32, i32
  }
  func.func @transform_7(%arg0: i32) -> (i32, i32) {
    %c0_i32 = arith.constant 0 : i32
    %c0_i32_0 = arith.constant 0 : i32
    %c0_i32_1 = arith.constant 0 : i32
    return %c0_i32, %c0_i32_0 : i32, i32
  }
  func.func @transform_8(%arg0: i32) -> (i32, i32) {
    %c0_i32 = arith.constant 0 : i32
    %c0_i32_0 = arith.constant 0 : i32
    %c0_i32_1 = arith.constant 0 : i32
    return %c0_i32, %c0_i32_0 : i32, i32
  }
  func.func @transform_9(%arg0: i32) -> (i32, i32) {
    %c0_i32 = arith.constant 0 : i32
    %c0_i32_0 = arith.constant 0 : i32
    return %arg0, %c0_i32 : i32, i32
  }
  func.func @transform_10(%arg0: i32) -> (i32, i32) {
    %c0_i32 = arith.constant 0 : i32
    %c0_i32_0 = arith.constant 0 : i32
    return %arg0, %c0_i32 : i32, i32
  }
}

</mosaic_0001>

<llo_original>
// kernel: la_block_forward.1
$region0: #{la_block_forward.1}
  #allocation0 [shape = 'u32[]', space=smem, size = 0x4, offset = 0x4, fixed_abs, tag = 'smem constant byte address 0x4 - core index']
  #allocation1 [shape = 'u32[72,128]{1,0:T(1,128)}', space=vmem, size = 0x9000, scoped, tag = 'internal scratch']
  %s0 = inlined_call_operand.vmem [shape: f32[16,32], index: 0, kind: input, shape index: {}]
  %s1 = inlined_call_operand.vmem [shape: f32[24,32], index: 1, kind: input, shape index: {}]
  %s2 = inlined_call_operand.vmem [shape: f32[2,1,8], index: 2, kind: input, shape index: {}]
  %s3 = inlined_call_operand.vmem [shape: f32[2,1,12], index: 3, kind: input, shape index: {}]
  %s4 = inlined_call_operand.vmem [shape: f32[2,8,1], index: 4, kind: input, shape index: {}]
  %s5 = inlined_call_operand.vmem [shape: f32[2,12,1], index: 5, kind: input, shape index: {}]
  %s6 = inlined_call_operand.hbm [shape: f32[32,1280], index: 6, kind: input, shape index: {}]
  %s7 = inlined_call_operand.hbm [shape: f32[128,512], index: 7, kind: input, shape index: {}]
  %s8 = inlined_call_operand.vmem [shape: f32[28,128], index: 8, kind: input, shape index: {}]
  %s9 = inlined_call_operand.hbm [shape: f32[16,32], index: 9, kind: output, shape index: {0}]
  %s10 = inlined_call_operand.vmem [shape: f32[24,32], index: 10, kind: output, shape index: {1}]
  %11 = xla_tuple %s9, %s10
  %s12 = sld [smem:[#allocation0]]
  $region62: #{la_block_forward.1} parent=0
    _
  %s14 = ssub.s32 1, %s12
  %s15 = scalar_select 0, %s14, %s12
  $region1: #{la_block_forward.1} parent=0
    #allocation2 [shape = 'u8[163840]{0}', space=vmem, size = 0x28000, scoped, tag = 'input window, operand 6, single buffered']
    #allocation3 [shape = 's32[1]{0}', space=sflag, size = 0x4, scoped, tag = 'scoped memory for la_block_forward.1']
    #allocation4 [shape = 's32[1]{0}', space=sflag, size = 0x4, scoped, tag = 'scoped memory for la_block_forward.1']
    #allocation5 [shape = 'u8[262144]{0}', space=vmem, size = 0x40000, scoped, tag = 'input window, operand 7, single buffered']
    #allocation6 [shape = 's32[1]{0}', space=sflag, size = 0x4, scoped, tag = 'scoped memory for la_block_forward.1']
    #allocation7 [shape = 'u8[8192]{0}', space=vmem, size = 0x2000, scoped, tag = 'output window, operand 0, single buffered']
    %16 = vsyncpa [#allocation3], 0
    %17 = vsyncpa [#allocation6], 0
    %18 = vsyncpa [#allocation4], 0
    // Predicated region
    $region2: #{la_block_forward.1} parent=1 // pred_check
      _
    $region3: #{la_block_forward.1} parent=1 // pred_check_branch
      %20 = sbr.rel (0) target = $region5
    $region4: #{la_block_forward.1} parent=1 // pred_region
      _
    $region5: #{la_block_forward.1} parent=1 // pred_fallthru
      _
    // Predicated region
    $region6: #{la_block_forward.1} parent=1 // pred_check
      _
    $region7: #{la_block_forward.1} parent=1 // pred_check_branch
      %22 = sbr.rel (0) target = $region9
    $region8: #{la_block_forward.1} parent=1 // pred_region
      _
    $region9: #{la_block_forward.1} parent=1 // pred_fallthru
      _
    // Predicated region
    $region10: #{la_block_forward.1} parent=1 // pred_check
      _
    $region11: #{la_block_forward.1} parent=1 // pred_check_branch
      %24 = sbr.rel (0) target = $region13
    $region12: #{la_block_forward.1} parent=1 // pred_region
      _
    $region13: #{la_block_forward.1} parent=1 // pred_fallthru
      _
    // Predicated region
    $region14: #{la_block_forward.1} parent=1 // pred_check
      _
    $region15: #{la_block_forward.1} parent=1 // pred_check_branch
      %26 = sbr.rel (0) target = $region17
    $region16: #{la_block_forward.1} parent=1 // pred_region
      _
    $region17: #{la_block_forward.1} parent=1 // pred_fallthru
      _
    // Predicated region
    $region18: #{la_block_forward.1} parent=1 // pred_check
      _
    $region19: #{la_block_forward.1} parent=1 // pred_check_branch
      %28 = sbr.rel (0) target = $region21
    $region20: #{la_block_forward.1} parent=1 // pred_region
      _
    $region21: #{la_block_forward.1} parent=1 // pred_fallthru
      _
    // Predicated region
    $region22: #{la_block_forward.1} parent=1 // pred_check
      _
    $region23: #{la_block_forward.1} parent=1 // pred_check_branch
      %30 = sbr.rel (0) target = $region25
    $region24: #{la_block_forward.1} parent=1 // pred_region
      _
    $region25: #{la_block_forward.1} parent=1 // pred_fallthru
      _
    // Predicated region
    $region26: #{la_block_forward.1} parent=1 // pred_check
      _
    $region27: #{la_block_forward.1} parent=1 // pred_check_branch
      %32 = sbr.rel (0) target = $region29
    $region28: #{la_block_forward.1} parent=1 // pred_region
      %34 = vsyncadd [#allocation3], 0
      %s35 = sshll.u32 %s6, 4
      %s36 = int_to_ptr.hbm [resolvable:$true] %s35
      %s37 = sshll.u32 [#allocation2], 4
      %s38 = int_to_ptr.vmem [resolvable:$true] %s37
      %43 = dma.hbm_to_vmem [thread:$0]  %s36, 5120, %s38, [#allocation3], 1280, 1280, 80
    $region29: #{la_block_forward.1} parent=1 // pred_fallthru
      _
    // Predicated region
    $region30: #{la_block_forward.1} parent=1 // pred_check
      _
    $region31: #{la_block_forward.1} parent=1 // pred_check_branch
      %45 = sbr.rel (0) target = $region33
    $region32: #{la_block_forward.1} parent=1 // pred_region
      %47 = vsyncadd [#allocation6], 0
      %s48 = sshll.u32 %s7, 4
      %s49 = int_to_ptr.hbm [resolvable:$true] %s48
      %s50 = sshll.u32 [#allocation5], 4
      %s51 = int_to_ptr.vmem [resolvable:$true] %s50
      %56 = dma.hbm_to_vmem [thread:$0]  %s49, 8192, %s51, [#allocation6], 512, 512, 32
    $region33: #{la_block_forward.1} parent=1 // pred_fallthru
      _
    // Predicated region
    $region34: #{la_block_forward.1} parent=1 // pred_check
      _
    $region35: #{la_block_forward.1} parent=1 // pred_check_branch
      %58 = sbr.rel (0) target = $region37
    $region36: #{la_block_forward.1} parent=1 // pred_region
      _
    $region37: #{la_block_forward.1} parent=1 // pred_fallthru
      _
    // Predicated region
    $region38: #{la_block_forward.1} parent=1 // pred_check
      _
    $region39: #{la_block_forward.1} parent=1 // pred_check_branch
      %60 = sbr.rel (0) target = $region41
    $region40: #{la_block_forward.1} parent=1 // pred_region
      %62 = dma.done [#allocation3], 5120
    $region41: #{la_block_forward.1} parent=1 // pred_fallthru
      _
    // Predicated region
    $region42: #{la_block_forward.1} parent=1 // pred_check
      _
    $region43: #{la_block_forward.1} parent=1 // pred_check_branch
      %64 = sbr.rel (0) target = $region45
    $region44: #{la_block_forward.1} parent=1 // pred_region
      %66 = dma.done [#allocation6], 8192
    $region45: #{la_block_forward.1} parent=1 // pred_fallthru
      _
    %v67 = vld [vmem:[%s0] sm:$0xff]
    %v68 = vld [vmem:[%s0 + $0x8] sm:$0xff]
    %v69 = vld [vmem:[%s1] sm:$0xff]
    %v70 = vld [vmem:[%s1 + $0x8] sm:$0xff]
    %v71 = vld [vmem:[%s1 + $0x10] sm:$0xff]
    %v72 = vld [vmem:[%s2] sm:$0x1]
    %v73 = vld [vmem:[%s2 + $0x1] sm:$0x1]
    %vm74 = vcmp.gt.f32.partialorder %v72, 0.5
    %vm75 = vcmp.gt.f32.partialorder %v73, 0.5
    %v76 = vld [vmem:[%s3] sm:$0x1]
    %v77 = vld [vmem:[%s3 + $0x1] sm:$0x1]
    %vm78 = vcmp.gt.f32.partialorder %v76, 0.5
    %vm79 = vcmp.gt.f32.partialorder %v77, 0.5
    %v80 = vld [vmem:[#allocation2] sm:$0xff]
    %v81 = vld [vmem:[#allocation2 + $0x50] sm:$0xff]
    %v82 = vld [vmem:[#allocation2 + $0xa0] sm:$0xff]
    %v83 = vld [vmem:[#allocation2 + $0xf0] sm:$0xff]
    %v84 = vld [vmem:[%s8] sm:$0x1]
    %v85 = vld [vmem:[#allocation2 + $0x8] sm:$0xff]
    %v86 = vld [vmem:[#allocation2 + $0x58] sm:$0xff]
    %v87 = vld [vmem:[#allocation2 + $0xa8] sm:$0xff]
    %v88 = vld [vmem:[#allocation2 + $0xf8] sm:$0xff]
    %v89 = vld [vmem:[%s8 + $0x1] sm:$0x1]
    %v90 = vld [vmem:[%s8 + $0x2] sm:$0x1]
    %v91 = vld [vmem:[%s8 + $0x3] sm:$0x1]
    %v92 = vperm.slane %v84, 0
    %vm93 = vcmask 261120
    %v95 = vsel %vm93, %v67, 0
    %v98 = vsel %vm93, %v68, 0
    %100 = vmatpush.msra.mxu0 0.0
    %101 = vmatpush.msra.mxu0 0.0
    %102 = vmatpush.msra.mxu0 0.0
    %103 = vmatpush.msra.mxu0 0.0
    %104 = vmatpush.msra.mxu0 0.0
    %105 = vmatpush.msra.mxu0 0.0
    %106 = vmatpush.msra.mxu0 0.0
    %107 = vmatpush.msra.mxu0 0.0
    %108 = vmatpush.msra.mxu0 0.0
    %109 = vmatpush.msra.mxu0 0.0
    %110 = vmatpush.msra.mxu0 0.0
    %111 = vmatpush.msra.mxu0 0.0
    %112 = vmatpush.msra.mxu0 %v83
    %113 = vmatpush.msra.mxu0 %v82
    %114 = vmatpush.msra.mxu0 %v81
    %115 = vmatpush.msra.mxu0 %v80
    %116 = vmatmul.f32.gmra.mxu0 %v95
    %v117 = vpop.f32.mrf.mxu0
    %v118 = vadd.f32 %v92, %v117
    %119 = vmatmul.f32.gmra.mxu0 %v98
    %v120 = vpop.f32.mrf.mxu0
    %v121 = vadd.f32 %v92, %v120
    %122 = vdwg.mxu0
    %124 = vrot.lane.b32.xlu0 %v118, 96
    %v125 = vpop.permute.xlu0 %124
    %vm126 = vcmask 64512
    %v127 = vsel %vm126, %v118, 0
    %v129 = vsel %vm126, %v125, 0
    %131 = vmatpush.xpose.msra.mxu0 0.0
    %132 = vmatpush.xpose.msra.mxu0 0.0
    %133 = vmatpush.xpose.msra.mxu0 0.0
    %134 = vmatpush.xpose.msra.mxu0 0.0
    %135 = vmatpush.xpose.msra.mxu0 0.0
    %136 = vmatpush.xpose.msra.mxu0 0.0
    %137 = vmatpush.xpose.msra.mxu0 0.0
    %138 = vmatpush.xpose.msra.mxu0 0.0
    %139 = vmatpush.xpose.msra.mxu0 0.0
    %140 = vmatpush.xpose.msra.mxu0 0.0
    %141 = vmatpush.xpose.msra.mxu0 0.0
    %142 = vmatpush.xpose.msra.mxu0 0.0
    %143 = vmatpush.xpose.msra.mxu0 0.0
    %144 = vmatpush.xpose.msra.mxu0 0.0
    %145 = vmatpush.xpose.msra.mxu0 0.0
    %146 = vmatpush.xpose.msra.mxu0 %v129
    %147 = vmatmul.f32.gmra.mxu0 %v127
    %v148 = vpop.f32.mrf.mxu0
    %v149 = vadd.f32 0.0, %v148
    %150 = vdwg.mxu0
    %152 = vrot.lane.b32.xlu0 %v121, 96
    %v153 = vpop.permute.xlu0 %152
    %v154 = vsel %vm126, %v121, 0
    %v156 = vsel %vm126, %v153, 0
    %158 = vmatpush.xpose.msra.mxu0 0.0
    %159 = vmatpush.xpose.msra.mxu0 0.0
    %160 = vmatpush.xpose.msra.mxu0 0.0
    %161 = vmatpush.xpose.msra.mxu0 0.0
    %162 = vmatpush.xpose.msra.mxu0 0.0
    %163 = vmatpush.xpose.msra.mxu0 0.0
    %164 = vmatpush.xpose.msra.mxu0 0.0
    %165 = vmatpush.xpose.msra.mxu0 0.0
    %166 = vmatpush.xpose.msra.mxu0 0.0
    %167 = vmatpush.xpose.msra.mxu0 0.0
    %168 = vmatpush.xpose.msra.mxu0 0.0
    %169 = vmatpush.xpose.msra.mxu0 0.0
    %170 = vmatpush.xpose.msra.mxu0 0.0
    %171 = vmatpush.xpose.msra.mxu0 0.0
    %172 = vmatpush.xpose.msra.mxu0 0.0
    %173 = vmatpush.xpose.msra.mxu0 %v156
    %174 = vmatmul.f32.gmra.mxu0 %v154
    %v175 = vpop.f32.mrf.mxu0
    %v176 = vadd.f32 0.0, %v175
    %177 = vdwg.mxu0
    %v178 = vmul.f32 %v149, 0.35355338
    %v179 = vmul.f32 %v176, 0.35355338
    %v180 = vsel %vm74, 1, 0
    %v181 = vsel %vm75, 1, 0
    %v182 = vperm.slane %v180, 0
    %v183 = vperm.slane %v181, 0
    %vm184 = vcmp.eq.s32.totalorder %v182, 1
    %vm185 = vcmp.eq.s32.totalorder %v183, 1
    %v186 = vsel %vm184, -1e+09, %v178
    %v187 = vsel %vm185, -1e+09, %v179
    %v188 = vsel %vm126, %v186, -inf
    %189 = vmax.xlane.f32.xlu0 %v188
    %v190 = vpop.xlane.xlu0 %189
    %v191 = vsel %vm126, %v187, -inf
    %192 = vmax.xlane.f32.xlu0 %v191
    %v193 = vpop.xlane.xlu0 %192
    %v194 = vsub.f32 %v186, %v190
    %v195 = vsub.f32 %v187, %v193
    %v196 = vmul.f32 %v194, 1.442695
    %v197 = vpow.pop %v196
    %v198 = vmul.f32 %v195, 1.442695
    %v199 = vpow.pop %v198
    %v200 = vsel %vm126, %v197, 0.0
    %201 = vadd.xlane.f32.xlu0 %v200
    %v202 = vpop.xlane.xlu0 %201
    %v203 = vsel %vm126, %v199, 0.0
    %204 = vadd.xlane.f32.xlu0 %v203
    %v205 = vpop.xlane.xlu0 %204
    %v206 = vrcp.pop %v202
    %v207 = vmul.f32 %v202, %v206
    %v208 = vsub.f32 1.0, %v207
    %v209 = vmul.f32 %v206, %v208
    %v210 = vadd.f32 %v206, %v209
    %vm211 = vweird.f32 %v202
    %vm212 = vweird.f32 %v206
    %vm213 = vmor %vm211, %vm212
    %v214 = vsel %vm213, %v206, %v210
    %v215 = vand.u32 2147483647, %v202
    %vm216 = vcmp.eq.f32.partialorder %v215, 8.507059e+37
    %v217 = vand.u32 %v202, 2147483648
    %v218 = vor.u32 1.1754944e-38, %v217
    %v219 = vsel %vm216, %v218, %v214
    %v220 = vmul.f32 %v197, %v219
    %v221 = vrcp.pop %v205
    %v222 = vmul.f32 %v205, %v221
    %v223 = vsub.f32 1.0, %v222
    %v224 = vmul.f32 %v221, %v223
    %v225 = vadd.f32 %v221, %v224
    %vm226 = vweird.f32 %v205
    %vm227 = vweird.f32 %v221
    %vm228 = vmor %vm226, %vm227
    %v229 = vsel %vm228, %v221, %v225
    %v230 = vand.u32 2147483647, %v205
    %vm231 = vcmp.eq.f32.partialorder %v230, 8.507059e+37
    %v232 = vand.u32 %v205, 2147483648
    %v233 = vor.u32 1.1754944e-38, %v232
    %v234 = vsel %vm231, %v233, %v229
    %v235 = vmul.f32 %v199, %v234
    %236 = vrot.lane.b32.xlu0 %v118, 64
    %v237 = vpop.permute.xlu0 %236
    %v240 = vsel %vm126, %v220, 0
    %242 = vmatpush.msra.mxu0 0.0
    %243 = vmatpush.msra.mxu0 0.0
    %244 = vmatpush.msra.mxu0 0.0
    %245 = vmatpush.msra.mxu0 0.0
    %246 = vmatpush.msra.mxu0 0.0
    %247 = vmatpush.msra.mxu0 0.0
    %248 = vmatpush.msra.mxu0 0.0
    %249 = vmatpush.msra.mxu0 0.0
    %250 = vmatpush.msra.mxu0 0.0
    %251 = vmatpush.msra.mxu0 0.0
    %252 = vmatpush.msra.mxu0 0.0
    %253 = vmatpush.msra.mxu0 0.0
    %254 = vmatpush.msra.mxu0 0.0
    %255 = vmatpush.msra.mxu0 0.0
    %256 = vmatpush.msra.mxu0 0.0
    %257 = vmatpush.msra.mxu0 %v237
    %258 = vmatmul.f32.gmra.mxu0 %v240
    %v259 = vpop.f32.mrf.mxu0
    %v260 = vadd.f32 0.0, %v259
    %261 = vdwg.mxu0
    %262 = vrot.lane.b32.xlu0 %v121, 64
    %v263 = vpop.permute.xlu0 %262
    %v266 = vsel %vm126, %v235, 0
    %268 = vmatpush.msra.mxu0 0.0
    %269 = vmatpush.msra.mxu0 0.0
    %270 = vmatpush.msra.mxu0 0.0
    %271 = vmatpush.msra.mxu0 0.0
    %272 = vmatpush.msra.mxu0 0.0
    %273 = vmatpush.msra.mxu0 0.0
    %274 = vmatpush.msra.mxu0 0.0
    %275 = vmatpush.msra.mxu0 0.0
    %276 = vmatpush.msra.mxu0 0.0
    %277 = vmatpush.msra.mxu0 0.0
    %278 = vmatpush.msra.mxu0 0.0
    %279 = vmatpush.msra.mxu0 0.0
    %280 = vmatpush.msra.mxu0 0.0
    %281 = vmatpush.msra.mxu0 0.0
    %282 = vmatpush.msra.mxu0 0.0
    %283 = vmatpush.msra.mxu0 %v263
    %284 = vmatmul.f32.gmra.mxu0 %v266
    %v285 = vpop.f32.mrf.mxu0
    %v286 = vadd.f32 0.0, %v285
    %287 = vdwg.mxu0
    %288 = vrot.lane.b32.xlu0 %v118, 120
    %v289 = vpop.permute.xlu0 %288
    %290 = vrot.lane.b32.xlu0 %v118, 88
    %v291 = vpop.permute.xlu0 %290
    %v292 = vsel %vm126, %v289, 0
    %v294 = vsel %vm126, %v291, 0
    %296 = vmatpush.xpose.msra.mxu0 0.0
    %297 = vmatpush.xpose.msra.mxu0 0.0
    %298 = vmatpush.xpose.msra.mxu0 0.0
    %299 = vmatpush.xpose.msra.mxu0 0.0
    %300 = vmatpush.xpose.msra.mxu0 0.0
    %301 = vmatpush.xpose.msra.mxu0 0.0
    %302 = vmatpush.xpose.msra.mxu0 0.0
    %303 = vmatpush.xpose.msra.mxu0 0.0
    %304 = vmatpush.xpose.msra.mxu0 0.0
    %305 = vmatpush.xpose.msra.mxu0 0.0
    %306 = vmatpush.xpose.msra.mxu0 0.0
    %307 = vmatpush.xpose.msra.mxu0 0.0
    %308 = vmatpush.xpose.msra.mxu0 0.0
    %309 = vmatpush.xpose.msra.mxu0 0.0
    %310 = vmatpush.xpose.msra.mxu0 0.0
    %311 = vmatpush.xpose.msra.mxu0 %v294
    %312 = vmatmul.f32.gmra.mxu0 %v292
    %v313 = vpop.f32.mrf.mxu0
    %v314 = vadd.f32 0.0, %v313
    %315 = vdwg.mxu0
    %316 = vrot.lane.b32.xlu0 %v121, 120
    %v317 = vpop.permute.xlu0 %316
    %318 = vrot.lane.b32.xlu0 %v121, 88
    %v319 = vpop.permute.xlu0 %318
    %v320 = vsel %vm126, %v317, 0
    %v322 = vsel %vm126, %v319, 0
    %324 = vmatpush.xpose.msra.mxu0 0.0
    %325 = vmatpush.xpose.msra.mxu0 0.0
    %326 = vmatpush.xpose.msra.mxu0 0.0
    %327 = vmatpush.xpose.msra.mxu0 0.0
    %328 = vmatpush.xpose.msra.mxu0 0.0
    %329 = vmatpush.xpose.msra.mxu0 0.0
    %330 = vmatpush.xpose.msra.mxu0 0.0
    %331 = vmatpush.xpose.msra.mxu0 0.0
    %332 = vmatpush.xpose.msra.mxu0 0.0
    %333 = vmatpush.xpose.msra.mxu0 0.0
    %334 = vmatpush.xpose.msra.mxu0 0.0
    %335 = vmatpush.xpose.msra.mxu0 0.0
    %336 = vmatpush.xpose.msra.mxu0 0.0
    %337 = vmatpush.xpose.msra.mxu0 0.0
    %338 = vmatpush.xpose.msra.mxu0 0.0
    %339 = vmatpush.xpose.msra.mxu0 %v322
    %340 = vmatmul.f32.gmra.mxu0 %v320
    %v341 = vpop.f32.mrf.mxu0
    %v342 = vadd.f32 0.0, %v341
    %343 = vdwg.mxu0
    %v344 = vmul.f32 %v314, 0.35355338
    %v345 = vmul.f32 %v342, 0.35355338
    %v346 = vsel %vm184, -1e+09, %v344
    %v347 = vsel %vm185, -1e+09, %v345
    %v348 = vsel %vm126, %v346, -inf
    %349 = vmax.xlane.f32.xlu0 %v348
    %v350 = vpop.xlane.xlu0 %349
    %v351 = vsel %vm126, %v347, -inf
    %352 = vmax.xlane.f32.xlu0 %v351
    %v353 = vpop.xlane.xlu0 %352
    %v354 = vsub.f32 %v346, %v350
    %v355 = vsub.f32 %v347, %v353
    %v356 = vmul.f32 %v354, 1.442695
    %v357 = vpow.pop %v356
    %v358 = vmul.f32 %v355, 1.442695
    %v359 = vpow.pop %v358
    %v360 = vsel %vm126, %v357, 0.0
    %361 = vadd.xlane.f32.xlu0 %v360
    %v362 = vpop.xlane.xlu0 %361
    %v363 = vsel %vm126, %v359, 0.0
    %364 = vadd.xlane.f32.xlu0 %v363
    %v365 = vpop.xlane.xlu0 %364
    %v366 = vrcp.pop %v362
    %v367 = vmul.f32 %v362, %v366
    %v368 = vsub.f32 1.0, %v367
    %v369 = vmul.f32 %v366, %v368
    %v370 = vadd.f32 %v366, %v369
    %vm371 = vweird.f32 %v362
    %vm372 = vweird.f32 %v366
    %vm373 = vmor %vm371, %vm372
    %v374 = vsel %vm373, %v366, %v370
    %v375 = vand.u32 2147483647, %v362
    %vm376 = vcmp.eq.f32.partialorder %v375, 8.507059e+37
    %v377 = vand.u32 %v362, 2147483648
    %v378 = vor.u32 1.1754944e-38, %v377
    %v379 = vsel %vm376, %v378, %v374
    %v380 = vmul.f32 %v357, %v379
    %v381 = vrcp.pop %v365
    %v382 = vmul.f32 %v365, %v381
    %v383 = vsub.f32 1.0, %v382
    %v384 = vmul.f32 %v381, %v383
    %v385 = vadd.f32 %v381, %v384
    %vm386 = vweird.f32 %v365
    %vm387 = vweird.f32 %v381
    %vm388 = vmor %vm386, %vm387
    %v389 = vsel %vm388, %v381, %v385
    %v390 = vand.u32 2147483647, %v365
    %vm391 = vcmp.eq.f32.partialorder %v390, 8.507059e+37
    %v392 = vand.u32 %v365, 2147483648
    %v393 = vor.u32 1.1754944e-38, %v392
    %v394 = vsel %vm391, %v393, %v389
    %v395 = vmul.f32 %v359, %v394
    %396 = vrot.lane.b32.xlu0 %v118, 56
    %v397 = vpop.permute.xlu0 %396
    %v400 = vsel %vm126, %v380, 0
    %402 = vmatpush.msra.mxu0 0.0
    %403 = vmatpush.msra.mxu0 0.0
    %404 = vmatpush.msra.mxu0 0.0
    %405 = vmatpush.msra.mxu0 0.0
    %406 = vmatpush.msra.mxu0 0.0
    %407 = vmatpush.msra.mxu0 0.0
    %408 = vmatpush.msra.mxu0 0.0
    %409 = vmatpush.msra.mxu0 0.0
    %410 = vmatpush.msra.mxu0 0.0
    %411 = vmatpush.msra.mxu0 0.0
    %412 = vmatpush.msra.mxu0 0.0
    %413 = vmatpush.msra.mxu0 0.0
    %414 = vmatpush.msra.mxu0 0.0
    %415 = vmatpush.msra.mxu0 0.0
    %416 = vmatpush.msra.mxu0 0.0
    %417 = vmatpush.msra.mxu0 %v397
    %418 = vmatmul.f32.gmra.mxu0 %v400
    %v419 = vpop.f32.mrf.mxu0
    %v420 = vadd.f32 0.0, %v419
    %421 = vdwg.mxu0
    %422 = vrot.lane.b32.xlu0 %v121, 56
    %v423 = vpop.permute.xlu0 %422
    %v426 = vsel %vm126, %v395, 0
    %428 = vmatpush.msra.mxu0 0.0
    %429 = vmatpush.msra.mxu0 0.0
    %430 = vmatpush.msra.mxu0 0.0
    %431 = vmatpush.msra.mxu0 0.0
    %432 = vmatpush.msra.mxu0 0.0
    %433 = vmatpush.msra.mxu0 0.0
    %434 = vmatpush.msra.mxu0 0.0
    %435 = vmatpush.msra.mxu0 0.0
    %436 = vmatpush.msra.mxu0 0.0
    %437 = vmatpush.msra.mxu0 0.0
    %438 = vmatpush.msra.mxu0 0.0
    %439 = vmatpush.msra.mxu0 0.0
    %440 = vmatpush.msra.mxu0 0.0
    %441 = vmatpush.msra.mxu0 0.0
    %442 = vmatpush.msra.mxu0 0.0
    %443 = vmatpush.msra.mxu0 %v423
    %444 = vmatmul.f32.gmra.mxu0 %v426
    %v445 = vpop.f32.mrf.mxu0
    %v446 = vadd.f32 0.0, %v445
    %447 = vdwg.mxu0
    %448 = vrot.lane.b32.xlu0 %v118, 112
    %v449 = vpop.permute.xlu0 %448
    %450 = vrot.lane.b32.xlu0 %v118, 80
    %v451 = vpop.permute.xlu0 %450
    %v452 = vsel %vm126, %v449, 0
    %v454 = vsel %vm126, %v451, 0
    %456 = vmatpush.xpose.msra.mxu0 0.0
    %457 = vmatpush.xpose.msra.mxu0 0.0
    %458 = vmatpush.xpose.msra.mxu0 0.0
    %459 = vmatpush.xpose.msra.mxu0 0.0
    %460 = vmatpush.xpose.msra.mxu0 0.0
    %461 = vmatpush.xpose.msra.mxu0 0.0
    %462 = vmatpush.xpose.msra.mxu0 0.0
    %463 = vmatpush.xpose.msra.mxu0 0.0
    %464 = vmatpush.xpose.msra.mxu0 0.0
    %465 = vmatpush.xpose.msra.mxu0 0.0
    %466 = vmatpush.xpose.msra.mxu0 0.0
    %467 = vmatpush.xpose.msra.mxu0 0.0
    %468 = vmatpush.xpose.msra.mxu0 0.0
    %469 = vmatpush.xpose.msra.mxu0 0.0
    %470 = vmatpush.xpose.msra.mxu0 0.0
    %471 = vmatpush.xpose.msra.mxu0 %v454
    %472 = vmatmul.f32.gmra.mxu0 %v452
    %v473 = vpop.f32.mrf.mxu0
    %v474 = vadd.f32 0.0, %v473
    %475 = vdwg.mxu0
    %476 = vrot.lane.b32.xlu0 %v121, 112
    %v477 = vpop.permute.xlu0 %476
    %478 = vrot.lane.b32.xlu0 %v121, 80
    %v479 = vpop.permute.xlu0 %478
    %v480 = vsel %vm126, %v477, 0
    %v482 = vsel %vm126, %v479, 0
    %484 = vmatpush.xpose.msra.mxu0 0.0
    %485 = vmatpush.xpose.msra.mxu0 0.0
    %486 = vmatpush.xpose.msra.mxu0 0.0
    %487 = vmatpush.xpose.msra.mxu0 0.0
    %488 = vmatpush.xpose.msra.mxu0 0.0
    %489 = vmatpush.xpose.msra.mxu0 0.0
    %490 = vmatpush.xpose.msra.mxu0 0.0
    %491 = vmatpush.xpose.msra.mxu0 0.0
    %492 = vmatpush.xpose.msra.mxu0 0.0
    %493 = vmatpush.xpose.msra.mxu0 0.0
    %494 = vmatpush.xpose.msra.mxu0 0.0
    %495 = vmatpush.xpose.msra.mxu0 0.0
    %496 = vmatpush.xpose.msra.mxu0 0.0
    %497 = vmatpush.xpose.msra.mxu0 0.0
    %498 = vmatpush.xpose.msra.mxu0 0.0
    %499 = vmatpush.xpose.msra.mxu0 %v482
    %500 = vmatmul.f32.gmra.mxu0 %v480
    %v501 = vpop.f32.mrf.mxu0
    %v502 = vadd.f32 0.0, %v501
    %503 = vdwg.mxu0
    %v504 = vmul.f32 %v474, 0.35355338
    %v505 = vmul.f32 %v502, 0.35355338
    %v506 = vsel %vm184, -1e+09, %v504
    %v507 = vsel %vm185, -1e+09, %v505
    %v508 = vsel %vm126, %v506, -inf
    %509 = vmax.xlane.f32.xlu0 %v508
    %v510 = vpop.xlane.xlu0 %509
    %v511 = vsel %vm126, %v507, -inf
    %512 = vmax.xlane.f32.xlu0 %v511
    %v513 = vpop.xlane.xlu0 %512
    %v514 = vsub.f32 %v506, %v510
    %v515 = vsub.f32 %v507, %v513
    %v516 = vmul.f32 %v514, 1.442695
    %v517 = vpow.pop %v516
    %v518 = vmul.f32 %v515, 1.442695
    %v519 = vpow.pop %v518
    %v520 = vsel %vm126, %v517, 0.0
    %521 = vadd.xlane.f32.xlu0 %v520
    %v522 = vpop.xlane.xlu0 %521
    %v523 = vsel %vm126, %v519, 0.0
    %524 = vadd.xlane.f32.xlu0 %v523
    %v525 = vpop.xlane.xlu0 %524
    %v526 = vrcp.pop %v522
    %v527 = vmul.f32 %v522, %v526
    %v528 = vsub.f32 1.0, %v527
    %v529 = vmul.f32 %v526, %v528
    %v530 = vadd.f32 %v526, %v529
    %vm531 = vweird.f32 %v522
    %vm532 = vweird.f32 %v526
    %vm533 = vmor %vm531, %vm532
    %v534 = vsel %vm533, %v526, %v530
    %v535 = vand.u32 2147483647, %v522
    %vm536 = vcmp.eq.f32.partialorder %v535, 8.507059e+37
    %v537 = vand.u32 %v522, 2147483648
    %v538 = vor.u32 1.1754944e-38, %v537
    %v539 = vsel %vm536, %v538, %v534
    %v540 = vmul.f32 %v517, %v539
    %v541 = vrcp.pop %v525
    %v542 = vmul.f32 %v525, %v541
    %v543 = vsub.f32 1.0, %v542
    %v544 = vmul.f32 %v541, %v543
    %v545 = vadd.f32 %v541, %v544
    %vm546 = vweird.f32 %v525
    %vm547 = vweird.f32 %v541
    %vm548 = vmor %vm546, %vm547
    %v549 = vsel %vm548, %v541, %v545
    %v550 = vand.u32 2147483647, %v525
    %vm551 = vcmp.eq.f32.partialorder %v550, 8.507059e+37
    %v552 = vand.u32 %v525, 2147483648
    %v553 = vor.u32 1.1754944e-38, %v552
    %v554 = vsel %vm551, %v553, %v549
    %v555 = vmul.f32 %v519, %v554
    %556 = vrot.lane.b32.xlu0 %v118, 48
    %v557 = vpop.permute.xlu0 %556
    %v560 = vsel %vm126, %v540, 0
    %562 = vmatpush.msra.mxu0 0.0
    %563 = vmatpush.msra.mxu0 0.0
    %564 = vmatpush.msra.mxu0 0.0
    %565 = vmatpush.msra.mxu0 0.0
    %566 = vmatpush.msra.mxu0 0.0
    %567 = vmatpush.msra.mxu0 0.0
    %568 = vmatpush.msra.mxu0 0.0
    %569 = vmatpush.msra.mxu0 0.0
    %570 = vmatpush.msra.mxu0 0.0
    %571 = vmatpush.msra.mxu0 0.0
    %572 = vmatpush.msra.mxu0 0.0
    %573 = vmatpush.msra.mxu0 0.0
    %574 = vmatpush.msra.mxu0 0.0
    %575 = vmatpush.msra.mxu0 0.0
    %576 = vmatpush.msra.mxu0 0.0
    %577 = vmatpush.msra.mxu0 %v557
    %578 = vmatmul.f32.gmra.mxu0 %v560
    %v579 = vpop.f32.mrf.mxu0
    %v580 = vadd.f32 0.0, %v579
    %581 = vdwg.mxu0
    %582 = vrot.lane.b32.xlu0 %v121, 48
    %v583 = vpop.permute.xlu0 %582
    %v586 = vsel %vm126, %v555, 0
    %588 = vmatpush.msra.mxu0 0.0
    %589 = vmatpush.msra.mxu0 0.0
    %590 = vmatpush.msra.mxu0 0.0
    %591 = vmatpush.msra.mxu0 0.0
    %592 = vmatpush.msra.mxu0 0.0
    %593 = vmatpush.msra.mxu0 0.0
    %594 = vmatpush.msra.mxu0 0.0
    %595 = vmatpush.msra.mxu0 0.0
    %596 = vmatpush.msra.mxu0 0.0
    %597 = vmatpush.msra.mxu0 0.0
    %598 = vmatpush.msra.mxu0 0.0
    %599 = vmatpush.msra.mxu0 0.0
    %600 = vmatpush.msra.mxu0 0.0
    %601 = vmatpush.msra.mxu0 0.0
    %602 = vmatpush.msra.mxu0 0.0
    %603 = vmatpush.msra.mxu0 %v583
    %604 = vmatmul.f32.gmra.mxu0 %v586
    %v605 = vpop.f32.mrf.mxu0
    %v606 = vadd.f32 0.0, %v605
    %607 = vdwg.mxu0
    %608 = vrot.lane.b32.xlu0 %v118, 104
    %v609 = vpop.permute.xlu0 %608
    %610 = vrot.lane.b32.xlu0 %v118, 72
    %v611 = vpop.permute.xlu0 %610
    %v612 = vsel %vm126, %v609, 0
    %v614 = vsel %vm126, %v611, 0
    %616 = vmatpush.xpose.msra.mxu0 0.0
    %617 = vmatpush.xpose.msra.mxu0 0.0
    %618 = vmatpush.xpose.msra.mxu0 0.0
    %619 = vmatpush.xpose.msra.mxu0 0.0
    %620 = vmatpush.xpose.msra.mxu0 0.0
    %621 = vmatpush.xpose.msra.mxu0 0.0
    %622 = vmatpush.xpose.msra.mxu0 0.0
    %623 = vmatpush.xpose.msra.mxu0 0.0
    %624 = vmatpush.xpose.msra.mxu0 0.0
    %625 = vmatpush.xpose.msra.mxu0 0.0
    %626 = vmatpush.xpose.msra.mxu0 0.0
    %627 = vmatpush.xpose.msra.mxu0 0.0
    %628 = vmatpush.xpose.msra.mxu0 0.0
    %629 = vmatpush.xpose.msra.mxu0 0.0
    %630 = vmatpush.xpose.msra.mxu0 0.0
    %631 = vmatpush.xpose.msra.mxu0 %v614
    %632 = vmatmul.f32.gmra.mxu0 %v612
    %v633 = vpop.f32.mrf.mxu0
    %v634 = vadd.f32 0.0, %v633
    %635 = vdwg.mxu0
    %636 = vrot.lane.b32.xlu0 %v121, 104
    %v637 = vpop.permute.xlu0 %636
    %638 = vrot.lane.b32.xlu0 %v121, 72
    %v639 = vpop.permute.xlu0 %638
    %v640 = vsel %vm126, %v637, 0
    %v642 = vsel %vm126, %v639, 0
    %644 = vmatpush.xpose.msra.mxu0 0.0
    %645 = vmatpush.xpose.msra.mxu0 0.0
    %646 = vmatpush.xpose.msra.mxu0 0.0
    %647 = vmatpush.xpose.msra.mxu0 0.0
    %648 = vmatpush.xpose.msra.mxu0 0.0
    %649 = vmatpush.xpose.msra.mxu0 0.0
    %650 = vmatpush.xpose.msra.mxu0 0.0
    %651 = vmatpush.xpose.msra.mxu0 0.0
    %652 = vmatpush.xpose.msra.mxu0 0.0
    %653 = vmatpush.xpose.msra.mxu0 0.0
    %654 = vmatpush.xpose.msra.mxu0 0.0
    %655 = vmatpush.xpose.msra.mxu0 0.0
    %656 = vmatpush.xpose.msra.mxu0 0.0
    %657 = vmatpush.xpose.msra.mxu0 0.0
    %658 = vmatpush.xpose.msra.mxu0 0.0
    %659 = vmatpush.xpose.msra.mxu0 %v642
    %660 = vmatmul.f32.gmra.mxu0 %v640
    %v661 = vpop.f32.mrf.mxu0
    %v662 = vadd.f32 0.0, %v661
    %663 = vdwg.mxu0
    %v664 = vmul.f32 %v634, 0.35355338
    %v665 = vmul.f32 %v662, 0.35355338
    %v666 = vsel %vm184, -1e+09, %v664
    %v667 = vsel %vm185, -1e+09, %v665
    %v668 = vsel %vm126, %v666, -inf
    %669 = vmax.xlane.f32.xlu0 %v668
    %v670 = vpop.xlane.xlu0 %669
    %v671 = vsel %vm126, %v667, -inf
    %672 = vmax.xlane.f32.xlu0 %v671
    %v673 = vpop.xlane.xlu0 %672
    %v674 = vsub.f32 %v666, %v670
    %v675 = vsub.f32 %v667, %v673
    %v676 = vmul.f32 %v674, 1.442695
    %v677 = vpow.pop %v676
    %v678 = vmul.f32 %v675, 1.442695
    %v679 = vpow.pop %v678
    %v680 = vsel %vm126, %v677, 0.0
    %681 = vadd.xlane.f32.xlu0 %v680
    %v682 = vpop.xlane.xlu0 %681
    %v683 = vsel %vm126, %v679, 0.0
    %684 = vadd.xlane.f32.xlu0 %v683
    %v685 = vpop.xlane.xlu0 %684
    %v686 = vrcp.pop %v682
    %v687 = vmul.f32 %v682, %v686
    %v688 = vsub.f32 1.0, %v687
    %v689 = vmul.f32 %v686, %v688
    %v690 = vadd.f32 %v686, %v689
    %vm691 = vweird.f32 %v682
    %vm692 = vweird.f32 %v686
    %vm693 = vmor %vm691, %vm692
    %v694 = vsel %vm693, %v686, %v690
    %v695 = vand.u32 2147483647, %v682
    %vm696 = vcmp.eq.f32.partialorder %v695, 8.507059e+37
    %v697 = vand.u32 %v682, 2147483648
    %v698 = vor.u32 1.1754944e-38, %v697
    %v699 = vsel %vm696, %v698, %v694
    %v700 = vmul.f32 %v677, %v699
    %v701 = vrcp.pop %v685
    %v702 = vmul.f32 %v685, %v701
    %v703 = vsub.f32 1.0, %v702
    %v704 = vmul.f32 %v701, %v703
    %v705 = vadd.f32 %v701, %v704
    %vm706 = vweird.f32 %v685
    %vm707 = vweird.f32 %v701
    %vm708 = vmor %vm706, %vm707
    %v709 = vsel %vm708, %v701, %v705
    %v710 = vand.u32 2147483647, %v685
    %vm711 = vcmp.eq.f32.partialorder %v710, 8.507059e+37
    %v712 = vand.u32 %v685, 2147483648
    %v713 = vor.u32 1.1754944e-38, %v712
    %v714 = vsel %vm711, %v713, %v709
    %v715 = vmul.f32 %v679, %v714
    %716 = vrot.lane.b32.xlu0 %v118, 40
    %v717 = vpop.permute.xlu0 %716
    %v720 = vsel %vm126, %v700, 0
    %722 = vmatpush.msra.mxu0 0.0
    %723 = vmatpush.msra.mxu0 0.0
    %724 = vmatpush.msra.mxu0 0.0
    %725 = vmatpush.msra.mxu0 0.0
    %726 = vmatpush.msra.mxu0 0.0
    %727 = vmatpush.msra.mxu0 0.0
    %728 = vmatpush.msra.mxu0 0.0
    %729 = vmatpush.msra.mxu0 0.0
    %730 = vmatpush.msra.mxu0 0.0
    %731 = vmatpush.msra.mxu0 0.0
    %732 = vmatpush.msra.mxu0 0.0
    %733 = vmatpush.msra.mxu0 0.0
    %734 = vmatpush.msra.mxu0 0.0
    %735 = vmatpush.msra.mxu0 0.0
    %736 = vmatpush.msra.mxu0 0.0
    %737 = vmatpush.msra.mxu0 %v717
    %738 = vmatmul.f32.gmra.mxu0 %v720
    %v739 = vpop.f32.mrf.mxu0
    %v740 = vadd.f32 0.0, %v739
    %741 = vdwg.mxu0
    %742 = vrot.lane.b32.xlu0 %v121, 40
    %v743 = vpop.permute.xlu0 %742
    %v746 = vsel %vm126, %v715, 0
    %748 = vmatpush.msra.mxu0 0.0
    %749 = vmatpush.msra.mxu0 0.0
    %750 = vmatpush.msra.mxu0 0.0
    %751 = vmatpush.msra.mxu0 0.0
    %752 = vmatpush.msra.mxu0 0.0
    %753 = vmatpush.msra.mxu0 0.0
    %754 = vmatpush.msra.mxu0 0.0
    %755 = vmatpush.msra.mxu0 0.0
    %756 = vmatpush.msra.mxu0 0.0
    %757 = vmatpush.msra.mxu0 0.0
    %758 = vmatpush.msra.mxu0 0.0
    %759 = vmatpush.msra.mxu0 0.0
    %760 = vmatpush.msra.mxu0 0.0
    %761 = vmatpush.msra.mxu0 0.0
    %762 = vmatpush.msra.mxu0 0.0
    %763 = vmatpush.msra.mxu0 %v743
    %764 = vmatmul.f32.gmra.mxu0 %v746
    %v765 = vpop.f32.mrf.mxu0
    %v766 = vadd.f32 0.0, %v765
    %767 = vdwg.mxu0
    %770 = vrot.lane.b32.xlu0 %v420, 8
    %v771 = vpop.permute.xlu0 %770
    %772 = vrot.lane.b32.xlu0 %v446, 8
    %v773 = vpop.permute.xlu0 %772
    %778 = vrot.lane.b32.xlu0 %v580, 16
    %v779 = vpop.permute.xlu0 %778
    %780 = vrot.lane.b32.xlu0 %v606, 16
    %v781 = vpop.permute.xlu0 %780
    %786 = vrot.lane.b32.xlu0 %v740, 24
    %v787 = vpop.permute.xlu0 %786
    %788 = vrot.lane.b32.xlu0 %v766, 24
    %v789 = vpop.permute.xlu0 %788
    %v792 = vsel %vm126, %v260, %v771
    %v793 = vsel %vm126, %v286, %v773
    %vm794 = vcmask 130048
    %v795 = vsel %vm794, %v792, %v779
    %v796 = vsel %vm794, %v793, %v781
    %vm797 = vcmask 195584
    %v798 = vsel %vm797, %v795, %v787
    %v799 = vsel %vm797, %v796, %v789
    %v800 = vperm.slane %v89, 0
    %v802 = vsel %vm93, %v798, 0
    %v805 = vsel %vm93, %v799, 0
    %807 = vmatpush.msra.mxu0 0.0
    %808 = vmatpush.msra.mxu0 0.0
    %809 = vmatpush.msra.mxu0 0.0
    %810 = vmatpush.msra.mxu0 0.0
    %811 = vmatpush.msra.mxu0 0.0
    %812 = vmatpush.msra.mxu0 0.0
    %813 = vmatpush.msra.mxu0 0.0
    %814 = vmatpush.msra.mxu0 0.0
    %815 = vmatpush.msra.mxu0 0.0
    %816 = vmatpush.msra.mxu0 0.0
    %817 = vmatpush.msra.mxu0 0.0
    %818 = vmatpush.msra.mxu0 0.0
    %819 = vmatpush.msra.mxu0 %v88
    %820 = vmatpush.msra.mxu0 %v87
    %821 = vmatpush.msra.mxu0 %v86
    %822 = vmatpush.msra.mxu0 %v85
    %823 = vmatmul.f32.gmra.mxu0 %v802
    %v824 = vpop.f32.mrf.mxu0
    %v825 = vadd.f32 %v800, %v824
    %826 = vmatmul.f32.gmra.mxu0 %v805
    %v827 = vpop.f32.mrf.mxu0
    %v828 = vadd.f32 %v800, %v827
    %829 = vdwg.mxu0
    %v830 = vadd.f32 %v67, %v825
    %v831 = vadd.f32 %v68, %v828
    %v832 = vsel %vm93, %v830, 0.0
    %833 = vadd.xlane.f32.xlu0 %v832
    %v834 = vpop.xlane.xlu0 %833
    %v835 = vsel %vm93, %v831, 0.0
    %836 = vadd.xlane.f32.xlu0 %v835
    %v837 = vpop.xlane.xlu0 %836
    %v838 = vrcp.pop 32.0
    %v839 = vmul.f32 32.0, %v838
    %v840 = vsub.f32 1.0, %v839
    %v841 = vmul.f32 %v838, %v840
    %v842 = vadd.f32 %v838, %v841
    %vm843 = vweird.f32 %v838
    %v844 = vsel %vm843, %v838, %v842
    %v845 = vmul.f32 %v834, %v844
    %v846 = vmul.f32 %v837, %v844
    %v847 = vsub.f32 %v830, %v845
    %v848 = vsub.f32 %v831, %v846
    %v849 = vmul.f32 %v847, %v847
    %v850 = vmul.f32 %v848, %v848
    %v851 = vsel %vm93, %v849, 0.0
    %852 = vadd.xlane.f32.xlu0 %v851
    %v853 = vpop.xlane.xlu0 %852
    %v854 = vsel %vm93, %v850, 0.0
    %855 = vadd.xlane.f32.xlu0 %v854
    %v856 = vpop.xlane.xlu0 %855
    %v857 = vmul.f32 %v853, 0.032258064
    %v858 = vmul.f32 %v856, 0.032258064
    %v859 = vrsqrt.pop %v857
    %v860 = vmul.f32 %v859, %v857
    %v861 = vmul.f32 %v860, %v859
    %v862 = vmul.f32 0.5, %v861
    %v863 = vsub.f32 1.5, %v862
    %v864 = vmul.f32 %v859, %v863
    %v865 = vmul.f32 %v857, %v864
    %vm866 = vcmp.eq.f32.partialorder %v857, inf
    %v867 = vsel %vm866, %v857, %v865
    %vm868 = vcmp.eq.f32.partialorder %v857, 0.0
    %v869 = vand.u32 %v857, 2147483648
    %v870 = vsel %vm868, %v869, %v867
    %v871 = vrsqrt.pop %v858
    %v872 = vmul.f32 %v871, %v858
    %v873 = vmul.f32 %v872, %v871
    %v874 = vmul.f32 0.5, %v873
    %v875 = vsub.f32 1.5, %v874
    %v876 = vmul.f32 %v871, %v875
    %v877 = vmul.f32 %v858, %v876
    %vm878 = vcmp.eq.f32.partialorder %v858, inf
    %v879 = vsel %vm878, %v858, %v877
    %vm880 = vcmp.eq.f32.partialorder %v858, 0.0
    %v881 = vand.u32 %v858, 2147483648
    %v882 = vsel %vm880, %v881, %v879
    %v883 = vadd.f32 %v870, 1e-06
    %v884 = vadd.f32 %v882, 1e-06
    %v885 = vrcp.pop %v883
    %v886 = vmul.f32 %v883, %v885
    %v887 = vsub.f32 1.0, %v886
    %v888 = vmul.f32 %v885, %v887
    %v889 = vadd.f32 %v885, %v888
    %vm890 = vweird.f32 %v883
    %vm891 = vweird.f32 %v885
    %vm892 = vmor %vm890, %vm891
    %v893 = vsel %vm892, %v885, %v889
    %v894 = vand.u32 2147483647, %v883
    %vm895 = vcmp.eq.f32.partialorder %v894, 8.507059e+37
    %v896 = vand.u32 %v883, 2147483648
    %v897 = vor.u32 1.1754944e-38, %v896
    %v898 = vsel %vm895, %v897, %v893
    %v899 = vmul.f32 1.0, %v898
    %v900 = vrcp.pop %v884
    %v901 = vmul.f32 %v884, %v900
    %v902 = vsub.f32 1.0, %v901
    %v903 = vmul.f32 %v900, %v902
    %v904 = vadd.f32 %v900, %v903
    %vm905 = vweird.f32 %v884
    %vm906 = vweird.f32 %v900
    %vm907 = vmor %vm905, %vm906
    %v908 = vsel %vm907, %v900, %v904
    %v909 = vand.u32 2147483647, %v884
    %vm910 = vcmp.eq.f32.partialorder %v909, 8.507059e+37
    %v911 = vand.u32 %v884, 2147483648
    %v912 = vor.u32 1.1754944e-38, %v911
    %v913 = vsel %vm910, %v912, %v908
    %v914 = vmul.f32 1.0, %v913
    %v915 = vperm.slane %v90, 0
    %v916 = vmul.f32 %v915, %v847
    %v917 = vmul.f32 %v915, %v848
    %v918 = vmul.f32 %v916, %v899
    %v919 = vmul.f32 %v917, %v914
    %v920 = vperm.slane %v91, 0
    %v921 = vadd.f32 %v918, %v920
    %v922 = vadd.f32 %v919, %v920
    %v923 = vld [vmem:[#allocation2 + $0x10] sm:$0xff]
    %v924 = vld [vmem:[#allocation2 + $0x60] sm:$0xff]
    %v925 = vld [vmem:[#allocation2 + $0xb0] sm:$0xff]
    %v926 = vld [vmem:[#allocation2 + $0x100] sm:$0xff]
    %v927 = vld [vmem:[%s8 + $0x4] sm:$0x1]
    %v928 = vld [vmem:[#allocation5] sm:$0xff]
    %v929 = vld [vmem:[#allocation5 + $0x20] sm:$0xff]
    %v930 = vld [vmem:[#allocation5 + $0x40] sm:$0xff]
    %v931 = vld [vmem:[#allocation5 + $0x60] sm:$0xff]
    %v932 = vld [vmem:[#allocation5 + $0x80] sm:$0xff]
    %v933 = vld [vmem:[#allocation5 + $0xa0] sm:$0xff]
    %v934 = vld [vmem:[#allocation5 + $0xc0] sm:$0xff]
    %v935 = vld [vmem:[#allocation5 + $0xe0] sm:$0xff]
    %v936 = vld [vmem:[#allocation5 + $0x100] sm:$0xff]
    %v937 = vld [vmem:[#allocation5 + $0x120] sm:$0xff]
    %v938 = vld [vmem:[#allocation5 + $0x140] sm:$0xff]
    %v939 = vld [vmem:[#allocation5 + $0x160] sm:$0xff]
    %v940 = vld [vmem:[#allocation5 + $0x180] sm:$0xff]
    %v941 = vld [vmem:[#allocation5 + $0x1a0] sm:$0xff]
    %v942 = vld [vmem:[#allocation5 + $0x1c0] sm:$0xff]
    %v943 = vld [vmem:[#allocation5 + $0x1e0] sm:$0xff]
    %v944 = vld [vmem:[%s8 + $0x5] sm:$0x1]
    %v945 = vld [vmem:[%s8 + $0x6] sm:$0x1]
    %v946 = vld [vmem:[%s8 + $0x7] sm:$0x1]
    %v947 = vperm.slane %v927, 0
    %v949 = vsel %vm93, %v921, 0
    %v952 = vsel %vm93, %v922, 0
    %954 = vmatpush.msra.mxu0 0.0
    %955 = vmatpush.msra.mxu0 0.0
    %956 = vmatpush.msra.mxu0 0.0
    %957 = vmatpush.msra.mxu0 0.0
    %958 = vmatpush.msra.mxu0 0.0
    %959 = vmatpush.msra.mxu0 0.0
    %960 = vmatpush.msra.mxu0 0.0
    %961 = vmatpush.msra.mxu0 0.0
    %962 = vmatpush.msra.mxu0 0.0
    %963 = vmatpush.msra.mxu0 0.0
    %964 = vmatpush.msra.mxu0 0.0
    %965 = vmatpush.msra.mxu0 0.0
    %966 = vmatpush.msra.mxu0 %v926
    %967 = vmatpush.msra.mxu0 %v925
    %968 = vmatpush.msra.mxu0 %v924
    %969 = vmatpush.msra.mxu0 %v923
    %970 = vmatmul.f32.gmra.mxu0 %v949
    %v971 = vpop.f32.mrf.mxu0
    %v972 = vadd.f32 %v947, %v971
    %973 = vmatmul.f32.gmra.mxu0 %v952
    %v974 = vpop.f32.mrf.mxu0
    %v975 = vadd.f32 %v947, %v974
    %976 = vdwg.mxu0
    %v977 = vmax.f32 %v972, 0.0
    %v978 = vmax.f32 %v975, 0.0
    %v979 = vperm.slane %v944, 0
    %980 = vmatpush.msra.mxu0 %v943
    %981 = vmatpush.msra.mxu0 %v942
    %982 = vmatpush.msra.mxu0 %v941
    %983 = vmatpush.msra.mxu0 %v940
    %984 = vmatpush.msra.mxu0 %v939
    %985 = vmatpush.msra.mxu0 %v938
    %986 = vmatpush.msra.mxu0 %v937
    %987 = vmatpush.msra.mxu0 %v936
    %988 = vmatpush.msra.mxu0 %v935
    %989 = vmatpush.msra.mxu0 %v934
    %990 = vmatpush.msra.mxu0 %v933
    %991 = vmatpush.msra.mxu0 %v932
    %992 = vmatpush.msra.mxu0 %v931
    %993 = vmatpush.msra.mxu0 %v930
    %994 = vmatpush.msra.mxu0 %v929
    %995 = vmatpush.msra.mxu0 %v928
    %996 = vmatmul.f32.gmra.mxu0 %v977
    %v997 = vpop.f32.mrf.mxu0
    %v998 = vadd.f32 %v979, %v997
    %999 = vmatmul.f32.gmra.mxu0 %v978
    %v1000 = vpop.f32.mrf.mxu0
    %v1001 = vadd.f32 %v979, %v1000
    %1002 = vdwg.mxu0
    %v1003 = vadd.f32 %v921, %v998
    %v1004 = vadd.f32 %v922, %v1001
    %v1005 = vsel %vm93, %v1003, 0.0
    %1006 = vadd.xlane.f32.xlu0 %v1005
    %v1007 = vpop.xlane.xlu0 %1006
    %v1008 = vsel %vm93, %v1004, 0.0
    %1009 = vadd.xlane.f32.xlu0 %v1008
    %v1010 = vpop.xlane.xlu0 %1009
    %v1011 = vmul.f32 %v1007, %v844
    %v1012 = vmul.f32 %v1010, %v844
    %v1013 = vsub.f32 %v1003, %v1011
    %v1014 = vsub.f32 %v1004, %v1012
    %v1015 = vmul.f32 %v1013, %v1013
    %v1016 = vmul.f32 %v1014, %v1014
    %v1017 = vsel %vm93, %v1015, 0.0
    %1018 = vadd.xlane.f32.xlu0 %v1017
    %v1019 = vpop.xlane.xlu0 %1018
    %v1020 = vsel %vm93, %v1016, 0.0
    %1021 = vadd.xlane.f32.xlu0 %v1020
    %v1022 = vpop.xlane.xlu0 %1021
    %v1023 = vmul.f32 %v1019, 0.032258064
    %v1024 = vmul.f32 %v1022, 0.032258064
    %v1025 = vrsqrt.pop %v1023
    %v1026 = vmul.f32 %v1025, %v1023
    %v1027 = vmul.f32 %v1026, %v1025
    %v1028 = vmul.f32 0.5, %v1027
    %v1029 = vsub.f32 1.5, %v1028
    %v1030 = vmul.f32 %v1025, %v1029
    %v1031 = vmul.f32 %v1023, %v1030
    %vm1032 = vcmp.eq.f32.partialorder %v1023, inf
    %v1033 = vsel %vm1032, %v1023, %v1031
    %vm1034 = vcmp.eq.f32.partialorder %v1023, 0.0
    %v1035 = vand.u32 %v1023, 2147483648
    %v1036 = vsel %vm1034, %v1035, %v1033
    %v1037 = vrsqrt.pop %v1024
    %v1038 = vmul.f32 %v1037, %v1024
    %v1039 = vmul.f32 %v1038, %v1037
    %v1040 = vmul.f32 0.5, %v1039
    %v1041 = vsub.f32 1.5, %v1040
    %v1042 = vmul.f32 %v1037, %v1041
    %v1043 = vmul.f32 %v1024, %v1042
    %vm1044 = vcmp.eq.f32.partialorder %v1024, inf
    %v1045 = vsel %vm1044, %v1024, %v1043
    %vm1046 = vcmp.eq.f32.partialorder %v1024, 0.0
    %v1047 = vand.u32 %v1024, 2147483648
    %v1048 = vsel %vm1046, %v1047, %v1045
    %v1049 = vadd.f32 %v1036, 1e-06
    %v1050 = vadd.f32 %v1048, 1e-06
    %v1051 = vrcp.pop %v1049
    %v1052 = vmul.f32 %v1049, %v1051
    %v1053 = vsub.f32 1.0, %v1052
    %v1054 = vmul.f32 %v1051, %v1053
    %v1055 = vadd.f32 %v1051, %v1054
    %vm1056 = vweird.f32 %v1049
    %vm1057 = vweird.f32 %v1051
    %vm1058 = vmor %vm1056, %vm1057
    %v1059 = vsel %vm1058, %v1051, %v1055
    %v1060 = vand.u32 2147483647, %v1049
    %vm1061 = vcmp.eq.f32.partialorder %v1060, 8.507059e+37
    %v1062 = vand.u32 %v1049, 2147483648
    %v1063 = vor.u32 1.1754944e-38, %v1062
    %v1064 = vsel %vm1061, %v1063, %v1059
    %v1065 = vmul.f32 1.0, %v1064
    %v1066 = vrcp.pop %v1050
    %v1067 = vmul.f32 %v1050, %v1066
    %v1068 = vsub.f32 1.0, %v1067
    %v1069 = vmul.f32 %v1066, %v1068
    %v1070 = vadd.f32 %v1066, %v1069
    %vm1071 = vweird.f32 %v1050
    %vm1072 = vweird.f32 %v1066
    %vm1073 = vmor %vm1071, %vm1072
    %v1074 = vsel %vm1073, %v1066, %v1070
    %v1075 = vand.u32 2147483647, %v1050
    %vm1076 = vcmp.eq.f32.partialorder %v1075, 8.507059e+37
    %v1077 = vand.u32 %v1050, 2147483648
    %v1078 = vor.u32 1.1754944e-38, %v1077
    %v1079 = vsel %vm1076, %v1078, %v1074
    %v1080 = vmul.f32 1.0, %v1079
    %v1081 = vperm.slane %v945, 0
    %v1082 = vmul.f32 %v1081, %v1013
    %v1083 = vmul.f32 %v1081, %v1014
    %v1084 = vmul.f32 %v1082, %v1065
    %v1085 = vmul.f32 %v1083, %v1080
    %v1086 = vperm.slane %v946, 0
    %v1087 = vadd.f32 %v1084, %v1086
    %v1088 = vadd.f32 %v1085, %v1086
    %v1089 = vld [vmem:[#allocation2 + $0x18] sm:$0xff]
    %v1090 = vld [vmem:[#allocation2 + $0x68] sm:$0xff]
    %v1091 = vld [vmem:[#allocation2 + $0xb8] sm:$0xff]
    %v1092 = vld [vmem:[#allocation2 + $0x108] sm:$0xff]
    %v1093 = vld [vmem:[%s8 + $0x8] sm:$0x1]
    %v1094 = vld [vmem:[#allocation2 + $0x20] sm:$0xff]
    %v1095 = vld [vmem:[#allocation2 + $0x70] sm:$0xff]
    %v1096 = vld [vmem:[#allocation2 + $0xc0] sm:$0xff]
    %v1097 = vld [vmem:[#allocation2 + $0x110] sm:$0xff]
    %v1098 = vld [vmem:[%s8 + $0x9] sm:$0x1]
    %v1099 = vld [vmem:[%s8 + $0xa] sm:$0x1]
    %v1100 = vld [vmem:[%s8 + $0xb] sm:$0x1]
    %v1101 = vperm.slane %v1093, 0
    %v1103 = vsel %vm93, %v69, 0
    %v1106 = vsel %vm93, %v70, 0
    %v1109 = vsel %vm93, %v71, 0
    %1111 = vmatpush.msra.mxu0 0.0
    %1112 = vmatpush.msra.mxu0 0.0
    %1113 = vmatpush.msra.mxu0 0.0
    %1114 = vmatpush.msra.mxu0 0.0
    %1115 = vmatpush.msra.mxu0 0.0
    %1116 = vmatpush.msra.mxu0 0.0
    %1117 = vmatpush.msra.mxu0 0.0
    %1118 = vmatpush.msra.mxu0 0.0
    %1119 = vmatpush.msra.mxu0 0.0
    %1120 = vmatpush.msra.mxu0 0.0
    %1121 = vmatpush.msra.mxu0 0.0
    %1122 = vmatpush.msra.mxu0 0.0
    %1123 = vmatpush.msra.mxu0 %v1092
    %1124 = vmatpush.msra.mxu0 %v1091
    %1125 = vmatpush.msra.mxu0 %v1090
    %1126 = vmatpush.msra.mxu0 %v1089
    %1127 = vmatmul.f32.gmra.mxu0 %v1103
    %v1128 = vpop.f32.mrf.mxu0
    %v1129 = vadd.f32 %v1101, %v1128
    %1130 = vmatmul.f32.gmra.mxu0 %v1106
    %v1131 = vpop.f32.mrf.mxu0
    %v1132 = vadd.f32 %v1101, %v1131
    %1133 = vmatmul.f32.gmra.mxu0 %v1109
    %v1134 = vpop.f32.mrf.mxu0
    %v1135 = vadd.f32 %v1101, %v1134
    %1136 = vdwg.mxu0
    %v1140 = vrot.slane %v1129, 4
    %v1141 = vrot.slane %v1132, 4
    %v1142 = vrot.slane %v1135, 4
    %1143 = vst [vmem:[#allocation1] ss:$2 sm:$0xff] %v1129
    %s1144 = scalar_lea.vmem [#allocation1], 1
    %1145 = vst [vmem:[%s1144] ss:$2 sm:$0xff] %v1140
    %s1146 = scalar_lea.vmem [#allocation1], 16
    %1147 = vst [vmem:[%s1146] ss:$2 sm:$0xff] %v1132
    %v1148 = vld.sshfl [vmem:[#allocation1] sm:$0xff pattern:$0x75316420]
    %v1149 = vld.sshfl [vmem:[#allocation1 + $0x10] sm:$0xff pattern:$0x75316420]
    %1150 = vst [vmem:[#allocation1] ss:$2 sm:$0xff] %v1129
    %s1151 = scalar_lea.vmem [#allocation1], 1
    %1152 = vst [vmem:[%s1151] ss:$2 sm:$0xff] %v1140
    %s1153 = scalar_lea.vmem [#allocation1], 16
    %1154 = vst [vmem:[%s1153] ss:$2 sm:$0xff] %v1132
    %v1155 = vld.sshfl [vmem:[#allocation1] sm:$0xff pattern:$0x75316420]
    %v1156 = vld.sshfl [vmem:[#allocation1 + $0x10] sm:$0xff pattern:$0x75316420]
    %1157 = vrot.lane.b32.xlu0 %v1155, 96
    %v1158 = vpop.permute.xlu0 %1157
    %1159 = vrot.lane.b32.xlu0 %v1156, 96
    %v1160 = vpop.permute.xlu0 %1159
    %v1161 = vsel %vm126, %v1148, 0
    %v1163 = vsel %vm126, %v1149, 0
    %v1165 = vsel %vm126, %v1158, 0
    %v1167 = vsel %vm126, %v1160, 0
    %1169 = vmatpush.xpose.msra.mxu0 0.0
    %1170 = vmatpush.xpose.msra.mxu0 0.0
    %1171 = vmatpush.xpose.msra.mxu0 0.0
    %1172 = vmatpush.xpose.msra.mxu0 0.0
    %1173 = vmatpush.xpose.msra.mxu0 0.0
    %1174 = vmatpush.xpose.msra.mxu0 0.0
    %1175 = vmatpush.xpose.msra.mxu0 0.0
    %1176 = vmatpush.xpose.msra.mxu0 0.0
    %1177 = vmatpush.xpose.msra.mxu0 0.0
    %1178 = vmatpush.xpose.msra.mxu0 0.0
    %1179 = vmatpush.xpose.msra.mxu0 0.0
    %1180 = vmatpush.xpose.msra.mxu0 0.0
    %1181 = vmatpush.xpose.msra.mxu0 0.0
    %1182 = vmatpush.xpose.msra.mxu0 0.0
    %1183 = vmatpush.xpose.msra.mxu0 %v1167
    %1184 = vmatpush.xpose.msra.mxu0 %v1165
    %1185 = vmatmul.f32.gmra.mxu0 %v1161
    %v1186 = vpop.f32.mrf.mxu0
    %v1187 = vadd.f32 0.0, %v1186
    %1188 = vmatmul.f32.gmra.mxu0 %v1163
    %v1189 = vpop.f32.mrf.mxu0
    %v1190 = vadd.f32 0.0, %v1189
    %1191 = vdwg.mxu0
    %1192 = vst [vmem:[#allocation1] ss:$2 sm:$0xff] %v1141
    %s1193 = scalar_lea.vmem [#allocation1], 1
    %1194 = vst [vmem:[%s1193] ss:$2 sm:$0xff] %v1135
    %s1195 = scalar_lea.vmem [#allocation1], 16
    %1196 = vst [vmem:[%s1195] ss:$2 sm:$0xff] %v1142
    %v1197 = vld.sshfl [vmem:[#allocation1] sm:$0xff pattern:$0x75316420]
    %v1198 = vld.sshfl [vmem:[#allocation1 + $0x10] sm:$0xff pattern:$0x75316420]
    %1199 = vst [vmem:[#allocation1] ss:$2 sm:$0xff] %v1141
    %s1200 = scalar_lea.vmem [#allocation1], 1
    %1201 = vst [vmem:[%s1200] ss:$2 sm:$0xff] %v1135
    %s1202 = scalar_lea.vmem [#allocation1], 16
    %1203 = vst [vmem:[%s1202] ss:$2 sm:$0xff] %v1142
    %v1204 = vld.sshfl [vmem:[#allocation1] sm:$0xff pattern:$0x75316420]
    %v1205 = vld.sshfl [vmem:[#allocation1 + $0x10] sm:$0xff pattern:$0x75316420]
    %1206 = vrot.lane.b32.xlu0 %v1204, 96
    %v1207 = vpop.permute.xlu0 %1206
    %1208 = vrot.lane.b32.xlu0 %v1205, 96
    %v1209 = vpop.permute.xlu0 %1208
    %v1210 = vsel %vm126, %v1197, 0
    %v1212 = vsel %vm126, %v1198, 0
    %v1214 = vsel %vm126, %v1207, 0
    %v1216 = vsel %vm126, %v1209, 0
    %1218 = vmatpush.xpose.msra.mxu0 0.0
    %1219 = vmatpush.xpose.msra.mxu0 0.0
    %1220 = vmatpush.xpose.msra.mxu0 0.0
    %1221 = vmatpush.xpose.msra.mxu0 0.0
    %1222 = vmatpush.xpose.msra.mxu0 0.0
    %1223 = vmatpush.xpose.msra.mxu0 0.0
    %1224 = vmatpush.xpose.msra.mxu0 0.0
    %1225 = vmatpush.xpose.msra.mxu0 0.0
    %1226 = vmatpush.xpose.msra.mxu0 0.0
    %1227 = vmatpush.xpose.msra.mxu0 0.0
    %1228 = vmatpush.xpose.msra.mxu0 0.0
    %1229 = vmatpush.xpose.msra.mxu0 0.0
    %1230 = vmatpush.xpose.msra.mxu0 0.0
    %1231 = vmatpush.xpose.msra.mxu0 0.0
    %1232 = vmatpush.xpose.msra.mxu0 %v1216
    %1233 = vmatpush.xpose.msra.mxu0 %v1214
    %1234 = vmatmul.f32.gmra.mxu0 %v1210
    %v1235 = vpop.f32.mrf.mxu0
    %v1236 = vadd.f32 0.0, %v1235
    %1237 = vmatmul.f32.gmra.mxu0 %v1212
    %v1238 = vpop.f32.mrf.mxu0
    %v1239 = vadd.f32 0.0, %v1238
    %1240 = vdwg.mxu0
    %v1241 = vmul.f32 %v1187, 0.35355338
    %v1242 = vmul.f32 %v1190, 0.35355338
    %v1243 = vmul.f32 %v1236, 0.35355338
    %v1244 = vmul.f32 %v1239, 0.35355338
    %v1245 = vsel %vm78, 1, 0
    %v1246 = vsel %vm79, 1, 0
    %v1247 = vperm.slane %v1245, 0
    %v1248 = vperm.slane %v1246, 0
    %vm1249 = vcmp.eq.s32.totalorder %v1247, 1
    %vm1250 = vcmp.eq.s32.totalorder %v1248, 1
    %v1251 = vsel %vm1249, -1e+09, %v1241
    %v1252 = vsel %vm1249, -1e+09, %v1242
    %v1253 = vsel %vm1250, -1e+09, %v1243
    %v1254 = vsel %vm1250, -1e+09, %v1244
    %vm1255 = vcmask 97280
    %v1256 = vsel %vm1255, %v1251, -inf
    %1257 = vmax.xlane.f32.xlu0 %v1256
    %v1258 = vpop.xlane.xlu0 %1257
    %vm1259 = vcmask 93184
    %v1260 = vsel %vm1259, %v1252, -inf
    %1261 = vmax.xlane.f32.xlu0 %v1260
    %v1262 = vpop.xlane.xlu0 %1261
    %v1263 = vsel %vm1255, %v1253, -inf
    %1264 = vmax.xlane.f32.xlu0 %v1263
    %v1265 = vpop.xlane.xlu0 %1264
    %v1266 = vsel %vm1259, %v1254, -inf
    %1267 = vmax.xlane.f32.xlu0 %v1266
    %v1268 = vpop.xlane.xlu0 %1267
    %v1269 = vsub.f32 %v1251, %v1258
    %v1270 = vsub.f32 %v1252, %v1262
    %v1271 = vsub.f32 %v1253, %v1265
    %v1272 = vsub.f32 %v1254, %v1268
    %v1273 = vmul.f32 %v1269, 1.442695
    %v1274 = vpow.pop %v1273
    %v1275 = vmul.f32 %v1270, 1.442695
    %v1276 = vpow.pop %v1275
    %v1277 = vmul.f32 %v1271, 1.442695
    %v1278 = vpow.pop %v1277
    %v1279 = vmul.f32 %v1272, 1.442695
    %v1280 = vpow.pop %v1279
    %v1281 = vsel %vm1255, %v1274, 0.0
    %1282 = vadd.xlane.f32.xlu0 %v1281
    %v1283 = vpop.xlane.xlu0 %1282
    %v1284 = vsel %vm1259, %v1276, 0.0
    %1285 = vadd.xlane.f32.xlu0 %v1284
    %v1286 = vpop.xlane.xlu0 %1285
    %v1287 = vsel %vm1255, %v1278, 0.0
    %1288 = vadd.xlane.f32.xlu0 %v1287
    %v1289 = vpop.xlane.xlu0 %1288
    %v1290 = vsel %vm1259, %v1280, 0.0
    %1291 = vadd.xlane.f32.xlu0 %v1290
    %v1292 = vpop.xlane.xlu0 %1291
    %v1293 = vrcp.pop %v1283
    %v1294 = vmul.f32 %v1283, %v1293
    %v1295 = vsub.f32 1.0, %v1294
    %v1296 = vmul.f32 %v1293, %v1295
    %v1297 = vadd.f32 %v1293, %v1296
    %vm1298 = vweird.f32 %v1283
    %vm1299 = vweird.f32 %v1293
    %vm1300 = vmor %vm1298, %vm1299
    %v1301 = vsel %vm1300, %v1293, %v1297
    %v1302 = vand.u32 2147483647, %v1283
    %vm1303 = vcmp.eq.f32.partialorder %v1302, 8.507059e+37
    %v1304 = vand.u32 %v1283, 2147483648
    %v1305 = vor.u32 1.1754944e-38, %v1304
    %v1306 = vsel %vm1303, %v1305, %v1301
    %v1307 = vmul.f32 %v1274, %v1306
    %v1308 = vrcp.pop %v1286
    %v1309 = vmul.f32 %v1286, %v1308
    %v1310 = vsub.f32 1.0, %v1309
    %v1311 = vmul.f32 %v1308, %v1310
    %v1312 = vadd.f32 %v1308, %v1311
    %vm1313 = vweird.f32 %v1286
    %vm1314 = vweird.f32 %v1308
    %vm1315 = vmor %vm1313, %vm1314
    %v1316 = vsel %vm1315, %v1308, %v1312
    %v1317 = vand.u32 2147483647, %v1286
    %vm1318 = vcmp.eq.f32.partialorder %v1317, 8.507059e+37
    %v1319 = vand.u32 %v1286, 2147483648
    %v1320 = vor.u32 1.1754944e-38, %v1319
    %v1321 = vsel %vm1318, %v1320, %v1316
    %v1322 = vmul.f32 %v1276, %v1321
    %v1323 = vrcp.pop %v1289
    %v1324 = vmul.f32 %v1289, %v1323
    %v1325 = vsub.f32 1.0, %v1324
    %v1326 = vmul.f32 %v1323, %v1325
    %v1327 = vadd.f32 %v1323, %v1326
    %vm1328 = vweird.f32 %v1289
    %vm1329 = vweird.f32 %v1323
    %vm1330 = vmor %vm1328, %vm1329
    %v1331 = vsel %vm1330, %v1323, %v1327
    %v1332 = vand.u32 2147483647, %v1289
    %vm1333 = vcmp.eq.f32.partialorder %v1332, 8.507059e+37
    %v1334 = vand.u32 %v1289, 2147483648
    %v1335 = vor.u32 1.1754944e-38, %v1334
    %v1336 = vsel %vm1333, %v1335, %v1331
    %v1337 = vmul.f32 %v1278, %v1336
    %v1338 = vrcp.pop %v1292
    %v1339 = vmul.f32 %v1292, %v1338
    %v1340 = vsub.f32 1.0, %v1339
    %v1341 = vmul.f32 %v1338, %v1340
    %v1342 = vadd.f32 %v1338, %v1341
    %vm1343 = vweird.f32 %v1292
    %vm1344 = vweird.f32 %v1338
    %vm1345 = vmor %vm1343, %vm1344
    %v1346 = vsel %vm1345, %v1338, %v1342
    %v1347 = vand.u32 2147483647, %v1292
    %vm1348 = vcmp.eq.f32.partialorder %v1347, 8.507059e+37
    %v1349 = vand.u32 %v1292, 2147483648
    %v1350 = vor.u32 1.1754944e-38, %v1349
    %v1351 = vsel %vm1348, %v1350, %v1346
    %v1352 = vmul.f32 %v1280, %v1351
    %1353 = vst [vmem:[#allocation1] ss:$2 sm:$0xff] %v1129
    %s1354 = scalar_lea.vmem [#allocation1], 1
    %1355 = vst [vmem:[%s1354] ss:$2 sm:$0xff] %v1140
    %s1356 = scalar_lea.vmem [#allocation1], 16
    %1357 = vst [vmem:[%s1356] ss:$2 sm:$0xff] %v1132
    %v1358 = vld.sshfl [vmem:[#allocation1] sm:$0xff pattern:$0x75316420]
    %v1359 = vld.sshfl [vmem:[#allocation1 + $0x10] sm:$0xff pattern:$0x75316420]
    %1360 = vrot.lane.b32.xlu0 %v1358, 64
    %v1361 = vpop.permute.xlu0 %1360
    %1362 = vrot.lane.b32.xlu0 %v1359, 64
    %v1363 = vpop.permute.xlu0 %1362
    %v1366 = vsel %vm1255, %v1307, 0
    %v1369 = vsel %vm1255, %v1322, 0
    %vm1371 = vcmask 1043456
    %v1372 = vsel %vm1371, %v1363, 0
    %1374 = vmatpush.msra.mxu0 0.0
    %1375 = vmatpush.msra.mxu0 0.0
    %1376 = vmatpush.msra.mxu0 0.0
    %1377 = vmatpush.msra.mxu0 0.0
    %1378 = vmatpush.msra.mxu0 0.0
    %1379 = vmatpush.msra.mxu0 0.0
    %1380 = vmatpush.msra.mxu0 0.0
    %1381 = vmatpush.msra.mxu0 0.0
    %1382 = vmatpush.msra.mxu0 0.0
    %1383 = vmatpush.msra.mxu0 0.0
    %1384 = vmatpush.msra.mxu0 0.0
    %1385 = vmatpush.msra.mxu0 0.0
    %1386 = vmatpush.msra.mxu0 0.0
    %1387 = vmatpush.msra.mxu0 0.0
    %1388 = vmatpush.msra.mxu0 %v1372
    %1389 = vmatpush.msra.mxu0 %v1361
    %1390 = vmatmul.f32.gmra.mxu0 %v1366
    %v1391 = vpop.f32.mrf.mxu0
    %v1392 = vadd.f32 0.0, %v1391
    %1393 = vmatmul.f32.gmra.mxu0 %v1369
    %v1394 = vpop.f32.mrf.mxu0
    %v1395 = vadd.f32 0.0, %v1394
    %1396 = vdwg.mxu0
    %1397 = vst [vmem:[#allocation1] ss:$2 sm:$0xff] %v1141
    %s1398 = scalar_lea.vmem [#allocation1], 1
    %1399 = vst [vmem:[%s1398] ss:$2 sm:$0xff] %v1135
    %s1400 = scalar_lea.vmem [#allocation1], 16
    %1401 = vst [vmem:[%s1400] ss:$2 sm:$0xff] %v1142
    %v1402 = vld.sshfl [vmem:[#allocation1] sm:$0xff pattern:$0x75316420]
    %v1403 = vld.sshfl [vmem:[#allocation1 + $0x10] sm:$0xff pattern:$0x75316420]
    %1404 = vrot.lane.b32.xlu0 %v1402, 64
    %v1405 = vpop.permute.xlu0 %1404
    %1406 = vrot.lane.b32.xlu0 %v1403, 64
    %v1407 = vpop.permute.xlu0 %1406
    %v1410 = vsel %vm1255, %v1337, 0
    %v1413 = vsel %vm1255, %v1352, 0
    %v1415 = vsel %vm1371, %v1407, 0
    %1417 = vmatpush.msra.mxu0 0.0
    %1418 = vmatpush.msra.mxu0 0.0
    %1419 = vmatpush.msra.mxu0 0.0
    %1420 = vmatpush.msra.mxu0 0.0
    %1421 = vmatpush.msra.mxu0 0.0
    %1422 = vmatpush.msra.mxu0 0.0
    %1423 = vmatpush.msra.mxu0 0.0
    %1424 = vmatpush.msra.mxu0 0.0
    %1425 = vmatpush.msra.mxu0 0.0
    %1426 = vmatpush.msra.mxu0 0.0
    %1427 = vmatpush.msra.mxu0 0.0
    %1428 = vmatpush.msra.mxu0 0.0
    %1429 = vmatpush.msra.mxu0 0.0
    %1430 = vmatpush.msra.mxu0 0.0
    %1431 = vmatpush.msra.mxu0 %v1415
    %1432 = vmatpush.msra.mxu0 %v1405
    %1433 = vmatmul.f32.gmra.mxu0 %v1410
    %v1434 = vpop.f32.mrf.mxu0
    %v1435 = vadd.f32 0.0, %v1434
    %1436 = vmatmul.f32.gmra.mxu0 %v1413
    %v1437 = vpop.f32.mrf.mxu0
    %v1438 = vadd.f32 0.0, %v1437
    %1439 = vdwg.mxu0
    %1440 = vst [vmem:[#allocation1] ss:$2 sm:$0xff] %v1129
    %s1441 = scalar_lea.vmem [#allocation1], 1
    %1442 = vst [vmem:[%s1441] ss:$2 sm:$0xff] %v1140
    %s1443 = scalar_lea.vmem [#allocation1], 16
    %1444 = vst [vmem:[%s1443] ss:$2 sm:$0xff] %v1132
    %v1445 = vld.sshfl [vmem:[#allocation1] sm:$0xff pattern:$0x75316420]
    %v1446 = vld.sshfl [vmem:[#allocation1 + $0x10] sm:$0xff pattern:$0x75316420]
    %1447 = vrot.lane.b32.xlu0 %v1445, 120
    %v1448 = vpop.permute.xlu0 %1447
    %1449 = vrot.lane.b32.xlu0 %v1446, 120
    %v1450 = vpop.permute.xlu0 %1449
    %1451 = vst [vmem:[#allocation1] ss:$2 sm:$0xff] %v1129
    %s1452 = scalar_lea.vmem [#allocation1], 1
    %1453 = vst [vmem:[%s1452] ss:$2 sm:$0xff] %v1140
    %s1454 = scalar_lea.vmem [#allocation1], 16
    %1455 = vst [vmem:[%s1454] ss:$2 sm:$0xff] %v1132
    %v1456 = vld.sshfl [vmem:[#allocation1] sm:$0xff pattern:$0x75316420]
    %v1457 = vld.sshfl [vmem:[#allocation1 + $0x10] sm:$0xff pattern:$0x75316420]
    %1458 = vrot.lane.b32.xlu0 %v1456, 88
    %v1459 = vpop.permute.xlu0 %1458
    %1460 = vrot.lane.b32.xlu0 %v1457, 88
    %v1461 = vpop.permute.xlu0 %1460
    %v1462 = vsel %vm126, %v1448, 0
    %v1464 = vsel %vm126, %v1450, 0
    %v1466 = vsel %vm126, %v1459, 0
    %v1468 = vsel %vm126, %v1461, 0
    %1470 = vmatpush.xpose.msra.mxu0 0.0
    %1471 = vmatpush.xpose.msra.mxu0 0.0
    %1472 = vmatpush.xpose.msra.mxu0 0.0
    %1473 = vmatpush.xpose.msra.mxu0 0.0
    %1474 = vmatpush.xpose.msra.mxu0 0.0
    %1475 = vmatpush.xpose.msra.mxu0 0.0
    %1476 = vmatpush.xpose.msra.mxu0 0.0
    %1477 = vmatpush.xpose.msra.mxu0 0.0
    %1478 = vmatpush.xpose.msra.mxu0 0.0
    %1479 = vmatpush.xpose.msra.mxu0 0.0
    %1480 = vmatpush.xpose.msra.mxu0 0.0
    %1481 = vmatpush.xpose.msra.mxu0 0.0
    %1482 = vmatpush.xpose.msra.mxu0 0.0
    %1483 = vmatpush.xpose.msra.mxu0 0.0
    %1484 = vmatpush.xpose.msra.mxu0 %v1468
    %1485 = vmatpush.xpose.msra.mxu0 %v1466
    %1486 = vmatmul.f32.gmra.mxu0 %v1462
    %v1487 = vpop.f32.mrf.mxu0
    %v1488 = vadd.f32 0.0, %v1487
    %1489 = vmatmul.f32.gmra.mxu0 %v1464
    %v1490 = vpop.f32.mrf.mxu0
    %v1491 = vadd.f32 0.0, %v1490
    %1492 = vdwg.mxu0
    %1493 = vst [vmem:[#allocation1] ss:$2 sm:$0xff] %v1141
    %s1494 = scalar_lea.vmem [#allocation1], 1
    %1495 = vst [vmem:[%s1494] ss:$2 sm:$0xff] %v1135
    %s1496 = scalar_lea.vmem [#allocation1], 16
    %1497 = vst [vmem:[%s1496] ss:$2 sm:$0xff] %v1142
    %v1498 = vld.sshfl [vmem:[#allocation1] sm:$0xff pattern:$0x75316420]
    %v1499 = vld.sshfl [vmem:[#allocation1 + $0x10] sm:$0xff pattern:$0x75316420]
    %1500 = vrot.lane.b32.xlu0 %v1498, 120
    %v1501 = vpop.permute.xlu0 %1500
    %1502 = vrot.lane.b32.xlu0 %v1499, 120
    %v1503 = vpop.permute.xlu0 %1502
    %1504 = vst [vmem:[#allocation1] ss:$2 sm:$0xff] %v1141
    %s1505 = scalar_lea.vmem [#allocation1], 1
    %1506 = vst [vmem:[%s1505] ss:$2 sm:$0xff] %v1135
    %s1507 = scalar_lea.vmem [#allocation1], 16
    %1508 = vst [vmem:[%s1507] ss:$2 sm:$0xff] %v1142
    %v1509 = vld.sshfl [vmem:[#allocation1] sm:$0xff pattern:$0x75316420]
    %v1510 = vld.sshfl [vmem:[#allocation1 + $0x10] sm:$0xff pattern:$0x75316420]
    %1511 = vrot.lane.b32.xlu0 %v1509, 88
    %v1512 = vpop.permute.xlu0 %1511
    %1513 = vrot.lane.b32.xlu0 %v1510, 88
    %v1514 = vpop.permute.xlu0 %1513
    %v1515 = vsel %vm126, %v1501, 0
    %v1517 = vsel %vm126, %v1503, 0
    %v1519 = vsel %vm126, %v1512, 0
    %v1521 = vsel %vm126, %v1514, 0
    %1523 = vmatpush.xpose.msra.mxu0 0.0
    %1524 = vmatpush.xpose.msra.mxu0 0.0
    %1525 = vmatpush.xpose.msra.mxu0 0.0
    %1526 = vmatpush.xpose.msra.mxu0 0.0
    %1527 = vmatpush.xpose.msra.mxu0 0.0
    %1528 = vmatpush.xpose.msra.mxu0 0.0
    %1529 = vmatpush.xpose.msra.mxu0 0.0
    %1530 = vmatpush.xpose.msra.mxu0 0.0
    %1531 = vmatpush.xpose.msra.mxu0 0.0
    %1532 = vmatpush.xpose.msra.mxu0 0.0
    %1533 = vmatpush.xpose.msra.mxu0 0.0
    %1534 = vmatpush.xpose.msra.mxu0 0.0
    %1535 = vmatpush.xpose.msra.mxu0 0.0
    %1536 = vmatpush.xpose.msra.mxu0 0.0
    %1537 = vmatpush.xpose.msra.mxu0 %v1521
    %1538 = vmatpush.xpose.msra.mxu0 %v1519
    %1539 = vmatmul.f32.gmra.mxu0 %v1515
    %v1540 = vpop.f32.mrf.mxu0
    %v1541 = vadd.f32 0.0, %v1540
    %1542 = vmatmul.f32.gmra.mxu0 %v1517
    %v1543 = vpop.f32.mrf.mxu0
    %v1544 = vadd.f32 0.0, %v1543
    %1545 = vdwg.mxu0
    %v1546 = vmul.f32 %v1488, 0.35355338
    %v1547 = vmul.f32 %v1491, 0.35355338
    %v1548 = vmul.f32 %v1541, 0.35355338
    %v1549 = vmul.f32 %v1544, 0.35355338
    %v1550 = vsel %vm1249, -1e+09, %v1546
    %v1551 = vsel %vm1249, -1e+09, %v1547
    %v1552 = vsel %vm1250, -1e+09, %v1548
    %v1553 = vsel %vm1250, -1e+09, %v1549
    %v1554 = vsel %vm1255, %v1550, -inf
    %1555 = vmax.xlane.f32.xlu0 %v1554
    %v1556 = vpop.xlane.xlu0 %1555
    %v1557 = vsel %vm1259, %v1551, -inf
    %1558 = vmax.xlane.f32.xlu0 %v1557
    %v1559 = vpop.xlane.xlu0 %1558
    %v1560 = vsel %vm1255, %v1552, -inf
    %1561 = vmax.xlane.f32.xlu0 %v1560
    %v1562 = vpop.xlane.xlu0 %1561
    %v1563 = vsel %vm1259, %v1553, -inf
    %1564 = vmax.xlane.f32.xlu0 %v1563
    %v1565 = vpop.xlane.xlu0 %1564
    %v1566 = vsub.f32 %v1550, %v1556
    %v1567 = vsub.f32 %v1551, %v1559
    %v1568 = vsub.f32 %v1552, %v1562
    %v1569 = vsub.f32 %v1553, %v1565
    %v1570 = vmul.f32 %v1566, 1.442695
    %v1571 = vpow.pop %v1570
    %v1572 = vmul.f32 %v1567, 1.442695
    %v1573 = vpow.pop %v1572
    %v1574 = vmul.f32 %v1568, 1.442695
    %v1575 = vpow.pop %v1574
    %v1576 = vmul.f32 %v1569, 1.442695
    %v1577 = vpow.pop %v1576
    %v1578 = vsel %vm1255, %v1571, 0.0
    %1579 = vadd.xlane.f32.xlu0 %v1578
    %v1580 = vpop.xlane.xlu0 %1579
    %v1581 = vsel %vm1259, %v1573, 0.0
    %1582 = vadd.xlane.f32.xlu0 %v1581
    %v1583 = vpop.xlane.xlu0 %1582
    %v1584 = vsel %vm1255, %v1575, 0.0
    %1585 = vadd.xlane.f32.xlu0 %v1584
    %v1586 = vpop.xlane.xlu0 %1585
    %v1587 = vsel %vm1259, %v1577, 0.0
    %1588 = vadd.xlane.f32.xlu0 %v1587
    %v1589 = vpop.xlane.xlu0 %1588
    %v1590 = vrcp.pop %v1580
    %v1591 = vmul.f32 %v1580, %v1590
    %v1592 = vsub.f32 1.0, %v1591
    %v1593 = vmul.f32 %v1590, %v1592
    %v1594 = vadd.f32 %v1590, %v1593
    %vm1595 = vweird.f32 %v1580
    %vm1596 = vweird.f32 %v1590
    %vm1597 = vmor %vm1595, %vm1596
    %v1598 = vsel %vm1597, %v1590, %v1594
    %v1599 = vand.u32 2147483647, %v1580
    %vm1600 = vcmp.eq.f32.partialorder %v1599, 8.507059e+37
    %v1601 = vand.u32 %v1580, 2147483648
    %v1602 = vor.u32 1.1754944e-38, %v1601
    %v1603 = vsel %vm1600, %v1602, %v1598
    %v1604 = vmul.f32 %v1571, %v1603
    %v1605 = vrcp.pop %v1583
    %v1606 = vmul.f32 %v1583, %v1605
    %v1607 = vsub.f32 1.0, %v1606
    %v1608 = vmul.f32 %v1605, %v1607
    %v1609 = vadd.f32 %v1605, %v1608
    %vm1610 = vweird.f32 %v1583
    %vm1611 = vweird.f32 %v1605
    %vm1612 = vmor %vm1610, %vm1611
    %v1613 = vsel %vm1612, %v1605, %v1609
    %v1614 = vand.u32 2147483647, %v1583
    %vm1615 = vcmp.eq.f32.partialorder %v1614, 8.507059e+37
    %v1616 = vand.u32 %v1583, 2147483648
    %v1617 = vor.u32 1.1754944e-38, %v1616
    %v1618 = vsel %vm1615, %v1617, %v1613
    %v1619 = vmul.f32 %v1573, %v1618
    %v1620 = vrcp.pop %v1586
    %v1621 = vmul.f32 %v1586, %v1620
    %v1622 = vsub.f32 1.0, %v1621
    %v1623 = vmul.f32 %v1620, %v1622
    %v1624 = vadd.f32 %v1620, %v1623
    %vm1625 = vweird.f32 %v1586
    %vm1626 = vweird.f32 %v1620
    %vm1627 = vmor %vm1625, %vm1626
    %v1628 = vsel %vm1627, %v1620, %v1624
    %v1629 = vand.u32 2147483647, %v1586
    %vm1630 = vcmp.eq.f32.partialorder %v1629, 8.507059e+37
    %v1631 = vand.u32 %v1586, 2147483648
    %v1632 = vor.u32 1.1754944e-38, %v1631
    %v1633 = vsel %vm1630, %v1632, %v1628
    %v1634 = vmul.f32 %v1575, %v1633
    %v1635 = vrcp.pop %v1589
    %v1636 = vmul.f32 %v1589, %v1635
    %v1637 = vsub.f32 1.0, %v1636
    %v1638 = vmul.f32 %v1635, %v1637
    %v1639 = vadd.f32 %v1635, %v1638
    %vm1640 = vweird.f32 %v1589
    %vm1641 = vweird.f32 %v1635
    %vm1642 = vmor %vm1640, %vm1641
    %v1643 = vsel %vm1642, %v1635, %v1639
    %v1644 = vand.u32 2147483647, %v1589
    %vm1645 = vcmp.eq.f32.partialorder %v1644, 8.507059e+37
    %v1646 = vand.u32 %v1589, 2147483648
    %v1647 = vor.u32 1.1754944e-38, %v1646
    %v1648 = vsel %vm1645, %v1647, %v1643
    %v1649 = vmul.f32 %v1577, %v1648
    %1650 = vst [vmem:[#allocation1] ss:$2 sm:$0xff] %v1129
    %s1651 = scalar_lea.vmem [#allocation1], 1
    %1652 = vst [vmem:[%s1651] ss:$2 sm:$0xff] %v1140
    %s1653 = scalar_lea.vmem [#allocation1], 16
    %1654 = vst [vmem:[%s1653] ss:$2 sm:$0xff] %v1132
    %v1655 = vld.sshfl [vmem:[#allocation1] sm:$0xff pattern:$0x75316420]
    %v1656 = vld.sshfl [vmem:[#allocation1 + $0x10] sm:$0xff pattern:$0x75316420]
    %1657 = vrot.lane.b32.xlu0 %v1655, 56
    %v1658 = vpop.permute.xlu0 %1657
    %1659 = vrot.lane.b32.xlu0 %v1656, 56
    %v1660 = vpop.permute.xlu0 %1659
    %v1663 = vsel %vm1255, %v1604, 0
    %v1666 = vsel %vm1255, %v1619, 0
    %v1668 = vsel %vm1371, %v1660, 0
    %1670 = vmatpush.msra.mxu0 0.0
    %1671 = vmatpush.msra.mxu0 0.0
    %1672 = vmatpush.msra.mxu0 0.0
    %1673 = vmatpush.msra.mxu0 0.0
    %1674 = vmatpush.msra.mxu0 0.0
    %1675 = vmatpush.msra.mxu0 0.0
    %1676 = vmatpush.msra.mxu0 0.0
    %1677 = vmatpush.msra.mxu0 0.0
    %1678 = vmatpush.msra.mxu0 0.0
    %1679 = vmatpush.msra.mxu0 0.0
    %1680 = vmatpush.msra.mxu0 0.0
    %1681 = vmatpush.msra.mxu0 0.0
    %1682 = vmatpush.msra.mxu0 0.0
    %1683 = vmatpush.msra.mxu0 0.0
    %1684 = vmatpush.msra.mxu0 %v1668
    %1685 = vmatpush.msra.mxu0 %v1658
    %1686 = vmatmul.f32.gmra.mxu0 %v1663
    %v1687 = vpop.f32.mrf.mxu0
    %v1688 = vadd.f32 0.0, %v1687
    %1689 = vmatmul.f32.gmra.mxu0 %v1666
    %v1690 = vpop.f32.mrf.mxu0
    %v1691 = vadd.f32 0.0, %v1690
    %1692 = vdwg.mxu0
    %1693 = vst [vmem:[#allocation1] ss:$2 sm:$0xff] %v1141
    %s1694 = scalar_lea.vmem [#allocation1], 1
    %1695 = vst [vmem:[%s1694] ss:$2 sm:$0xff] %v1135
    %s1696 = scalar_lea.vmem [#allocation1], 16
    %1697 = vst [vmem:[%s1696] ss:$2 sm:$0xff] %v1142
    %v1698 = vld.sshfl [vmem:[#allocation1] sm:$0xff pattern:$0x75316420]
    %v1699 = vld.sshfl [vmem:[#allocation1 + $0x10] sm:$0xff pattern:$0x75316420]
    %1700 = vrot.lane.b32.xlu0 %v1698, 56
    %v1701 = vpop.permute.xlu0 %1700
    %1702 = vrot.lane.b32.xlu0 %v1699, 56
    %v1703 = vpop.permute.xlu0 %1702
    %v1706 = vsel %vm1255, %v1634, 0
    %v1709 = vsel %vm1255, %v1649, 0
    %v1711 = vsel %vm1371, %v1703, 0
    %1713 = vmatpush.msra.mxu0 0.0
    %1714 = vmatpush.msra.mxu0 0.0
    %1715 = vmatpush.msra.mxu0 0.0
    %1716 = vmatpush.msra.mxu0 0.0
    %1717 = vmatpush.msra.mxu0 0.0
    %1718 = vmatpush.msra.mxu0 0.0
    %1719 = vmatpush.msra.mxu0 0.0
    %1720 = vmatpush.msra.mxu0 0.0
    %1721 = vmatpush.msra.mxu0 0.0
    %1722 = vmatpush.msra.mxu0 0.0
    %1723 = vmatpush.msra.mxu0 0.0
    %1724 = vmatpush.msra.mxu0 0.0
    %1725 = vmatpush.msra.mxu0 0.0
    %1726 = vmatpush.msra.mxu0 0.0
    %1727 = vmatpush.msra.mxu0 %v1711
    %1728 = vmatpush.msra.mxu0 %v1701
    %1729 = vmatmul.f32.gmra.mxu0 %v1706
    %v1730 = vpop.f32.mrf.mxu0
    %v1731 = vadd.f32 0.0, %v1730
    %1732 = vmatmul.f32.gmra.mxu0 %v1709
    %v1733 = vpop.f32.mrf.mxu0
    %v1734 = vadd.f32 0.0, %v1733
    %1735 = vdwg.mxu0
    %1736 = vst [vmem:[#allocation1] ss:$2 sm:$0xff] %v1129
    %s1737 = scalar_lea.vmem [#allocation1], 1
    %1738 = vst [vmem:[%s1737] ss:$2 sm:$0xff] %v1140
    %s1739 = scalar_lea.vmem [#allocation1], 16
    %1740 = vst [vmem:[%s1739] ss:$2 sm:$0xff] %v1132
    %v1741 = vld.sshfl [vmem:[#allocation1] sm:$0xff pattern:$0x75316420]
    %v1742 = vld.sshfl [vmem:[#allocation1 + $0x10] sm:$0xff pattern:$0x75316420]
    %1743 = vrot.lane.b32.xlu0 %v1741, 112
    %v1744 = vpop.permute.xlu0 %1743
    %1745 = vrot.lane.b32.xlu0 %v1742, 112
    %v1746 = vpop.permute.xlu0 %1745
    %1747 = vst [vmem:[#allocation1] ss:$2 sm:$0xff] %v1129
    %s1748 = scalar_lea.vmem [#allocation1], 1
    %1749 = vst [vmem:[%s1748] ss:$2 sm:$0xff] %v1140
    %s1750 = scalar_lea.vmem [#allocation1], 16
    %1751 = vst [vmem:[%s1750] ss:$2 sm:$0xff] %v1132
    %v1752 = vld.sshfl [vmem:[#allocation1] sm:$0xff pattern:$0x75316420]
    %v1753 = vld.sshfl [vmem:[#allocation1 + $0x10] sm:$0xff pattern:$0x75316420]
    %1754 = vrot.lane.b32.xlu0 %v1752, 80
    %v1755 = vpop.permute.xlu0 %1754
    %1756 = vrot.lane.b32.xlu0 %v1753, 80
    %v1757 = vpop.permute.xlu0 %1756
    %v1758 = vsel %vm126, %v1744, 0
    %v1760 = vsel %vm126, %v1746, 0
    %v1762 = vsel %vm126, %v1755, 0
    %v1764 = vsel %vm126, %v1757, 0
    %1766 = vmatpush.xpose.msra.mxu0 0.0
    %1767 = vmatpush.xpose.msra.mxu0 0.0
    %1768 = vmatpush.xpose.msra.mxu0 0.0
    %1769 = vmatpush.xpose.msra.mxu0 0.0
    %1770 = vmatpush.xpose.msra.mxu0 0.0
    %1771 = vmatpush.xpose.msra.mxu0 0.0
    %1772 = vmatpush.xpose.msra.mxu0 0.0
    %1773 = vmatpush.xpose.msra.mxu0 0.0
    %1774 = vmatpush.xpose.msra.mxu0 0.0
    %1775 = vmatpush.xpose.msra.mxu0 0.0
    %1776 = vmatpush.xpose.msra.mxu0 0.0
    %1777 = vmatpush.xpose.msra.mxu0 0.0
    %1778 = vmatpush.xpose.msra.mxu0 0.0
    %1779 = vmatpush.xpose.msra.mxu0 0.0
    %1780 = vmatpush.xpose.msra.mxu0 %v1764
    %1781 = vmatpush.xpose.msra.mxu0 %v1762
    %1782 = vmatmul.f32.gmra.mxu0 %v1758
    %v1783 = vpop.f32.mrf.mxu0
    %v1784 = vadd.f32 0.0, %v1783
    %1785 = vmatmul.f32.gmra.mxu0 %v1760
    %v1786 = vpop.f32.mrf.mxu0
    %v1787 = vadd.f32 0.0, %v1786
    %1788 = vdwg.mxu0
    %1789 = vst [vmem:[#allocation1] ss:$2 sm:$0xff] %v1141
    %s1790 = scalar_lea.vmem [#allocation1], 1
    %1791 = vst [vmem:[%s1790] ss:$2 sm:$0xff] %v1135
    %s1792 = scalar_lea.vmem [#allocation1], 16
    %1793 = vst [vmem:[%s1792] ss:$2 sm:$0xff] %v1142
    %v1794 = vld.sshfl [vmem:[#allocation1] sm:$0xff pattern:$0x75316420]
    %v1795 = vld.sshfl [vmem:[#allocation1 + $0x10] sm:$0xff pattern:$0x75316420]
    %1796 = vrot.lane.b32.xlu0 %v1794, 112
    %v1797 = vpop.permute.xlu0 %1796
    %1798 = vrot.lane.b32.xlu0 %v1795, 112
    %v1799 = vpop.permute.xlu0 %1798
    %1800 = vst [vmem:[#allocation1] ss:$2 sm:$0xff] %v1141
    %s1801 = scalar_lea.vmem [#allocation1], 1
    %1802 = vst [vmem:[%s1801] ss:$2 sm:$0xff] %v1135
    %s1803 = scalar_lea.vmem [#allocation1], 16
    %1804 = vst [vmem:[%s1803] ss:$2 sm:$0xff] %v1142
    %v1805 = vld.sshfl [vmem:[#allocation1] sm:$0xff pattern:$0x75316420]
    %v1806 = vld.sshfl [vmem:[#allocation1 + $0x10] sm:$0xff pattern:$0x75316420]
    %1807 = vrot.lane.b32.xlu0 %v1805, 80
    %v1808 = vpop.permute.xlu0 %1807
    %1809 = vrot.lane.b32.xlu0 %v1806, 80
    %v1810 = vpop.permute.xlu0 %1809
    %v1811 = vsel %vm126, %v1797, 0
    %v1813 = vsel %vm126, %v1799, 0
    %v1815 = vsel %vm126, %v1808, 0
    %v1817 = vsel %vm126, %v1810, 0
    %1819 = vmatpush.xpose.msra.mxu0 0.0
    %1820 = vmatpush.xpose.msra.mxu0 0.0
    %1821 = vmatpush.xpose.msra.mxu0 0.0
    %1822 = vmatpush.xpose.msra.mxu0 0.0
    %1823 = vmatpush.xpose.msra.mxu0 0.0
    %1824 = vmatpush.xpose.msra.mxu0 0.0
    %1825 = vmatpush.xpose.msra.mxu0 0.0
    %1826 = vmatpush.xpose.msra.mxu0 0.0
    %1827 = vmatpush.xpose.msra.mxu0 0.0
    %1828 = vmatpush.xpose.msra.mxu0 0.0
    %1829 = vmatpush.xpose.msra.mxu0 0.0
    %1830 = vmatpush.xpose.msra.mxu0 0.0
    %1831 = vmatpush.xpose.msra.mxu0 0.0
    %1832 = vmatpush.xpose.msra.mxu0 0.0
    %1833 = vmatpush.xpose.msra.mxu0 %v1817
    %1834 = vmatpush.xpose.msra.mxu0 %v1815
    %1835 = vmatmul.f32.gmra.mxu0 %v1811
    %v1836 = vpop.f32.mrf.mxu0
    %v1837 = vadd.f32 0.0, %v1836
    %1838 = vmatmul.f32.gmra.mxu0 %v1813
    %v1839 = vpop.f32.mrf.mxu0
    %v1840 = vadd.f32 0.0, %v1839
    %1841 = vdwg.mxu0
    %v1842 = vmul.f32 %v1784, 0.35355338
    %v1843 = vmul.f32 %v1787, 0.35355338
    %v1844 = vmul.f32 %v1837, 0.35355338
    %v1845 = vmul.f32 %v1840, 0.35355338
    %v1846 = vsel %vm1249, -1e+09, %v1842
    %v1847 = vsel %vm1249, -1e+09, %v1843
    %v1848 = vsel %vm1250, -1e+09, %v1844
    %v1849 = vsel %vm1250, -1e+09, %v1845
    %v1850 = vsel %vm1255, %v1846, -inf
    %1851 = vmax.xlane.f32.xlu0 %v1850
    %v1852 = vpop.xlane.xlu0 %1851
    %v1853 = vsel %vm1259, %v1847, -inf
    %1854 = vmax.xlane.f32.xlu0 %v1853
    %v1855 = vpop.xlane.xlu0 %1854
    %v1856 = vsel %vm1255, %v1848, -inf
    %1857 = vmax.xlane.f32.xlu0 %v1856
    %v1858 = vpop.xlane.xlu0 %1857
    %v1859 = vsel %vm1259, %v1849, -inf
    %1860 = vmax.xlane.f32.xlu0 %v1859
    %v1861 = vpop.xlane.xlu0 %1860
    %v1862 = vsub.f32 %v1846, %v1852
    %v1863 = vsub.f32 %v1847, %v1855
    %v1864 = vsub.f32 %v1848, %v1858
    %v1865 = vsub.f32 %v1849, %v1861
    %v1866 = vmul.f32 %v1862, 1.442695
    %v1867 = vpow.pop %v1866
    %v1868 = vmul.f32 %v1863, 1.442695
    %v1869 = vpow.pop %v1868
    %v1870 = vmul.f32 %v1864, 1.442695
    %v1871 = vpow.pop %v1870
    %v1872 = vmul.f32 %v1865, 1.442695
    %v1873 = vpow.pop %v1872
    %v1874 = vsel %vm1255, %v1867, 0.0
    %1875 = vadd.xlane.f32.xlu0 %v1874
    %v1876 = vpop.xlane.xlu0 %1875
    %v1877 = vsel %vm1259, %v1869, 0.0
    %1878 = vadd.xlane.f32.xlu0 %v1877
    %v1879 = vpop.xlane.xlu0 %1878
    %v1880 = vsel %vm1255, %v1871, 0.0
    %1881 = vadd.xlane.f32.xlu0 %v1880
    %v1882 = vpop.xlane.xlu0 %1881
    %v1883 = vsel %vm1259, %v1873, 0.0
    %1884 = vadd.xlane.f32.xlu0 %v1883
    %v1885 = vpop.xlane.xlu0 %1884
    %v1886 = vrcp.pop %v1876
    %v1887 = vmul.f32 %v1876, %v1886
    %v1888 = vsub.f32 1.0, %v1887
    %v1889 = vmul.f32 %v1886, %v1888
    %v1890 = vadd.f32 %v1886, %v1889
    %vm1891 = vweird.f32 %v1876
    %vm1892 = vweird.f32 %v1886
    %vm1893 = vmor %vm1891, %vm1892
    %v1894 = vsel %vm1893, %v1886, %v1890
    %v1895 = vand.u32 2147483647, %v1876
    %vm1896 = vcmp.eq.f32.partialorder %v1895, 8.507059e+37
    %v1897 = vand.u32 %v1876, 2147483648
    %v1898 = vor.u32 1.1754944e-38, %v1897
    %v1899 = vsel %vm1896, %v1898, %v1894
    %v1900 = vmul.f32 %v1867, %v1899
    %v1901 = vrcp.pop %v1879
    %v1902 = vmul.f32 %v1879, %v1901
    %v1903 = vsub.f32 1.0, %v1902
    %v1904 = vmul.f32 %v1901, %v1903
    %v1905 = vadd.f32 %v1901, %v1904
    %vm1906 = vweird.f32 %v1879
    %vm1907 = vweird.f32 %v1901
    %vm1908 = vmor %vm1906, %vm1907
    %v1909 = vsel %vm1908, %v1901, %v1905
    %v1910 = vand.u32 2147483647, %v1879
    %vm1911 = vcmp.eq.f32.partialorder %v1910, 8.507059e+37
    %v1912 = vand.u32 %v1879, 2147483648
    %v1913 = vor.u32 1.1754944e-38, %v1912
    %v1914 = vsel %vm1911, %v1913, %v1909
    %v1915 = vmul.f32 %v1869, %v1914
    %v1916 = vrcp.pop %v1882
    %v1917 = vmul.f32 %v1882, %v1916
    %v1918 = vsub.f32 1.0, %v1917
    %v1919 = vmul.f32 %v1916, %v1918
    %v1920 = vadd.f32 %v1916, %v1919
    %vm1921 = vweird.f32 %v1882
    %vm1922 = vweird.f32 %v1916
    %vm1923 = vmor %vm1921, %vm1922
    %v1924 = vsel %vm1923, %v1916, %v1920
    %v1925 = vand.u32 2147483647, %v1882
    %vm1926 = vcmp.eq.f32.partialorder %v1925, 8.507059e+37
    %v1927 = vand.u32 %v1882, 2147483648
    %v1928 = vor.u32 1.1754944e-38, %v1927
    %v1929 = vsel %vm1926, %v1928, %v1924
    %v1930 = vmul.f32 %v1871, %v1929
    %v1931 = vrcp.pop %v1885
    %v1932 = vmul.f32 %v1885, %v1931
    %v1933 = vsub.f32 1.0, %v1932
    %v1934 = vmul.f32 %v1931, %v1933
    %v1935 = vadd.f32 %v1931, %v1934
    %vm1936 = vweird.f32 %v1885
    %vm1937 = vweird.f32 %v1931
    %vm1938 = vmor %vm1936, %vm1937
    %v1939 = vsel %vm1938, %v1931, %v1935
    %v1940 = vand.u32 2147483647, %v1885
    %vm1941 = vcmp.eq.f32.partialorder %v1940, 8.507059e+37
    %v1942 = vand.u32 %v1885, 2147483648
    %v1943 = vor.u32 1.1754944e-38, %v1942
    %v1944 = vsel %vm1941, %v1943, %v1939
    %v1945 = vmul.f32 %v1873, %v1944
    %1946 = vst [vmem:[#allocation1] ss:$2 sm:$0xff] %v1129
    %s1947 = scalar_lea.vmem [#allocation1], 1
    %1948 = vst [vmem:[%s1947] ss:$2 sm:$0xff] %v1140
    %s1949 = scalar_lea.vmem [#allocation1], 16
    %1950 = vst [vmem:[%s1949] ss:$2 sm:$0xff] %v1132
    %v1951 = vld.sshfl [vmem:[#allocation1] sm:$0xff pattern:$0x75316420]
    %v1952 = vld.sshfl [vmem:[#allocation1 + $0x10] sm:$0xff pattern:$0x75316420]
    %1953 = vrot.lane.b32.xlu0 %v1951, 48
    %v1954 = vpop.permute.xlu0 %1953
    %1955 = vrot.lane.b32.xlu0 %v1952, 48
    %v1956 = vpop.permute.xlu0 %1955
    %v1959 = vsel %vm1255, %v1900, 0
    %v1962 = vsel %vm1255, %v1915, 0
    %v1964 = vsel %vm1371, %v1956, 0
    %1966 = vmatpush.msra.mxu0 0.0
    %1967 = vmatpush.msra.mxu0 0.0
    %1968 = vmatpush.msra.mxu0 0.0
    %1969 = vmatpush.msra.mxu0 0.0
    %1970 = vmatpush.msra.mxu0 0.0
    %1971 = vmatpush.msra.mxu0 0.0
    %1972 = vmatpush.msra.mxu0 0.0
    %1973 = vmatpush.msra.mxu0 0.0
    %1974 = vmatpush.msra.mxu0 0.0
    %1975 = vmatpush.msra.mxu0 0.0
    %1976 = vmatpush.msra.mxu0 0.0
    %1977 = vmatpush.msra.mxu0 0.0
    %1978 = vmatpush.msra.mxu0 0.0
    %1979 = vmatpush.msra.mxu0 0.0
    %1980 = vmatpush.msra.mxu0 %v1964
    %1981 = vmatpush.msra.mxu0 %v1954
    %1982 = vmatmul.f32.gmra.mxu0 %v1959
    %v1983 = vpop.f32.mrf.mxu0
    %v1984 = vadd.f32 0.0, %v1983
    %1985 = vmatmul.f32.gmra.mxu0 %v1962
    %v1986 = vpop.f32.mrf.mxu0
    %v1987 = vadd.f32 0.0, %v1986
    %1988 = vdwg.mxu0
    %1989 = vst [vmem:[#allocation1] ss:$2 sm:$0xff] %v1141
    %s1990 = scalar_lea.vmem [#allocation1], 1
    %1991 = vst [vmem:[%s1990] ss:$2 sm:$0xff] %v1135
    %s1992 = scalar_lea.vmem [#allocation1], 16
    %1993 = vst [vmem:[%s1992] ss:$2 sm:$0xff] %v1142
    %v1994 = vld.sshfl [vmem:[#allocation1] sm:$0xff pattern:$0x75316420]
    %v1995 = vld.sshfl [vmem:[#allocation1 + $0x10] sm:$0xff pattern:$0x75316420]
    %1996 = vrot.lane.b32.xlu0 %v1994, 48
    %v1997 = vpop.permute.xlu0 %1996
    %1998 = vrot.lane.b32.xlu0 %v1995, 48
    %v1999 = vpop.permute.xlu0 %1998
    %v2002 = vsel %vm1255, %v1930, 0
    %v2005 = vsel %vm1255, %v1945, 0
    %v2007 = vsel %vm1371, %v1999, 0
    %2009 = vmatpush.msra.mxu0 0.0
    %2010 = vmatpush.msra.mxu0 0.0
    %2011 = vmatpush.msra.mxu0 0.0
    %2012 = vmatpush.msra.mxu0 0.0
    %2013 = vmatpush.msra.mxu0 0.0
    %2014 = vmatpush.msra.mxu0 0.0
    %2015 = vmatpush.msra.mxu0 0.0
    %2016 = vmatpush.msra.mxu0 0.0
    %2017 = vmatpush.msra.mxu0 0.0
    %2018 = vmatpush.msra.mxu0 0.0
    %2019 = vmatpush.msra.mxu0 0.0
    %2020 = vmatpush.msra.mxu0 0.0
    %2021 = vmatpush.msra.mxu0 0.0
    %2022 = vmatpush.msra.mxu0 0.0
    %2023 = vmatpush.msra.mxu0 %v2007
    %2024 = vmatpush.msra.mxu0 %v1997
    %2025 = vmatmul.f32.gmra.mxu0 %v2002
    %v2026 = vpop.f32.mrf.mxu0
    %v2027 = vadd.f32 0.0, %v2026
    %2028 = vmatmul.f32.gmra.mxu0 %v2005
    %v2029 = vpop.f32.mrf.mxu0
    %v2030 = vadd.f32 0.0, %v2029
    %2031 = vdwg.mxu0
    %2032 = vst [vmem:[#allocation1] ss:$2 sm:$0xff] %v1129
    %s2033 = scalar_lea.vmem [#allocation1], 1
    %2034 = vst [vmem:[%s2033] ss:$2 sm:$0xff] %v1140
    %s2035 = scalar_lea.vmem [#allocation1], 16
    %2036 = vst [vmem:[%s2035] ss:$2 sm:$0xff] %v1132
    %v2037 = vld.sshfl [vmem:[#allocation1] sm:$0xff pattern:$0x75316420]
    %v2038 = vld.sshfl [vmem:[#allocation1 + $0x10] sm:$0xff pattern:$0x75316420]
    %2039 = vrot.lane.b32.xlu0 %v2037, 104
    %v2040 = vpop.permute.xlu0 %2039
    %2041 = vrot.lane.b32.xlu0 %v2038, 104
    %v2042 = vpop.permute.xlu0 %2041
    %2043 = vst [vmem:[#allocation1] ss:$2 sm:$0xff] %v1129
    %s2044 = scalar_lea.vmem [#allocation1], 1
    %2045 = vst [vmem:[%s2044] ss:$2 sm:$0xff] %v1140
    %s2046 = scalar_lea.vmem [#allocation1], 16
    %2047 = vst [vmem:[%s2046] ss:$2 sm:$0xff] %v1132
    %v2048 = vld.sshfl [vmem:[#allocation1] sm:$0xff pattern:$0x75316420]
    %v2049 = vld.sshfl [vmem:[#allocation1 + $0x10] sm:$0xff pattern:$0x75316420]
    %2050 = vrot.lane.b32.xlu0 %v2048, 72
    %v2051 = vpop.permute.xlu0 %2050
    %2052 = vrot.lane.b32.xlu0 %v2049, 72
    %v2053 = vpop.permute.xlu0 %2052
    %v2054 = vsel %vm126, %v2040, 0
    %v2056 = vsel %vm126, %v2042, 0
    %v2058 = vsel %vm126, %v2051, 0
    %v2060 = vsel %vm126, %v2053, 0
    %2062 = vmatpush.xpose.msra.mxu0 0.0
    %2063 = vmatpush.xpose.msra.mxu0 0.0
    %2064 = vmatpush.xpose.msra.mxu0 0.0
    %2065 = vmatpush.xpose.msra.mxu0 0.0
    %2066 = vmatpush.xpose.msra.mxu0 0.0
    %2067 = vmatpush.xpose.msra.mxu0 0.0
    %2068 = vmatpush.xpose.msra.mxu0 0.0
    %2069 = vmatpush.xpose.msra.mxu0 0.0
    %2070 = vmatpush.xpose.msra.mxu0 0.0
    %2071 = vmatpush.xpose.msra.mxu0 0.0
    %2072 = vmatpush.xpose.msra.mxu0 0.0
    %2073 = vmatpush.xpose.msra.mxu0 0.0
    %2074 = vmatpush.xpose.msra.mxu0 0.0
    %2075 = vmatpush.xpose.msra.mxu0 0.0
    %2076 = vmatpush.xpose.msra.mxu0 %v2060
    %2077 = vmatpush.xpose.msra.mxu0 %v2058
    %2078 = vmatmul.f32.gmra.mxu0 %v2054
    %v2079 = vpop.f32.mrf.mxu0
    %v2080 = vadd.f32 0.0, %v2079
    %2081 = vmatmul.f32.gmra.mxu0 %v2056
    %v2082 = vpop.f32.mrf.mxu0
    %v2083 = vadd.f32 0.0, %v2082
    %2084 = vdwg.mxu0
    %2085 = vst [vmem:[#allocation1] ss:$2 sm:$0xff] %v1141
    %s2086 = scalar_lea.vmem [#allocation1], 1
    %2087 = vst [vmem:[%s2086] ss:$2 sm:$0xff] %v1135
    %s2088 = scalar_lea.vmem [#allocation1], 16
    %2089 = vst [vmem:[%s2088] ss:$2 sm:$0xff] %v1142
    %v2090 = vld.sshfl [vmem:[#allocation1] sm:$0xff pattern:$0x75316420]
    %v2091 = vld.sshfl [vmem:[#allocation1 + $0x10] sm:$0xff pattern:$0x75316420]
    %2092 = vrot.lane.b32.xlu0 %v2090, 104
    %v2093 = vpop.permute.xlu0 %2092
    %2094 = vrot.lane.b32.xlu0 %v2091, 104
    %v2095 = vpop.permute.xlu0 %2094
    %2096 = vst [vmem:[#allocation1] ss:$2 sm:$0xff] %v1141
    %s2097 = scalar_lea.vmem [#allocation1], 1
    %2098 = vst [vmem:[%s2097] ss:$2 sm:$0xff] %v1135
    %s2099 = scalar_lea.vmem [#allocation1], 16
    %2100 = vst [vmem:[%s2099] ss:$2 sm:$0xff] %v1142
    %v2101 = vld.sshfl [vmem:[#allocation1] sm:$0xff pattern:$0x75316420]
    %v2102 = vld.sshfl [vmem:[#allocation1 + $0x10] sm:$0xff pattern:$0x75316420]
    %2103 = vrot.lane.b32.xlu0 %v2101, 72
    %v2104 = vpop.permute.xlu0 %2103
    %2105 = vrot.lane.b32.xlu0 %v2102, 72
    %v2106 = vpop.permute.xlu0 %2105
    %v2107 = vsel %vm126, %v2093, 0
    %v2109 = vsel %vm126, %v2095, 0
    %v2111 = vsel %vm126, %v2104, 0
    %v2113 = vsel %vm126, %v2106, 0
    %2115 = vmatpush.xpose.msra.mxu0 0.0
    %2116 = vmatpush.xpose.msra.mxu0 0.0
    %2117 = vmatpush.xpose.msra.mxu0 0.0
    %2118 = vmatpush.xpose.msra.mxu0 0.0
    %2119 = vmatpush.xpose.msra.mxu0 0.0
    %2120 = vmatpush.xpose.msra.mxu0 0.0
    %2121 = vmatpush.xpose.msra.mxu0 0.0
    %2122 = vmatpush.xpose.msra.mxu0 0.0
    %2123 = vmatpush.xpose.msra.mxu0 0.0
    %2124 = vmatpush.xpose.msra.mxu0 0.0
    %2125 = vmatpush.xpose.msra.mxu0 0.0
    %2126 = vmatpush.xpose.msra.mxu0 0.0
    %2127 = vmatpush.xpose.msra.mxu0 0.0
    %2128 = vmatpush.xpose.msra.mxu0 0.0
    %2129 = vmatpush.xpose.msra.mxu0 %v2113
    %2130 = vmatpush.xpose.msra.mxu0 %v2111
    %2131 = vmatmul.f32.gmra.mxu0 %v2107
    %v2132 = vpop.f32.mrf.mxu0
    %v2133 = vadd.f32 0.0, %v2132
    %2134 = vmatmul.f32.gmra.mxu0 %v2109
    %v2135 = vpop.f32.mrf.mxu0
    %v2136 = vadd.f32 0.0, %v2135
    %2137 = vdwg.mxu0
    %v2138 = vmul.f32 %v2080, 0.35355338
    %v2139 = vmul.f32 %v2083, 0.35355338
    %v2140 = vmul.f32 %v2133, 0.35355338
    %v2141 = vmul.f32 %v2136, 0.35355338
    %v2142 = vsel %vm1249, -1e+09, %v2138
    %v2143 = vsel %vm1249, -1e+09, %v2139
    %v2144 = vsel %vm1250, -1e+09, %v2140
    %v2145 = vsel %vm1250, -1e+09, %v2141
    %v2146 = vsel %vm1255, %v2142, -inf
    %2147 = vmax.xlane.f32.xlu0 %v2146
    %v2148 = vpop.xlane.xlu0 %2147
    %v2149 = vsel %vm1259, %v2143, -inf
    %2150 = vmax.xlane.f32.xlu0 %v2149
    %v2151 = vpop.xlane.xlu0 %2150
    %v2152 = vsel %vm1255, %v2144, -inf
    %2153 = vmax.xlane.f32.xlu0 %v2152
    %v2154 = vpop.xlane.xlu0 %2153
    %v2155 = vsel %vm1259, %v2145, -inf
    %2156 = vmax.xlane.f32.xlu0 %v2155
    %v2157 = vpop.xlane.xlu0 %2156
    %v2158 = vsub.f32 %v2142, %v2148
    %v2159 = vsub.f32 %v2143, %v2151
    %v2160 = vsub.f32 %v2144, %v2154
    %v2161 = vsub.f32 %v2145, %v2157
    %v2162 = vmul.f32 %v2158, 1.442695
    %v2163 = vpow.pop %v2162
    %v2164 = vmul.f32 %v2159, 1.442695
    %v2165 = vpow.pop %v2164
    %v2166 = vmul.f32 %v2160, 1.442695
    %v2167 = vpow.pop %v2166
    %v2168 = vmul.f32 %v2161, 1.442695
    %v2169 = vpow.pop %v2168
    %v2170 = vsel %vm1255, %v2163, 0.0
    %2171 = vadd.xlane.f32.xlu0 %v2170
    %v2172 = vpop.xlane.xlu0 %2171
    %v2173 = vsel %vm1259, %v2165, 0.0
    %2174 = vadd.xlane.f32.xlu0 %v2173
    %v2175 = vpop.xlane.xlu0 %2174
    %v2176 = vsel %vm1255, %v2167, 0.0
    %2177 = vadd.xlane.f32.xlu0 %v2176
    %v2178 = vpop.xlane.xlu0 %2177
    %v2179 = vsel %vm1259, %v2169, 0.0
    %2180 = vadd.xlane.f32.xlu0 %v2179
    %v2181 = vpop.xlane.xlu0 %2180
    %v2182 = vrcp.pop %v2172
    %v2183 = vmul.f32 %v2172, %v2182
    %v2184 = vsub.f32 1.0, %v2183
    %v2185 = vmul.f32 %v2182, %v2184
    %v2186 = vadd.f32 %v2182, %v2185
    %vm2187 = vweird.f32 %v2172
    %vm2188 = vweird.f32 %v2182
    %vm2189 = vmor %vm2187, %vm2188
    %v2190 = vsel %vm2189, %v2182, %v2186
    %v2191 = vand.u32 2147483647, %v2172
    %vm2192 = vcmp.eq.f32.partialorder %v2191, 8.507059e+37
    %v2193 = vand.u32 %v2172, 2147483648
    %v2194 = vor.u32 1.1754944e-38, %v2193
    %v2195 = vsel %vm2192, %v2194, %v2190
    %v2196 = vmul.f32 %v2163, %v2195
    %v2197 = vrcp.pop %v2175
    %v2198 = vmul.f32 %v2175, %v2197
    %v2199 = vsub.f32 1.0, %v2198
    %v2200 = vmul.f32 %v2197, %v2199
    %v2201 = vadd.f32 %v2197, %v2200
    %vm2202 = vweird.f32 %v2175
    %vm2203 = vweird.f32 %v2197
    %vm2204 = vmor %vm2202, %vm2203
    %v2205 = vsel %vm2204, %v2197, %v2201
    %v2206 = vand.u32 2147483647, %v2175
    %vm2207 = vcmp.eq.f32.partialorder %v2206, 8.507059e+37
    %v2208 = vand.u32 %v2175, 2147483648
    %v2209 = vor.u32 1.1754944e-38, %v2208
    %v2210 = vsel %vm2207, %v2209, %v2205
    %v2211 = vmul.f32 %v2165, %v2210
    %v2212 = vrcp.pop %v2178
    %v2213 = vmul.f32 %v2178, %v2212
    %v2214 = vsub.f32 1.0, %v2213
    %v2215 = vmul.f32 %v2212, %v2214
    %v2216 = vadd.f32 %v2212, %v2215
    %vm2217 = vweird.f32 %v2178
    %vm2218 = vweird.f32 %v2212
    %vm2219 = vmor %vm2217, %vm2218
    %v2220 = vsel %vm2219, %v2212, %v2216
    %v2221 = vand.u32 2147483647, %v2178
    %vm2222 = vcmp.eq.f32.partialorder %v2221, 8.507059e+37
    %v2223 = vand.u32 %v2178, 2147483648
    %v2224 = vor.u32 1.1754944e-38, %v2223
    %v2225 = vsel %vm2222, %v2224, %v2220
    %v2226 = vmul.f32 %v2167, %v2225
    %v2227 = vrcp.pop %v2181
    %v2228 = vmul.f32 %v2181, %v2227
    %v2229 = vsub.f32 1.0, %v2228
    %v2230 = vmul.f32 %v2227, %v2229
    %v2231 = vadd.f32 %v2227, %v2230
    %vm2232 = vweird.f32 %v2181
    %vm2233 = vweird.f32 %v2227
    %vm2234 = vmor %vm2232, %vm2233
    %v2235 = vsel %vm2234, %v2227, %v2231
    %v2236 = vand.u32 2147483647, %v2181
    %vm2237 = vcmp.eq.f32.partialorder %v2236, 8.507059e+37
    %v2238 = vand.u32 %v2181, 2147483648
    %v2239 = vor.u32 1.1754944e-38, %v2238
    %v2240 = vsel %vm2237, %v2239, %v2235
    %v2241 = vmul.f32 %v2169, %v2240
    %2242 = vst [vmem:[#allocation1] ss:$2 sm:$0xff] %v1129
    %s2243 = scalar_lea.vmem [#allocation1], 1
    %2244 = vst [vmem:[%s2243] ss:$2 sm:$0xff] %v1140
    %s2245 = scalar_lea.vmem [#allocation1], 16
    %2246 = vst [vmem:[%s2245] ss:$2 sm:$0xff] %v1132
    %v2247 = vld.sshfl [vmem:[#allocation1] sm:$0xff pattern:$0x75316420]
    %v2248 = vld.sshfl [vmem:[#allocation1 + $0x10] sm:$0xff pattern:$0x75316420]
    %2249 = vrot.lane.b32.xlu0 %v2247, 40
    %v2250 = vpop.permute.xlu0 %2249
    %2251 = vrot.lane.b32.xlu0 %v2248, 40
    %v2252 = vpop.permute.xlu0 %2251
    %v2255 = vsel %vm1255, %v2196, 0
    %v2258 = vsel %vm1255, %v2211, 0
    %v2260 = vsel %vm1371, %v2252, 0
    %2262 = vmatpush.msra.mxu0 0.0
    %2263 = vmatpush.msra.mxu0 0.0
    %2264 = vmatpush.msra.mxu0 0.0
    %2265 = vmatpush.msra.mxu0 0.0
    %2266 = vmatpush.msra.mxu0 0.0
    %2267 = vmatpush.msra.mxu0 0.0
    %2268 = vmatpush.msra.mxu0 0.0
    %2269 = vmatpush.msra.mxu0 0.0
    %2270 = vmatpush.msra.mxu0 0.0
    %2271 = vmatpush.msra.mxu0 0.0
    %2272 = vmatpush.msra.mxu0 0.0
    %2273 = vmatpush.msra.mxu0 0.0
    %2274 = vmatpush.msra.mxu0 0.0
    %2275 = vmatpush.msra.mxu0 0.0
    %2276 = vmatpush.msra.mxu0 %v2260
    %2277 = vmatpush.msra.mxu0 %v2250
    %2278 = vmatmul.f32.gmra.mxu0 %v2255
    %v2279 = vpop.f32.mrf.mxu0
    %v2280 = vadd.f32 0.0, %v2279
    %2281 = vmatmul.f32.gmra.mxu0 %v2258
    %v2282 = vpop.f32.mrf.mxu0
    %v2283 = vadd.f32 0.0, %v2282
    %2284 = vdwg.mxu0
    %2285 = vst [vmem:[#allocation1] ss:$2 sm:$0xff] %v1141
    %s2286 = scalar_lea.vmem [#allocation1], 1
    %2287 = vst [vmem:[%s2286] ss:$2 sm:$0xff] %v1135
    %s2288 = scalar_lea.vmem [#allocation1], 16
    %2289 = vst [vmem:[%s2288] ss:$2 sm:$0xff] %v1142
    %v2290 = vld.sshfl [vmem:[#allocation1] sm:$0xff pattern:$0x75316420]
    %v2291 = vld.sshfl [vmem:[#allocation1 + $0x10] sm:$0xff pattern:$0x75316420]
    %2292 = vrot.lane.b32.xlu0 %v2290, 40
    %v2293 = vpop.permute.xlu0 %2292
    %2294 = vrot.lane.b32.xlu0 %v2291, 40
    %v2295 = vpop.permute.xlu0 %2294
    %v2298 = vsel %vm1255, %v2226, 0
    %v2301 = vsel %vm1255, %v2241, 0
    %v2303 = vsel %vm1371, %v2295, 0
    %2305 = vmatpush.msra.mxu0 0.0
    %2306 = vmatpush.msra.mxu0 0.0
    %2307 = vmatpush.msra.mxu0 0.0
    %2308 = vmatpush.msra.mxu0 0.0
    %2309 = vmatpush.msra.mxu0 0.0
    %2310 = vmatpush.msra.mxu0 0.0
    %2311 = vmatpush.msra.mxu0 0.0
    %2312 = vmatpush.msra.mxu0 0.0
    %2313 = vmatpush.msra.mxu0 0.0
    %2314 = vmatpush.msra.mxu0 0.0
    %2315 = vmatpush.msra.mxu0 0.0
    %2316 = vmatpush.msra.mxu0 0.0
    %2317 = vmatpush.msra.mxu0 0.0
    %2318 = vmatpush.msra.mxu0 0.0
    %2319 = vmatpush.msra.mxu0 %v2303
    %2320 = vmatpush.msra.mxu0 %v2293
    %2321 = vmatmul.f32.gmra.mxu0 %v2298
    %v2322 = vpop.f32.mrf.mxu0
    %v2323 = vadd.f32 0.0, %v2322
    %2324 = vmatmul.f32.gmra.mxu0 %v2301
    %v2325 = vpop.f32.mrf.mxu0
    %v2326 = vadd.f32 0.0, %v2325
    %2327 = vdwg.mxu0
    %2332 = vrot.lane.b32.xlu0 %v1688, 8
    %v2333 = vpop.permute.xlu0 %2332
    %2334 = vrot.lane.b32.xlu0 %v1691, 8
    %v2335 = vpop.permute.xlu0 %2334
    %2336 = vrot.lane.b32.xlu0 %v1731, 8
    %v2337 = vpop.permute.xlu0 %2336
    %2338 = vrot.lane.b32.xlu0 %v1734, 8
    %v2339 = vpop.permute.xlu0 %2338
    %2348 = vrot.lane.b32.xlu0 %v1984, 16
    %v2349 = vpop.permute.xlu0 %2348
    %2350 = vrot.lane.b32.xlu0 %v1987, 16
    %v2351 = vpop.permute.xlu0 %2350
    %2352 = vrot.lane.b32.xlu0 %v2027, 16
    %v2353 = vpop.permute.xlu0 %2352
    %2354 = vrot.lane.b32.xlu0 %v2030, 16
    %v2355 = vpop.permute.xlu0 %2354
    %2364 = vrot.lane.b32.xlu0 %v2280, 24
    %v2365 = vpop.permute.xlu0 %2364
    %2366 = vrot.lane.b32.xlu0 %v2283, 24
    %v2367 = vpop.permute.xlu0 %2366
    %2368 = vrot.lane.b32.xlu0 %v2323, 24
    %v2369 = vpop.permute.xlu0 %2368
    %2370 = vrot.lane.b32.xlu0 %v2326, 24
    %v2371 = vpop.permute.xlu0 %2370
    %v2376 = vsel %vm126, %v1392, %v2333
    %v2377 = vsel %vm126, %v1395, %v2335
    %v2378 = vsel %vm126, %v1435, %v2337
    %v2379 = vsel %vm126, %v1438, %v2339
    %v2380 = vsel %vm794, %v2376, %v2349
    %v2381 = vsel %vm794, %v2377, %v2351
    %v2382 = vsel %vm794, %v2378, %v2353
    %v2383 = vsel %vm794, %v2379, %v2355
    %v2384 = vsel %vm797, %v2380, %v2365
    %v2385 = vsel %vm797, %v2381, %v2367
    %v2386 = vsel %vm797, %v2382, %v2369
    %v2387 = vsel %vm797, %v2383, %v2371
    %v2392 = vrot.slane %v2384, 4
    %v2393 = vrot.slane %v2386, 4
    %v2394 = vperm.slane %v1098, 0
    %2395 = vst [vmem:[#allocation1] ss:$2 sm:$0xff] %v2384
    %s2396 = scalar_lea.vmem [#allocation1], 1
    %2397 = vst [vmem:[%s2396] ss:$2 sm:$0xff] %v2392
    %s2398 = scalar_lea.vmem [#allocation1], 16
    %2399 = vst [vmem:[%s2398] ss:$2 sm:$0xff] %v2385
    %s2400 = scalar_lea.vmem [#allocation1], 17
    %2401 = vst [vmem:[%s2400] ss:$2 sm:$0xff] %v2386
    %s2402 = scalar_lea.vmem [#allocation1], 32
    %2403 = vst [vmem:[%s2402] ss:$2 sm:$0xff] %v2393
    %s2404 = scalar_lea.vmem [#allocation1], 33
    %2405 = vst [vmem:[%s2404] ss:$2 sm:$0xff] %v2387
    %v2406 = vld.sshfl [vmem:[#allocation1] sm:$0xff pattern:$0x75316420]
    %v2407 = vld.sshfl [vmem:[#allocation1 + $0x10] sm:$0xff pattern:$0x75316420]
    %v2408 = vld.sshfl [vmem:[#allocation1 + $0x20] sm:$0xff pattern:$0x75316420]
    %v2409 = vsel %vm93, %v2406, 0
    %v2411 = vsel %vm93, %v2407, 0
    %v2413 = vsel %vm93, %v2408, 0
    %2415 = vmatpush.msra.mxu0 0.0
    %2416 = vmatpush.msra.mxu0 0.0
    %2417 = vmatpush.msra.mxu0 0.0
    %2418 = vmatpush.msra.mxu0 0.0
    %2419 = vmatpush.msra.mxu0 0.0
    %2420 = vmatpush.msra.mxu0 0.0
    %2421 = vmatpush.msra.mxu0 0.0
    %2422 = vmatpush.msra.mxu0 0.0
    %2423 = vmatpush.msra.mxu0 0.0
    %2424 = vmatpush.msra.mxu0 0.0
    %2425 = vmatpush.msra.mxu0 0.0
    %2426 = vmatpush.msra.mxu0 0.0
    %2427 = vmatpush.msra.mxu0 %v1097
    %2428 = vmatpush.msra.mxu0 %v1096
    %2429 = vmatpush.msra.mxu0 %v1095
    %2430 = vmatpush.msra.mxu0 %v1094
    %2431 = vmatmul.f32.gmra.mxu0 %v2409
    %v2432 = vpop.f32.mrf.mxu0
    %v2433 = vadd.f32 %v2394, %v2432
    %2434 = vmatmul.f32.gmra.mxu0 %v2411
    %v2435 = vpop.f32.mrf.mxu0
    %v2436 = vadd.f32 %v2394, %v2435
    %2437 = vmatmul.f32.gmra.mxu0 %v2413
    %v2438 = vpop.f32.mrf.mxu0
    %v2439 = vadd.f32 %v2394, %v2438
    %2440 = vdwg.mxu0
    %v2441 = vadd.f32 %v69, %v2433
    %v2442 = vadd.f32 %v70, %v2436
    %v2443 = vadd.f32 %v71, %v2439
    %v2444 = vsel %vm93, %v2441, 0.0
    %2445 = vadd.xlane.f32.xlu0 %v2444
    %v2446 = vpop.xlane.xlu0 %2445
    %v2447 = vsel %vm93, %v2442, 0.0
    %2448 = vadd.xlane.f32.xlu0 %v2447
    %v2449 = vpop.xlane.xlu0 %2448
    %v2450 = vsel %vm93, %v2443, 0.0
    %2451 = vadd.xlane.f32.xlu0 %v2450
    %v2452 = vpop.xlane.xlu0 %2451
    %v2453 = vmul.f32 %v2446, %v844
    %v2454 = vmul.f32 %v2449, %v844
    %v2455 = vmul.f32 %v2452, %v844
    %v2456 = vsub.f32 %v2441, %v2453
    %v2457 = vsub.f32 %v2442, %v2454
    %v2458 = vsub.f32 %v2443, %v2455
    %v2459 = vmul.f32 %v2456, %v2456
    %v2460 = vmul.f32 %v2457, %v2457
    %v2461 = vmul.f32 %v2458, %v2458
    %v2462 = vsel %vm93, %v2459, 0.0
    %2463 = vadd.xlane.f32.xlu0 %v2462
    %v2464 = vpop.xlane.xlu0 %2463
    %v2465 = vsel %vm93, %v2460, 0.0
    %2466 = vadd.xlane.f32.xlu0 %v2465
    %v2467 = vpop.xlane.xlu0 %2466
    %v2468 = vsel %vm93, %v2461, 0.0
    %2469 = vadd.xlane.f32.xlu0 %v2468
    %v2470 = vpop.xlane.xlu0 %2469
    %v2471 = vmul.f32 %v2464, 0.032258064
    %v2472 = vmul.f32 %v2467, 0.032258064
    %v2473 = vmul.f32 %v2470, 0.032258064
    %v2474 = vrsqrt.pop %v2471
    %v2475 = vmul.f32 %v2474, %v2471
    %v2476 = vmul.f32 %v2475, %v2474
    %v2477 = vmul.f32 0.5, %v2476
    %v2478 = vsub.f32 1.5, %v2477
    %v2479 = vmul.f32 %v2474, %v2478
    %v2480 = vmul.f32 %v2471, %v2479
    %vm2481 = vcmp.eq.f32.partialorder %v2471, inf
    %v2482 = vsel %vm2481, %v2471, %v2480
    %vm2483 = vcmp.eq.f32.partialorder %v2471, 0.0
    %v2484 = vand.u32 %v2471, 2147483648
    %v2485 = vsel %vm2483, %v2484, %v2482
    %v2486 = vrsqrt.pop %v2472
    %v2487 = vmul.f32 %v2486, %v2472
    %v2488 = vmul.f32 %v2487, %v2486
    %v2489 = vmul.f32 0.5, %v2488
    %v2490 = vsub.f32 1.5, %v2489
    %v2491 = vmul.f32 %v2486, %v2490
    %v2492 = vmul.f32 %v2472, %v2491
    %vm2493 = vcmp.eq.f32.partialorder %v2472, inf
    %v2494 = vsel %vm2493, %v2472, %v2492
    %vm2495 = vcmp.eq.f32.partialorder %v2472, 0.0
    %v2496 = vand.u32 %v2472, 2147483648
    %v2497 = vsel %vm2495, %v2496, %v2494
    %v2498 = vrsqrt.pop %v2473
    %v2499 = vmul.f32 %v2498, %v2473
    %v2500 = vmul.f32 %v2499, %v2498
    %v2501 = vmul.f32 0.5, %v2500
    %v2502 = vsub.f32 1.5, %v2501
    %v2503 = vmul.f32 %v2498, %v2502
    %v2504 = vmul.f32 %v2473, %v2503
    %vm2505 = vcmp.eq.f32.partialorder %v2473, inf
    %v2506 = vsel %vm2505, %v2473, %v2504
    %vm2507 = vcmp.eq.f32.partialorder %v2473, 0.0
    %v2508 = vand.u32 %v2473, 2147483648
    %v2509 = vsel %vm2507, %v2508, %v2506
    %v2510 = vadd.f32 %v2485, 1e-06
    %v2511 = vadd.f32 %v2497, 1e-06
    %v2512 = vadd.f32 %v2509, 1e-06
    %v2513 = vrcp.pop %v2510
    %v2514 = vmul.f32 %v2510, %v2513
    %v2515 = vsub.f32 1.0, %v2514
    %v2516 = vmul.f32 %v2513, %v2515
    %v2517 = vadd.f32 %v2513, %v2516
    %vm2518 = vweird.f32 %v2510
    %vm2519 = vweird.f32 %v2513
    %vm2520 = vmor %vm2518, %vm2519
    %v2521 = vsel %vm2520, %v2513, %v2517
    %v2522 = vand.u32 2147483647, %v2510
    %vm2523 = vcmp.eq.f32.partialorder %v2522, 8.507059e+37
    %v2524 = vand.u32 %v2510, 2147483648
    %v2525 = vor.u32 1.1754944e-38, %v2524
    %v2526 = vsel %vm2523, %v2525, %v2521
    %v2527 = vmul.f32 1.0, %v2526
    %v2528 = vrcp.pop %v2511
    %v2529 = vmul.f32 %v2511, %v2528
    %v2530 = vsub.f32 1.0, %v2529
    %v2531 = vmul.f32 %v2528, %v2530
    %v2532 = vadd.f32 %v2528, %v2531
    %vm2533 = vweird.f32 %v2511
    %vm2534 = vweird.f32 %v2528
    %vm2535 = vmor %vm2533, %vm2534
    %v2536 = vsel %vm2535, %v2528, %v2532
    %v2537 = vand.u32 2147483647, %v2511
    %vm2538 = vcmp.eq.f32.partialorder %v2537, 8.507059e+37
    %v2539 = vand.u32 %v2511, 2147483648
    %v2540 = vor.u32 1.1754944e-38, %v2539
    %v2541 = vsel %vm2538, %v2540, %v2536
    %v2542 = vmul.f32 1.0, %v2541
    %v2543 = vrcp.pop %v2512
    %v2544 = vmul.f32 %v2512, %v2543
    %v2545 = vsub.f32 1.0, %v2544
    %v2546 = vmul.f32 %v2543, %v2545
    %v2547 = vadd.f32 %v2543, %v2546
    %vm2548 = vweird.f32 %v2512
    %vm2549 = vweird.f32 %v2543
    %vm2550 = vmor %vm2548, %vm2549
    %v2551 = vsel %vm2550, %v2543, %v2547
    %v2552 = vand.u32 2147483647, %v2512
    %vm2553 = vcmp.eq.f32.partialorder %v2552, 8.507059e+37
    %v2554 = vand.u32 %v2512, 2147483648
    %v2555 = vor.u32 1.1754944e-38, %v2554
    %v2556 = vsel %vm2553, %v2555, %v2551
    %v2557 = vmul.f32 1.0, %v2556
    %v2558 = vperm.slane %v1099, 0
    %v2559 = vmul.f32 %v2558, %v2456
    %v2560 = vmul.f32 %v2558, %v2457
    %v2561 = vmul.f32 %v2558, %v2458
    %v2562 = vmul.f32 %v2559, %v2527
    %v2563 = vmul.f32 %v2560, %v2542
    %v2564 = vmul.f32 %v2561, %v2557
    %v2565 = vperm.slane %v1100, 0
    %v2566 = vadd.f32 %v2562, %v2565
    %v2567 = vadd.f32 %v2563, %v2565
    %v2568 = vadd.f32 %v2564, %v2565
    %v2569 = vld [vmem:[#allocation2 + $0x28] sm:$0xff]
    %v2570 = vld [vmem:[#allocation2 + $0x78] sm:$0xff]
    %v2571 = vld [vmem:[#allocation2 + $0xc8] sm:$0xff]
    %v2572 = vld [vmem:[#allocation2 + $0x118] sm:$0xff]
    %v2573 = vld [vmem:[%s8 + $0xc] sm:$0x1]
    %v2574 = vld [vmem:[#allocation2 + $0x30] sm:$0xff]
    %v2575 = vld [vmem:[#allocation2 + $0x80] sm:$0xff]
    %v2576 = vld [vmem:[#allocation2 + $0xd0] sm:$0xff]
    %v2577 = vld [vmem:[#allocation2 + $0x120] sm:$0xff]
    %v2578 = vld [vmem:[%s8 + $0xd] sm:$0x1]
    %v2579 = vld [vmem:[%s8 + $0xe] sm:$0x1]
    %v2580 = vld [vmem:[%s8 + $0xf] sm:$0x1]
    %v2581 = vperm.slane %v2573, 0
    %v2583 = vsel %vm93, %v2566, 0
    %v2586 = vsel %vm93, %v2567, 0
    %v2589 = vsel %vm93, %v2568, 0
    %2591 = vmatpush.msra.mxu0 0.0
    %2592 = vmatpush.msra.mxu0 0.0
    %2593 = vmatpush.msra.mxu0 0.0
    %2594 = vmatpush.msra.mxu0 0.0
    %2595 = vmatpush.msra.mxu0 0.0
    %2596 = vmatpush.msra.mxu0 0.0
    %2597 = vmatpush.msra.mxu0 0.0
    %2598 = vmatpush.msra.mxu0 0.0
    %2599 = vmatpush.msra.mxu0 0.0
    %2600 = vmatpush.msra.mxu0 0.0
    %2601 = vmatpush.msra.mxu0 0.0
    %2602 = vmatpush.msra.mxu0 0.0
    %2603 = vmatpush.msra.mxu0 %v2572
    %2604 = vmatpush.msra.mxu0 %v2571
    %2605 = vmatpush.msra.mxu0 %v2570
    %2606 = vmatpush.msra.mxu0 %v2569
    %2607 = vmatmul.f32.gmra.mxu0 %v2583
    %v2608 = vpop.f32.mrf.mxu0
    %v2609 = vadd.f32 %v2581, %v2608
    %2610 = vmatmul.f32.gmra.mxu0 %v2586
    %v2611 = vpop.f32.mrf.mxu0
    %v2612 = vadd.f32 %v2581, %v2611
    %2613 = vmatmul.f32.gmra.mxu0 %v2589
    %v2614 = vpop.f32.mrf.mxu0
    %v2615 = vadd.f32 %v2581, %v2614
    %2616 = vdwg.mxu0
    %2621 = vrot.lane.b32.xlu0 %v2569, 96
    %v2622 = vpop.permute.xlu0 %2621
    %2623 = vrot.lane.b32.xlu0 %v2570, 96
    %v2624 = vpop.permute.xlu0 %2623
    %2625 = vrot.lane.b32.xlu0 %v2571, 96
    %v2626 = vpop.permute.xlu0 %2625
    %2627 = vrot.lane.b32.xlu0 %v2572, 96
    %v2628 = vpop.permute.xlu0 %2627
    %2634 = vrot.lane.b32.xlu0 %v2581, 96
    %v2635 = vpop.permute.xlu0 %2634
    %2637 = vmatpush.msra.mxu0 0.0
    %2638 = vmatpush.msra.mxu0 0.0
    %2639 = vmatpush.msra.mxu0 0.0
    %2640 = vmatpush.msra.mxu0 0.0
    %2641 = vmatpush.msra.mxu0 0.0
    %2642 = vmatpush.msra.mxu0 0.0
    %2643 = vmatpush.msra.mxu0 0.0
    %2644 = vmatpush.msra.mxu0 0.0
    %2645 = vmatpush.msra.mxu0 0.0
    %2646 = vmatpush.msra.mxu0 0.0
    %2647 = vmatpush.msra.mxu0 0.0
    %2648 = vmatpush.msra.mxu0 0.0
    %2649 = vmatpush.msra.mxu0 %v2628
    %2650 = vmatpush.msra.mxu0 %v2626
    %2651 = vmatpush.msra.mxu0 %v2624
    %2652 = vmatpush.msra.mxu0 %v2622
    %2653 = vmatmul.f32.gmra.mxu0 %v95
    %v2654 = vpop.f32.mrf.mxu0
    %v2655 = vadd.f32 %v2635, %v2654
    %2656 = vmatmul.f32.gmra.mxu0 %v98
    %v2657 = vpop.f32.mrf.mxu0
    %v2658 = vadd.f32 %v2635, %v2657
    %2659 = vdwg.mxu0
    %v2663 = vrot.slane %v2609, 4
    %v2664 = vrot.slane %v2612, 4
    %v2665 = vrot.slane %v2615, 4
    %2666 = vst [vmem:[#allocation1] ss:$2 sm:$0xff] %v2609
    %s2667 = scalar_lea.vmem [#allocation1], 1
    %2668 = vst [vmem:[%s2667] ss:$2 sm:$0xff] %v2663
    %s2669 = scalar_lea.vmem [#allocation1], 16
    %2670 = vst [vmem:[%s2669] ss:$2 sm:$0xff] %v2612
    %v2671 = vld.sshfl [vmem:[#allocation1] sm:$0xff pattern:$0x75316420]
    %v2672 = vld.sshfl [vmem:[#allocation1 + $0x10] sm:$0xff pattern:$0x75316420]
    %v2673 = vsel %vm126, %v2671, 0
    %v2675 = vsel %vm126, %v2672, 0
    %v2678 = vsel %vm126, %v2655, 0
    %2680 = vmatpush.xpose.msra.mxu0 0.0
    %2681 = vmatpush.xpose.msra.mxu0 0.0
    %2682 = vmatpush.xpose.msra.mxu0 0.0
    %2683 = vmatpush.xpose.msra.mxu0 0.0
    %2684 = vmatpush.xpose.msra.mxu0 0.0
    %2685 = vmatpush.xpose.msra.mxu0 0.0
    %2686 = vmatpush.xpose.msra.mxu0 0.0
    %2687 = vmatpush.xpose.msra.mxu0 0.0
    %2688 = vmatpush.xpose.msra.mxu0 0.0
    %2689 = vmatpush.xpose.msra.mxu0 0.0
    %2690 = vmatpush.xpose.msra.mxu0 0.0
    %2691 = vmatpush.xpose.msra.mxu0 0.0
    %2692 = vmatpush.xpose.msra.mxu0 0.0
    %2693 = vmatpush.xpose.msra.mxu0 0.0
    %2694 = vmatpush.xpose.msra.mxu0 0.0
    %2695 = vmatpush.xpose.msra.mxu0 %v2678
    %2696 = vmatmul.f32.gmra.mxu0 %v2673
    %v2697 = vpop.f32.mrf.mxu0
    %v2698 = vadd.f32 0.0, %v2697
    %2699 = vmatmul.f32.gmra.mxu0 %v2675
    %v2700 = vpop.f32.mrf.mxu0
    %v2701 = vadd.f32 0.0, %v2700
    %2702 = vdwg.mxu0
    %2703 = vst [vmem:[#allocation1] ss:$2 sm:$0xff] %v2664
    %s2704 = scalar_lea.vmem [#allocation1], 1
    %2705 = vst [vmem:[%s2704] ss:$2 sm:$0xff] %v2615
    %s2706 = scalar_lea.vmem [#allocation1], 16
    %2707 = vst [vmem:[%s2706] ss:$2 sm:$0xff] %v2665
    %v2708 = vld.sshfl [vmem:[#allocation1] sm:$0xff pattern:$0x75316420]
    %v2709 = vld.sshfl [vmem:[#allocation1 + $0x10] sm:$0xff pattern:$0x75316420]
    %v2710 = vsel %vm126, %v2708, 0
    %v2712 = vsel %vm126, %v2709, 0
    %v2715 = vsel %vm126, %v2658, 0
    %2717 = vmatpush.xpose.msra.mxu0 0.0
    %2718 = vmatpush.xpose.msra.mxu0 0.0
    %2719 = vmatpush.xpose.msra.mxu0 0.0
    %2720 = vmatpush.xpose.msra.mxu0 0.0
    %2721 = vmatpush.xpose.msra.mxu0 0.0
    %2722 = vmatpush.xpose.msra.mxu0 0.0
    %2723 = vmatpush.xpose.msra.mxu0 0.0
    %2724 = vmatpush.xpose.msra.mxu0 0.0
    %2725 = vmatpush.xpose.msra.mxu0 0.0
    %2726 = vmatpush.xpose.msra.mxu0 0.0
    %2727 = vmatpush.xpose.msra.mxu0 0.0
    %2728 = vmatpush.xpose.msra.mxu0 0.0
    %2729 = vmatpush.xpose.msra.mxu0 0.0
    %2730 = vmatpush.xpose.msra.mxu0 0.0
    %2731 = vmatpush.xpose.msra.mxu0 0.0
    %2732 = vmatpush.xpose.msra.mxu0 %v2715
    %2733 = vmatmul.f32.gmra.mxu0 %v2710
    %v2734 = vpop.f32.mrf.mxu0
    %v2735 = vadd.f32 0.0, %v2734
    %2736 = vmatmul.f32.gmra.mxu0 %v2712
    %v2737 = vpop.f32.mrf.mxu0
    %v2738 = vadd.f32 0.0, %v2737
    %2739 = vdwg.mxu0
    %v2740 = vmul.f32 %v2698, 0.35355338
    %v2741 = vmul.f32 %v2701, 0.35355338
    %v2742 = vmul.f32 %v2735, 0.35355338
    %v2743 = vmul.f32 %v2738, 0.35355338
    %v2744 = vsel %vm184, -1e+09, %v2740
    %v2745 = vsel %vm184, -1e+09, %v2741
    %v2746 = vsel %vm185, -1e+09, %v2742
    %v2747 = vsel %vm185, -1e+09, %v2743
    %v2748 = vsel %vm126, %v2744, -inf
    %2749 = vmax.xlane.f32.xlu0 %v2748
    %v2750 = vpop.xlane.xlu0 %2749
    %vm2751 = vcmask 60416
    %v2752 = vsel %vm2751, %v2745, -inf
    %2753 = vmax.xlane.f32.xlu0 %v2752
    %v2754 = vpop.xlane.xlu0 %2753
    %v2755 = vsel %vm126, %v2746, -inf
    %2756 = vmax.xlane.f32.xlu0 %v2755
    %v2757 = vpop.xlane.xlu0 %2756
    %v2758 = vsel %vm2751, %v2747, -inf
    %2759 = vmax.xlane.f32.xlu0 %v2758
    %v2760 = vpop.xlane.xlu0 %2759
    %v2761 = vsub.f32 %v2744, %v2750
    %v2762 = vsub.f32 %v2745, %v2754
    %v2763 = vsub.f32 %v2746, %v2757
    %v2764 = vsub.f32 %v2747, %v2760
    %v2765 = vmul.f32 %v2761, 1.442695
    %v2766 = vpow.pop %v2765
    %v2767 = vmul.f32 %v2762, 1.442695
    %v2768 = vpow.pop %v2767
    %v2769 = vmul.f32 %v2763, 1.442695
    %v2770 = vpow.pop %v2769
    %v2771 = vmul.f32 %v2764, 1.442695
    %v2772 = vpow.pop %v2771
    %v2773 = vsel %vm126, %v2766, 0.0
    %2774 = vadd.xlane.f32.xlu0 %v2773
    %v2775 = vpop.xlane.xlu0 %2774
    %v2776 = vsel %vm2751, %v2768, 0.0
    %2777 = vadd.xlane.f32.xlu0 %v2776
    %v2778 = vpop.xlane.xlu0 %2777
    %v2779 = vsel %vm126, %v2770, 0.0
    %2780 = vadd.xlane.f32.xlu0 %v2779
    %v2781 = vpop.xlane.xlu0 %2780
    %v2782 = vsel %vm2751, %v2772, 0.0
    %2783 = vadd.xlane.f32.xlu0 %v2782
    %v2784 = vpop.xlane.xlu0 %2783
    %v2785 = vrcp.pop %v2775
    %v2786 = vmul.f32 %v2775, %v2785
    %v2787 = vsub.f32 1.0, %v2786
    %v2788 = vmul.f32 %v2785, %v2787
    %v2789 = vadd.f32 %v2785, %v2788
    %vm2790 = vweird.f32 %v2775
    %vm2791 = vweird.f32 %v2785
    %vm2792 = vmor %vm2790, %vm2791
    %v2793 = vsel %vm2792, %v2785, %v2789
    %v2794 = vand.u32 2147483647, %v2775
    %vm2795 = vcmp.eq.f32.partialorder %v2794, 8.507059e+37
    %v2796 = vand.u32 %v2775, 2147483648
    %v2797 = vor.u32 1.1754944e-38, %v2796
    %v2798 = vsel %vm2795, %v2797, %v2793
    %v2799 = vmul.f32 %v2766, %v2798
    %v2800 = vrcp.pop %v2778
    %v2801 = vmul.f32 %v2778, %v2800
    %v2802 = vsub.f32 1.0, %v2801
    %v2803 = vmul.f32 %v2800, %v2802
    %v2804 = vadd.f32 %v2800, %v2803
    %vm2805 = vweird.f32 %v2778
    %vm2806 = vweird.f32 %v2800
    %vm2807 = vmor %vm2805, %vm2806
    %v2808 = vsel %vm2807, %v2800, %v2804
    %v2809 = vand.u32 2147483647, %v2778
    %vm2810 = vcmp.eq.f32.partialorder %v2809, 8.507059e+37
    %v2811 = vand.u32 %v2778, 2147483648
    %v2812 = vor.u32 1.1754944e-38, %v2811
    %v2813 = vsel %vm2810, %v2812, %v2808
    %v2814 = vmul.f32 %v2768, %v2813
    %v2815 = vrcp.pop %v2781
    %v2816 = vmul.f32 %v2781, %v2815
    %v2817 = vsub.f32 1.0, %v2816
    %v2818 = vmul.f32 %v2815, %v2817
    %v2819 = vadd.f32 %v2815, %v2818
    %vm2820 = vweird.f32 %v2781
    %vm2821 = vweird.f32 %v2815
    %vm2822 = vmor %vm2820, %vm2821
    %v2823 = vsel %vm2822, %v2815, %v2819
    %v2824 = vand.u32 2147483647, %v2781
    %vm2825 = vcmp.eq.f32.partialorder %v2824, 8.507059e+37
    %v2826 = vand.u32 %v2781, 2147483648
    %v2827 = vor.u32 1.1754944e-38, %v2826
    %v2828 = vsel %vm2825, %v2827, %v2823
    %v2829 = vmul.f32 %v2770, %v2828
    %v2830 = vrcp.pop %v2784
    %v2831 = vmul.f32 %v2784, %v2830
    %v2832 = vsub.f32 1.0, %v2831
    %v2833 = vmul.f32 %v2830, %v2832
    %v2834 = vadd.f32 %v2830, %v2833
    %vm2835 = vweird.f32 %v2784
    %vm2836 = vweird.f32 %v2830
    %vm2837 = vmor %vm2835, %vm2836
    %v2838 = vsel %vm2837, %v2830, %v2834
    %v2839 = vand.u32 2147483647, %v2784
    %vm2840 = vcmp.eq.f32.partialorder %v2839, 8.507059e+37
    %v2841 = vand.u32 %v2784, 2147483648
    %v2842 = vor.u32 1.1754944e-38, %v2841
    %v2843 = vsel %vm2840, %v2842, %v2838
    %v2844 = vmul.f32 %v2772, %v2843
    %2845 = vrot.lane.b32.xlu0 %v2655, 96
    %v2846 = vpop.permute.xlu0 %2845
    %v2849 = vsel %vm126, %v2799, 0
    %v2852 = vsel %vm126, %v2814, 0
    %2854 = vmatpush.msra.mxu0 0.0
    %2855 = vmatpush.msra.mxu0 0.0
    %2856 = vmatpush.msra.mxu0 0.0
    %2857 = vmatpush.msra.mxu0 0.0
    %2858 = vmatpush.msra.mxu0 0.0
    %2859 = vmatpush.msra.mxu0 0.0
    %2860 = vmatpush.msra.mxu0 0.0
    %2861 = vmatpush.msra.mxu0 0.0
    %2862 = vmatpush.msra.mxu0 0.0
    %2863 = vmatpush.msra.mxu0 0.0
    %2864 = vmatpush.msra.mxu0 0.0
    %2865 = vmatpush.msra.mxu0 0.0
    %2866 = vmatpush.msra.mxu0 0.0
    %2867 = vmatpush.msra.mxu0 0.0
    %2868 = vmatpush.msra.mxu0 0.0
    %2869 = vmatpush.msra.mxu0 %v2846
    %2870 = vmatmul.f32.gmra.mxu0 %v2849
    %v2871 = vpop.f32.mrf.mxu0
    %v2872 = vadd.f32 0.0, %v2871
    %2873 = vmatmul.f32.gmra.mxu0 %v2852
    %v2874 = vpop.f32.mrf.mxu0
    %v2875 = vadd.f32 0.0, %v2874
    %2876 = vdwg.mxu0
    %2877 = vrot.lane.b32.xlu0 %v2658, 96
    %v2878 = vpop.permute.xlu0 %2877
    %v2881 = vsel %vm126, %v2829, 0
    %v2884 = vsel %vm126, %v2844, 0
    %2886 = vmatpush.msra.mxu0 0.0
    %2887 = vmatpush.msra.mxu0 0.0
    %2888 = vmatpush.msra.mxu0 0.0
    %2889 = vmatpush.msra.mxu0 0.0
    %2890 = vmatpush.msra.mxu0 0.0
    %2891 = vmatpush.msra.mxu0 0.0
    %2892 = vmatpush.msra.mxu0 0.0
    %2893 = vmatpush.msra.mxu0 0.0
    %2894 = vmatpush.msra.mxu0 0.0
    %2895 = vmatpush.msra.mxu0 0.0
    %2896 = vmatpush.msra.mxu0 0.0
    %2897 = vmatpush.msra.mxu0 0.0
    %2898 = vmatpush.msra.mxu0 0.0
    %2899 = vmatpush.msra.mxu0 0.0
    %2900 = vmatpush.msra.mxu0 0.0
    %2901 = vmatpush.msra.mxu0 %v2878
    %2902 = vmatmul.f32.gmra.mxu0 %v2881
    %v2903 = vpop.f32.mrf.mxu0
    %v2904 = vadd.f32 0.0, %v2903
    %2905 = vmatmul.f32.gmra.mxu0 %v2884
    %v2906 = vpop.f32.mrf.mxu0
    %v2907 = vadd.f32 0.0, %v2906
    %2908 = vdwg.mxu0
    %2909 = vst [vmem:[#allocation1] ss:$2 sm:$0xff] %v2609
    %s2910 = scalar_lea.vmem [#allocation1], 1
    %2911 = vst [vmem:[%s2910] ss:$2 sm:$0xff] %v2663
    %s2912 = scalar_lea.vmem [#allocation1], 16
    %2913 = vst [vmem:[%s2912] ss:$2 sm:$0xff] %v2612
    %v2914 = vld.sshfl [vmem:[#allocation1] sm:$0xff pattern:$0x75316420]
    %v2915 = vld.sshfl [vmem:[#allocation1 + $0x10] sm:$0xff pattern:$0x75316420]
    %2916 = vrot.lane.b32.xlu0 %v2914, 120
    %v2917 = vpop.permute.xlu0 %2916
    %2918 = vrot.lane.b32.xlu0 %v2915, 120
    %v2919 = vpop.permute.xlu0 %2918
    %2920 = vrot.lane.b32.xlu0 %v2655, 120
    %v2921 = vpop.permute.xlu0 %2920
    %v2922 = vsel %vm126, %v2917, 0
    %v2924 = vsel %vm126, %v2919, 0
    %v2926 = vsel %vm126, %v2921, 0
    %2928 = vmatpush.xpose.msra.mxu0 0.0
    %2929 = vmatpush.xpose.msra.mxu0 0.0
    %2930 = vmatpush.xpose.msra.mxu0 0.0
    %2931 = vmatpush.xpose.msra.mxu0 0.0
    %2932 = vmatpush.xpose.msra.mxu0 0.0
    %2933 = vmatpush.xpose.msra.mxu0 0.0
    %2934 = vmatpush.xpose.msra.mxu0 0.0
    %2935 = vmatpush.xpose.msra.mxu0 0.0
    %2936 = vmatpush.xpose.msra.mxu0 0.0
    %2937 = vmatpush.xpose.msra.mxu0 0.0
    %2938 = vmatpush.xpose.msra.mxu0 0.0
    %2939 = vmatpush.xpose.msra.mxu0 0.0
    %2940 = vmatpush.xpose.msra.mxu0 0.0
    %2941 = vmatpush.xpose.msra.mxu0 0.0
    %2942 = vmatpush.xpose.msra.mxu0 0.0
    %2943 = vmatpush.xpose.msra.mxu0 %v2926
    %2944 = vmatmul.f32.gmra.mxu0 %v2922
    %v2945 = vpop.f32.mrf.mxu0
    %v2946 = vadd.f32 0.0, %v2945
    %2947 = vmatmul.f32.gmra.mxu0 %v2924
    %v2948 = vpop.f32.mrf.mxu0
    %v2949 = vadd.f32 0.0, %v2948
    %2950 = vdwg.mxu0
    %2951 = vst [vmem:[#allocation1] ss:$2 sm:$0xff] %v2664
    %s2952 = scalar_lea.vmem [#allocation1], 1
    %2953 = vst [vmem:[%s2952] ss:$2 sm:$0xff] %v2615
    %s2954 = scalar_lea.vmem [#allocation1], 16
    %2955 = vst [vmem:[%s2954] ss:$2 sm:$0xff] %v2665
    %v2956 = vld.sshfl [vmem:[#allocation1] sm:$0xff pattern:$0x75316420]
    %v2957 = vld.sshfl [vmem:[#allocation1 + $0x10] sm:$0xff pattern:$0x75316420]
    %2958 = vrot.lane.b32.xlu0 %v2956, 120
    %v2959 = vpop.permute.xlu0 %2958
    %2960 = vrot.lane.b32.xlu0 %v2957, 120
    %v2961 = vpop.permute.xlu0 %2960
    %2962 = vrot.lane.b32.xlu0 %v2658, 120
    %v2963 = vpop.permute.xlu0 %2962
    %v2964 = vsel %vm126, %v2959, 0
    %v2966 = vsel %vm126, %v2961, 0
    %v2968 = vsel %vm126, %v2963, 0
    %2970 = vmatpush.xpose.msra.mxu0 0.0
    %2971 = vmatpush.xpose.msra.mxu0 0.0
    %2972 = vmatpush.xpose.msra.mxu0 0.0
    %2973 = vmatpush.xpose.msra.mxu0 0.0
    %2974 = vmatpush.xpose.msra.mxu0 0.0
    %2975 = vmatpush.xpose.msra.mxu0 0.0
    %2976 = vmatpush.xpose.msra.mxu0 0.0
    %2977 = vmatpush.xpose.msra.mxu0 0.0
    %2978 = vmatpush.xpose.msra.mxu0 0.0
    %2979 = vmatpush.xpose.msra.mxu0 0.0
    %2980 = vmatpush.xpose.msra.mxu0 0.0
    %2981 = vmatpush.xpose.msra.mxu0 0.0
    %2982 = vmatpush.xpose.msra.mxu0 0.0
    %2983 = vmatpush.xpose.msra.mxu0 0.0
    %2984 = vmatpush.xpose.msra.mxu0 0.0
    %2985 = vmatpush.xpose.msra.mxu0 %v2968
    %2986 = vmatmul.f32.gmra.mxu0 %v2964
    %v2987 = vpop.f32.mrf.mxu0
    %v2988 = vadd.f32 0.0, %v2987
    %2989 = vmatmul.f32.gmra.mxu0 %v2966
    %v2990 = vpop.f32.mrf.mxu0
    %v2991 = vadd.f32 0.0, %v2990
    %2992 = vdwg.mxu0
    %v2993 = vmul.f32 %v2946, 0.35355338
    %v2994 = vmul.f32 %v2949, 0.35355338
    %v2995 = vmul.f32 %v2988, 0.35355338
    %v2996 = vmul.f32 %v2991, 0.35355338
    %v2997 = vsel %vm184, -1e+09, %v2993
    %v2998 = vsel %vm184, -1e+09, %v2994
    %v2999 = vsel %vm185, -1e+09, %v2995
    %v3000 = vsel %vm185, -1e+09, %v2996
    %v3001 = vsel %vm126, %v2997, -inf
    %3002 = vmax.xlane.f32.xlu0 %v3001
    %v3003 = vpop.xlane.xlu0 %3002
    %v3004 = vsel %vm2751, %v2998, -inf
    %3005 = vmax.xlane.f32.xlu0 %v3004
    %v3006 = vpop.xlane.xlu0 %3005
    %v3007 = vsel %vm126, %v2999, -inf
    %3008 = vmax.xlane.f32.xlu0 %v3007
    %v3009 = vpop.xlane.xlu0 %3008
    %v3010 = vsel %vm2751, %v3000, -inf
    %3011 = vmax.xlane.f32.xlu0 %v3010
    %v3012 = vpop.xlane.xlu0 %3011
    %v3013 = vsub.f32 %v2997, %v3003
    %v3014 = vsub.f32 %v2998, %v3006
    %v3015 = vsub.f32 %v2999, %v3009
    %v3016 = vsub.f32 %v3000, %v3012
    %v3017 = vmul.f32 %v3013, 1.442695
    %v3018 = vpow.pop %v3017
    %v3019 = vmul.f32 %v3014, 1.442695
    %v3020 = vpow.pop %v3019
    %v3021 = vmul.f32 %v3015, 1.442695
    %v3022 = vpow.pop %v3021
    %v3023 = vmul.f32 %v3016, 1.442695
    %v3024 = vpow.pop %v3023
    %v3025 = vsel %vm126, %v3018, 0.0
    %3026 = vadd.xlane.f32.xlu0 %v3025
    %v3027 = vpop.xlane.xlu0 %3026
    %v3028 = vsel %vm2751, %v3020, 0.0
    %3029 = vadd.xlane.f32.xlu0 %v3028
    %v3030 = vpop.xlane.xlu0 %3029
    %v3031 = vsel %vm126, %v3022, 0.0
    %3032 = vadd.xlane.f32.xlu0 %v3031
    %v3033 = vpop.xlane.xlu0 %3032
    %v3034 = vsel %vm2751, %v3024, 0.0
    %3035 = vadd.xlane.f32.xlu0 %v3034
    %v3036 = vpop.xlane.xlu0 %3035
    %v3037 = vrcp.pop %v3027
    %v3038 = vmul.f32 %v3027, %v3037
    %v3039 = vsub.f32 1.0, %v3038
    %v3040 = vmul.f32 %v3037, %v3039
    %v3041 = vadd.f32 %v3037, %v3040
    %vm3042 = vweird.f32 %v3027
    %vm3043 = vweird.f32 %v3037
    %vm3044 = vmor %vm3042, %vm3043
    %v3045 = vsel %vm3044, %v3037, %v3041
    %v3046 = vand.u32 2147483647, %v3027
    %vm3047 = vcmp.eq.f32.partialorder %v3046, 8.507059e+37
    %v3048 = vand.u32 %v3027, 2147483648
    %v3049 = vor.u32 1.1754944e-38, %v3048
    %v3050 = vsel %vm3047, %v3049, %v3045
    %v3051 = vmul.f32 %v3018, %v3050
    %v3052 = vrcp.pop %v3030
    %v3053 = vmul.f32 %v3030, %v3052
    %v3054 = vsub.f32 1.0, %v3053
    %v3055 = vmul.f32 %v3052, %v3054
    %v3056 = vadd.f32 %v3052, %v3055
    %vm3057 = vweird.f32 %v3030
    %vm3058 = vweird.f32 %v3052
    %vm3059 = vmor %vm3057, %vm3058
    %v3060 = vsel %vm3059, %v3052, %v3056
    %v3061 = vand.u32 2147483647, %v3030
    %vm3062 = vcmp.eq.f32.partialorder %v3061, 8.507059e+37
    %v3063 = vand.u32 %v3030, 2147483648
    %v3064 = vor.u32 1.1754944e-38, %v3063
    %v3065 = vsel %vm3062, %v3064, %v3060
    %v3066 = vmul.f32 %v3020, %v3065
    %v3067 = vrcp.pop %v3033
    %v3068 = vmul.f32 %v3033, %v3067
    %v3069 = vsub.f32 1.0, %v3068
    %v3070 = vmul.f32 %v3067, %v3069
    %v3071 = vadd.f32 %v3067, %v3070
    %vm3072 = vweird.f32 %v3033
    %vm3073 = vweird.f32 %v3067
    %vm3074 = vmor %vm3072, %vm3073
    %v3075 = vsel %vm3074, %v3067, %v3071
    %v3076 = vand.u32 2147483647, %v3033
    %vm3077 = vcmp.eq.f32.partialorder %v3076, 8.507059e+37
    %v3078 = vand.u32 %v3033, 2147483648
    %v3079 = vor.u32 1.1754944e-38, %v3078
    %v3080 = vsel %vm3077, %v3079, %v3075
    %v3081 = vmul.f32 %v3022, %v3080
    %v3082 = vrcp.pop %v3036
    %v3083 = vmul.f32 %v3036, %v3082
    %v3084 = vsub.f32 1.0, %v3083
    %v3085 = vmul.f32 %v3082, %v3084
    %v3086 = vadd.f32 %v3082, %v3085
    %vm3087 = vweird.f32 %v3036
    %vm3088 = vweird.f32 %v3082
    %vm3089 = vmor %vm3087, %vm3088
    %v3090 = vsel %vm3089, %v3082, %v3086
    %v3091 = vand.u32 2147483647, %v3036
    %vm3092 = vcmp.eq.f32.partialorder %v3091, 8.507059e+37
    %v3093 = vand.u32 %v3036, 2147483648
    %v3094 = vor.u32 1.1754944e-38, %v3093
    %v3095 = vsel %vm3092, %v3094, %v3090
    %v3096 = vmul.f32 %v3024, %v3095
    %3097 = vrot.lane.b32.xlu0 %v2655, 88
    %v3098 = vpop.permute.xlu0 %3097
    %v3101 = vsel %vm126, %v3051, 0
    %v3104 = vsel %vm126, %v3066, 0
    %3106 = vmatpush.msra.mxu0 0.0
    %3107 = vmatpush.msra.mxu0 0.0
    %3108 = vmatpush.msra.mxu0 0.0
    %3109 = vmatpush.msra.mxu0 0.0
    %3110 = vmatpush.msra.mxu0 0.0
    %3111 = vmatpush.msra.mxu0 0.0
    %3112 = vmatpush.msra.mxu0 0.0
    %3113 = vmatpush.msra.mxu0 0.0
    %3114 = vmatpush.msra.mxu0 0.0
    %3115 = vmatpush.msra.mxu0 0.0
    %3116 = vmatpush.msra.mxu0 0.0
    %3117 = vmatpush.msra.mxu0 0.0
    %3118 = vmatpush.msra.mxu0 0.0
    %3119 = vmatpush.msra.mxu0 0.0
    %3120 = vmatpush.msra.mxu0 0.0
    %3121 = vmatpush.msra.mxu0 %v3098
    %3122 = vmatmul.f32.gmra.mxu0 %v3101
    %v3123 = vpop.f32.mrf.mxu0
    %v3124 = vadd.f32 0.0, %v3123
    %3125 = vmatmul.f32.gmra.mxu0 %v3104
    %v3126 = vpop.f32.mrf.mxu0
    %v3127 = vadd.f32 0.0, %v3126
    %3128 = vdwg.mxu0
    %3129 = vrot.lane.b32.xlu0 %v2658, 88
    %v3130 = vpop.permute.xlu0 %3129
    %v3133 = vsel %vm126, %v3081, 0
    %v3136 = vsel %vm126, %v3096, 0
    %3138 = vmatpush.msra.mxu0 0.0
    %3139 = vmatpush.msra.mxu0 0.0
    %3140 = vmatpush.msra.mxu0 0.0
    %3141 = vmatpush.msra.mxu0 0.0
    %3142 = vmatpush.msra.mxu0 0.0
    %3143 = vmatpush.msra.mxu0 0.0
    %3144 = vmatpush.msra.mxu0 0.0
    %3145 = vmatpush.msra.mxu0 0.0
    %3146 = vmatpush.msra.mxu0 0.0
    %3147 = vmatpush.msra.mxu0 0.0
    %3148 = vmatpush.msra.mxu0 0.0
    %3149 = vmatpush.msra.mxu0 0.0
    %3150 = vmatpush.msra.mxu0 0.0
    %3151 = vmatpush.msra.mxu0 0.0
    %3152 = vmatpush.msra.mxu0 0.0
    %3153 = vmatpush.msra.mxu0 %v3130
    %3154 = vmatmul.f32.gmra.mxu0 %v3133
    %v3155 = vpop.f32.mrf.mxu0
    %v3156 = vadd.f32 0.0, %v3155
    %3157 = vmatmul.f32.gmra.mxu0 %v3136
    %v3158 = vpop.f32.mrf.mxu0
    %v3159 = vadd.f32 0.0, %v3158
    %3160 = vdwg.mxu0
    %3161 = vst [vmem:[#allocation1] ss:$2 sm:$0xff] %v2609
    %s3162 = scalar_lea.vmem [#allocation1], 1
    %3163 = vst [vmem:[%s3162] ss:$2 sm:$0xff] %v2663
    %s3164 = scalar_lea.vmem [#allocation1], 16
    %3165 = vst [vmem:[%s3164] ss:$2 sm:$0xff] %v2612
    %v3166 = vld.sshfl [vmem:[#allocation1] sm:$0xff pattern:$0x75316420]
    %v3167 = vld.sshfl [vmem:[#allocation1 + $0x10] sm:$0xff pattern:$0x75316420]
    %3168 = vrot.lane.b32.xlu0 %v3166, 112
    %v3169 = vpop.permute.xlu0 %3168
    %3170 = vrot.lane.b32.xlu0 %v3167, 112
    %v3171 = vpop.permute.xlu0 %3170
    %3172 = vrot.lane.b32.xlu0 %v2655, 112
    %v3173 = vpop.permute.xlu0 %3172
    %v3174 = vsel %vm126, %v3169, 0
    %v3176 = vsel %vm126, %v3171, 0
    %v3178 = vsel %vm126, %v3173, 0
    %3180 = vmatpush.xpose.msra.mxu0 0.0
    %3181 = vmatpush.xpose.msra.mxu0 0.0
    %3182 = vmatpush.xpose.msra.mxu0 0.0
    %3183 = vmatpush.xpose.msra.mxu0 0.0
    %3184 = vmatpush.xpose.msra.mxu0 0.0
    %3185 = vmatpush.xpose.msra.mxu0 0.0
    %3186 = vmatpush.xpose.msra.mxu0 0.0
    %3187 = vmatpush.xpose.msra.mxu0 0.0
    %3188 = vmatpush.xpose.msra.mxu0 0.0
    %3189 = vmatpush.xpose.msra.mxu0 0.0
    %3190 = vmatpush.xpose.msra.mxu0 0.0
    %3191 = vmatpush.xpose.msra.mxu0 0.0
    %3192 = vmatpush.xpose.msra.mxu0 0.0
    %3193 = vmatpush.xpose.msra.mxu0 0.0
    %3194 = vmatpush.xpose.msra.mxu0 0.0
    %3195 = vmatpush.xpose.msra.mxu0 %v3178
    %3196 = vmatmul.f32.gmra.mxu0 %v3174
    %v3197 = vpop.f32.mrf.mxu0
    %v3198 = vadd.f32 0.0, %v3197
    %3199 = vmatmul.f32.gmra.mxu0 %v3176
    %v3200 = vpop.f32.mrf.mxu0
    %v3201 = vadd.f32 0.0, %v3200
    %3202 = vdwg.mxu0
    %3203 = vst [vmem:[#allocation1] ss:$2 sm:$0xff] %v2664
    %s3204 = scalar_lea.vmem [#allocation1], 1
    %3205 = vst [vmem:[%s3204] ss:$2 sm:$0xff] %v2615
    %s3206 = scalar_lea.vmem [#allocation1], 16
    %3207 = vst [vmem:[%s3206] ss:$2 sm:$0xff] %v2665
    %v3208 = vld.sshfl [vmem:[#allocation1] sm:$0xff pattern:$0x75316420]
    %v3209 = vld.sshfl [vmem:[#allocation1 + $0x10] sm:$0xff pattern:$0x75316420]
    %3210 = vrot.lane.b32.xlu0 %v3208, 112
    %v3211 = vpop.permute.xlu0 %3210
    %3212 = vrot.lane.b32.xlu0 %v3209, 112
    %v3213 = vpop.permute.xlu0 %3212
    %3214 = vrot.lane.b32.xlu0 %v2658, 112
    %v3215 = vpop.permute.xlu0 %3214
    %v3216 = vsel %vm126, %v3211, 0
    %v3218 = vsel %vm126, %v3213, 0
    %v3220 = vsel %vm126, %v3215, 0
    %3222 = vmatpush.xpose.msra.mxu0 0.0
    %3223 = vmatpush.xpose.msra.mxu0 0.0
    %3224 = vmatpush.xpose.msra.mxu0 0.0
    %3225 = vmatpush.xpose.msra.mxu0 0.0
    %3226 = vmatpush.xpose.msra.mxu0 0.0
    %3227 = vmatpush.xpose.msra.mxu0 0.0
    %3228 = vmatpush.xpose.msra.mxu0 0.0
    %3229 = vmatpush.xpose.msra.mxu0 0.0
    %3230 = vmatpush.xpose.msra.mxu0 0.0
    %3231 = vmatpush.xpose.msra.mxu0 0.0
    %3232 = vmatpush.xpose.msra.mxu0 0.0
    %3233 = vmatpush.xpose.msra.mxu0 0.0
    %3234 = vmatpush.xpose.msra.mxu0 0.0
    %3235 = vmatpush.xpose.msra.mxu0 0.0
    %3236 = vmatpush.xpose.msra.mxu0 0.0
    %3237 = vmatpush.xpose.msra.mxu0 %v3220
    %3238 = vmatmul.f32.gmra.mxu0 %v3216
    %v3239 = vpop.f32.mrf.mxu0
    %v3240 = vadd.f32 0.0, %v3239
    %3241 = vmatmul.f32.gmra.mxu0 %v3218
    %v3242 = vpop.f32.mrf.mxu0
    %v3243 = vadd.f32 0.0, %v3242
    %3244 = vdwg.mxu0
    %v3245 = vmul.f32 %v3198, 0.35355338
    %v3246 = vmul.f32 %v3201, 0.35355338
    %v3247 = vmul.f32 %v3240, 0.35355338
    %v3248 = vmul.f32 %v3243, 0.35355338
    %v3249 = vsel %vm184, -1e+09, %v3245
    %v3250 = vsel %vm184, -1e+09, %v3246
    %v3251 = vsel %vm185, -1e+09, %v3247
    %v3252 = vsel %vm185, -1e+09, %v3248
    %v3253 = vsel %vm126, %v3249, -inf
    %3254 = vmax.xlane.f32.xlu0 %v3253
    %v3255 = vpop.xlane.xlu0 %3254
    %v3256 = vsel %vm2751, %v3250, -inf
    %3257 = vmax.xlane.f32.xlu0 %v3256
    %v3258 = vpop.xlane.xlu0 %3257
    %v3259 = vsel %vm126, %v3251, -inf
    %3260 = vmax.xlane.f32.xlu0 %v3259
    %v3261 = vpop.xlane.xlu0 %3260
    %v3262 = vsel %vm2751, %v3252, -inf
    %3263 = vmax.xlane.f32.xlu0 %v3262
    %v3264 = vpop.xlane.xlu0 %3263
    %v3265 = vsub.f32 %v3249, %v3255
    %v3266 = vsub.f32 %v3250, %v3258
    %v3267 = vsub.f32 %v3251, %v3261
    %v3268 = vsub.f32 %v3252, %v3264
    %v3269 = vmul.f32 %v3265, 1.442695
    %v3270 = vpow.pop %v3269
    %v3271 = vmul.f32 %v3266, 1.442695
    %v3272 = vpow.pop %v3271
    %v3273 = vmul.f32 %v3267, 1.442695
    %v3274 = vpow.pop %v3273
    %v3275 = vmul.f32 %v3268, 1.442695
    %v3276 = vpow.pop %v3275
    %v3277 = vsel %vm126, %v3270, 0.0
    %3278 = vadd.xlane.f32.xlu0 %v3277
    %v3279 = vpop.xlane.xlu0 %3278
    %v3280 = vsel %vm2751, %v3272, 0.0
    %3281 = vadd.xlane.f32.xlu0 %v3280
    %v3282 = vpop.xlane.xlu0 %3281
    %v3283 = vsel %vm126, %v3274, 0.0
    %3284 = vadd.xlane.f32.xlu0 %v3283
    %v3285 = vpop.xlane.xlu0 %3284
    %v3286 = vsel %vm2751, %v3276, 0.0
    %3287 = vadd.xlane.f32.xlu0 %v3286
    %v3288 = vpop.xlane.xlu0 %3287
    %v3289 = vrcp.pop %v3279
    %v3290 = vmul.f32 %v3279, %v3289
    %v3291 = vsub.f32 1.0, %v3290
    %v3292 = vmul.f32 %v3289, %v3291
    %v3293 = vadd.f32 %v3289, %v3292
    %vm3294 = vweird.f32 %v3279
    %vm3295 = vweird.f32 %v3289
    %vm3296 = vmor %vm3294, %vm3295
    %v3297 = vsel %vm3296, %v3289, %v3293
    %v3298 = vand.u32 2147483647, %v3279
    %vm3299 = vcmp.eq.f32.partialorder %v3298, 8.507059e+37
    %v3300 = vand.u32 %v3279, 2147483648
    %v3301 = vor.u32 1.1754944e-38, %v3300
    %v3302 = vsel %vm3299, %v3301, %v3297
    %v3303 = vmul.f32 %v3270, %v3302
    %v3304 = vrcp.pop %v3282
    %v3305 = vmul.f32 %v3282, %v3304
    %v3306 = vsub.f32 1.0, %v3305
    %v3307 = vmul.f32 %v3304, %v3306
    %v3308 = vadd.f32 %v3304, %v3307
    %vm3309 = vweird.f32 %v3282
    %vm3310 = vweird.f32 %v3304
    %vm3311 = vmor %vm3309, %vm3310
    %v3312 = vsel %vm3311, %v3304, %v3308
    %v3313 = vand.u32 2147483647, %v3282
    %vm3314 = vcmp.eq.f32.partialorder %v3313, 8.507059e+37
    %v3315 = vand.u32 %v3282, 2147483648
    %v3316 = vor.u32 1.1754944e-38, %v3315
    %v3317 = vsel %vm3314, %v3316, %v3312
    %v3318 = vmul.f32 %v3272, %v3317
    %v3319 = vrcp.pop %v3285
    %v3320 = vmul.f32 %v3285, %v3319
    %v3321 = vsub.f32 1.0, %v3320
    %v3322 = vmul.f32 %v3319, %v3321
    %v3323 = vadd.f32 %v3319, %v3322
    %vm3324 = vweird.f32 %v3285
    %vm3325 = vweird.f32 %v3319
    %vm3326 = vmor %vm3324, %vm3325
    %v3327 = vsel %vm3326, %v3319, %v3323
    %v3328 = vand.u32 2147483647, %v3285
    %vm3329 = vcmp.eq.f32.partialorder %v3328, 8.507059e+37
    %v3330 = vand.u32 %v3285, 2147483648
    %v3331 = vor.u32 1.1754944e-38, %v3330
    %v3332 = vsel %vm3329, %v3331, %v3327
    %v3333 = vmul.f32 %v3274, %v3332
    %v3334 = vrcp.pop %v3288
    %v3335 = vmul.f32 %v3288, %v3334
    %v3336 = vsub.f32 1.0, %v3335
    %v3337 = vmul.f32 %v3334, %v3336
    %v3338 = vadd.f32 %v3334, %v3337
    %vm3339 = vweird.f32 %v3288
    %vm3340 = vweird.f32 %v3334
    %vm3341 = vmor %vm3339, %vm3340
    %v3342 = vsel %vm3341, %v3334, %v3338
    %v3343 = vand.u32 2147483647, %v3288
    %vm3344 = vcmp.eq.f32.partialorder %v3343, 8.507059e+37
    %v3345 = vand.u32 %v3288, 2147483648
    %v3346 = vor.u32 1.1754944e-38, %v3345
    %v3347 = vsel %vm3344, %v3346, %v3342
    %v3348 = vmul.f32 %v3276, %v3347
    %3349 = vrot.lane.b32.xlu0 %v2655, 80
    %v3350 = vpop.permute.xlu0 %3349
    %v3353 = vsel %vm126, %v3303, 0
    %v3356 = vsel %vm126, %v3318, 0
    %3358 = vmatpush.msra.mxu0 0.0
    %3359 = vmatpush.msra.mxu0 0.0
    %3360 = vmatpush.msra.mxu0 0.0
    %3361 = vmatpush.msra.mxu0 0.0
    %3362 = vmatpush.msra.mxu0 0.0
    %3363 = vmatpush.msra.mxu0 0.0
    %3364 = vmatpush.msra.mxu0 0.0
    %3365 = vmatpush.msra.mxu0 0.0
    %3366 = vmatpush.msra.mxu0 0.0
    %3367 = vmatpush.msra.mxu0 0.0
    %3368 = vmatpush.msra.mxu0 0.0
    %3369 = vmatpush.msra.mxu0 0.0
    %3370 = vmatpush.msra.mxu0 0.0
    %3371 = vmatpush.msra.mxu0 0.0
    %3372 = vmatpush.msra.mxu0 0.0
    %3373 = vmatpush.msra.mxu0 %v3350
    %3374 = vmatmul.f32.gmra.mxu0 %v3353
    %v3375 = vpop.f32.mrf.mxu0
    %v3376 = vadd.f32 0.0, %v3375
    %3377 = vmatmul.f32.gmra.mxu0 %v3356
    %v3378 = vpop.f32.mrf.mxu0
    %v3379 = vadd.f32 0.0, %v3378
    %3380 = vdwg.mxu0
    %3381 = vrot.lane.b32.xlu0 %v2658, 80
    %v3382 = vpop.permute.xlu0 %3381
    %v3385 = vsel %vm126, %v3333, 0
    %v3388 = vsel %vm126, %v3348, 0
    %3390 = vmatpush.msra.mxu0 0.0
    %3391 = vmatpush.msra.mxu0 0.0
    %3392 = vmatpush.msra.mxu0 0.0
    %3393 = vmatpush.msra.mxu0 0.0
    %3394 = vmatpush.msra.mxu0 0.0
    %3395 = vmatpush.msra.mxu0 0.0
    %3396 = vmatpush.msra.mxu0 0.0
    %3397 = vmatpush.msra.mxu0 0.0
    %3398 = vmatpush.msra.mxu0 0.0
    %3399 = vmatpush.msra.mxu0 0.0
    %3400 = vmatpush.msra.mxu0 0.0
    %3401 = vmatpush.msra.mxu0 0.0
    %3402 = vmatpush.msra.mxu0 0.0
    %3403 = vmatpush.msra.mxu0 0.0
    %3404 = vmatpush.msra.mxu0 0.0
    %3405 = vmatpush.msra.mxu0 %v3382
    %3406 = vmatmul.f32.gmra.mxu0 %v3385
    %v3407 = vpop.f32.mrf.mxu0
    %v3408 = vadd.f32 0.0, %v3407
    %3409 = vmatmul.f32.gmra.mxu0 %v3388
    %v3410 = vpop.f32.mrf.mxu0
    %v3411 = vadd.f32 0.0, %v3410
    %3412 = vdwg.mxu0
    %3413 = vst [vmem:[#allocation1] ss:$2 sm:$0xff] %v2609
    %s3414 = scalar_lea.vmem [#allocation1], 1
    %3415 = vst [vmem:[%s3414] ss:$2 sm:$0xff] %v2663
    %s3416 = scalar_lea.vmem [#allocation1], 16
    %3417 = vst [vmem:[%s3416] ss:$2 sm:$0xff] %v2612
    %v3418 = vld.sshfl [vmem:[#allocation1] sm:$0xff pattern:$0x75316420]
    %v3419 = vld.sshfl [vmem:[#allocation1 + $0x10] sm:$0xff pattern:$0x75316420]
    %3420 = vrot.lane.b32.xlu0 %v3418, 104
    %v3421 = vpop.permute.xlu0 %3420
    %3422 = vrot.lane.b32.xlu0 %v3419, 104
    %v3423 = vpop.permute.xlu0 %3422
    %3424 = vrot.lane.b32.xlu0 %v2655, 104
    %v3425 = vpop.permute.xlu0 %3424
    %v3426 = vsel %vm126, %v3421, 0
    %v3428 = vsel %vm126, %v3423, 0
    %v3430 = vsel %vm126, %v3425, 0
    %3432 = vmatpush.xpose.msra.mxu0 0.0
    %3433 = vmatpush.xpose.msra.mxu0 0.0
    %3434 = vmatpush.xpose.msra.mxu0 0.0
    %3435 = vmatpush.xpose.msra.mxu0 0.0
    %3436 = vmatpush.xpose.msra.mxu0 0.0
    %3437 = vmatpush.xpose.msra.mxu0 0.0
    %3438 = vmatpush.xpose.msra.mxu0 0.0
    %3439 = vmatpush.xpose.msra.mxu0 0.0
    %3440 = vmatpush.xpose.msra.mxu0 0.0
    %3441 = vmatpush.xpose.msra.mxu0 0.0
    %3442 = vmatpush.xpose.msra.mxu0 0.0
    %3443 = vmatpush.xpose.msra.mxu0 0.0
    %3444 = vmatpush.xpose.msra.mxu0 0.0
    %3445 = vmatpush.xpose.msra.mxu0 0.0
    %3446 = vmatpush.xpose.msra.mxu0 0.0
    %3447 = vmatpush.xpose.msra.mxu0 %v3430
    %3448 = vmatmul.f32.gmra.mxu0 %v3426
    %v3449 = vpop.f32.mrf.mxu0
    %v3450 = vadd.f32 0.0, %v3449
    %3451 = vmatmul.f32.gmra.mxu0 %v3428
    %v3452 = vpop.f32.mrf.mxu0
    %v3453 = vadd.f32 0.0, %v3452
    %3454 = vdwg.mxu0
    %3455 = vst [vmem:[#allocation1] ss:$2 sm:$0xff] %v2664
    %s3456 = scalar_lea.vmem [#allocation1], 1
    %3457 = vst [vmem:[%s3456] ss:$2 sm:$0xff] %v2615
    %s3458 = scalar_lea.vmem [#allocation1], 16
    %3459 = vst [vmem:[%s3458] ss:$2 sm:$0xff] %v2665
    %v3460 = vld.sshfl [vmem:[#allocation1] sm:$0xff pattern:$0x75316420]
    %v3461 = vld.sshfl [vmem:[#allocation1 + $0x10] sm:$0xff pattern:$0x75316420]
    %3462 = vrot.lane.b32.xlu0 %v3460, 104
    %v3463 = vpop.permute.xlu0 %3462
    %3464 = vrot.lane.b32.xlu0 %v3461, 104
    %v3465 = vpop.permute.xlu0 %3464
    %3466 = vrot.lane.b32.xlu0 %v2658, 104
    %v3467 = vpop.permute.xlu0 %3466
    %v3468 = vsel %vm126, %v3463, 0
    %v3470 = vsel %vm126, %v3465, 0
    %v3472 = vsel %vm126, %v3467, 0
    %3474 = vmatpush.xpose.msra.mxu0 0.0
    %3475 = vmatpush.xpose.msra.mxu0 0.0
    %3476 = vmatpush.xpose.msra.mxu0 0.0
    %3477 = vmatpush.xpose.msra.mxu0 0.0
    %3478 = vmatpush.xpose.msra.mxu0 0.0
    %3479 = vmatpush.xpose.msra.mxu0 0.0
    %3480 = vmatpush.xpose.msra.mxu0 0.0
    %3481 = vmatpush.xpose.msra.mxu0 0.0
    %3482 = vmatpush.xpose.msra.mxu0 0.0
    %3483 = vmatpush.xpose.msra.mxu0 0.0
    %3484 = vmatpush.xpose.msra.mxu0 0.0
    %3485 = vmatpush.xpose.msra.mxu0 0.0
    %3486 = vmatpush.xpose.msra.mxu0 0.0
    %3487 = vmatpush.xpose.msra.mxu0 0.0
    %3488 = vmatpush.xpose.msra.mxu0 0.0
    %3489 = vmatpush.xpose.msra.mxu0 %v3472
    %3490 = vmatmul.f32.gmra.mxu0 %v3468
    %v3491 = vpop.f32.mrf.mxu0
    %v3492 = vadd.f32 0.0, %v3491
    %3493 = vmatmul.f32.gmra.mxu0 %v3470
    %v3494 = vpop.f32.mrf.mxu0
    %v3495 = vadd.f32 0.0, %v3494
    %3496 = vdwg.mxu0
    %v3497 = vmul.f32 %v3450, 0.35355338
    %v3498 = vmul.f32 %v3453, 0.35355338
    %v3499 = vmul.f32 %v3492, 0.35355338
    %v3500 = vmul.f32 %v3495, 0.35355338
    %v3501 = vsel %vm184, -1e+09, %v3497
    %v3502 = vsel %vm184, -1e+09, %v3498
    %v3503 = vsel %vm185, -1e+09, %v3499
    %v3504 = vsel %vm185, -1e+09, %v3500
    %v3505 = vsel %vm126, %v3501, -inf
    %3506 = vmax.xlane.f32.xlu0 %v3505
    %v3507 = vpop.xlane.xlu0 %3506
    %v3508 = vsel %vm2751, %v3502, -inf
    %3509 = vmax.xlane.f32.xlu0 %v3508
    %v3510 = vpop.xlane.xlu0 %3509
    %v3511 = vsel %vm126, %v3503, -inf
    %3512 = vmax.xlane.f32.xlu0 %v3511
    %v3513 = vpop.xlane.xlu0 %3512
    %v3514 = vsel %vm2751, %v3504, -inf
    %3515 = vmax.xlane.f32.xlu0 %v3514
    %v3516 = vpop.xlane.xlu0 %3515
    %v3517 = vsub.f32 %v3501, %v3507
    %v3518 = vsub.f32 %v3502, %v3510
    %v3519 = vsub.f32 %v3503, %v3513
    %v3520 = vsub.f32 %v3504, %v3516
    %v3521 = vmul.f32 %v3517, 1.442695
    %v3522 = vpow.pop %v3521
    %v3523 = vmul.f32 %v3518, 1.442695
    %v3524 = vpow.pop %v3523
    %v3525 = vmul.f32 %v3519, 1.442695
    %v3526 = vpow.pop %v3525
    %v3527 = vmul.f32 %v3520, 1.442695
    %v3528 = vpow.pop %v3527
    %v3529 = vsel %vm126, %v3522, 0.0
    %3530 = vadd.xlane.f32.xlu0 %v3529
    %v3531 = vpop.xlane.xlu0 %3530
    %v3532 = vsel %vm2751, %v3524, 0.0
    %3533 = vadd.xlane.f32.xlu0 %v3532
    %v3534 = vpop.xlane.xlu0 %3533
    %v3535 = vsel %vm126, %v3526, 0.0
    %3536 = vadd.xlane.f32.xlu0 %v3535
    %v3537 = vpop.xlane.xlu0 %3536
    %v3538 = vsel %vm2751, %v3528, 0.0
    %3539 = vadd.xlane.f32.xlu0 %v3538
    %v3540 = vpop.xlane.xlu0 %3539
    %v3541 = vrcp.pop %v3531
    %v3542 = vmul.f32 %v3531, %v3541
    %v3543 = vsub.f32 1.0, %v3542
    %v3544 = vmul.f32 %v3541, %v3543
    %v3545 = vadd.f32 %v3541, %v3544
    %vm3546 = vweird.f32 %v3531
    %vm3547 = vweird.f32 %v3541
    %vm3548 = vmor %vm3546, %vm3547
    %v3549 = vsel %vm3548, %v3541, %v3545
    %v3550 = vand.u32 2147483647, %v3531
    %vm3551 = vcmp.eq.f32.partialorder %v3550, 8.507059e+37
    %v3552 = vand.u32 %v3531, 2147483648
    %v3553 = vor.u32 1.1754944e-38, %v3552
    %v3554 = vsel %vm3551, %v3553, %v3549
    %v3555 = vmul.f32 %v3522, %v3554
    %v3556 = vrcp.pop %v3534
    %v3557 = vmul.f32 %v3534, %v3556
    %v3558 = vsub.f32 1.0, %v3557
    %v3559 = vmul.f32 %v3556, %v3558
    %v3560 = vadd.f32 %v3556, %v3559
    %vm3561 = vweird.f32 %v3534
    %vm3562 = vweird.f32 %v3556
    %vm3563 = vmor %vm3561, %vm3562
    %v3564 = vsel %vm3563, %v3556, %v3560
    %v3565 = vand.u32 2147483647, %v3534
    %vm3566 = vcmp.eq.f32.partialorder %v3565, 8.507059e+37
    %v3567 = vand.u32 %v3534, 2147483648
    %v3568 = vor.u32 1.1754944e-38, %v3567
    %v3569 = vsel %vm3566, %v3568, %v3564
    %v3570 = vmul.f32 %v3524, %v3569
    %v3571 = vrcp.pop %v3537
    %v3572 = vmul.f32 %v3537, %v3571
    %v3573 = vsub.f32 1.0, %v3572
    %v3574 = vmul.f32 %v3571, %v3573
    %v3575 = vadd.f32 %v3571, %v3574
    %vm3576 = vweird.f32 %v3537
    %vm3577 = vweird.f32 %v3571
    %vm3578 = vmor %vm3576, %vm3577
    %v3579 = vsel %vm3578, %v3571, %v3575
    %v3580 = vand.u32 2147483647, %v3537
    %vm3581 = vcmp.eq.f32.partialorder %v3580, 8.507059e+37
    %v3582 = vand.u32 %v3537, 2147483648
    %v3583 = vor.u32 1.1754944e-38, %v3582
    %v3584 = vsel %vm3581, %v3583, %v3579
    %v3585 = vmul.f32 %v3526, %v3584
    %v3586 = vrcp.pop %v3540
    %v3587 = vmul.f32 %v3540, %v3586
    %v3588 = vsub.f32 1.0, %v3587
    %v3589 = vmul.f32 %v3586, %v3588
    %v3590 = vadd.f32 %v3586, %v3589
    %vm3591 = vweird.f32 %v3540
    %vm3592 = vweird.f32 %v3586
    %vm3593 = vmor %vm3591, %vm3592
    %v3594 = vsel %vm3593, %v3586, %v3590
    %v3595 = vand.u32 2147483647, %v3540
    %vm3596 = vcmp.eq.f32.partialorder %v3595, 8.507059e+37
    %v3597 = vand.u32 %v3540, 2147483648
    %v3598 = vor.u32 1.1754944e-38, %v3597
    %v3599 = vsel %vm3596, %v3598, %v3594
    %v3600 = vmul.f32 %v3528, %v3599
    %3601 = vrot.lane.b32.xlu0 %v2655, 72
    %v3602 = vpop.permute.xlu0 %3601
    %v3605 = vsel %vm126, %v3555, 0
    %v3608 = vsel %vm126, %v3570, 0
    %3610 = vmatpush.msra.mxu0 0.0
    %3611 = vmatpush.msra.mxu0 0.0
    %3612 = vmatpush.msra.mxu0 0.0
    %3613 = vmatpush.msra.mxu0 0.0
    %3614 = vmatpush.msra.mxu0 0.0
    %3615 = vmatpush.msra.mxu0 0.0
    %3616 = vmatpush.msra.mxu0 0.0
    %3617 = vmatpush.msra.mxu0 0.0
    %3618 = vmatpush.msra.mxu0 0.0
    %3619 = vmatpush.msra.mxu0 0.0
    %3620 = vmatpush.msra.mxu0 0.0
    %3621 = vmatpush.msra.mxu0 0.0
    %3622 = vmatpush.msra.mxu0 0.0
    %3623 = vmatpush.msra.mxu0 0.0
    %3624 = vmatpush.msra.mxu0 0.0
    %3625 = vmatpush.msra.mxu0 %v3602
    %3626 = vmatmul.f32.gmra.mxu0 %v3605
    %v3627 = vpop.f32.mrf.mxu0
    %v3628 = vadd.f32 0.0, %v3627
    %3629 = vmatmul.f32.gmra.mxu0 %v3608
    %v3630 = vpop.f32.mrf.mxu0
    %v3631 = vadd.f32 0.0, %v3630
    %3632 = vdwg.mxu0
    %3633 = vrot.lane.b32.xlu0 %v2658, 72
    %v3634 = vpop.permute.xlu0 %3633
    %v3637 = vsel %vm126, %v3585, 0
    %v3640 = vsel %vm126, %v3600, 0
    %3642 = vmatpush.msra.mxu0 0.0
    %3643 = vmatpush.msra.mxu0 0.0
    %3644 = vmatpush.msra.mxu0 0.0
    %3645 = vmatpush.msra.mxu0 0.0
    %3646 = vmatpush.msra.mxu0 0.0
    %3647 = vmatpush.msra.mxu0 0.0
    %3648 = vmatpush.msra.mxu0 0.0
    %3649 = vmatpush.msra.mxu0 0.0
    %3650 = vmatpush.msra.mxu0 0.0
    %3651 = vmatpush.msra.mxu0 0.0
    %3652 = vmatpush.msra.mxu0 0.0
    %3653 = vmatpush.msra.mxu0 0.0
    %3654 = vmatpush.msra.mxu0 0.0
    %3655 = vmatpush.msra.mxu0 0.0
    %3656 = vmatpush.msra.mxu0 0.0
    %3657 = vmatpush.msra.mxu0 %v3634
    %3658 = vmatmul.f32.gmra.mxu0 %v3637
    %v3659 = vpop.f32.mrf.mxu0
    %v3660 = vadd.f32 0.0, %v3659
    %3661 = vmatmul.f32.gmra.mxu0 %v3640
    %v3662 = vpop.f32.mrf.mxu0
    %v3663 = vadd.f32 0.0, %v3662
    %3664 = vdwg.mxu0
    %3669 = vrot.lane.b32.xlu0 %v3124, 8
    %v3670 = vpop.permute.xlu0 %3669
    %3671 = vrot.lane.b32.xlu0 %v3127, 8
    %v3672 = vpop.permute.xlu0 %3671
    %3673 = vrot.lane.b32.xlu0 %v3156, 8
    %v3674 = vpop.permute.xlu0 %3673
    %3675 = vrot.lane.b32.xlu0 %v3159, 8
    %v3676 = vpop.permute.xlu0 %3675
    %3685 = vrot.lane.b32.xlu0 %v3376, 16
    %v3686 = vpop.permute.xlu0 %3685
    %3687 = vrot.lane.b32.xlu0 %v3379, 16
    %v3688 = vpop.permute.xlu0 %3687
    %3689 = vrot.lane.b32.xlu0 %v3408, 16
    %v3690 = vpop.permute.xlu0 %3689
    %3691 = vrot.lane.b32.xlu0 %v3411, 16
    %v3692 = vpop.permute.xlu0 %3691
    %3701 = vrot.lane.b32.xlu0 %v3628, 24
    %v3702 = vpop.permute.xlu0 %3701
    %3703 = vrot.lane.b32.xlu0 %v3631, 24
    %v3704 = vpop.permute.xlu0 %3703
    %3705 = vrot.lane.b32.xlu0 %v3660, 24
    %v3706 = vpop.permute.xlu0 %3705
    %3707 = vrot.lane.b32.xlu0 %v3663, 24
    %v3708 = vpop.permute.xlu0 %3707
    %v3713 = vsel %vm126, %v2872, %v3670
    %v3714 = vsel %vm126, %v2875, %v3672
    %v3715 = vsel %vm126, %v2904, %v3674
    %v3716 = vsel %vm126, %v2907, %v3676
    %v3717 = vsel %vm794, %v3713, %v3686
    %v3718 = vsel %vm794, %v3714, %v3688
    %v3719 = vsel %vm794, %v3715, %v3690
    %v3720 = vsel %vm794, %v3716, %v3692
    %v3721 = vsel %vm797, %v3717, %v3702
    %v3722 = vsel %vm797, %v3718, %v3704
    %v3723 = vsel %vm797, %v3719, %v3706
    %v3724 = vsel %vm797, %v3720, %v3708
    %v3729 = vrot.slane %v3721, 4
    %v3730 = vrot.slane %v3723, 4
    %v3731 = vperm.slane %v2578, 0
    %3732 = vst [vmem:[#allocation1] ss:$2 sm:$0xff] %v3721
    %s3733 = scalar_lea.vmem [#allocation1], 1
    %3734 = vst [vmem:[%s3733] ss:$2 sm:$0xff] %v3729
    %s3735 = scalar_lea.vmem [#allocation1], 16
    %3736 = vst [vmem:[%s3735] ss:$2 sm:$0xff] %v3722
    %s3737 = scalar_lea.vmem [#allocation1], 17
    %3738 = vst [vmem:[%s3737] ss:$2 sm:$0xff] %v3723
    %s3739 = scalar_lea.vmem [#allocation1], 32
    %3740 = vst [vmem:[%s3739] ss:$2 sm:$0xff] %v3730
    %s3741 = scalar_lea.vmem [#allocation1], 33
    %3742 = vst [vmem:[%s3741] ss:$2 sm:$0xff] %v3724
    %v3743 = vld.sshfl [vmem:[#allocation1] sm:$0xff pattern:$0x75316420]
    %v3744 = vld.sshfl [vmem:[#allocation1 + $0x10] sm:$0xff pattern:$0x75316420]
    %v3745 = vld.sshfl [vmem:[#allocation1 + $0x20] sm:$0xff pattern:$0x75316420]
    %v3746 = vsel %vm93, %v3743, 0
    %v3748 = vsel %vm93, %v3744, 0
    %v3750 = vsel %vm93, %v3745, 0
    %3752 = vmatpush.msra.mxu0 0.0
    %3753 = vmatpush.msra.mxu0 0.0
    %3754 = vmatpush.msra.mxu0 0.0
    %3755 = vmatpush.msra.mxu0 0.0
    %3756 = vmatpush.msra.mxu0 0.0
    %3757 = vmatpush.msra.mxu0 0.0
    %3758 = vmatpush.msra.mxu0 0.0
    %3759 = vmatpush.msra.mxu0 0.0
    %3760 = vmatpush.msra.mxu0 0.0
    %3761 = vmatpush.msra.mxu0 0.0
    %3762 = vmatpush.msra.mxu0 0.0
    %3763 = vmatpush.msra.mxu0 0.0
    %3764 = vmatpush.msra.mxu0 %v2577
    %3765 = vmatpush.msra.mxu0 %v2576
    %3766 = vmatpush.msra.mxu0 %v2575
    %3767 = vmatpush.msra.mxu0 %v2574
    %3768 = vmatmul.f32.gmra.mxu0 %v3746
    %v3769 = vpop.f32.mrf.mxu0
    %v3770 = vadd.f32 %v3731, %v3769
    %3771 = vmatmul.f32.gmra.mxu0 %v3748
    %v3772 = vpop.f32.mrf.mxu0
    %v3773 = vadd.f32 %v3731, %v3772
    %3774 = vmatmul.f32.gmra.mxu0 %v3750
    %v3775 = vpop.f32.mrf.mxu0
    %v3776 = vadd.f32 %v3731, %v3775
    %3777 = vdwg.mxu0
    %v3778 = vadd.f32 %v2566, %v3770
    %v3779 = vadd.f32 %v2567, %v3773
    %v3780 = vadd.f32 %v2568, %v3776
    %v3781 = vsel %vm93, %v3778, 0.0
    %3782 = vadd.xlane.f32.xlu0 %v3781
    %v3783 = vpop.xlane.xlu0 %3782
    %v3784 = vsel %vm93, %v3779, 0.0
    %3785 = vadd.xlane.f32.xlu0 %v3784
    %v3786 = vpop.xlane.xlu0 %3785
    %v3787 = vsel %vm93, %v3780, 0.0
    %3788 = vadd.xlane.f32.xlu0 %v3787
    %v3789 = vpop.xlane.xlu0 %3788
    %v3790 = vmul.f32 %v3783, %v844
    %v3791 = vmul.f32 %v3786, %v844
    %v3792 = vmul.f32 %v3789, %v844
    %v3793 = vsub.f32 %v3778, %v3790
    %v3794 = vsub.f32 %v3779, %v3791
    %v3795 = vsub.f32 %v3780, %v3792
    %v3796 = vmul.f32 %v3793, %v3793
    %v3797 = vmul.f32 %v3794, %v3794
    %v3798 = vmul.f32 %v3795, %v3795
    %v3799 = vsel %vm93, %v3796, 0.0
    %3800 = vadd.xlane.f32.xlu0 %v3799
    %v3801 = vpop.xlane.xlu0 %3800
    %v3802 = vsel %vm93, %v3797, 0.0
    %3803 = vadd.xlane.f32.xlu0 %v3802
    %v3804 = vpop.xlane.xlu0 %3803
    %v3805 = vsel %vm93, %v3798, 0.0
    %3806 = vadd.xlane.f32.xlu0 %v3805
    %v3807 = vpop.xlane.xlu0 %3806
    %v3808 = vmul.f32 %v3801, 0.032258064
    %v3809 = vmul.f32 %v3804, 0.032258064
    %v3810 = vmul.f32 %v3807, 0.032258064
    %v3811 = vrsqrt.pop %v3808
    %v3812 = vmul.f32 %v3811, %v3808
    %v3813 = vmul.f32 %v3812, %v3811
    %v3814 = vmul.f32 0.5, %v3813
    %v3815 = vsub.f32 1.5, %v3814
    %v3816 = vmul.f32 %v3811, %v3815
    %v3817 = vmul.f32 %v3808, %v3816
    %vm3818 = vcmp.eq.f32.partialorder %v3808, inf
    %v3819 = vsel %vm3818, %v3808, %v3817
    %vm3820 = vcmp.eq.f32.partialorder %v3808, 0.0
    %v3821 = vand.u32 %v3808, 2147483648
    %v3822 = vsel %vm3820, %v3821, %v3819
    %v3823 = vrsqrt.pop %v3809
    %v3824 = vmul.f32 %v3823, %v3809
    %v3825 = vmul.f32 %v3824, %v3823
    %v3826 = vmul.f32 0.5, %v3825
    %v3827 = vsub.f32 1.5, %v3826
    %v3828 = vmul.f32 %v3823, %v3827
    %v3829 = vmul.f32 %v3809, %v3828
    %vm3830 = vcmp.eq.f32.partialorder %v3809, inf
    %v3831 = vsel %vm3830, %v3809, %v3829
    %vm3832 = vcmp.eq.f32.partialorder %v3809, 0.0
    %v3833 = vand.u32 %v3809, 2147483648
    %v3834 = vsel %vm3832, %v3833, %v3831
    %v3835 = vrsqrt.pop %v3810
    %v3836 = vmul.f32 %v3835, %v3810
    %v3837 = vmul.f32 %v3836, %v3835
    %v3838 = vmul.f32 0.5, %v3837
    %v3839 = vsub.f32 1.5, %v3838
    %v3840 = vmul.f32 %v3835, %v3839
    %v3841 = vmul.f32 %v3810, %v3840
    %vm3842 = vcmp.eq.f32.partialorder %v3810, inf
    %v3843 = vsel %vm3842, %v3810, %v3841
    %vm3844 = vcmp.eq.f32.partialorder %v3810, 0.0
    %v3845 = vand.u32 %v3810, 2147483648
    %v3846 = vsel %vm3844, %v3845, %v3843
    %v3847 = vadd.f32 %v3822, 1e-06
    %v3848 = vadd.f32 %v3834, 1e-06
    %v3849 = vadd.f32 %v3846, 1e-06
    %v3850 = vrcp.pop %v3847
    %v3851 = vmul.f32 %v3847, %v3850
    %v3852 = vsub.f32 1.0, %v3851
    %v3853 = vmul.f32 %v3850, %v3852
    %v3854 = vadd.f32 %v3850, %v3853
    %vm3855 = vweird.f32 %v3847
    %vm3856 = vweird.f32 %v3850
    %vm3857 = vmor %vm3855, %vm3856
    %v3858 = vsel %vm3857, %v3850, %v3854
    %v3859 = vand.u32 2147483647, %v3847
    %vm3860 = vcmp.eq.f32.partialorder %v3859, 8.507059e+37
    %v3861 = vand.u32 %v3847, 2147483648
    %v3862 = vor.u32 1.1754944e-38, %v3861
    %v3863 = vsel %vm3860, %v3862, %v3858
    %v3864 = vmul.f32 1.0, %v3863
    %v3865 = vrcp.pop %v3848
    %v3866 = vmul.f32 %v3848, %v3865
    %v3867 = vsub.f32 1.0, %v3866
    %v3868 = vmul.f32 %v3865, %v3867
    %v3869 = vadd.f32 %v3865, %v3868
    %vm3870 = vweird.f32 %v3848
    %vm3871 = vweird.f32 %v3865
    %vm3872 = vmor %vm3870, %vm3871
    %v3873 = vsel %vm3872, %v3865, %v3869
    %v3874 = vand.u32 2147483647, %v3848
    %vm3875 = vcmp.eq.f32.partialorder %v3874, 8.507059e+37
    %v3876 = vand.u32 %v3848, 2147483648
    %v3877 = vor.u32 1.1754944e-38, %v3876
    %v3878 = vsel %vm3875, %v3877, %v3873
    %v3879 = vmul.f32 1.0, %v3878
    %v3880 = vrcp.pop %v3849
    %v3881 = vmul.f32 %v3849, %v3880
    %v3882 = vsub.f32 1.0, %v3881
    %v3883 = vmul.f32 %v3880, %v3882
    %v3884 = vadd.f32 %v3880, %v3883
    %vm3885 = vweird.f32 %v3849
    %vm3886 = vweird.f32 %v3880
    %vm3887 = vmor %vm3885, %vm3886
    %v3888 = vsel %vm3887, %v3880, %v3884
    %v3889 = vand.u32 2147483647, %v3849
    %vm3890 = vcmp.eq.f32.partialorder %v3889, 8.507059e+37
    %v3891 = vand.u32 %v3849, 2147483648
    %v3892 = vor.u32 1.1754944e-38, %v3891
    %v3893 = vsel %vm3890, %v3892, %v3888
    %v3894 = vmul.f32 1.0, %v3893
    %v3895 = vperm.slane %v2579, 0
    %v3896 = vmul.f32 %v3895, %v3793
    %v3897 = vmul.f32 %v3895, %v3794
    %v3898 = vmul.f32 %v3895, %v3795
    %v3899 = vmul.f32 %v3896, %v3864
    %v3900 = vmul.f32 %v3897, %v3879
    %v3901 = vmul.f32 %v3898, %v3894
    %v3902 = vperm.slane %v2580, 0
    %v3903 = vadd.f32 %v3899, %v3902
    %v3904 = vadd.f32 %v3900, %v3902
    %v3905 = vadd.f32 %v3901, %v3902
    %v3906 = vld [vmem:[#allocation2 + $0x38] sm:$0xff]
    %v3907 = vld [vmem:[#allocation2 + $0x88] sm:$0xff]
    %v3908 = vld [vmem:[#allocation2 + $0xd8] sm:$0xff]
    %v3909 = vld [vmem:[#allocation2 + $0x128] sm:$0xff]
    %v3910 = vld [vmem:[%s8 + $0x10] sm:$0x1]
    %v3911 = vld [vmem:[#allocation5 + $0x8] sm:$0xff]
    %v3912 = vld [vmem:[#allocation5 + $0x28] sm:$0xff]
    %v3913 = vld [vmem:[#allocation5 + $0x48] sm:$0xff]
    %v3914 = vld [vmem:[#allocation5 + $0x68] sm:$0xff]
    %v3915 = vld [vmem:[#allocation5 + $0x88] sm:$0xff]
    %v3916 = vld [vmem:[#allocation5 + $0xa8] sm:$0xff]
    %v3917 = vld [vmem:[#allocation5 + $0xc8] sm:$0xff]
    %v3918 = vld [vmem:[#allocation5 + $0xe8] sm:$0xff]
    %v3919 = vld [vmem:[#allocation5 + $0x108] sm:$0xff]
    %v3920 = vld [vmem:[#allocation5 + $0x128] sm:$0xff]
    %v3921 = vld [vmem:[#allocation5 + $0x148] sm:$0xff]
    %v3922 = vld [vmem:[#allocation5 + $0x168] sm:$0xff]
    %v3923 = vld [vmem:[#allocation5 + $0x188] sm:$0xff]
    %v3924 = vld [vmem:[#allocation5 + $0x1a8] sm:$0xff]
    %v3925 = vld [vmem:[#allocation5 + $0x1c8] sm:$0xff]
    %v3926 = vld [vmem:[#allocation5 + $0x1e8] sm:$0xff]
    %v3927 = vld [vmem:[%s8 + $0x11] sm:$0x1]
    %v3928 = vld [vmem:[%s8 + $0x12] sm:$0x1]
    %v3929 = vld [vmem:[%s8 + $0x13] sm:$0x1]
    %v3930 = vperm.slane %v3910, 0
    %v3932 = vsel %vm93, %v3903, 0
    %v3935 = vsel %vm93, %v3904, 0
    %v3938 = vsel %vm93, %v3905, 0
    %3940 = vmatpush.msra.mxu0 0.0
    %3941 = vmatpush.msra.mxu0 0.0
    %3942 = vmatpush.msra.mxu0 0.0
    %3943 = vmatpush.msra.mxu0 0.0
    %3944 = vmatpush.msra.mxu0 0.0
    %3945 = vmatpush.msra.mxu0 0.0
    %3946 = vmatpush.msra.mxu0 0.0
    %3947 = vmatpush.msra.mxu0 0.0
    %3948 = vmatpush.msra.mxu0 0.0
    %3949 = vmatpush.msra.mxu0 0.0
    %3950 = vmatpush.msra.mxu0 0.0
    %3951 = vmatpush.msra.mxu0 0.0
    %3952 = vmatpush.msra.mxu0 %v3909
    %3953 = vmatpush.msra.mxu0 %v3908
    %3954 = vmatpush.msra.mxu0 %v3907
    %3955 = vmatpush.msra.mxu0 %v3906
    %3956 = vmatmul.f32.gmra.mxu0 %v3932
    %v3957 = vpop.f32.mrf.mxu0
    %v3958 = vadd.f32 %v3930, %v3957
    %3959 = vmatmul.f32.gmra.mxu0 %v3935
    %v3960 = vpop.f32.mrf.mxu0
    %v3961 = vadd.f32 %v3930, %v3960
    %3962 = vmatmul.f32.gmra.mxu0 %v3938
    %v3963 = vpop.f32.mrf.mxu0
    %v3964 = vadd.f32 %v3930, %v3963
    %3965 = vdwg.mxu0
    %v3966 = vmax.f32 %v3958, 0.0
    %v3967 = vmax.f32 %v3961, 0.0
    %v3968 = vmax.f32 %v3964, 0.0
    %v3969 = vperm.slane %v3927, 0
    %3970 = vmatpush.msra.mxu0 %v3926
    %3971 = vmatpush.msra.mxu0 %v3925
    %3972 = vmatpush.msra.mxu0 %v3924
    %3973 = vmatpush.msra.mxu0 %v3923
    %3974 = vmatpush.msra.mxu0 %v3922
    %3975 = vmatpush.msra.mxu0 %v3921
    %3976 = vmatpush.msra.mxu0 %v3920
    %3977 = vmatpush.msra.mxu0 %v3919
    %3978 = vmatpush.msra.mxu0 %v3918
    %3979 = vmatpush.msra.mxu0 %v3917
    %3980 = vmatpush.msra.mxu0 %v3916
    %3981 = vmatpush.msra.mxu0 %v3915
    %3982 = vmatpush.msra.mxu0 %v3914
    %3983 = vmatpush.msra.mxu0 %v3913
    %3984 = vmatpush.msra.mxu0 %v3912
    %3985 = vmatpush.msra.mxu0 %v3911
    %3986 = vmatmul.f32.gmra.mxu0 %v3966
    %v3987 = vpop.f32.mrf.mxu0
    %v3988 = vadd.f32 %v3969, %v3987
    %3989 = vmatmul.f32.gmra.mxu0 %v3967
    %v3990 = vpop.f32.mrf.mxu0
    %v3991 = vadd.f32 %v3969, %v3990
    %3992 = vmatmul.f32.gmra.mxu0 %v3968
    %v3993 = vpop.f32.mrf.mxu0
    %v3994 = vadd.f32 %v3969, %v3993
    %3995 = vdwg.mxu0
    %v3996 = vadd.f32 %v3903, %v3988
    %v3997 = vadd.f32 %v3904, %v3991
    %v3998 = vadd.f32 %v3905, %v3994
    %v3999 = vsel %vm93, %v3996, 0.0
    %4000 = vadd.xlane.f32.xlu0 %v3999
    %v4001 = vpop.xlane.xlu0 %4000
    %v4002 = vsel %vm93, %v3997, 0.0
    %4003 = vadd.xlane.f32.xlu0 %v4002
    %v4004 = vpop.xlane.xlu0 %4003
    %v4005 = vsel %vm93, %v3998, 0.0
    %4006 = vadd.xlane.f32.xlu0 %v4005
    %v4007 = vpop.xlane.xlu0 %4006
    %v4008 = vmul.f32 %v4001, %v844
    %v4009 = vmul.f32 %v4004, %v844
    %v4010 = vmul.f32 %v4007, %v844
    %v4011 = vsub.f32 %v3996, %v4008
    %v4012 = vsub.f32 %v3997, %v4009
    %v4013 = vsub.f32 %v3998, %v4010
    %v4014 = vmul.f32 %v4011, %v4011
    %v4015 = vmul.f32 %v4012, %v4012
    %v4016 = vmul.f32 %v4013, %v4013
    %v4017 = vsel %vm93, %v4014, 0.0
    %4018 = vadd.xlane.f32.xlu0 %v4017
    %v4019 = vpop.xlane.xlu0 %4018
    %v4020 = vsel %vm93, %v4015, 0.0
    %4021 = vadd.xlane.f32.xlu0 %v4020
    %v4022 = vpop.xlane.xlu0 %4021
    %v4023 = vsel %vm93, %v4016, 0.0
    %4024 = vadd.xlane.f32.xlu0 %v4023
    %v4025 = vpop.xlane.xlu0 %4024
    %v4026 = vmul.f32 %v4019, 0.032258064
    %v4027 = vmul.f32 %v4022, 0.032258064
    %v4028 = vmul.f32 %v4025, 0.032258064
    %v4029 = vrsqrt.pop %v4026
    %v4030 = vmul.f32 %v4029, %v4026
    %v4031 = vmul.f32 %v4030, %v4029
    %v4032 = vmul.f32 0.5, %v4031
    %v4033 = vsub.f32 1.5, %v4032
    %v4034 = vmul.f32 %v4029, %v4033
    %v4035 = vmul.f32 %v4026, %v4034
    %vm4036 = vcmp.eq.f32.partialorder %v4026, inf
    %v4037 = vsel %vm4036, %v4026, %v4035
    %vm4038 = vcmp.eq.f32.partialorder %v4026, 0.0
    %v4039 = vand.u32 %v4026, 2147483648
    %v4040 = vsel %vm4038, %v4039, %v4037
    %v4041 = vrsqrt.pop %v4027
    %v4042 = vmul.f32 %v4041, %v4027
    %v4043 = vmul.f32 %v4042, %v4041
    %v4044 = vmul.f32 0.5, %v4043
    %v4045 = vsub.f32 1.5, %v4044
    %v4046 = vmul.f32 %v4041, %v4045
    %v4047 = vmul.f32 %v4027, %v4046
    %vm4048 = vcmp.eq.f32.partialorder %v4027, inf
    %v4049 = vsel %vm4048, %v4027, %v4047
    %vm4050 = vcmp.eq.f32.partialorder %v4027, 0.0
    %v4051 = vand.u32 %v4027, 2147483648
    %v4052 = vsel %vm4050, %v4051, %v4049
    %v4053 = vrsqrt.pop %v4028
    %v4054 = vmul.f32 %v4053, %v4028
    %v4055 = vmul.f32 %v4054, %v4053
    %v4056 = vmul.f32 0.5, %v4055
    %v4057 = vsub.f32 1.5, %v4056
    %v4058 = vmul.f32 %v4053, %v4057
    %v4059 = vmul.f32 %v4028, %v4058
    %vm4060 = vcmp.eq.f32.partialorder %v4028, inf
    %v4061 = vsel %vm4060, %v4028, %v4059
    %vm4062 = vcmp.eq.f32.partialorder %v4028, 0.0
    %v4063 = vand.u32 %v4028, 2147483648
    %v4064 = vsel %vm4062, %v4063, %v4061
    %v4065 = vadd.f32 %v4040, 1e-06
    %v4066 = vadd.f32 %v4052, 1e-06
    %v4067 = vadd.f32 %v4064, 1e-06
    %v4068 = vrcp.pop %v4065
    %v4069 = vmul.f32 %v4065, %v4068
    %v4070 = vsub.f32 1.0, %v4069
    %v4071 = vmul.f32 %v4068, %v4070
    %v4072 = vadd.f32 %v4068, %v4071
    %vm4073 = vweird.f32 %v4065
    %vm4074 = vweird.f32 %v4068
    %vm4075 = vmor %vm4073, %vm4074
    %v4076 = vsel %vm4075, %v4068, %v4072
    %v4077 = vand.u32 2147483647, %v4065
    %vm4078 = vcmp.eq.f32.partialorder %v4077, 8.507059e+37
    %v4079 = vand.u32 %v4065, 2147483648
    %v4080 = vor.u32 1.1754944e-38, %v4079
    %v4081 = vsel %vm4078, %v4080, %v4076
    %v4082 = vmul.f32 1.0, %v4081
    %v4083 = vrcp.pop %v4066
    %v4084 = vmul.f32 %v4066, %v4083
    %v4085 = vsub.f32 1.0, %v4084
    %v4086 = vmul.f32 %v4083, %v4085
    %v4087 = vadd.f32 %v4083, %v4086
    %vm4088 = vweird.f32 %v4066
    %vm4089 = vweird.f32 %v4083
    %vm4090 = vmor %vm4088, %vm4089
    %v4091 = vsel %vm4090, %v4083, %v4087
    %v4092 = vand.u32 2147483647, %v4066
    %vm4093 = vcmp.eq.f32.partialorder %v4092, 8.507059e+37
    %v4094 = vand.u32 %v4066, 2147483648
    %v4095 = vor.u32 1.1754944e-38, %v4094
    %v4096 = vsel %vm4093, %v4095, %v4091
    %v4097 = vmul.f32 1.0, %v4096
    %v4098 = vrcp.pop %v4067
    %v4099 = vmul.f32 %v4067, %v4098
    %v4100 = vsub.f32 1.0, %v4099
    %v4101 = vmul.f32 %v4098, %v4100
    %v4102 = vadd.f32 %v4098, %v4101
    %vm4103 = vweird.f32 %v4067
    %vm4104 = vweird.f32 %v4098
    %vm4105 = vmor %vm4103, %vm4104
    %v4106 = vsel %vm4105, %v4098, %v4102
    %v4107 = vand.u32 2147483647, %v4067
    %vm4108 = vcmp.eq.f32.partialorder %v4107, 8.507059e+37
    %v4109 = vand.u32 %v4067, 2147483648
    %v4110 = vor.u32 1.1754944e-38, %v4109
    %v4111 = vsel %vm4108, %v4110, %v4106
    %v4112 = vmul.f32 1.0, %v4111
    %v4113 = vperm.slane %v3928, 0
    %v4114 = vmul.f32 %v4113, %v4011
    %v4115 = vmul.f32 %v4113, %v4012
    %v4116 = vmul.f32 %v4113, %v4013
    %v4117 = vmul.f32 %v4114, %v4082
    %v4118 = vmul.f32 %v4115, %v4097
    %v4119 = vmul.f32 %v4116, %v4112
    %v4120 = vperm.slane %v3929, 0
    %v4121 = vadd.f32 %v4117, %v4120
    %v4122 = vadd.f32 %v4118, %v4120
    %v4123 = vadd.f32 %v4119, %v4120
    %v4124 = vadd.f32 %v1087, %v67
    %v4125 = vadd.f32 %v1088, %v68
    %v4126 = vadd.f32 %v4121, %v69
    %v4127 = vadd.f32 %v4122, %v70
    %v4128 = vadd.f32 %v4123, %v71
    %v4129 = vld [vmem:[%s4] sm:$0xff]
    %v4130 = vld [vmem:[%s4 + $0x8] sm:$0xff]
    %vm4131 = vcmp.gt.f32.partialorder %v4129, 0.5
    %vm4132 = vcmp.gt.f32.partialorder %v4130, 0.5
    %v4133 = vld [vmem:[%s5] sm:$0xff]
    %v4134 = vld [vmem:[%s5 + $0x8] sm:$0xf]
    %v4135 = vld [vmem:[%s5 + $0x10] sm:$0xff]
    %v4136 = vld [vmem:[%s5 + $0x18] sm:$0xf]
    %vm4137 = vcmp.gt.f32.partialorder %v4133, 0.5
    %vm4138 = vcmp.gt.f32.partialorder %v4134, 0.5
    %vm4139 = vcmp.gt.f32.partialorder %v4135, 0.5
    %vm4140 = vcmp.gt.f32.partialorder %v4136, 0.5
    %v4141 = vld [vmem:[#allocation2 + $0x40] sm:$0xff]
    %v4142 = vld [vmem:[#allocation2 + $0x90] sm:$0xff]
    %v4143 = vld [vmem:[#allocation2 + $0xe0] sm:$0xff]
    %v4144 = vld [vmem:[#allocation2 + $0x130] sm:$0xff]
    %v4145 = vld [vmem:[%s8 + $0x14] sm:$0x1]
    %v4146 = vld [vmem:[#allocation5 + $0x10] sm:$0xff]
    %v4147 = vld [vmem:[#allocation5 + $0x30] sm:$0xff]
    %v4148 = vld [vmem:[#allocation5 + $0x50] sm:$0xff]
    %v4149 = vld [vmem:[#allocation5 + $0x70] sm:$0xff]
    %v4150 = vld [vmem:[#allocation5 + $0x90] sm:$0xff]
    %v4151 = vld [vmem:[#allocation5 + $0xb0] sm:$0xff]
    %v4152 = vld [vmem:[#allocation5 + $0xd0] sm:$0xff]
    %v4153 = vld [vmem:[#allocation5 + $0xf0] sm:$0xff]
    %v4154 = vld [vmem:[#allocation5 + $0x110] sm:$0xff]
    %v4155 = vld [vmem:[#allocation5 + $0x130] sm:$0xff]
    %v4156 = vld [vmem:[#allocation5 + $0x150] sm:$0xff]
    %v4157 = vld [vmem:[#allocation5 + $0x170] sm:$0xff]
    %v4158 = vld [vmem:[#allocation5 + $0x190] sm:$0xff]
    %v4159 = vld [vmem:[#allocation5 + $0x1b0] sm:$0xff]
    %v4160 = vld [vmem:[#allocation5 + $0x1d0] sm:$0xff]
    %v4161 = vld [vmem:[#allocation5 + $0x1f0] sm:$0xff]
    %v4162 = vld [vmem:[%s8 + $0x15] sm:$0x1]
    %v4163 = vld [vmem:[%s8 + $0x16] sm:$0x1]
    %v4164 = vld [vmem:[%s8 + $0x17] sm:$0x1]
    %v4165 = vperm.slane %v4145, 0
    %v4167 = vsel %vm93, %v4124, 0
    %v4170 = vsel %vm93, %v4125, 0
    %4172 = vmatpush.msra.mxu0 0.0
    %4173 = vmatpush.msra.mxu0 0.0
    %4174 = vmatpush.msra.mxu0 0.0
    %4175 = vmatpush.msra.mxu0 0.0
    %4176 = vmatpush.msra.mxu0 0.0
    %4177 = vmatpush.msra.mxu0 0.0
    %4178 = vmatpush.msra.mxu0 0.0
    %4179 = vmatpush.msra.mxu0 0.0
    %4180 = vmatpush.msra.mxu0 0.0
    %4181 = vmatpush.msra.mxu0 0.0
    %4182 = vmatpush.msra.mxu0 0.0
    %4183 = vmatpush.msra.mxu0 0.0
    %4184 = vmatpush.msra.mxu0 %v4144
    %4185 = vmatpush.msra.mxu0 %v4143
    %4186 = vmatpush.msra.mxu0 %v4142
    %4187 = vmatpush.msra.mxu0 %v4141
    %4188 = vmatmul.f32.gmra.mxu0 %v4167
    %v4189 = vpop.f32.mrf.mxu0
    %v4190 = vadd.f32 %v4165, %v4189
    %4191 = vmatmul.f32.gmra.mxu0 %v4170
    %v4192 = vpop.f32.mrf.mxu0
    %v4193 = vadd.f32 %v4165, %v4192
    %4194 = vdwg.mxu0
    %v4195 = vmax.f32 %v4190, 0.0
    %v4196 = vmax.f32 %v4193, 0.0
    %v4197 = vperm.slane %v4162, 0
    %4198 = vmatpush.msra.mxu0 %v4161
    %4199 = vmatpush.msra.mxu0 %v4160
    %4200 = vmatpush.msra.mxu0 %v4159
    %4201 = vmatpush.msra.mxu0 %v4158
    %4202 = vmatpush.msra.mxu0 %v4157
    %4203 = vmatpush.msra.mxu0 %v4156
    %4204 = vmatpush.msra.mxu0 %v4155
    %4205 = vmatpush.msra.mxu0 %v4154
    %4206 = vmatpush.msra.mxu0 %v4153
    %4207 = vmatpush.msra.mxu0 %v4152
    %4208 = vmatpush.msra.mxu0 %v4151
    %4209 = vmatpush.msra.mxu0 %v4150
    %4210 = vmatpush.msra.mxu0 %v4149
    %4211 = vmatpush.msra.mxu0 %v4148
    %4212 = vmatpush.msra.mxu0 %v4147
    %4213 = vmatpush.msra.mxu0 %v4146
    %4214 = vmatmul.f32.gmra.mxu0 %v4195
    %v4215 = vpop.f32.mrf.mxu0
    %v4216 = vadd.f32 %v4197, %v4215
    %4217 = vmatmul.f32.gmra.mxu0 %v4196
    %v4218 = vpop.f32.mrf.mxu0
    %v4219 = vadd.f32 %v4197, %v4218
    %4220 = vdwg.mxu0
    %v4221 = vsel %vm4131, 1, 0
    %v4222 = vsel %vm4132, 1, 0
    %4223 = vset.pattern.permute.xlu0 0
    %4224 = vperm.xlu0 %4223, %v4221
    %v4225 = vpop.permute.xlu0 %4224
    %4226 = vset.pattern.permute.xlu0 0
    %4227 = vperm.xlu0 %4226, %v4222
    %v4228 = vpop.permute.xlu0 %4227
    %vm4229 = vcmp.eq.s32.totalorder %v4225, 1
    %vm4230 = vcmp.eq.s32.totalorder %v4228, 1
    %v4231 = vsel %vm4229, -1e+09, %v4216
    %v4232 = vsel %vm4230, -1e+09, %v4219
    %v4233 = vsel %vm126, %v4231, -inf
    %v4234 = vrot.slane %v4233, 4
    %v4235 = vmax.f32 %v4233, %v4234
    %v4236 = vrot.slane %v4235, 2
    %v4237 = vmax.f32 %v4235, %v4236
    %v4238 = vrot.slane %v4237, 1
    %v4239 = vmax.f32 %v4237, %v4238
    %v4240 = vsel %vm126, %v4232, -inf
    %v4241 = vrot.slane %v4240, 4
    %v4242 = vmax.f32 %v4240, %v4241
    %v4243 = vrot.slane %v4242, 2
    %v4244 = vmax.f32 %v4242, %v4243
    %v4245 = vrot.slane %v4244, 1
    %v4246 = vmax.f32 %v4244, %v4245
    %v4247 = vsub.f32 %v4231, %v4239
    %v4248 = vsub.f32 %v4232, %v4246
    %v4249 = vmul.f32 %v4247, 1.442695
    %v4250 = vpow.pop %v4249
    %v4251 = vmul.f32 %v4248, 1.442695
    %v4252 = vpow.pop %v4251
    %v4253 = vsel %vm126, %v4250, 0.0
    %v4254 = vrot.slane %v4253, 4
    %v4255 = vadd.f32 %v4253, %v4254
    %v4256 = vrot.slane %v4255, 2
    %v4257 = vadd.f32 %v4255, %v4256
    %v4258 = vrot.slane %v4257, 1
    %v4259 = vadd.f32 %v4257, %v4258
    %v4260 = vsel %vm126, %v4252, 0.0
    %v4261 = vrot.slane %v4260, 4
    %v4262 = vadd.f32 %v4260, %v4261
    %v4263 = vrot.slane %v4262, 2
    %v4264 = vadd.f32 %v4262, %v4263
    %v4265 = vrot.slane %v4264, 1
    %v4266 = vadd.f32 %v4264, %v4265
    %v4267 = vrcp.pop %v4259
    %v4268 = vmul.f32 %v4259, %v4267
    %v4269 = vsub.f32 1.0, %v4268
    %v4270 = vmul.f32 %v4267, %v4269
    %v4271 = vadd.f32 %v4267, %v4270
    %vm4272 = vweird.f32 %v4259
    %vm4273 = vweird.f32 %v4267
    %vm4274 = vmor %vm4272, %vm4273
    %v4275 = vsel %vm4274, %v4267, %v4271
    %v4276 = vand.u32 2147483647, %v4259
    %vm4277 = vcmp.eq.f32.partialorder %v4276, 8.507059e+37
    %v4278 = vand.u32 %v4259, 2147483648
    %v4279 = vor.u32 1.1754944e-38, %v4278
    %v4280 = vsel %vm4277, %v4279, %v4275
    %v4281 = vmul.f32 %v4250, %v4280
    %v4282 = vrcp.pop %v4266
    %v4283 = vmul.f32 %v4266, %v4282
    %v4284 = vsub.f32 1.0, %v4283
    %v4285 = vmul.f32 %v4282, %v4284
    %v4286 = vadd.f32 %v4282, %v4285
    %vm4287 = vweird.f32 %v4266
    %vm4288 = vweird.f32 %v4282
    %vm4289 = vmor %vm4287, %vm4288
    %v4290 = vsel %vm4289, %v4282, %v4286
    %v4291 = vand.u32 2147483647, %v4266
    %vm4292 = vcmp.eq.f32.partialorder %v4291, 8.507059e+37
    %v4293 = vand.u32 %v4266, 2147483648
    %v4294 = vor.u32 1.1754944e-38, %v4293
    %v4295 = vsel %vm4292, %v4294, %v4290
    %v4296 = vmul.f32 %v4252, %v4295
    %4297 = vxpose.xlu0.b32.start [1/16] %v4281, 128
    %4298 = vxpose.xlu0.b32.cont [2/16] 0.0, 128
    %4299 = vxpose.xlu0.b32.cont [3/16] 0.0, 128
    %4300 = vxpose.xlu0.b32.cont [4/16] 0.0, 128
    %4301 = vxpose.xlu0.b32.cont [5/16] 0.0, 128
    %4302 = vxpose.xlu0.b32.cont [6/16] 0.0, 128
    %4303 = vxpose.xlu0.b32.cont [7/16] 0.0, 128
    %4304 = vxpose.xlu0.b32.cont [8/16] 0.0, 128
    %4305 = vxpose.xlu0.b32.cont [9/16] 0.0, 128
    %4306 = vxpose.xlu0.b32.cont [10/16] 0.0, 128
    %4307 = vxpose.xlu0.b32.cont [11/16] 0.0, 128
    %4308 = vxpose.xlu0.b32.cont [12/16] 0.0, 128
    %4309 = vxpose.xlu0.b32.cont [13/16] 0.0, 128
    %4310 = vxpose.xlu0.b32.cont [14/16] 0.0, 128
    %4311 = vxpose.xlu0.b32.cont [15/16] 0.0, 128
    %4312 = vxpose.xlu0.b32.end [16/16] 0.0, 128
    %v4313 = vpop.trf.xlu0
    %v4314 = vpop.trf.xlu0
    %v4315 = vpop.trf.xlu0
    %v4316 = vpop.trf.xlu0
    %v4317 = vpop.trf.xlu0
    %v4318 = vpop.trf.xlu0
    %v4319 = vpop.trf.xlu0
    %v4320 = vpop.trf.xlu0
    %v4321 = vpop.trf.xlu0
    %v4322 = vpop.trf.xlu0
    %v4323 = vpop.trf.xlu0
    %v4324 = vpop.trf.xlu0
    %v4325 = vpop.trf.xlu0
    %v4326 = vpop.trf.xlu0
    %v4327 = vpop.trf.xlu0
    %v4328 = vpop.trf.xlu0
    %4329 = vxpose.xlu0.b32.start [1/16] %v4296, 128
    %4330 = vxpose.xlu0.b32.cont [2/16] 0.0, 128
    %4331 = vxpose.xlu0.b32.cont [3/16] 0.0, 128
    %4332 = vxpose.xlu0.b32.cont [4/16] 0.0, 128
    %4333 = vxpose.xlu0.b32.cont [5/16] 0.0, 128
    %4334 = vxpose.xlu0.b32.cont [6/16] 0.0, 128
    %4335 = vxpose.xlu0.b32.cont [7/16] 0.0, 128
    %4336 = vxpose.xlu0.b32.cont [8/16] 0.0, 128
    %4337 = vxpose.xlu0.b32.cont [9/16] 0.0, 128
    %4338 = vxpose.xlu0.b32.cont [10/16] 0.0, 128
    %4339 = vxpose.xlu0.b32.cont [11/16] 0.0, 128
    %4340 = vxpose.xlu0.b32.cont [12/16] 0.0, 128
    %4341 = vxpose.xlu0.b32.cont [13/16] 0.0, 128
    %4342 = vxpose.xlu0.b32.cont [14/16] 0.0, 128
    %4343 = vxpose.xlu0.b32.cont [15/16] 0.0, 128
    %4344 = vxpose.xlu0.b32.end [16/16] 0.0, 128
    %v4345 = vpop.trf.xlu0
    %v4346 = vpop.trf.xlu0
    %v4347 = vpop.trf.xlu0
    %v4348 = vpop.trf.xlu0
    %v4349 = vpop.trf.xlu0
    %v4350 = vpop.trf.xlu0
    %v4351 = vpop.trf.xlu0
    %v4352 = vpop.trf.xlu0
    %v4353 = vpop.trf.xlu0
    %v4354 = vpop.trf.xlu0
    %v4355 = vpop.trf.xlu0
    %v4356 = vpop.trf.xlu0
    %v4357 = vpop.trf.xlu0
    %v4358 = vpop.trf.xlu0
    %v4359 = vpop.trf.xlu0
    %v4360 = vpop.trf.xlu0
    %v4362 = vsel %vm126, %v4313, 0
    %4364 = vmatpush.msra.mxu0 0.0
    %4365 = vmatpush.msra.mxu0 0.0
    %4366 = vmatpush.msra.mxu0 0.0
    %4367 = vmatpush.msra.mxu0 0.0
    %4368 = vmatpush.msra.mxu0 0.0
    %4369 = vmatpush.msra.mxu0 0.0
    %4370 = vmatpush.msra.mxu0 0.0
    %4371 = vmatpush.msra.mxu0 0.0
    %4372 = vmatpush.msra.mxu0 0.0
    %4373 = vmatpush.msra.mxu0 0.0
    %4374 = vmatpush.msra.mxu0 0.0
    %4375 = vmatpush.msra.mxu0 0.0
    %4376 = vmatpush.msra.mxu0 0.0
    %4377 = vmatpush.msra.mxu0 0.0
    %4378 = vmatpush.msra.mxu0 0.0
    %4379 = vmatpush.msra.mxu0 %v4124
    %4380 = vmatmul.f32.gmra.mxu0 %v4362
    %v4381 = vpop.f32.mrf.mxu0
    %v4382 = vadd.f32 0.0, %v4381
    %4383 = vdwg.mxu0
    %v4385 = vsel %vm126, %v4345, 0
    %4387 = vmatpush.msra.mxu0 0.0
    %4388 = vmatpush.msra.mxu0 0.0
    %4389 = vmatpush.msra.mxu0 0.0
    %4390 = vmatpush.msra.mxu0 0.0
    %4391 = vmatpush.msra.mxu0 0.0
    %4392 = vmatpush.msra.mxu0 0.0
    %4393 = vmatpush.msra.mxu0 0.0
    %4394 = vmatpush.msra.mxu0 0.0
    %4395 = vmatpush.msra.mxu0 0.0
    %4396 = vmatpush.msra.mxu0 0.0
    %4397 = vmatpush.msra.mxu0 0.0
    %4398 = vmatpush.msra.mxu0 0.0
    %4399 = vmatpush.msra.mxu0 0.0
    %4400 = vmatpush.msra.mxu0 0.0
    %4401 = vmatpush.msra.mxu0 0.0
    %4402 = vmatpush.msra.mxu0 %v4125
    %4403 = vmatmul.f32.gmra.mxu0 %v4385
    %v4404 = vpop.f32.mrf.mxu0
    %v4405 = vadd.f32 0.0, %v4404
    %4406 = vdwg.mxu0
    %v4407 = vadd.f32 %v4124, %v4382
    %v4408 = vadd.f32 %v4125, %v4405
    %v4409 = vsel %vm93, %v4407, 0.0
    %4410 = vadd.xlane.f32.xlu0 %v4409
    %v4411 = vpop.xlane.xlu0 %4410
    %v4412 = vsel %vm93, %v4408, 0.0
    %4413 = vadd.xlane.f32.xlu0 %v4412
    %v4414 = vpop.xlane.xlu0 %4413
    %v4415 = vmul.f32 %v4411, %v844
    %v4416 = vmul.f32 %v4414, %v844
    %v4417 = vsub.f32 %v4407, %v4415
    %v4418 = vsub.f32 %v4408, %v4416
    %v4419 = vmul.f32 %v4417, %v4417
    %v4420 = vmul.f32 %v4418, %v4418
    %v4421 = vsel %vm93, %v4419, 0.0
    %4422 = vadd.xlane.f32.xlu0 %v4421
    %v4423 = vpop.xlane.xlu0 %4422
    %v4424 = vsel %vm93, %v4420, 0.0
    %4425 = vadd.xlane.f32.xlu0 %v4424
    %v4426 = vpop.xlane.xlu0 %4425
    %v4427 = vmul.f32 %v4423, 0.032258064
    %v4428 = vmul.f32 %v4426, 0.032258064
    %v4429 = vrsqrt.pop %v4427
    %v4430 = vmul.f32 %v4429, %v4427
    %v4431 = vmul.f32 %v4430, %v4429
    %v4432 = vmul.f32 0.5, %v4431
    %v4433 = vsub.f32 1.5, %v4432
    %v4434 = vmul.f32 %v4429, %v4433
    %v4435 = vmul.f32 %v4427, %v4434
    %vm4436 = vcmp.eq.f32.partialorder %v4427, inf
    %v4437 = vsel %vm4436, %v4427, %v4435
    %vm4438 = vcmp.eq.f32.partialorder %v4427, 0.0
    %v4439 = vand.u32 %v4427, 2147483648
    %v4440 = vsel %vm4438, %v4439, %v4437
    %v4441 = vrsqrt.pop %v4428
    %v4442 = vmul.f32 %v4441, %v4428
    %v4443 = vmul.f32 %v4442, %v4441
    %v4444 = vmul.f32 0.5, %v4443
    %v4445 = vsub.f32 1.5, %v4444
    %v4446 = vmul.f32 %v4441, %v4445
    %v4447 = vmul.f32 %v4428, %v4446
    %vm4448 = vcmp.eq.f32.partialorder %v4428, inf
    %v4449 = vsel %vm4448, %v4428, %v4447
    %vm4450 = vcmp.eq.f32.partialorder %v4428, 0.0
    %v4451 = vand.u32 %v4428, 2147483648
    %v4452 = vsel %vm4450, %v4451, %v4449
    %v4453 = vadd.f32 %v4440, 1e-06
    %v4454 = vadd.f32 %v4452, 1e-06
    %v4455 = vrcp.pop %v4453
    %v4456 = vmul.f32 %v4453, %v4455
    %v4457 = vsub.f32 1.0, %v4456
    %v4458 = vmul.f32 %v4455, %v4457
    %v4459 = vadd.f32 %v4455, %v4458
    %vm4460 = vweird.f32 %v4453
    %vm4461 = vweird.f32 %v4455
    %vm4462 = vmor %vm4460, %vm4461
    %v4463 = vsel %vm4462, %v4455, %v4459
    %v4464 = vand.u32 2147483647, %v4453
    %vm4465 = vcmp.eq.f32.partialorder %v4464, 8.507059e+37
    %v4466 = vand.u32 %v4453, 2147483648
    %v4467 = vor.u32 1.1754944e-38, %v4466
    %v4468 = vsel %vm4465, %v4467, %v4463
    %v4469 = vmul.f32 1.0, %v4468
    %v4470 = vrcp.pop %v4454
    %v4471 = vmul.f32 %v4454, %v4470
    %v4472 = vsub.f32 1.0, %v4471
    %v4473 = vmul.f32 %v4470, %v4472
    %v4474 = vadd.f32 %v4470, %v4473
    %vm4475 = vweird.f32 %v4454
    %vm4476 = vweird.f32 %v4470
    %vm4477 = vmor %vm4475, %vm4476
    %v4478 = vsel %vm4477, %v4470, %v4474
    %v4479 = vand.u32 2147483647, %v4454
    %vm4480 = vcmp.eq.f32.partialorder %v4479, 8.507059e+37
    %v4481 = vand.u32 %v4454, 2147483648
    %v4482 = vor.u32 1.1754944e-38, %v4481
    %v4483 = vsel %vm4480, %v4482, %v4478
    %v4484 = vmul.f32 1.0, %v4483
    %v4485 = vperm.slane %v4163, 0
    %v4486 = vmul.f32 %v4485, %v4417
    %v4487 = vmul.f32 %v4485, %v4418
    %v4488 = vmul.f32 %v4486, %v4469
    %v4489 = vmul.f32 %v4487, %v4484
    %v4490 = vperm.slane %v4164, 0
    %v4491 = vadd.f32 %v4488, %v4490
    %v4492 = vadd.f32 %v4489, %v4490
    %4493 = vst.msk [vmem:[#allocation7] sm:$0xff] %vm93, %v4491
    %4494 = vst.msk [vmem:[#allocation7 + $0x8] sm:$0xff] %vm93, %v4492
    %v4495 = vld [vmem:[#allocation2 + $0x48] sm:$0xff]
    %v4496 = vld [vmem:[#allocation2 + $0x98] sm:$0xff]
    %v4497 = vld [vmem:[#allocation2 + $0xe8] sm:$0xff]
    %v4498 = vld [vmem:[#allocation2 + $0x138] sm:$0xff]
    %v4499 = vld [vmem:[%s8 + $0x18] sm:$0x1]
    %v4500 = vld [vmem:[#allocation5 + $0x18] sm:$0xff]
    %v4501 = vld [vmem:[#allocation5 + $0x38] sm:$0xff]
    %v4502 = vld [vmem:[#allocation5 + $0x58] sm:$0xff]
    %v4503 = vld [vmem:[#allocation5 + $0x78] sm:$0xff]
    %v4504 = vld [vmem:[#allocation5 + $0x98] sm:$0xff]
    %v4505 = vld [vmem:[#allocation5 + $0xb8] sm:$0xff]
    %v4506 = vld [vmem:[#allocation5 + $0xd8] sm:$0xff]
    %v4507 = vld [vmem:[#allocation5 + $0xf8] sm:$0xff]
    %v4508 = vld [vmem:[#allocation5 + $0x118] sm:$0xff]
    %v4509 = vld [vmem:[#allocation5 + $0x138] sm:$0xff]
    %v4510 = vld [vmem:[#allocation5 + $0x158] sm:$0xff]
    %v4511 = vld [vmem:[#allocation5 + $0x178] sm:$0xff]
    %v4512 = vld [vmem:[#allocation5 + $0x198] sm:$0xff]
    %v4513 = vld [vmem:[#allocation5 + $0x1b8] sm:$0xff]
    %v4514 = vld [vmem:[#allocation5 + $0x1d8] sm:$0xff]
    %v4515 = vld [vmem:[#allocation5 + $0x1f8] sm:$0xff]
    %v4516 = vld [vmem:[%s8 + $0x19] sm:$0x1]
    %v4517 = vld [vmem:[%s8 + $0x1a] sm:$0x1]
    %v4518 = vld [vmem:[%s8 + $0x1b] sm:$0x1]
    %v4519 = vperm.slane %v4499, 0
    %v4521 = vsel %vm93, %v4126, 0
    %v4524 = vsel %vm93, %v4127, 0
    %v4527 = vsel %vm93, %v4128, 0
    %4529 = vmatpush.msra.mxu0 0.0
    %4530 = vmatpush.msra.mxu0 0.0
    %4531 = vmatpush.msra.mxu0 0.0
    %4532 = vmatpush.msra.mxu0 0.0
    %4533 = vmatpush.msra.mxu0 0.0
    %4534 = vmatpush.msra.mxu0 0.0
    %4535 = vmatpush.msra.mxu0 0.0
    %4536 = vmatpush.msra.mxu0 0.0
    %4537 = vmatpush.msra.mxu0 0.0
    %4538 = vmatpush.msra.mxu0 0.0
    %4539 = vmatpush.msra.mxu0 0.0
    %4540 = vmatpush.msra.mxu0 0.0
    %4541 = vmatpush.msra.mxu0 %v4498
    %4542 = vmatpush.msra.mxu0 %v4497
    %4543 = vmatpush.msra.mxu0 %v4496
    %4544 = vmatpush.msra.mxu0 %v4495
    %4545 = vmatmul.f32.gmra.mxu0 %v4521
    %v4546 = vpop.f32.mrf.mxu0
    %v4547 = vadd.f32 %v4519, %v4546
    %4548 = vmatmul.f32.gmra.mxu0 %v4524
    %v4549 = vpop.f32.mrf.mxu0
    %v4550 = vadd.f32 %v4519, %v4549
    %4551 = vmatmul.f32.gmra.mxu0 %v4527
    %v4552 = vpop.f32.mrf.mxu0
    %v4553 = vadd.f32 %v4519, %v4552
    %4554 = vdwg.mxu0
    %v4555 = vmax.f32 %v4547, 0.0
    %v4556 = vmax.f32 %v4550, 0.0
    %v4557 = vmax.f32 %v4553, 0.0
    %v4558 = vperm.slane %v4516, 0
    %4559 = vmatpush.msra.mxu0 %v4515
    %4560 = vmatpush.msra.mxu0 %v4514
    %4561 = vmatpush.msra.mxu0 %v4513
    %4562 = vmatpush.msra.mxu0 %v4512
    %4563 = vmatpush.msra.mxu0 %v4511
    %4564 = vmatpush.msra.mxu0 %v4510
    %4565 = vmatpush.msra.mxu0 %v4509
    %4566 = vmatpush.msra.mxu0 %v4508
    %4567 = vmatpush.msra.mxu0 %v4507
    %4568 = vmatpush.msra.mxu0 %v4506
    %4569 = vmatpush.msra.mxu0 %v4505
    %4570 = vmatpush.msra.mxu0 %v4504
    %4571 = vmatpush.msra.mxu0 %v4503
    %4572 = vmatpush.msra.mxu0 %v4502
    %4573 = vmatpush.msra.mxu0 %v4501
    %4574 = vmatpush.msra.mxu0 %v4500
    %4575 = vmatmul.f32.gmra.mxu0 %v4555
    %v4576 = vpop.f32.mrf.mxu0
    %v4577 = vadd.f32 %v4558, %v4576
    %4578 = vmatmul.f32.gmra.mxu0 %v4556
    %v4579 = vpop.f32.mrf.mxu0
    %v4580 = vadd.f32 %v4558, %v4579
    %4581 = vmatmul.f32.gmra.mxu0 %v4557
    %v4582 = vpop.f32.mrf.mxu0
    %v4583 = vadd.f32 %v4558, %v4582
    %4584 = vdwg.mxu0
    %v4588 = vrot.slane %v4577, 4
    %v4589 = vrot.slane %v4580, 4
    %v4590 = vrot.slane %v4583, 4
    %v4591 = vsel %vm4137, 1, 0
    %v4592 = vsel %vm4138, 1, 0
    %v4593 = vsel %vm4139, 1, 0
    %v4594 = vsel %vm4140, 1, 0
    %4595 = vset.pattern.permute.xlu0 0
    %4596 = vperm.xlu0 %4595, %v4591
    %v4597 = vpop.permute.xlu0 %4596
    %4598 = vset.pattern.permute.xlu0 0
    %4599 = vperm.xlu0 %4598, %v4592
    %v4600 = vpop.permute.xlu0 %4599
    %4601 = vset.pattern.permute.xlu0 0
    %4602 = vperm.xlu0 %4601, %v4593
    %v4603 = vpop.permute.xlu0 %4602
    %4604 = vset.pattern.permute.xlu0 0
    %4605 = vperm.xlu0 %4604, %v4594
    %v4606 = vpop.permute.xlu0 %4605
    %vm4607 = vcmp.eq.s32.totalorder %v4597, 1
    %vm4608 = vcmp.eq.s32.totalorder %v4600, 1
    %vm4609 = vcmp.eq.s32.totalorder %v4603, 1
    %vm4610 = vcmp.eq.s32.totalorder %v4606, 1
    %4611 = vst [vmem:[#allocation1] ss:$2 sm:$0xff] %v4577
    %s4612 = scalar_lea.vmem [#allocation1], 1
    %4613 = vst [vmem:[%s4612] ss:$2 sm:$0xff] %v4588
    %s4614 = scalar_lea.vmem [#allocation1], 16
    %4615 = vst [vmem:[%s4614] ss:$2 sm:$0xff] %v4580
    %v4616 = vld.sshfl [vmem:[#allocation1] sm:$0xff pattern:$0x75316420]
    %v4617 = vld.sshfl [vmem:[#allocation1 + $0x10] sm:$0xff pattern:$0x75316420]
    %s4618 = scalar_lea.vmem [#allocation1], 32
    %4619 = vst [vmem:[%s4618] ss:$2 sm:$0xff] %v4589
    %s4620 = scalar_lea.vmem [#allocation1], 33
    %4621 = vst [vmem:[%s4620] ss:$2 sm:$0xff] %v4583
    %s4622 = scalar_lea.vmem [#allocation1], 48
    %4623 = vst [vmem:[%s4622] ss:$2 sm:$0xff] %v4590
    %v4624 = vld.sshfl [vmem:[#allocation1 + $0x20] sm:$0xff pattern:$0x75316420]
    %v4625 = vld.sshfl [vmem:[#allocation1 + $0x30] sm:$0xff pattern:$0x75316420]
    %v4630 = vsel %vm4607, -1e+09, %v4616
    %v4631 = vsel %vm4608, -1e+09, %v4617
    %v4632 = vsel %vm4609, -1e+09, %v4624
    %v4633 = vsel %vm4610, -1e+09, %v4625
    %v4634 = vsel %vm1255, %v4630, -inf
    %v4635 = vsel %vm1259, %v4631, -inf
    %v4636 = vmax.f32 %v4634, %v4635
    %v4637 = vrot.slane %v4636, 4
    %v4638 = vmax.f32 %v4636, %v4637
    %v4639 = vrot.slane %v4638, 2
    %v4640 = vmax.f32 %v4638, %v4639
    %v4641 = vrot.slane %v4640, 1
    %v4642 = vmax.f32 %v4640, %v4641
    %v4643 = vsel %vm1255, %v4632, -inf
    %v4644 = vsel %vm1259, %v4633, -inf
    %v4645 = vmax.f32 %v4643, %v4644
    %v4646 = vrot.slane %v4645, 4
    %v4647 = vmax.f32 %v4645, %v4646
    %v4648 = vrot.slane %v4647, 2
    %v4649 = vmax.f32 %v4647, %v4648
    %v4650 = vrot.slane %v4649, 1
    %v4651 = vmax.f32 %v4649, %v4650
    %v4652 = vsub.f32 %v4630, %v4642
    %v4653 = vsub.f32 %v4631, %v4642
    %v4654 = vsub.f32 %v4632, %v4651
    %v4655 = vsub.f32 %v4633, %v4651
    %v4656 = vmul.f32 %v4652, 1.442695
    %v4657 = vpow.pop %v4656
    %v4658 = vmul.f32 %v4653, 1.442695
    %v4659 = vpow.pop %v4658
    %v4660 = vmul.f32 %v4654, 1.442695
    %v4661 = vpow.pop %v4660
    %v4662 = vmul.f32 %v4655, 1.442695
    %v4663 = vpow.pop %v4662
    %v4664 = vsel %vm1255, %v4657, 0.0
    %v4665 = vsel %vm1259, %v4659, 0.0
    %v4666 = vadd.f32 %v4664, %v4665
    %v4667 = vrot.slane %v4666, 4
    %v4668 = vadd.f32 %v4666, %v4667
    %v4669 = vrot.slane %v4668, 2
    %v4670 = vadd.f32 %v4668, %v4669
    %v4671 = vrot.slane %v4670, 1
    %v4672 = vadd.f32 %v4670, %v4671
    %v4673 = vsel %vm1255, %v4661, 0.0
    %v4674 = vsel %vm1259, %v4663, 0.0
    %v4675 = vadd.f32 %v4673, %v4674
    %v4676 = vrot.slane %v4675, 4
    %v4677 = vadd.f32 %v4675, %v4676
    %v4678 = vrot.slane %v4677, 2
    %v4679 = vadd.f32 %v4677, %v4678
    %v4680 = vrot.slane %v4679, 1
    %v4681 = vadd.f32 %v4679, %v4680
    %v4682 = vrcp.pop %v4672
    %v4683 = vmul.f32 %v4672, %v4682
    %v4684 = vsub.f32 1.0, %v4683
    %v4685 = vmul.f32 %v4682, %v4684
    %v4686 = vadd.f32 %v4682, %v4685
    %vm4687 = vweird.f32 %v4672
    %vm4688 = vweird.f32 %v4682
    %vm4689 = vmor %vm4687, %vm4688
    %v4690 = vsel %vm4689, %v4682, %v4686
    %v4691 = vand.u32 2147483647, %v4672
    %vm4692 = vcmp.eq.f32.partialorder %v4691, 8.507059e+37
    %v4693 = vand.u32 %v4672, 2147483648
    %v4694 = vor.u32 1.1754944e-38, %v4693
    %v4695 = vsel %vm4692, %v4694, %v4690
    %v4696 = vmul.f32 %v4657, %v4695
    %v4697 = vmul.f32 %v4659, %v4695
    %v4698 = vrcp.pop %v4681
    %v4699 = vmul.f32 %v4681, %v4698
    %v4700 = vsub.f32 1.0, %v4699
    %v4701 = vmul.f32 %v4698, %v4700
    %v4702 = vadd.f32 %v4698, %v4701
    %vm4703 = vweird.f32 %v4681
    %vm4704 = vweird.f32 %v4698
    %vm4705 = vmor %vm4703, %vm4704
    %v4706 = vsel %vm4705, %v4698, %v4702
    %v4707 = vand.u32 2147483647, %v4681
    %vm4708 = vcmp.eq.f32.partialorder %v4707, 8.507059e+37
    %v4709 = vand.u32 %v4681, 2147483648
    %v4710 = vor.u32 1.1754944e-38, %v4709
    %v4711 = vsel %vm4708, %v4710, %v4706
    %v4712 = vmul.f32 %v4661, %v4711
    %v4713 = vmul.f32 %v4663, %v4711
    %v4714 = vrot.slane %v4126, 4
    %v4715 = vrot.slane %v4127, 4
    %v4716 = vrot.slane %v4128, 4
    %4720 = vxpose.xlu0.b32.start [1/16] %v4696, 128
    %4721 = vxpose.xlu0.b32.cont [2/16] %v4697, 128
    %4722 = vxpose.xlu0.b32.cont [3/16] 0.0, 128
    %4723 = vxpose.xlu0.b32.cont [4/16] 0.0, 128
    %4724 = vxpose.xlu0.b32.cont [5/16] 0.0, 128
    %4725 = vxpose.xlu0.b32.cont [6/16] 0.0, 128
    %4726 = vxpose.xlu0.b32.cont [7/16] 0.0, 128
    %4727 = vxpose.xlu0.b32.cont [8/16] 0.0, 128
    %4728 = vxpose.xlu0.b32.cont [9/16] 0.0, 128
    %4729 = vxpose.xlu0.b32.cont [10/16] 0.0, 128
    %4730 = vxpose.xlu0.b32.cont [11/16] 0.0, 128
    %4731 = vxpose.xlu0.b32.cont [12/16] 0.0, 128
    %4732 = vxpose.xlu0.b32.cont [13/16] 0.0, 128
    %4733 = vxpose.xlu0.b32.cont [14/16] 0.0, 128
    %4734 = vxpose.xlu0.b32.cont [15/16] 0.0, 128
    %4735 = vxpose.xlu0.b32.end [16/16] 0.0, 128
    %v4736 = vpop.trf.xlu0
    %v4737 = vpop.trf.xlu0
    %v4738 = vpop.trf.xlu0
    %v4739 = vpop.trf.xlu0
    %v4740 = vpop.trf.xlu0
    %v4741 = vpop.trf.xlu0
    %v4742 = vpop.trf.xlu0
    %v4743 = vpop.trf.xlu0
    %v4744 = vpop.trf.xlu0
    %v4745 = vpop.trf.xlu0
    %v4746 = vpop.trf.xlu0
    %v4747 = vpop.trf.xlu0
    %v4748 = vpop.trf.xlu0
    %v4749 = vpop.trf.xlu0
    %v4750 = vpop.trf.xlu0
    %v4751 = vpop.trf.xlu0
    %4752 = vxpose.xlu0.b32.start [1/16] %v4712, 128
    %4753 = vxpose.xlu0.b32.cont [2/16] %v4713, 128
    %4754 = vxpose.xlu0.b32.cont [3/16] 0.0, 128
    %4755 = vxpose.xlu0.b32.cont [4/16] 0.0, 128
    %4756 = vxpose.xlu0.b32.cont [5/16] 0.0, 128
    %4757 = vxpose.xlu0.b32.cont [6/16] 0.0, 128
    %4758 = vxpose.xlu0.b32.cont [7/16] 0.0, 128
    %4759 = vxpose.xlu0.b32.cont [8/16] 0.0, 128
    %4760 = vxpose.xlu0.b32.cont [9/16] 0.0, 128
    %4761 = vxpose.xlu0.b32.cont [10/16] 0.0, 128
    %4762 = vxpose.xlu0.b32.cont [11/16] 0.0, 128
    %4763 = vxpose.xlu0.b32.cont [12/16] 0.0, 128
    %4764 = vxpose.xlu0.b32.cont [13/16] 0.0, 128
    %4765 = vxpose.xlu0.b32.cont [14/16] 0.0, 128
    %4766 = vxpose.xlu0.b32.cont [15/16] 0.0, 128
    %4767 = vxpose.xlu0.b32.end [16/16] 0.0, 128
    %v4768 = vpop.trf.xlu0
    %v4769 = vpop.trf.xlu0
    %v4770 = vpop.trf.xlu0
    %v4771 = vpop.trf.xlu0
    %v4772 = vpop.trf.xlu0
    %v4773 = vpop.trf.xlu0
    %v4774 = vpop.trf.xlu0
    %v4775 = vpop.trf.xlu0
    %v4776 = vpop.trf.xlu0
    %v4777 = vpop.trf.xlu0
    %v4778 = vpop.trf.xlu0
    %v4779 = vpop.trf.xlu0
    %v4780 = vpop.trf.xlu0
    %v4781 = vpop.trf.xlu0
    %v4782 = vpop.trf.xlu0
    %v4783 = vpop.trf.xlu0
    %4784 = vst [vmem:[#allocation1] ss:$2 sm:$0xff] %v4126
    %s4785 = scalar_lea.vmem [#allocation1], 1
    %4786 = vst [vmem:[%s4785] ss:$2 sm:$0xff] %v4714
    %s4787 = scalar_lea.vmem [#allocation1], 16
    %4788 = vst [vmem:[%s4787] ss:$2 sm:$0xff] %v4127
    %v4789 = vld.sshfl [vmem:[#allocation1] sm:$0xff pattern:$0x75316420]
    %v4790 = vld.sshfl [vmem:[#allocation1 + $0x10] sm:$0xff pattern:$0x75316420]
    %v4793 = vsel %vm1255, %v4736, 0
    %v4796 = vsel %vm1255, %v4737, 0
    %v4798 = vsel %vm1371, %v4790, 0
    %4800 = vmatpush.msra.mxu0 0.0
    %4801 = vmatpush.msra.mxu0 0.0
    %4802 = vmatpush.msra.mxu0 0.0
    %4803 = vmatpush.msra.mxu0 0.0
    %4804 = vmatpush.msra.mxu0 0.0
    %4805 = vmatpush.msra.mxu0 0.0
    %4806 = vmatpush.msra.mxu0 0.0
    %4807 = vmatpush.msra.mxu0 0.0
    %4808 = vmatpush.msra.mxu0 0.0
    %4809 = vmatpush.msra.mxu0 0.0
    %4810 = vmatpush.msra.mxu0 0.0
    %4811 = vmatpush.msra.mxu0 0.0
    %4812 = vmatpush.msra.mxu0 0.0
    %4813 = vmatpush.msra.mxu0 0.0
    %4814 = vmatpush.msra.mxu0 %v4798
    %4815 = vmatpush.msra.mxu0 %v4789
    %4816 = vmatmul.f32.gmra.mxu0 %v4793
    %v4817 = vpop.f32.mrf.mxu0
    %v4818 = vadd.f32 0.0, %v4817
    %4819 = vmatmul.f32.gmra.mxu0 %v4796
    %v4820 = vpop.f32.mrf.mxu0
    %v4821 = vadd.f32 0.0, %v4820
    %4822 = vdwg.mxu0
    %4823 = vst [vmem:[#allocation1] ss:$2 sm:$0xff] %v4715
    %s4824 = scalar_lea.vmem [#allocation1], 1
    %4825 = vst [vmem:[%s4824] ss:$2 sm:$0xff] %v4128
    %s4826 = scalar_lea.vmem [#allocation1], 16
    %4827 = vst [vmem:[%s4826] ss:$2 sm:$0xff] %v4716
    %v4828 = vld.sshfl [vmem:[#allocation1] sm:$0xff pattern:$0x75316420]
    %v4829 = vld.sshfl [vmem:[#allocation1 + $0x10] sm:$0xff pattern:$0x75316420]
    %v4832 = vsel %vm1255, %v4768, 0
    %v4835 = vsel %vm1255, %v4769, 0
    %v4837 = vsel %vm1371, %v4829, 0
    %4839 = vmatpush.msra.mxu0 0.0
    %4840 = vmatpush.msra.mxu0 0.0
    %4841 = vmatpush.msra.mxu0 0.0
    %4842 = vmatpush.msra.mxu0 0.0
    %4843 = vmatpush.msra.mxu0 0.0
    %4844 = vmatpush.msra.mxu0 0.0
    %4845 = vmatpush.msra.mxu0 0.0
    %4846 = vmatpush.msra.mxu0 0.0
    %4847 = vmatpush.msra.mxu0 0.0
    %4848 = vmatpush.msra.mxu0 0.0
    %4849 = vmatpush.msra.mxu0 0.0
    %4850 = vmatpush.msra.mxu0 0.0
    %4851 = vmatpush.msra.mxu0 0.0
    %4852 = vmatpush.msra.mxu0 0.0
    %4853 = vmatpush.msra.mxu0 %v4837
    %4854 = vmatpush.msra.mxu0 %v4828
    %4855 = vmatmul.f32.gmra.mxu0 %v4832
    %v4856 = vpop.f32.mrf.mxu0
    %v4857 = vadd.f32 0.0, %v4856
    %4858 = vmatmul.f32.gmra.mxu0 %v4835
    %v4859 = vpop.f32.mrf.mxu0
    %v4860 = vadd.f32 0.0, %v4859
    %4861 = vdwg.mxu0
    %v4864 = vrot.slane %v4818, 4
    %v4865 = vrot.slane %v4857, 4
    %v4868 = vadd.f32 %v4126, %v4818
    %v4869 = vadd.f32 %v4714, %v4864
    %v4870 = vadd.f32 %v4127, %v4821
    %v4871 = vadd.f32 %v4715, %v4857
    %v4872 = vadd.f32 %v4128, %v4865
    %v4873 = vadd.f32 %v4716, %v4860
    %4880 = vst [vmem:[#allocation1] ss:$2 sm:$0xff] %v4868
    %s4881 = scalar_lea.vmem [#allocation1], 1
    %4882 = vst [vmem:[%s4881] ss:$2 sm:$0xff] %v4869
    %s4883 = scalar_lea.vmem [#allocation1], 16
    %4884 = vst [vmem:[%s4883] ss:$2 sm:$0xff] %v4870
    %s4885 = scalar_lea.vmem [#allocation1], 17
    %4886 = vst [vmem:[%s4885] ss:$2 sm:$0xff] %v4871
    %s4887 = scalar_lea.vmem [#allocation1], 32
    %4888 = vst [vmem:[%s4887] ss:$2 sm:$0xff] %v4872
    %s4889 = scalar_lea.vmem [#allocation1], 33
    %4890 = vst [vmem:[%s4889] ss:$2 sm:$0xff] %v4873
    %v4891 = vld.sshfl [vmem:[#allocation1] sm:$0xff pattern:$0x75316420]
    %v4892 = vld.sshfl [vmem:[#allocation1 + $0x10] sm:$0xff pattern:$0x75316420]
    %v4893 = vld.sshfl [vmem:[#allocation1 + $0x20] sm:$0xff pattern:$0x75316420]
    %v4897 = vsel %vm93, %v4891, 0.0
    %4898 = vadd.xlane.f32.xlu0 %v4897
    %v4899 = vpop.xlane.xlu0 %4898
    %v4900 = vsel %vm93, %v4892, 0.0
    %4901 = vadd.xlane.f32.xlu0 %v4900
    %v4902 = vpop.xlane.xlu0 %4901
    %v4903 = vsel %vm93, %v4893, 0.0
    %4904 = vadd.xlane.f32.xlu0 %v4903
    %v4905 = vpop.xlane.xlu0 %4904
    %v4906 = vmul.f32 %v4899, %v844
    %v4907 = vmul.f32 %v4902, %v844
    %v4908 = vmul.f32 %v4905, %v844
    %v4913 = vunpack.c.l.s4 839922192
    %v4914 = vunpack.c.0.s8 %v4913
    %v4915 = vperm.slane %v4906, %v4914
    %v4917 = vunpack.c.l.s4 1985246804
    %v4918 = vunpack.c.0.s8 %v4917
    %v4919 = vperm.slane %v4906, %v4918
    %v4921 = vunpack.c.l.s4 839922192
    %v4922 = vunpack.c.0.s8 %v4921
    %v4923 = vperm.slane %v4907, %v4922
    %v4925 = vunpack.c.l.s4 1985246804
    %v4926 = vunpack.c.0.s8 %v4925
    %v4927 = vperm.slane %v4907, %v4926
    %v4929 = vunpack.c.l.s4 839922192
    %v4930 = vunpack.c.0.s8 %v4929
    %v4931 = vperm.slane %v4908, %v4930
    %v4933 = vunpack.c.l.s4 1985246804
    %v4934 = vunpack.c.0.s8 %v4933
    %v4935 = vperm.slane %v4908, %v4934
    %v4942 = vsub.f32 %v4868, %v4915
    %v4943 = vsub.f32 %v4869, %v4919
    %v4944 = vsub.f32 %v4870, %v4923
    %v4945 = vsub.f32 %v4871, %v4927
    %v4946 = vsub.f32 %v4872, %v4931
    %v4947 = vsub.f32 %v4873, %v4935
    %v4948 = vmul.f32 %v4942, %v4942
    %v4949 = vmul.f32 %v4943, %v4943
    %v4950 = vmul.f32 %v4944, %v4944
    %v4951 = vmul.f32 %v4945, %v4945
    %v4952 = vmul.f32 %v4946, %v4946
    %v4953 = vmul.f32 %v4947, %v4947
    %4960 = vst [vmem:[#allocation1] ss:$2 sm:$0xff] %v4948
    %s4961 = scalar_lea.vmem [#allocation1], 1
    %4962 = vst [vmem:[%s4961] ss:$2 sm:$0xff] %v4949
    %s4963 = scalar_lea.vmem [#allocation1], 16
    %4964 = vst [vmem:[%s4963] ss:$2 sm:$0xff] %v4950
    %s4965 = scalar_lea.vmem [#allocation1], 17
    %4966 = vst [vmem:[%s4965] ss:$2 sm:$0xff] %v4951
    %s4967 = scalar_lea.vmem [#allocation1], 32
    %4968 = vst [vmem:[%s4967] ss:$2 sm:$0xff] %v4952
    %s4969 = scalar_lea.vmem [#allocation1], 33
    %4970 = vst [vmem:[%s4969] ss:$2 sm:$0xff] %v4953
    %v4971 = vld.sshfl [vmem:[#allocation1] sm:$0xff pattern:$0x75316420]
    %v4972 = vld.sshfl [vmem:[#allocation1 + $0x10] sm:$0xff pattern:$0x75316420]
    %v4973 = vld.sshfl [vmem:[#allocation1 + $0x20] sm:$0xff pattern:$0x75316420]
    %v4977 = vsel %vm93, %v4971, 0.0
    %4978 = vadd.xlane.f32.xlu0 %v4977
    %v4979 = vpop.xlane.xlu0 %4978
    %v4980 = vsel %vm93, %v4972, 0.0
    %4981 = vadd.xlane.f32.xlu0 %v4980
    %v4982 = vpop.xlane.xlu0 %4981
    %v4983 = vsel %vm93, %v4973, 0.0
    %4984 = vadd.xlane.f32.xlu0 %v4983
    %v4985 = vpop.xlane.xlu0 %4984
    %v4986 = vmul.f32 %v4979, 0.032258064
    %v4987 = vmul.f32 %v4982, 0.032258064
    %v4988 = vmul.f32 %v4985, 0.032258064
    %v4989 = vrsqrt.pop %v4986
    %v4990 = vmul.f32 %v4989, %v4986
    %v4991 = vmul.f32 %v4990, %v4989
    %v4992 = vmul.f32 0.5, %v4991
    %v4993 = vsub.f32 1.5, %v4992
    %v4994 = vmul.f32 %v4989, %v4993
    %v4995 = vmul.f32 %v4986, %v4994
    %vm4996 = vcmp.eq.f32.partialorder %v4986, inf
    %v4997 = vsel %vm4996, %v4986, %v4995
    %vm4998 = vcmp.eq.f32.partialorder %v4986, 0.0
    %v4999 = vand.u32 %v4986, 2147483648
    %v5000 = vsel %vm4998, %v4999, %v4997
    %v5001 = vrsqrt.pop %v4987
    %v5002 = vmul.f32 %v5001, %v4987
    %v5003 = vmul.f32 %v5002, %v5001
    %v5004 = vmul.f32 0.5, %v5003
    %v5005 = vsub.f32 1.5, %v5004
    %v5006 = vmul.f32 %v5001, %v5005
    %v5007 = vmul.f32 %v4987, %v5006
    %vm5008 = vcmp.eq.f32.partialorder %v4987, inf
    %v5009 = vsel %vm5008, %v4987, %v5007
    %vm5010 = vcmp.eq.f32.partialorder %v4987, 0.0
    %v5011 = vand.u32 %v4987, 2147483648
    %v5012 = vsel %vm5010, %v5011, %v5009
    %v5013 = vrsqrt.pop %v4988
    %v5014 = vmul.f32 %v5013, %v4988
    %v5015 = vmul.f32 %v5014, %v5013
    %v5016 = vmul.f32 0.5, %v5015
    %v5017 = vsub.f32 1.5, %v5016
    %v5018 = vmul.f32 %v5013, %v5017
    %v5019 = vmul.f32 %v4988, %v5018
    %vm5020 = vcmp.eq.f32.partialorder %v4988, inf
    %v5021 = vsel %vm5020, %v4988, %v5019
    %vm5022 = vcmp.eq.f32.partialorder %v4988, 0.0
    %v5023 = vand.u32 %v4988, 2147483648
    %v5024 = vsel %vm5022, %v5023, %v5021
    %v5025 = vadd.f32 %v5000, 1e-06
    %v5026 = vadd.f32 %v5012, 1e-06
    %v5027 = vadd.f32 %v5024, 1e-06
    %v5028 = vrcp.pop %v5025
    %v5029 = vmul.f32 %v5025, %v5028
    %v5030 = vsub.f32 1.0, %v5029
    %v5031 = vmul.f32 %v5028, %v5030
    %v5032 = vadd.f32 %v5028, %v5031
    %vm5033 = vweird.f32 %v5025
    %vm5034 = vweird.f32 %v5028
    %vm5035 = vmor %vm5033, %vm5034
    %v5036 = vsel %vm5035, %v5028, %v5032
    %v5037 = vand.u32 2147483647, %v5025
    %vm5038 = vcmp.eq.f32.partialorder %v5037, 8.507059e+37
    %v5039 = vand.u32 %v5025, 2147483648
    %v5040 = vor.u32 1.1754944e-38, %v5039
    %v5041 = vsel %vm5038, %v5040, %v5036
    %v5042 = vmul.f32 1.0, %v5041
    %v5043 = vrcp.pop %v5026
    %v5044 = vmul.f32 %v5026, %v5043
    %v5045 = vsub.f32 1.0, %v5044
    %v5046 = vmul.f32 %v5043, %v5045
    %v5047 = vadd.f32 %v5043, %v5046
    %vm5048 = vweird.f32 %v5026
    %vm5049 = vweird.f32 %v5043
    %vm5050 = vmor %vm5048, %vm5049
    %v5051 = vsel %vm5050, %v5043, %v5047
    %v5052 = vand.u32 2147483647, %v5026
    %vm5053 = vcmp.eq.f32.partialorder %v5052, 8.507059e+37
    %v5054 = vand.u32 %v5026, 2147483648
    %v5055 = vor.u32 1.1754944e-38, %v5054
    %v5056 = vsel %vm5053, %v5055, %v5051
    %v5057 = vmul.f32 1.0, %v5056
    %v5058 = vrcp.pop %v5027
    %v5059 = vmul.f32 %v5027, %v5058
    %v5060 = vsub.f32 1.0, %v5059
    %v5061 = vmul.f32 %v5058, %v5060
    %v5062 = vadd.f32 %v5058, %v5061
    %vm5063 = vweird.f32 %v5027
    %vm5064 = vweird.f32 %v5058
    %vm5065 = vmor %vm5063, %vm5064
    %v5066 = vsel %vm5065, %v5058, %v5062
    %v5067 = vand.u32 2147483647, %v5027
    %vm5068 = vcmp.eq.f32.partialorder %v5067, 8.507059e+37
    %v5069 = vand.u32 %v5027, 2147483648
    %v5070 = vor.u32 1.1754944e-38, %v5069
    %v5071 = vsel %vm5068, %v5070, %v5066
    %v5072 = vmul.f32 1.0, %v5071
    %v5073 = vperm.slane %v4517, 0
    %5080 = vst [vmem:[#allocation1] ss:$2 sm:$0xff] %v4942
    %s5081 = scalar_lea.vmem [#allocation1], 1
    %5082 = vst [vmem:[%s5081] ss:$2 sm:$0xff] %v4943
    %s5083 = scalar_lea.vmem [#allocation1], 16
    %5084 = vst [vmem:[%s5083] ss:$2 sm:$0xff] %v4944
    %s5085 = scalar_lea.vmem [#allocation1], 17
    %5086 = vst [vmem:[%s5085] ss:$2 sm:$0xff] %v4945
    %s5087 = scalar_lea.vmem [#allocation1], 32
    %5088 = vst [vmem:[%s5087] ss:$2 sm:$0xff] %v4946
    %s5089 = scalar_lea.vmem [#allocation1], 33
    %5090 = vst [vmem:[%s5089] ss:$2 sm:$0xff] %v4947
    %v5091 = vld.sshfl [vmem:[#allocation1] sm:$0xff pattern:$0x75316420]
    %v5092 = vld.sshfl [vmem:[#allocation1 + $0x10] sm:$0xff pattern:$0x75316420]
    %v5093 = vld.sshfl [vmem:[#allocation1 + $0x20] sm:$0xff pattern:$0x75316420]
    %v5097 = vmul.f32 %v5073, %v5091
    %v5098 = vmul.f32 %v5073, %v5092
    %v5099 = vmul.f32 %v5073, %v5093
    %v5100 = vmul.f32 %v5097, %v5042
    %v5101 = vmul.f32 %v5098, %v5057
    %v5102 = vmul.f32 %v5099, %v5072
    %v5103 = vperm.slane %v4518, 0
    %v5104 = vadd.f32 %v5100, %v5103
    %v5105 = vadd.f32 %v5101, %v5103
    %v5106 = vadd.f32 %v5102, %v5103
    %5107 = vst.msk [vmem:[%s10] sm:$0xff] %vm93, %v5104
    %5108 = vst.msk [vmem:[%s10 + $0x8] sm:$0xff] %vm93, %v5105
    %5109 = vst.msk [vmem:[%s10 + $0x10] sm:$0xff] %vm93, %v5106
    // Predicated region
    $region46: #{la_block_forward.1} parent=1 // pred_check
      _
    $region47: #{la_block_forward.1} parent=1 // pred_check_branch
      %5111 = sbr.rel (0) target = $region49
    $region48: #{la_block_forward.1} parent=1 // pred_region
      %5113 = vsyncadd [#allocation4], 0
      %s5114 = sshll.u32 [#allocation7], 4
      %s5115 = int_to_ptr.vmem [resolvable:$true] %s5114
      %s5116 = sshll.u32 %s9, 4
      %s5117 = int_to_ptr.hbm [resolvable:$true] %s5116
      %5122 = dma.vmem_to_hbm [thread:$0]  %s5115, 256, %s5117, [#allocation4], 128, 128, 8
    $region49: #{la_block_forward.1} parent=1 // pred_fallthru
      _
    // Predicated region
    $region50: #{la_block_forward.1} parent=1 // pred_check
      _
    $region51: #{la_block_forward.1} parent=1 // pred_check_branch
      %5124 = sbr.rel (0) target = $region53
    $region52: #{la_block_forward.1} parent=1 // pred_region
      _
    $region53: #{la_block_forward.1} parent=1 // pred_fallthru
      _
    // Predicated region
    $region54: #{la_block_forward.1} parent=1 // pred_check
      _
    $region55: #{la_block_forward.1} parent=1 // pred_check_branch
      %5126 = sbr.rel (0) target = $region57
    $region56: #{la_block_forward.1} parent=1 // pred_region
      %5128 = dma.done [#allocation4], 256
    $region57: #{la_block_forward.1} parent=1 // pred_fallthru
      _
    // Predicated region
    $region58: #{la_block_forward.1} parent=1 // pred_check
      _
    $region59: #{la_block_forward.1} parent=1 // pred_check_branch
      %5130 = sbr.rel (0) target = $region61
    $region60: #{la_block_forward.1} parent=1 // pred_region
      _
    $region61: #{la_block_forward.1} parent=1 // pred_fallthru
      _
    %5131 = vsyncpa [#allocation3], 1
    %5132 = vsyncpa [#allocation6], 1
    %5133 = vsyncpa [#allocation4], 1

</llo_original>
